<compile_context>
chip_gen: v6e
topology: v6e:2x2x1
jax: 0.10.0
libtpu: 0.0.40
codegen_flags: <defaults>
</compile_context>

<pallas_src>
import functools
import math

import jax
import jax.numpy as jnp
from jax import lax
from jax.experimental import pallas as pl
from jax.experimental.pallas import tpu as pltpu


# ----------------------------------------------------------------------------
# Fused Pallas kernel: 2-layer bi-LSTM + endpoint gather + relation head
# ----------------------------------------------------------------------------
def _fused_bilstm_relation_kernel(
        idx_ref,               # SMEM (5, R) int32: (b, lidx_s, lidx_e, ridx_s, ridx_e)
        x_ref,                 # VMEM (T*Bp, 768) bf16, time-major, batch padded to 8
        fts_ref,               # VMEM (R, n_fts) f32
        wih0_ref,              # VMEM (768, 8H) bf16, columns = [fwd | bwd], gates (i,f,o,g)
        whh0_ref,              # VMEM (2, H, 4H) f32
        wih1_ref,              # VMEM (2H, 8H) bf16
        whh1_ref,              # VMEM (2, H, 4H) f32
        w1a_ref,               # VMEM (4H, H) bf16   (lane-aligned part of linear1)
        w1b_ref,               # VMEM (n_fts, H) f32
        b1_ref,                # VMEM (1, H) f32
        w2_ref,                # VMEM (H, C) f32
        b2_ref,                # VMEM (1, C) f32
        logits_ref,            # VMEM (R, C) f32 out
        prob_ref,              # VMEM (R, C) f32 out
        g_ref,                 # VMEM scratch (T*Bp, 8H) f32  -- hoisted projections
        h_ref,                 # VMEM scratch (T*Bp, 2H) f32  -- current layer output
        *, seq_len, batch, hid, n_rel):
    h3 = 3 * hid
    h4 = 4 * hid

    def run_direction(d, whh):
        """One direction's recurrence. d is a static Python int (0=fwd, 1=bwd)."""
        gate_col = d * h4          # static column offset into g_ref
        out_col = d * hid          # static column offset into h_ref

        def step(i, carry):
            h, c = carry
            t = i if d == 0 else seq_len - 1 - i
            row = pl.multiple_of(t * batch, batch)            # 8-aligned sublane start
            gates = (g_ref[pl.ds(row, batch), gate_col:gate_col + h4]
                     + jnp.dot(h, whh, preferred_element_type=jnp.float32))
            # gate columns packed (i, f, o | g): 1 sigmoid over 3H + 1 tanh over H
            sig = jax.nn.sigmoid(gates[:, :h3])
            g_g = jnp.tanh(gates[:, h3:])
            c_new = sig[:, hid:2 * hid] * c + sig[:, :hid] * g_g
            h_new = sig[:, 2 * hid:h3] * jnp.tanh(c_new)
            h_ref[pl.ds(row, batch), out_col:out_col + hid] = h_new
            return (h_new, c_new)

        zeros = jnp.zeros((batch, hid), jnp.float32)
        # TODO(synk): use unroll=8 (partial) for realistic seq_len (~512).
        lax.fori_loop(0, seq_len, step, (zeros, zeros), unroll=True)

    # ---- layer 0: single shared input projection for both directions (N = 8H) ----
    g_ref[...] = jnp.dot(x_ref[...], wih0_ref[...],
                         preferred_element_type=jnp.float32)
    run_direction(0, whh0_ref[0])
    run_direction(1, whh0_ref[1])

    # ---- layer 1: project the layer-0 output (resident in VMEM scratch) ----------
    g_ref[...] = jnp.dot(h_ref[...].astype(jnp.bfloat16), wih1_ref[...],
                         preferred_element_type=jnp.float32)
    run_direction(0, whh1_ref[0])
    run_direction(1, whh1_ref[1])

    # ---- relation head: endpoint gather (direct dynamic row reads) + MLP ---------
    def endpoint(col, t, b):
        # single dynamic row from the VMEM-resident final-layer output
        return h_ref[pl.ds(t * batch + b, 1), col:col + hid]            # (1, H)

    rows = []
    for r in range(n_rel):                                              # static, small
        b = idx_ref[0, r]
        lf = endpoint(0, idx_ref[1, r], b)        # fwd half @ lidx_start
        lb = endpoint(hid, idx_ref[2, r], b)      # bwd half @ lidx_end
        rf = endpoint(0, idx_ref[3, r], b)        # fwd half @ ridx_start
        rb = endpoint(hid, idx_ref[4, r], b)      # bwd half @ ridx_end
        rows.append(jnp.concatenate([lf, lb, rf, rb], axis=1))          # (1, 4H)
    z4h = jnp.concatenate(rows, axis=0)                                 # (R, 4H)

    h1 = jnp.tanh(
        jnp.dot(z4h.astype(jnp.bfloat16), w1a_ref[...],
                preferred_element_type=jnp.float32)
        + jnp.dot(fts_ref[...], w1b_ref[...], preferred_element_type=jnp.float32)
        + b1_ref[...])
    logits = (jnp.dot(h1, w2_ref[...], preferred_element_type=jnp.float32)
              + b2_ref[...])
    logits_ref[...] = logits

    m = jnp.max(logits, axis=1, keepdims=True)
    e = jnp.exp(logits - m)
    prob_ref[...] = e / jnp.sum(e, axis=1, keepdims=True)               # exact softmax


def fused_forward_call(idx, x_slab, fts, kw, *, seq_len, batch, hid, n_rel, n_cls):
    kernel = functools.partial(_fused_bilstm_relation_kernel,
                               seq_len=seq_len, batch=batch, hid=hid, n_rel=n_rel)
    vmem = pl.BlockSpec(memory_space=pltpu.MemorySpace.VMEM)
    smem = pl.BlockSpec(memory_space=pltpu.MemorySpace.SMEM)
    return pl.pallas_call(
        kernel,
        out_shape=(jax.ShapeDtypeStruct((n_rel, n_cls), jnp.float32),
                   jax.ShapeDtypeStruct((n_rel, n_cls), jnp.float32)),
        in_specs=[smem] + [vmem] * 11,
        out_specs=(vmem, vmem),
        scratch_shapes=[pltpu.VMEM((seq_len * batch, 8 * hid), jnp.float32),
                        pltpu.VMEM((seq_len * batch, 2 * hid), jnp.float32)],
    )(idx, x_slab, fts,
      kw["wih0"], kw["whh0"], kw["wih1"], kw["whh1"],
      kw["w1a"], kw["w1b"], kw["b1"], kw["w2"], kw["b2"])


# ----------------------------------------------------------------------------
# Parameters (PyTorch layout) and kernel-side weight packing
# ----------------------------------------------------------------------------
def init_params(key, *, hid, num_layers, num_classes, n_fts, input_size=768):
    """PyTorch-shaped params: lstm[layer][dir] = (W_ih (4H,In), W_hh (4H,H)),
    gate row order (i, f, g, o); linear1/linear2 stored transposed as (In, Out)."""
    keys = iter(jax.random.split(key, 4 * num_layers + 4))
    bound = 1.0 / math.sqrt(hid)
    lstm = []
    for layer in range(num_layers):
        in_size = input_size if layer == 0 else 2 * hid
        dirs = []
        for _ in range(2):  # forward, reverse
            wih = jax.random.uniform(next(keys), (4 * hid, in_size),
                                     minval=-bound, maxval=bound)
            whh = jax.random.uniform(next(keys), (4 * hid, hid),
                                     minval=-bound, maxval=bound)
            dirs.append((wih, whh))
        lstm.append(dirs)
    params = {"lstm": lstm}
    lin1_in = 4 * hid + n_fts
    b = 1.0 / math.sqrt(lin1_in)
    params["w1"] = jax.random.uniform(next(keys), (lin1_in, hid), minval=-b, maxval=b)
    params["b1"] = jax.random.uniform(next(keys), (1, hid), minval=-b, maxval=b)
    b = 1.0 / math.sqrt(hid)
    params["w2"] = jax.random.uniform(next(keys), (hid, num_classes), minval=-b, maxval=b)
    params["b2"] = jax.random.uniform(next(keys), (1, num_classes), minval=-b, maxval=b)
    return params


def _repack_gates_T(w, hid):
    """(4H, In) with PyTorch gate rows (i,f,g,o) -> (In, 4H) with columns (i,f,o,g)."""
    i, f, g, o = jnp.split(w, 4, axis=0)
    return jnp.concatenate([i, f, o, g], axis=0).T


def pack_kernel_weights(params, *, hid):
    (wih0_f, whh0_f), (wih0_b, whh0_b) = params["lstm"][0]
    (wih1_f, whh1_f), (wih1_b, whh1_b) = params["lstm"][1]
    kw = {
        # fused [fwd | bwd] input projections, bf16 for the MXU
        "wih0": jnp.concatenate([_repack_gates_T(wih0_f, hid),
                                 _repack_gates_T(wih0_b, hid)],
                                axis=1).astype(jnp.bfloat16),
        "wih1": jnp.concatenate([_repack_gates_T(wih1_f, hid),
                                 _repack_gates_T(wih1_b, hid)],
                                axis=1).astype(jnp.bfloat16),
        # per-step recurrent weights stay f32 (latency-bound, tiny)
        "whh0": jnp.stack([_repack_gates_T(whh0_f, hid),
                           _repack_gates_T(whh0_b, hid)], axis=0),
        "whh1": jnp.stack([_repack_gates_T(whh1_f, hid),
                           _repack_gates_T(whh1_b, hid)], axis=0),
        # head: lane-aligned 4H part in bf16, tiny n_fts part in f32
        "w1a": params["w1"][:4 * hid].astype(jnp.bfloat16),
        "w1b": params["w1"][4 * hid:],
        "b1": params["b1"],
        "w2": params["w2"],
        "b2": params["b2"],
    }
    return kw


# ----------------------------------------------------------------------------
# Forward pass (task='relation')
# ----------------------------------------------------------------------------
def bert_classifier_relation_forward(params, sents, lengths, fts, rel_idxs,
                                     lidx_start, lidx_end, ridx_start, ridx_end,
                                     *, hid):
    # dropout is identity (eval mode)
    del lengths  # full-length sequences: pack/unpack is identity (see TODO above)

    B, T, d_in = sents.shape
    bp = ((B + 7) // 8) * 8                        # pad batch to 8 sublanes
    x = jnp.transpose(sents, (1, 0, 2))            # (T, B, 768) time-major
    x = jnp.pad(x, ((0, 0), (0, bp - B), (0, 0)))
    x = x.reshape(T * bp, d_in).astype(jnp.bfloat16)

    kw = pack_kernel_weights(params, hid=hid)

    # resolved endpoint indices -> SMEM scalar table (5, R); clamp so a bad index
    # can never become an OOB VMEM read inside the kernel.
    b_idx = jnp.array([b for b, _ in rel_idxs], dtype=jnp.int32)
    r_idx = jnp.array([r for _, r in rel_idxs], dtype=jnp.int32)
    idx = jnp.stack([b_idx,
                     lidx_start[b_idx, r_idx],
                     lidx_end[b_idx, r_idx],
                     ridx_start[b_idx, r_idx],
                     ridx_end[b_idx, r_idx]], axis=0).astype(jnp.int32)
    clamp_max = jnp.array([[B - 1], [T - 1], [T - 1], [T - 1], [T - 1]], jnp.int32)
    idx = jnp.clip(idx, 0, clamp_max)

    n_rel = len(rel_idxs)
    n_cls = params["w2"].shape[1]
    return fused_forward_call(idx, x, fts, kw, seq_len=T, batch=bp, hid=hid,
                              n_rel=n_rel, n_cls=n_cls)


# ----------------------------------------------------------------------------
# Pure-JAX f32 reference (mirrors the PyTorch forward) for self-check
# ----------------------------------------------------------------------------
def _reference_forward(params, sents, fts, rel_idxs, lidx_start, lidx_end,
                       ridx_start, ridx_end, *, hid):
    B, T, _ = sents.shape
    x = sents
    for layer in params["lstm"]:
        outs = []
        for d, (wih, whh) in enumerate(layer):
            h = jnp.zeros((B, hid), jnp.float32)
            c = jnp.zeros((B, hid), jnp.float32)
            hs = [None] * T
            order = range(T) if d == 0 else range(T - 1, -1, -1)
            for t in order:
                gates = x[:, t, :] @ wih.T + h @ whh.T       # PyTorch order (i,f,g,o)
                i_g = jax.nn.sigmoid(gates[:, :hid])
                f_g = jax.nn.sigmoid(gates[:, hid:2 * hid])
                g_g = jnp.tanh(gates[:, 2 * hid:3 * hid])
                o_g = jax.nn.sigmoid(gates[:, 3 * hid:])
                c = f_g * c + i_g * g_g
                h = o_g * jnp.tanh(c)
                hs[t] = h
            outs.append(jnp.stack(hs, axis=1))               # (B, T, H)
        x = jnp.concatenate(outs, axis=-1)                   # (B, T, 2H)
    out = x
    b_idx = jnp.array([b for b, _ in rel_idxs], dtype=jnp.int32)
    r_idx = jnp.array([r for _, r in rel_idxs], dtype=jnp.int32)
    lt_f = out[b_idx, lidx_start[b_idx, r_idx], :hid]
    lt_b = out[b_idx, lidx_end[b_idx, r_idx], hid:]
    rt_f = out[b_idx, ridx_start[b_idx, r_idx], :hid]
    rt_b = out[b_idx, ridx_end[b_idx, r_idx], hid:]
    z = jnp.concatenate([lt_f, lt_b, rt_f, rt_b, fts], axis=1)
    h1 = jnp.tanh(z @ params["w1"] + params["b1"])
    logits = h1 @ params["w2"] + params["b2"]
    return logits, jax.nn.softmax(logits, axis=1)


# ----------------------------------------------------------------------------
if __name__ == "__main__":
    B, T, D_IN = 2, 8, 768
    HID = 32
    NUM_LAYERS = 2
    NUM_CLASSES = 4
    N_FTS = 2
    R = 4  # number of relation pairs

    root = jax.random.PRNGKey(0)
    k_param, k_sents, k_fts = jax.random.split(root, 3)

    params = init_params(k_param, hid=HID, num_layers=NUM_LAYERS,
                         num_classes=NUM_CLASSES, n_fts=N_FTS, input_size=D_IN)

    sents = jax.random.normal(k_sents, (B, T, D_IN), jnp.float32)
    fts = jax.random.normal(k_fts, (R, N_FTS), jnp.float32)
    lengths = jnp.array([T, T], dtype=jnp.int32)

    rel_idxs = [(0, 0), (0, 1), (1, 0), (1, 1)]
    lidx_start = jnp.array([[1, 3], [0, 2]], dtype=jnp.int32)
    lidx_end = jnp.array([[2, 4], [1, 3]], dtype=jnp.int32)
    ridx_start = jnp.array([[5, 6], [4, 5]], dtype=jnp.int32)
    ridx_end = jnp.array([[6, 7], [5, 6]], dtype=jnp.int32)

    logits, prob = bert_classifier_relation_forward(
        params, sents, lengths, fts, rel_idxs,
        lidx_start, lidx_end, ridx_start, ridx_end, hid=HID)
    jax.block_until_ready((logits, prob))
    assert logits.shape == (R, NUM_CLASSES) and prob.shape == (R, NUM_CLASSES)

    # self-check against the pure-f32 reference; tolerance relaxed because the
    # kernel uses bf16 MXU operands (x slab, wih, w1a) with f32 accumulation.
    ref_logits, ref_prob = _reference_forward(
        params, sents, fts, rel_idxs, lidx_start, lidx_end,
        ridx_start, ridx_end, hid=HID)
    assert bool(jnp.allclose(logits, ref_logits, atol=5e-2, rtol=5e-2)), "logits mismatch"
    assert bool(jnp.allclose(prob, ref_prob, atol=5e-2, rtol=5e-2)), "prob mismatch"

    print("KERNEL_OK")
</pallas_src>

<mosaic_0001>
module attributes {stable_mosaic.version = 11 : i64} {
  func.func @_fused_bilstm_relation_kernel(%arg0: memref<5x4xi32, #tpu.memory_space<smem>>, %arg1: memref<64x768xbf16, #tpu.memory_space<vmem>>, %arg2: memref<4x2xf32, #tpu.memory_space<vmem>>, %arg3: memref<768x256xbf16, #tpu.memory_space<vmem>>, %arg4: memref<2x32x128xf32, #tpu.memory_space<vmem>>, %arg5: memref<64x256xbf16, #tpu.memory_space<vmem>>, %arg6: memref<2x32x128xf32, #tpu.memory_space<vmem>>, %arg7: memref<128x32xbf16, #tpu.memory_space<vmem>>, %arg8: memref<2x32xf32, #tpu.memory_space<vmem>>, %arg9: memref<1x32xf32, #tpu.memory_space<vmem>>, %arg10: memref<32x4xf32, #tpu.memory_space<vmem>>, %arg11: memref<1x4xf32, #tpu.memory_space<vmem>>, %arg12: memref<4x4xf32, #tpu.memory_space<vmem>>, %arg13: memref<4x4xf32, #tpu.memory_space<vmem>>, %arg14: memref<64x256xf32, #tpu.memory_space<vmem>>, %arg15: memref<64x64xf32, #tpu.memory_space<vmem>>) attributes {dimension_semantics = [], scalar_prefetch = 0 : i64, scratch_operands = 2 : i64, tpu.core_type = #tpu.core_type<tc>} {
    %c0 = arith.constant 0 : index
    %c0_0 = arith.constant 0 : index
    %0 = vector.load %arg1[%c0, %c0_0] : memref<64x768xbf16, #tpu.memory_space<vmem>>, vector<64x768xbf16>
    %c0_1 = arith.constant 0 : index
    %c0_2 = arith.constant 0 : index
    %1 = vector.load %arg3[%c0_1, %c0_2] : memref<768x256xbf16, #tpu.memory_space<vmem>>, vector<768x256xbf16>
    %cst = arith.constant dense<0.000000e+00> : vector<64x256xf32>
    %2 = tpu.matmul %0, %1, %cst {dimension_numbers = #tpu.dot_dimension_numbers<[1], [0], [0], [1], [0, 0, 1, 1], [], []>} : vector<64x768xbf16>, vector<768x256xbf16>, vector<64x256xf32> -> vector<64x256xf32>
    %c0_3 = arith.constant 0 : index
    %c0_4 = arith.constant 0 : index
    %3 = vector.load %arg14[%c0_3, %c0_4] : memref<64x256xf32, #tpu.memory_space<vmem>>, vector<64x256xf32>
    tpu.vector_store %arg14[%c0_3, %c0_4], %2 {strides = array<i32>} : memref<64x256xf32, #tpu.memory_space<vmem>>, vector<64x256xf32>,
    %c0_5 = arith.constant 0 : index
    %c0_6 = arith.constant 0 : index
    %c0_7 = arith.constant 0 : index
    %4 = vector.load %arg4[%c0_5, %c0_6, %c0_7] : memref<2x32x128xf32, #tpu.memory_space<vmem>>, vector<1x32x128xf32>
    %5 = vector.shape_cast %4 : vector<1x32x128xf32> to vector<32x128xf32>
    %cst_8 = arith.constant 0.000000e+00 : f32
    %6 = vector.broadcast %cst_8 : f32 to vector<8x32xf32>
    %c0_i32 = arith.constant 0 : i32
    %c8_i32 = arith.constant 8 : i32
    %7 = arith.muli %c0_i32, %c8_i32 : i32
    %8 = tpu.assume_multiple %7, 8 : i32
    %9 = arith.index_cast %8 : i32 to index
    %c0_9 = arith.constant 0 : index
    %10 = vector.load %arg14[%9, %c0_9] : memref<64x256xf32, #tpu.memory_space<vmem>>, vector<8x128xf32>
    %cst_10 = arith.constant dense<0.000000e+00> : vector<8x128xf32>
    %11 = tpu.matmul %6, %5, %cst_10 {dimension_numbers = #tpu.dot_dimension_numbers<[1], [0], [0], [1], [0, 0, 1, 1], [], []>} : vector<8x32xf32>, vector<32x128xf32>, vector<8x128xf32> -> vector<8x128xf32>
    %12 = arith.addf %10, %11 : vector<8x128xf32>
    %13 = vector.extract_strided_slice %12 {offsets = [0, 0], sizes = [8, 96], strides = [1, 1]} : vector<8x128xf32> to vector<8x96xf32>
    %14 = arith.negf %13 : vector<8x96xf32>
    %15 = math.exp %14 : vector<8x96xf32>
    %cst_11 = arith.constant 1.000000e+00 : f32
    %16 = vector.broadcast %cst_11 : f32 to vector<8x96xf32>
    %17 = arith.addf %16, %15 : vector<8x96xf32>
    %18 = arith.divf %16, %17 : vector<8x96xf32>
    %19 = vector.extract_strided_slice %12 {offsets = [0, 96], sizes = [8, 32], strides = [1, 1]} : vector<8x128xf32> to vector<8x32xf32>
    %20 = math.tanh %19 : vector<8x32xf32>
    %21 = vector.extract_strided_slice %18 {offsets = [0, 32], sizes = [8, 32], strides = [1, 1]} : vector<8x96xf32> to vector<8x32xf32>
    %22 = arith.mulf %21, %6 : vector<8x32xf32>
    %23 = vector.extract_strided_slice %18 {offsets = [0, 0], sizes = [8, 32], strides = [1, 1]} : vector<8x96xf32> to vector<8x32xf32>
    %24 = arith.mulf %23, %20 : vector<8x32xf32>
    %25 = arith.addf %22, %24 : vector<8x32xf32>
    %26 = vector.extract_strided_slice %18 {offsets = [0, 64], sizes = [8, 32], strides = [1, 1]} : vector<8x96xf32> to vector<8x32xf32>
    %27 = math.tanh %25 : vector<8x32xf32>
    %28 = arith.mulf %26, %27 : vector<8x32xf32>
    %29 = arith.index_cast %8 : i32 to index
    %c0_12 = arith.constant 0 : index
    %30 = vector.load %arg15[%29, %c0_12] : memref<64x64xf32, #tpu.memory_space<vmem>>, vector<8x32xf32>
    tpu.vector_store %arg15[%29, %c0_12], %28 {strides = array<i32>} : memref<64x64xf32, #tpu.memory_space<vmem>>, vector<8x32xf32>,
    %c1_i32 = arith.constant 1 : i32
    %c8_i32_13 = arith.constant 8 : i32
    %31 = arith.muli %c1_i32, %c8_i32_13 : i32
    %32 = tpu.assume_multiple %31, 8 : i32
    %33 = arith.index_cast %32 : i32 to index
    %c0_14 = arith.constant 0 : index
    %34 = vector.load %arg14[%33, %c0_14] : memref<64x256xf32, #tpu.memory_space<vmem>>, vector<8x128xf32>
    %cst_15 = arith.constant dense<0.000000e+00> : vector<8x128xf32>
    %35 = tpu.matmul %28, %5, %cst_15 {dimension_numbers = #tpu.dot_dimension_numbers<[1], [0], [0], [1], [0, 0, 1, 1], [], []>} : vector<8x32xf32>, vector<32x128xf32>, vector<8x128xf32> -> vector<8x128xf32>
    %36 = arith.addf %34, %35 : vector<8x128xf32>
    %37 = vector.extract_strided_slice %36 {offsets = [0, 0], sizes = [8, 96], strides = [1, 1]} : vector<8x128xf32> to vector<8x96xf32>
    %38 = arith.negf %37 : vector<8x96xf32>
    %39 = math.exp %38 : vector<8x96xf32>
    %cst_16 = arith.constant 1.000000e+00 : f32
    %40 = vector.broadcast %cst_16 : f32 to vector<8x96xf32>
    %41 = arith.addf %40, %39 : vector<8x96xf32>
    %42 = arith.divf %40, %41 : vector<8x96xf32>
    %43 = vector.extract_strided_slice %36 {offsets = [0, 96], sizes = [8, 32], strides = [1, 1]} : vector<8x128xf32> to vector<8x32xf32>
    %44 = math.tanh %43 : vector<8x32xf32>
    %45 = vector.extract_strided_slice %42 {offsets = [0, 32], sizes = [8, 32], strides = [1, 1]} : vector<8x96xf32> to vector<8x32xf32>
    %46 = arith.mulf %45, %25 : vector<8x32xf32>
    %47 = vector.extract_strided_slice %42 {offsets = [0, 0], sizes = [8, 32], strides = [1, 1]} : vector<8x96xf32> to vector<8x32xf32>
    %48 = arith.mulf %47, %44 : vector<8x32xf32>
    %49 = arith.addf %46, %48 : vector<8x32xf32>
    %50 = vector.extract_strided_slice %42 {offsets = [0, 64], sizes = [8, 32], strides = [1, 1]} : vector<8x96xf32> to vector<8x32xf32>
    %51 = math.tanh %49 : vector<8x32xf32>
    %52 = arith.mulf %50, %51 : vector<8x32xf32>
    %53 = arith.index_cast %32 : i32 to index
    %c0_17 = arith.constant 0 : index
    %54 = vector.load %arg15[%53, %c0_17] : memref<64x64xf32, #tpu.memory_space<vmem>>, vector<8x32xf32>
    tpu.vector_store %arg15[%53, %c0_17], %52 {strides = array<i32>} : memref<64x64xf32, #tpu.memory_space<vmem>>, vector<8x32xf32>,
    %c2_i32 = arith.constant 2 : i32
    %c8_i32_18 = arith.constant 8 : i32
    %55 = arith.muli %c2_i32, %c8_i32_18 : i32
    %56 = tpu.assume_multiple %55, 8 : i32
    %57 = arith.index_cast %56 : i32 to index
    %c0_19 = arith.constant 0 : index
    %58 = vector.load %arg14[%57, %c0_19] : memref<64x256xf32, #tpu.memory_space<vmem>>, vector<8x128xf32>
    %cst_20 = arith.constant dense<0.000000e+00> : vector<8x128xf32>
    %59 = tpu.matmul %52, %5, %cst_20 {dimension_numbers = #tpu.dot_dimension_numbers<[1], [0], [0], [1], [0, 0, 1, 1], [], []>} : vector<8x32xf32>, vector<32x128xf32>, vector<8x128xf32> -> vector<8x128xf32>
    %60 = arith.addf %58, %59 : vector<8x128xf32>
    %61 = vector.extract_strided_slice %60 {offsets = [0, 0], sizes = [8, 96], strides = [1, 1]} : vector<8x128xf32> to vector<8x96xf32>
    %62 = arith.negf %61 : vector<8x96xf32>
    %63 = math.exp %62 : vector<8x96xf32>
    %cst_21 = arith.constant 1.000000e+00 : f32
    %64 = vector.broadcast %cst_21 : f32 to vector<8x96xf32>
    %65 = arith.addf %64, %63 : vector<8x96xf32>
    %66 = arith.divf %64, %65 : vector<8x96xf32>
    %67 = vector.extract_strided_slice %60 {offsets = [0, 96], sizes = [8, 32], strides = [1, 1]} : vector<8x128xf32> to vector<8x32xf32>
    %68 = math.tanh %67 : vector<8x32xf32>
    %69 = vector.extract_strided_slice %66 {offsets = [0, 32], sizes = [8, 32], strides = [1, 1]} : vector<8x96xf32> to vector<8x32xf32>
    %70 = arith.mulf %69, %49 : vector<8x32xf32>
    %71 = vector.extract_strided_slice %66 {offsets = [0, 0], sizes = [8, 32], strides = [1, 1]} : vector<8x96xf32> to vector<8x32xf32>
    %72 = arith.mulf %71, %68 : vector<8x32xf32>
    %73 = arith.addf %70, %72 : vector<8x32xf32>
    %74 = vector.extract_strided_slice %66 {offsets = [0, 64], sizes = [8, 32], strides = [1, 1]} : vector<8x96xf32> to vector<8x32xf32>
    %75 = math.tanh %73 : vector<8x32xf32>
    %76 = arith.mulf %74, %75 : vector<8x32xf32>
    %77 = arith.index_cast %56 : i32 to index
    %c0_22 = arith.constant 0 : index
    %78 = vector.load %arg15[%77, %c0_22] : memref<64x64xf32, #tpu.memory_space<vmem>>, vector<8x32xf32>
    tpu.vector_store %arg15[%77, %c0_22], %76 {strides = array<i32>} : memref<64x64xf32, #tpu.memory_space<vmem>>, vector<8x32xf32>,
    %c3_i32 = arith.constant 3 : i32
    %c8_i32_23 = arith.constant 8 : i32
    %79 = arith.muli %c3_i32, %c8_i32_23 : i32
    %80 = tpu.assume_multiple %79, 8 : i32
    %81 = arith.index_cast %80 : i32 to index
    %c0_24 = arith.constant 0 : index
    %82 = vector.load %arg14[%81, %c0_24] : memref<64x256xf32, #tpu.memory_space<vmem>>, vector<8x128xf32>
    %cst_25 = arith.constant dense<0.000000e+00> : vector<8x128xf32>
    %83 = tpu.matmul %76, %5, %cst_25 {dimension_numbers = #tpu.dot_dimension_numbers<[1], [0], [0], [1], [0, 0, 1, 1], [], []>} : vector<8x32xf32>, vector<32x128xf32>, vector<8x128xf32> -> vector<8x128xf32>
    %84 = arith.addf %82, %83 : vector<8x128xf32>
    %85 = vector.extract_strided_slice %84 {offsets = [0, 0], sizes = [8, 96], strides = [1, 1]} : vector<8x128xf32> to vector<8x96xf32>
    %86 = arith.negf %85 : vector<8x96xf32>
    %87 = math.exp %86 : vector<8x96xf32>
    %cst_26 = arith.constant 1.000000e+00 : f32
    %88 = vector.broadcast %cst_26 : f32 to vector<8x96xf32>
    %89 = arith.addf %88, %87 : vector<8x96xf32>
    %90 = arith.divf %88, %89 : vector<8x96xf32>
    %91 = vector.extract_strided_slice %84 {offsets = [0, 96], sizes = [8, 32], strides = [1, 1]} : vector<8x128xf32> to vector<8x32xf32>
    %92 = math.tanh %91 : vector<8x32xf32>
    %93 = vector.extract_strided_slice %90 {offsets = [0, 32], sizes = [8, 32], strides = [1, 1]} : vector<8x96xf32> to vector<8x32xf32>
    %94 = arith.mulf %93, %73 : vector<8x32xf32>
    %95 = vector.extract_strided_slice %90 {offsets = [0, 0], sizes = [8, 32], strides = [1, 1]} : vector<8x96xf32> to vector<8x32xf32>
    %96 = arith.mulf %95, %92 : vector<8x32xf32>
    %97 = arith.addf %94, %96 : vector<8x32xf32>
    %98 = vector.extract_strided_slice %90 {offsets = [0, 64], sizes = [8, 32], strides = [1, 1]} : vector<8x96xf32> to vector<8x32xf32>
    %99 = math.tanh %97 : vector<8x32xf32>
    %100 = arith.mulf %98, %99 : vector<8x32xf32>
    %101 = arith.index_cast %80 : i32 to index
    %c0_27 = arith.constant 0 : index
    %102 = vector.load %arg15[%101, %c0_27] : memref<64x64xf32, #tpu.memory_space<vmem>>, vector<8x32xf32>
    tpu.vector_store %arg15[%101, %c0_27], %100 {strides = array<i32>} : memref<64x64xf32, #tpu.memory_space<vmem>>, vector<8x32xf32>,
    %c4_i32 = arith.constant 4 : i32
    %c8_i32_28 = arith.constant 8 : i32
    %103 = arith.muli %c4_i32, %c8_i32_28 : i32
    %104 = tpu.assume_multiple %103, 8 : i32
    %105 = arith.index_cast %104 : i32 to index
    %c0_29 = arith.constant 0 : index
    %106 = vector.load %arg14[%105, %c0_29] : memref<64x256xf32, #tpu.memory_space<vmem>>, vector<8x128xf32>
    %cst_30 = arith.constant dense<0.000000e+00> : vector<8x128xf32>
    %107 = tpu.matmul %100, %5, %cst_30 {dimension_numbers = #tpu.dot_dimension_numbers<[1], [0], [0], [1], [0, 0, 1, 1], [], []>} : vector<8x32xf32>, vector<32x128xf32>, vector<8x128xf32> -> vector<8x128xf32>
    %108 = arith.addf %106, %107 : vector<8x128xf32>
    %109 = vector.extract_strided_slice %108 {offsets = [0, 0], sizes = [8, 96], strides = [1, 1]} : vector<8x128xf32> to vector<8x96xf32>
    %110 = arith.negf %109 : vector<8x96xf32>
    %111 = math.exp %110 : vector<8x96xf32>
    %cst_31 = arith.constant 1.000000e+00 : f32
    %112 = vector.broadcast %cst_31 : f32 to vector<8x96xf32>
    %113 = arith.addf %112, %111 : vector<8x96xf32>
    %114 = arith.divf %112, %113 : vector<8x96xf32>
    %115 = vector.extract_strided_slice %108 {offsets = [0, 96], sizes = [8, 32], strides = [1, 1]} : vector<8x128xf32> to vector<8x32xf32>
    %116 = math.tanh %115 : vector<8x32xf32>
    %117 = vector.extract_strided_slice %114 {offsets = [0, 32], sizes = [8, 32], strides = [1, 1]} : vector<8x96xf32> to vector<8x32xf32>
    %118 = arith.mulf %117, %97 : vector<8x32xf32>
    %119 = vector.extract_strided_slice %114 {offsets = [0, 0], sizes = [8, 32], strides = [1, 1]} : vector<8x96xf32> to vector<8x32xf32>
    %120 = arith.mulf %119, %116 : vector<8x32xf32>
    %121 = arith.addf %118, %120 : vector<8x32xf32>
    %122 = vector.extract_strided_slice %114 {offsets = [0, 64], sizes = [8, 32], strides = [1, 1]} : vector<8x96xf32> to vector<8x32xf32>
    %123 = math.tanh %121 : vector<8x32xf32>
    %124 = arith.mulf %122, %123 : vector<8x32xf32>
    %125 = arith.index_cast %104 : i32 to index
    %c0_32 = arith.constant 0 : index
    %126 = vector.load %arg15[%125, %c0_32] : memref<64x64xf32, #tpu.memory_space<vmem>>, vector<8x32xf32>
    tpu.vector_store %arg15[%125, %c0_32], %124 {strides = array<i32>} : memref<64x64xf32, #tpu.memory_space<vmem>>, vector<8x32xf32>,
    %c5_i32 = arith.constant 5 : i32
    %c8_i32_33 = arith.constant 8 : i32
    %127 = arith.muli %c5_i32, %c8_i32_33 : i32
    %128 = tpu.assume_multiple %127, 8 : i32
    %129 = arith.index_cast %128 : i32 to index
    %c0_34 = arith.constant 0 : index
    %130 = vector.load %arg14[%129, %c0_34] : memref<64x256xf32, #tpu.memory_space<vmem>>, vector<8x128xf32>
    %cst_35 = arith.constant dense<0.000000e+00> : vector<8x128xf32>
    %131 = tpu.matmul %124, %5, %cst_35 {dimension_numbers = #tpu.dot_dimension_numbers<[1], [0], [0], [1], [0, 0, 1, 1], [], []>} : vector<8x32xf32>, vector<32x128xf32>, vector<8x128xf32> -> vector<8x128xf32>
    %132 = arith.addf %130, %131 : vector<8x128xf32>
    %133 = vector.extract_strided_slice %132 {offsets = [0, 0], sizes = [8, 96], strides = [1, 1]} : vector<8x128xf32> to vector<8x96xf32>
    %134 = arith.negf %133 : vector<8x96xf32>
    %135 = math.exp %134 : vector<8x96xf32>
    %cst_36 = arith.constant 1.000000e+00 : f32
    %136 = vector.broadcast %cst_36 : f32 to vector<8x96xf32>
    %137 = arith.addf %136, %135 : vector<8x96xf32>
    %138 = arith.divf %136, %137 : vector<8x96xf32>
    %139 = vector.extract_strided_slice %132 {offsets = [0, 96], sizes = [8, 32], strides = [1, 1]} : vector<8x128xf32> to vector<8x32xf32>
    %140 = math.tanh %139 : vector<8x32xf32>
    %141 = vector.extract_strided_slice %138 {offsets = [0, 32], sizes = [8, 32], strides = [1, 1]} : vector<8x96xf32> to vector<8x32xf32>
    %142 = arith.mulf %141, %121 : vector<8x32xf32>
    %143 = vector.extract_strided_slice %138 {offsets = [0, 0], sizes = [8, 32], strides = [1, 1]} : vector<8x96xf32> to vector<8x32xf32>
    %144 = arith.mulf %143, %140 : vector<8x32xf32>
    %145 = arith.addf %142, %144 : vector<8x32xf32>
    %146 = vector.extract_strided_slice %138 {offsets = [0, 64], sizes = [8, 32], strides = [1, 1]} : vector<8x96xf32> to vector<8x32xf32>
    %147 = math.tanh %145 : vector<8x32xf32>
    %148 = arith.mulf %146, %147 : vector<8x32xf32>
    %149 = arith.index_cast %128 : i32 to index
    %c0_37 = arith.constant 0 : index
    %150 = vector.load %arg15[%149, %c0_37] : memref<64x64xf32, #tpu.memory_space<vmem>>, vector<8x32xf32>
    tpu.vector_store %arg15[%149, %c0_37], %148 {strides = array<i32>} : memref<64x64xf32, #tpu.memory_space<vmem>>, vector<8x32xf32>,
    %c6_i32 = arith.constant 6 : i32
    %c8_i32_38 = arith.constant 8 : i32
    %151 = arith.muli %c6_i32, %c8_i32_38 : i32
    %152 = tpu.assume_multiple %151, 8 : i32
    %153 = arith.index_cast %152 : i32 to index
    %c0_39 = arith.constant 0 : index
    %154 = vector.load %arg14[%153, %c0_39] : memref<64x256xf32, #tpu.memory_space<vmem>>, vector<8x128xf32>
    %cst_40 = arith.constant dense<0.000000e+00> : vector<8x128xf32>
    %155 = tpu.matmul %148, %5, %cst_40 {dimension_numbers = #tpu.dot_dimension_numbers<[1], [0], [0], [1], [0, 0, 1, 1], [], []>} : vector<8x32xf32>, vector<32x128xf32>, vector<8x128xf32> -> vector<8x128xf32>
    %156 = arith.addf %154, %155 : vector<8x128xf32>
    %157 = vector.extract_strided_slice %156 {offsets = [0, 0], sizes = [8, 96], strides = [1, 1]} : vector<8x128xf32> to vector<8x96xf32>
    %158 = arith.negf %157 : vector<8x96xf32>
    %159 = math.exp %158 : vector<8x96xf32>
    %cst_41 = arith.constant 1.000000e+00 : f32
    %160 = vector.broadcast %cst_41 : f32 to vector<8x96xf32>
    %161 = arith.addf %160, %159 : vector<8x96xf32>
    %162 = arith.divf %160, %161 : vector<8x96xf32>
    %163 = vector.extract_strided_slice %156 {offsets = [0, 96], sizes = [8, 32], strides = [1, 1]} : vector<8x128xf32> to vector<8x32xf32>
    %164 = math.tanh %163 : vector<8x32xf32>
    %165 = vector.extract_strided_slice %162 {offsets = [0, 32], sizes = [8, 32], strides = [1, 1]} : vector<8x96xf32> to vector<8x32xf32>
    %166 = arith.mulf %165, %145 : vector<8x32xf32>
    %167 = vector.extract_strided_slice %162 {offsets = [0, 0], sizes = [8, 32], strides = [1, 1]} : vector<8x96xf32> to vector<8x32xf32>
    %168 = arith.mulf %167, %164 : vector<8x32xf32>
    %169 = arith.addf %166, %168 : vector<8x32xf32>
    %170 = vector.extract_strided_slice %162 {offsets = [0, 64], sizes = [8, 32], strides = [1, 1]} : vector<8x96xf32> to vector<8x32xf32>
    %171 = math.tanh %169 : vector<8x32xf32>
    %172 = arith.mulf %170, %171 : vector<8x32xf32>
    %173 = arith.index_cast %152 : i32 to index
    %c0_42 = arith.constant 0 : index
    %174 = vector.load %arg15[%173, %c0_42] : memref<64x64xf32, #tpu.memory_space<vmem>>, vector<8x32xf32>
    tpu.vector_store %arg15[%173, %c0_42], %172 {strides = array<i32>} : memref<64x64xf32, #tpu.memory_space<vmem>>, vector<8x32xf32>,
    %c7_i32 = arith.constant 7 : i32
    %c8_i32_43 = arith.constant 8 : i32
    %175 = arith.muli %c7_i32, %c8_i32_43 : i32
    %176 = tpu.assume_multiple %175, 8 : i32
    %177 = arith.index_cast %176 : i32 to index
    %c0_44 = arith.constant 0 : index
    %178 = vector.load %arg14[%177, %c0_44] : memref<64x256xf32, #tpu.memory_space<vmem>>, vector<8x128xf32>
    %cst_45 = arith.constant dense<0.000000e+00> : vector<8x128xf32>
    %179 = tpu.matmul %172, %5, %cst_45 {dimension_numbers = #tpu.dot_dimension_numbers<[1], [0], [0], [1], [0, 0, 1, 1], [], []>} : vector<8x32xf32>, vector<32x128xf32>, vector<8x128xf32> -> vector<8x128xf32>
    %180 = arith.addf %178, %179 : vector<8x128xf32>
    %181 = vector.extract_strided_slice %180 {offsets = [0, 0], sizes = [8, 96], strides = [1, 1]} : vector<8x128xf32> to vector<8x96xf32>
    %182 = arith.negf %181 : vector<8x96xf32>
    %183 = math.exp %182 : vector<8x96xf32>
    %cst_46 = arith.constant 1.000000e+00 : f32
    %184 = vector.broadcast %cst_46 : f32 to vector<8x96xf32>
    %185 = arith.addf %184, %183 : vector<8x96xf32>
    %186 = arith.divf %184, %185 : vector<8x96xf32>
    %187 = vector.extract_strided_slice %180 {offsets = [0, 96], sizes = [8, 32], strides = [1, 1]} : vector<8x128xf32> to vector<8x32xf32>
    %188 = math.tanh %187 : vector<8x32xf32>
    %189 = vector.extract_strided_slice %186 {offsets = [0, 32], sizes = [8, 32], strides = [1, 1]} : vector<8x96xf32> to vector<8x32xf32>
    %190 = arith.mulf %189, %169 : vector<8x32xf32>
    %191 = vector.extract_strided_slice %186 {offsets = [0, 0], sizes = [8, 32], strides = [1, 1]} : vector<8x96xf32> to vector<8x32xf32>
    %192 = arith.mulf %191, %188 : vector<8x32xf32>
    %193 = arith.addf %190, %192 : vector<8x32xf32>
    %194 = vector.extract_strided_slice %186 {offsets = [0, 64], sizes = [8, 32], strides = [1, 1]} : vector<8x96xf32> to vector<8x32xf32>
    %195 = math.tanh %193 : vector<8x32xf32>
    %196 = arith.mulf %194, %195 : vector<8x32xf32>
    %197 = arith.index_cast %176 : i32 to index
    %c0_47 = arith.constant 0 : index
    %198 = vector.load %arg15[%197, %c0_47] : memref<64x64xf32, #tpu.memory_space<vmem>>, vector<8x32xf32>
    tpu.vector_store %arg15[%197, %c0_47], %196 {strides = array<i32>} : memref<64x64xf32, #tpu.memory_space<vmem>>, vector<8x32xf32>,
    %c8_i32_48 = arith.constant 8 : i32
    %c1 = arith.constant 1 : index
    %c0_49 = arith.constant 0 : index
    %c0_50 = arith.constant 0 : index
    %199 = vector.load %arg4[%c1, %c0_49, %c0_50] : memref<2x32x128xf32, #tpu.memory_space<vmem>>, vector<1x32x128xf32>
    %200 = vector.shape_cast %199 : vector<1x32x128xf32> to vector<32x128xf32>
    %cst_51 = arith.constant 0.000000e+00 : f32
    %201 = vector.broadcast %cst_51 : f32 to vector<8x32xf32>
    %c0_i32_52 = arith.constant 0 : i32
    %c7_i32_53 = arith.constant 7 : i32
    %202 = arith.subi %c7_i32_53, %c0_i32_52 : i32
    %c8_i32_54 = arith.constant 8 : i32
    %203 = arith.muli %202, %c8_i32_54 : i32
    %204 = tpu.assume_multiple %203, 8 : i32
    %205 = arith.index_cast %204 : i32 to index
    %c128 = arith.constant 128 : index
    %206 = vector.load %arg14[%205, %c128] : memref<64x256xf32, #tpu.memory_space<vmem>>, vector<8x128xf32>
    %cst_55 = arith.constant dense<0.000000e+00> : vector<8x128xf32>
    %207 = tpu.matmul %201, %200, %cst_55 {dimension_numbers = #tpu.dot_dimension_numbers<[1], [0], [0], [1], [0, 0, 1, 1], [], []>} : vector<8x32xf32>, vector<32x128xf32>, vector<8x128xf32> -> vector<8x128xf32>
    %208 = arith.addf %206, %207 : vector<8x128xf32>
    %209 = vector.extract_strided_slice %208 {offsets = [0, 0], sizes = [8, 96], strides = [1, 1]} : vector<8x128xf32> to vector<8x96xf32>
    %210 = arith.negf %209 : vector<8x96xf32>
    %211 = math.exp %210 : vector<8x96xf32>
    %cst_56 = arith.constant 1.000000e+00 : f32
    %212 = vector.broadcast %cst_56 : f32 to vector<8x96xf32>
    %213 = arith.addf %212, %211 : vector<8x96xf32>
    %214 = arith.divf %212, %213 : vector<8x96xf32>
    %215 = vector.extract_strided_slice %208 {offsets = [0, 96], sizes = [8, 32], strides = [1, 1]} : vector<8x128xf32> to vector<8x32xf32>
    %216 = math.tanh %215 : vector<8x32xf32>
    %217 = vector.extract_strided_slice %214 {offsets = [0, 32], sizes = [8, 32], strides = [1, 1]} : vector<8x96xf32> to vector<8x32xf32>
    %218 = arith.mulf %217, %201 : vector<8x32xf32>
    %219 = vector.extract_strided_slice %214 {offsets = [0, 0], sizes = [8, 32], strides = [1, 1]} : vector<8x96xf32> to vector<8x32xf32>
    %220 = arith.mulf %219, %216 : vector<8x32xf32>
    %221 = arith.addf %218, %220 : vector<8x32xf32>
    %222 = vector.extract_strided_slice %214 {offsets = [0, 64], sizes = [8, 32], strides = [1, 1]} : vector<8x96xf32> to vector<8x32xf32>
    %223 = math.tanh %221 : vector<8x32xf32>
    %224 = arith.mulf %222, %223 : vector<8x32xf32>
    %225 = arith.index_cast %204 : i32 to index
    %c32 = arith.constant 32 : index
    %226 = vector.load %arg15[%225, %c32] : memref<64x64xf32, #tpu.memory_space<vmem>>, vector<8x32xf32>
    tpu.vector_store %arg15[%225, %c32], %224 {strides = array<i32>} : memref<64x64xf32, #tpu.memory_space<vmem>>, vector<8x32xf32>,
    %c1_i32_57 = arith.constant 1 : i32
    %c7_i32_58 = arith.constant 7 : i32
    %227 = arith.subi %c7_i32_58, %c1_i32_57 : i32
    %c8_i32_59 = arith.constant 8 : i32
    %228 = arith.muli %227, %c8_i32_59 : i32
    %229 = tpu.assume_multiple %228, 8 : i32
    %230 = arith.index_cast %229 : i32 to index
    %c128_60 = arith.constant 128 : index
    %231 = vector.load %arg14[%230, %c128_60] : memref<64x256xf32, #tpu.memory_space<vmem>>, vector<8x128xf32>
    %cst_61 = arith.constant dense<0.000000e+00> : vector<8x128xf32>
    %232 = tpu.matmul %224, %200, %cst_61 {dimension_numbers = #tpu.dot_dimension_numbers<[1], [0], [0], [1], [0, 0, 1, 1], [], []>} : vector<8x32xf32>, vector<32x128xf32>, vector<8x128xf32> -> vector<8x128xf32>
    %233 = arith.addf %231, %232 : vector<8x128xf32>
    %234 = vector.extract_strided_slice %233 {offsets = [0, 0], sizes = [8, 96], strides = [1, 1]} : vector<8x128xf32> to vector<8x96xf32>
    %235 = arith.negf %234 : vector<8x96xf32>
    %236 = math.exp %235 : vector<8x96xf32>
    %cst_62 = arith.constant 1.000000e+00 : f32
    %237 = vector.broadcast %cst_62 : f32 to vector<8x96xf32>
    %238 = arith.addf %237, %236 : vector<8x96xf32>
    %239 = arith.divf %237, %238 : vector<8x96xf32>
    %240 = vector.extract_strided_slice %233 {offsets = [0, 96], sizes = [8, 32], strides = [1, 1]} : vector<8x128xf32> to vector<8x32xf32>
    %241 = math.tanh %240 : vector<8x32xf32>
    %242 = vector.extract_strided_slice %239 {offsets = [0, 32], sizes = [8, 32], strides = [1, 1]} : vector<8x96xf32> to vector<8x32xf32>
    %243 = arith.mulf %242, %221 : vector<8x32xf32>
    %244 = vector.extract_strided_slice %239 {offsets = [0, 0], sizes = [8, 32], strides = [1, 1]} : vector<8x96xf32> to vector<8x32xf32>
    %245 = arith.mulf %244, %241 : vector<8x32xf32>
    %246 = arith.addf %243, %245 : vector<8x32xf32>
    %247 = vector.extract_strided_slice %239 {offsets = [0, 64], sizes = [8, 32], strides = [1, 1]} : vector<8x96xf32> to vector<8x32xf32>
    %248 = math.tanh %246 : vector<8x32xf32>
    %249 = arith.mulf %247, %248 : vector<8x32xf32>
    %250 = arith.index_cast %229 : i32 to index
    %c32_63 = arith.constant 32 : index
    %251 = vector.load %arg15[%250, %c32_63] : memref<64x64xf32, #tpu.memory_space<vmem>>, vector<8x32xf32>
    tpu.vector_store %arg15[%250, %c32_63], %249 {strides = array<i32>} : memref<64x64xf32, #tpu.memory_space<vmem>>, vector<8x32xf32>,
    %c2_i32_64 = arith.constant 2 : i32
    %c7_i32_65 = arith.constant 7 : i32
    %252 = arith.subi %c7_i32_65, %c2_i32_64 : i32
    %c8_i32_66 = arith.constant 8 : i32
    %253 = arith.muli %252, %c8_i32_66 : i32
    %254 = tpu.assume_multiple %253, 8 : i32
    %255 = arith.index_cast %254 : i32 to index
    %c128_67 = arith.constant 128 : index
    %256 = vector.load %arg14[%255, %c128_67] : memref<64x256xf32, #tpu.memory_space<vmem>>, vector<8x128xf32>
    %cst_68 = arith.constant dense<0.000000e+00> : vector<8x128xf32>
    %257 = tpu.matmul %249, %200, %cst_68 {dimension_numbers = #tpu.dot_dimension_numbers<[1], [0], [0], [1], [0, 0, 1, 1], [], []>} : vector<8x32xf32>, vector<32x128xf32>, vector<8x128xf32> -> vector<8x128xf32>
    %258 = arith.addf %256, %257 : vector<8x128xf32>
    %259 = vector.extract_strided_slice %258 {offsets = [0, 0], sizes = [8, 96], strides = [1, 1]} : vector<8x128xf32> to vector<8x96xf32>
    %260 = arith.negf %259 : vector<8x96xf32>
    %261 = math.exp %260 : vector<8x96xf32>
    %cst_69 = arith.constant 1.000000e+00 : f32
    %262 = vector.broadcast %cst_69 : f32 to vector<8x96xf32>
    %263 = arith.addf %262, %261 : vector<8x96xf32>
    %264 = arith.divf %262, %263 : vector<8x96xf32>
    %265 = vector.extract_strided_slice %258 {offsets = [0, 96], sizes = [8, 32], strides = [1, 1]} : vector<8x128xf32> to vector<8x32xf32>
    %266 = math.tanh %265 : vector<8x32xf32>
    %267 = vector.extract_strided_slice %264 {offsets = [0, 32], sizes = [8, 32], strides = [1, 1]} : vector<8x96xf32> to vector<8x32xf32>
    %268 = arith.mulf %267, %246 : vector<8x32xf32>
    %269 = vector.extract_strided_slice %264 {offsets = [0, 0], sizes = [8, 32], strides = [1, 1]} : vector<8x96xf32> to vector<8x32xf32>
    %270 = arith.mulf %269, %266 : vector<8x32xf32>
    %271 = arith.addf %268, %270 : vector<8x32xf32>
    %272 = vector.extract_strided_slice %264 {offsets = [0, 64], sizes = [8, 32], strides = [1, 1]} : vector<8x96xf32> to vector<8x32xf32>
    %273 = math.tanh %271 : vector<8x32xf32>
    %274 = arith.mulf %272, %273 : vector<8x32xf32>
    %275 = arith.index_cast %254 : i32 to index
    %c32_70 = arith.constant 32 : index
    %276 = vector.load %arg15[%275, %c32_70] : memref<64x64xf32, #tpu.memory_space<vmem>>, vector<8x32xf32>
    tpu.vector_store %arg15[%275, %c32_70], %274 {strides = array<i32>} : memref<64x64xf32, #tpu.memory_space<vmem>>, vector<8x32xf32>,
    %c3_i32_71 = arith.constant 3 : i32
    %c7_i32_72 = arith.constant 7 : i32
    %277 = arith.subi %c7_i32_72, %c3_i32_71 : i32
    %c8_i32_73 = arith.constant 8 : i32
    %278 = arith.muli %277, %c8_i32_73 : i32
    %279 = tpu.assume_multiple %278, 8 : i32
    %280 = arith.index_cast %279 : i32 to index
    %c128_74 = arith.constant 128 : index
    %281 = vector.load %arg14[%280, %c128_74] : memref<64x256xf32, #tpu.memory_space<vmem>>, vector<8x128xf32>
    %cst_75 = arith.constant dense<0.000000e+00> : vector<8x128xf32>
    %282 = tpu.matmul %274, %200, %cst_75 {dimension_numbers = #tpu.dot_dimension_numbers<[1], [0], [0], [1], [0, 0, 1, 1], [], []>} : vector<8x32xf32>, vector<32x128xf32>, vector<8x128xf32> -> vector<8x128xf32>
    %283 = arith.addf %281, %282 : vector<8x128xf32>
    %284 = vector.extract_strided_slice %283 {offsets = [0, 0], sizes = [8, 96], strides = [1, 1]} : vector<8x128xf32> to vector<8x96xf32>
    %285 = arith.negf %284 : vector<8x96xf32>
    %286 = math.exp %285 : vector<8x96xf32>
    %cst_76 = arith.constant 1.000000e+00 : f32
    %287 = vector.broadcast %cst_76 : f32 to vector<8x96xf32>
    %288 = arith.addf %287, %286 : vector<8x96xf32>
    %289 = arith.divf %287, %288 : vector<8x96xf32>
    %290 = vector.extract_strided_slice %283 {offsets = [0, 96], sizes = [8, 32], strides = [1, 1]} : vector<8x128xf32> to vector<8x32xf32>
    %291 = math.tanh %290 : vector<8x32xf32>
    %292 = vector.extract_strided_slice %289 {offsets = [0, 32], sizes = [8, 32], strides = [1, 1]} : vector<8x96xf32> to vector<8x32xf32>
    %293 = arith.mulf %292, %271 : vector<8x32xf32>
    %294 = vector.extract_strided_slice %289 {offsets = [0, 0], sizes = [8, 32], strides = [1, 1]} : vector<8x96xf32> to vector<8x32xf32>
    %295 = arith.mulf %294, %291 : vector<8x32xf32>
    %296 = arith.addf %293, %295 : vector<8x32xf32>
    %297 = vector.extract_strided_slice %289 {offsets = [0, 64], sizes = [8, 32], strides = [1, 1]} : vector<8x96xf32> to vector<8x32xf32>
    %298 = math.tanh %296 : vector<8x32xf32>
    %299 = arith.mulf %297, %298 : vector<8x32xf32>
    %300 = arith.index_cast %279 : i32 to index
    %c32_77 = arith.constant 32 : index
    %301 = vector.load %arg15[%300, %c32_77] : memref<64x64xf32, #tpu.memory_space<vmem>>, vector<8x32xf32>
    tpu.vector_store %arg15[%300, %c32_77], %299 {strides = array<i32>} : memref<64x64xf32, #tpu.memory_space<vmem>>, vector<8x32xf32>,
    %c4_i32_78 = arith.constant 4 : i32
    %c7_i32_79 = arith.constant 7 : i32
    %302 = arith.subi %c7_i32_79, %c4_i32_78 : i32
    %c8_i32_80 = arith.constant 8 : i32
    %303 = arith.muli %302, %c8_i32_80 : i32
    %304 = tpu.assume_multiple %303, 8 : i32
    %305 = arith.index_cast %304 : i32 to index
    %c128_81 = arith.constant 128 : index
    %306 = vector.load %arg14[%305, %c128_81] : memref<64x256xf32, #tpu.memory_space<vmem>>, vector<8x128xf32>
    %cst_82 = arith.constant dense<0.000000e+00> : vector<8x128xf32>
    %307 = tpu.matmul %299, %200, %cst_82 {dimension_numbers = #tpu.dot_dimension_numbers<[1], [0], [0], [1], [0, 0, 1, 1], [], []>} : vector<8x32xf32>, vector<32x128xf32>, vector<8x128xf32> -> vector<8x128xf32>
    %308 = arith.addf %306, %307 : vector<8x128xf32>
    %309 = vector.extract_strided_slice %308 {offsets = [0, 0], sizes = [8, 96], strides = [1, 1]} : vector<8x128xf32> to vector<8x96xf32>
    %310 = arith.negf %309 : vector<8x96xf32>
    %311 = math.exp %310 : vector<8x96xf32>
    %cst_83 = arith.constant 1.000000e+00 : f32
    %312 = vector.broadcast %cst_83 : f32 to vector<8x96xf32>
    %313 = arith.addf %312, %311 : vector<8x96xf32>
    %314 = arith.divf %312, %313 : vector<8x96xf32>
    %315 = vector.extract_strided_slice %308 {offsets = [0, 96], sizes = [8, 32], strides = [1, 1]} : vector<8x128xf32> to vector<8x32xf32>
    %316 = math.tanh %315 : vector<8x32xf32>
    %317 = vector.extract_strided_slice %314 {offsets = [0, 32], sizes = [8, 32], strides = [1, 1]} : vector<8x96xf32> to vector<8x32xf32>
    %318 = arith.mulf %317, %296 : vector<8x32xf32>
    %319 = vector.extract_strided_slice %314 {offsets = [0, 0], sizes = [8, 32], strides = [1, 1]} : vector<8x96xf32> to vector<8x32xf32>
    %320 = arith.mulf %319, %316 : vector<8x32xf32>
    %321 = arith.addf %318, %320 : vector<8x32xf32>
    %322 = vector.extract_strided_slice %314 {offsets = [0, 64], sizes = [8, 32], strides = [1, 1]} : vector<8x96xf32> to vector<8x32xf32>
    %323 = math.tanh %321 : vector<8x32xf32>
    %324 = arith.mulf %322, %323 : vector<8x32xf32>
    %325 = arith.index_cast %304 : i32 to index
    %c32_84 = arith.constant 32 : index
    %326 = vector.load %arg15[%325, %c32_84] : memref<64x64xf32, #tpu.memory_space<vmem>>, vector<8x32xf32>
    tpu.vector_store %arg15[%325, %c32_84], %324 {strides = array<i32>} : memref<64x64xf32, #tpu.memory_space<vmem>>, vector<8x32xf32>,
    %c5_i32_85 = arith.constant 5 : i32
    %c7_i32_86 = arith.constant 7 : i32
    %327 = arith.subi %c7_i32_86, %c5_i32_85 : i32
    %c8_i32_87 = arith.constant 8 : i32
    %328 = arith.muli %327, %c8_i32_87 : i32
    %329 = tpu.assume_multiple %328, 8 : i32
    %330 = arith.index_cast %329 : i32 to index
    %c128_88 = arith.constant 128 : index
    %331 = vector.load %arg14[%330, %c128_88] : memref<64x256xf32, #tpu.memory_space<vmem>>, vector<8x128xf32>
    %cst_89 = arith.constant dense<0.000000e+00> : vector<8x128xf32>
    %332 = tpu.matmul %324, %200, %cst_89 {dimension_numbers = #tpu.dot_dimension_numbers<[1], [0], [0], [1], [0, 0, 1, 1], [], []>} : vector<8x32xf32>, vector<32x128xf32>, vector<8x128xf32> -> vector<8x128xf32>
    %333 = arith.addf %331, %332 : vector<8x128xf32>
    %334 = vector.extract_strided_slice %333 {offsets = [0, 0], sizes = [8, 96], strides = [1, 1]} : vector<8x128xf32> to vector<8x96xf32>
    %335 = arith.negf %334 : vector<8x96xf32>
    %336 = math.exp %335 : vector<8x96xf32>
    %cst_90 = arith.constant 1.000000e+00 : f32
    %337 = vector.broadcast %cst_90 : f32 to vector<8x96xf32>
    %338 = arith.addf %337, %336 : vector<8x96xf32>
    %339 = arith.divf %337, %338 : vector<8x96xf32>
    %340 = vector.extract_strided_slice %333 {offsets = [0, 96], sizes = [8, 32], strides = [1, 1]} : vector<8x128xf32> to vector<8x32xf32>
    %341 = math.tanh %340 : vector<8x32xf32>
    %342 = vector.extract_strided_slice %339 {offsets = [0, 32], sizes = [8, 32], strides = [1, 1]} : vector<8x96xf32> to vector<8x32xf32>
    %343 = arith.mulf %342, %321 : vector<8x32xf32>
    %344 = vector.extract_strided_slice %339 {offsets = [0, 0], sizes = [8, 32], strides = [1, 1]} : vector<8x96xf32> to vector<8x32xf32>
    %345 = arith.mulf %344, %341 : vector<8x32xf32>
    %346 = arith.addf %343, %345 : vector<8x32xf32>
    %347 = vector.extract_strided_slice %339 {offsets = [0, 64], sizes = [8, 32], strides = [1, 1]} : vector<8x96xf32> to vector<8x32xf32>
    %348 = math.tanh %346 : vector<8x32xf32>
    %349 = arith.mulf %347, %348 : vector<8x32xf32>
    %350 = arith.index_cast %329 : i32 to index
    %c32_91 = arith.constant 32 : index
    %351 = vector.load %arg15[%350, %c32_91] : memref<64x64xf32, #tpu.memory_space<vmem>>, vector<8x32xf32>
    tpu.vector_store %arg15[%350, %c32_91], %349 {strides = array<i32>} : memref<64x64xf32, #tpu.memory_space<vmem>>, vector<8x32xf32>,
    %c6_i32_92 = arith.constant 6 : i32
    %c7_i32_93 = arith.constant 7 : i32
    %352 = arith.subi %c7_i32_93, %c6_i32_92 : i32
    %c8_i32_94 = arith.constant 8 : i32
    %353 = arith.muli %352, %c8_i32_94 : i32
    %354 = tpu.assume_multiple %353, 8 : i32
    %355 = arith.index_cast %354 : i32 to index
    %c128_95 = arith.constant 128 : index
    %356 = vector.load %arg14[%355, %c128_95] : memref<64x256xf32, #tpu.memory_space<vmem>>, vector<8x128xf32>
    %cst_96 = arith.constant dense<0.000000e+00> : vector<8x128xf32>
    %357 = tpu.matmul %349, %200, %cst_96 {dimension_numbers = #tpu.dot_dimension_numbers<[1], [0], [0], [1], [0, 0, 1, 1], [], []>} : vector<8x32xf32>, vector<32x128xf32>, vector<8x128xf32> -> vector<8x128xf32>
    %358 = arith.addf %356, %357 : vector<8x128xf32>
    %359 = vector.extract_strided_slice %358 {offsets = [0, 0], sizes = [8, 96], strides = [1, 1]} : vector<8x128xf32> to vector<8x96xf32>
    %360 = arith.negf %359 : vector<8x96xf32>
    %361 = math.exp %360 : vector<8x96xf32>
    %cst_97 = arith.constant 1.000000e+00 : f32
    %362 = vector.broadcast %cst_97 : f32 to vector<8x96xf32>
    %363 = arith.addf %362, %361 : vector<8x96xf32>
    %364 = arith.divf %362, %363 : vector<8x96xf32>
    %365 = vector.extract_strided_slice %358 {offsets = [0, 96], sizes = [8, 32], strides = [1, 1]} : vector<8x128xf32> to vector<8x32xf32>
    %366 = math.tanh %365 : vector<8x32xf32>
    %367 = vector.extract_strided_slice %364 {offsets = [0, 32], sizes = [8, 32], strides = [1, 1]} : vector<8x96xf32> to vector<8x32xf32>
    %368 = arith.mulf %367, %346 : vector<8x32xf32>
    %369 = vector.extract_strided_slice %364 {offsets = [0, 0], sizes = [8, 32], strides = [1, 1]} : vector<8x96xf32> to vector<8x32xf32>
    %370 = arith.mulf %369, %366 : vector<8x32xf32>
    %371 = arith.addf %368, %370 : vector<8x32xf32>
    %372 = vector.extract_strided_slice %364 {offsets = [0, 64], sizes = [8, 32], strides = [1, 1]} : vector<8x96xf32> to vector<8x32xf32>
    %373 = math.tanh %371 : vector<8x32xf32>
    %374 = arith.mulf %372, %373 : vector<8x32xf32>
    %375 = arith.index_cast %354 : i32 to index
    %c32_98 = arith.constant 32 : index
    %376 = vector.load %arg15[%375, %c32_98] : memref<64x64xf32, #tpu.memory_space<vmem>>, vector<8x32xf32>
    tpu.vector_store %arg15[%375, %c32_98], %374 {strides = array<i32>} : memref<64x64xf32, #tpu.memory_space<vmem>>, vector<8x32xf32>,
    %c7_i32_99 = arith.constant 7 : i32
    %c7_i32_100 = arith.constant 7 : i32
    %377 = arith.subi %c7_i32_100, %c7_i32_99 : i32
    %c8_i32_101 = arith.constant 8 : i32
    %378 = arith.muli %377, %c8_i32_101 : i32
    %379 = tpu.assume_multiple %378, 8 : i32
    %380 = arith.index_cast %379 : i32 to index
    %c128_102 = arith.constant 128 : index
    %381 = vector.load %arg14[%380, %c128_102] : memref<64x256xf32, #tpu.memory_space<vmem>>, vector<8x128xf32>
    %cst_103 = arith.constant dense<0.000000e+00> : vector<8x128xf32>
    %382 = tpu.matmul %374, %200, %cst_103 {dimension_numbers = #tpu.dot_dimension_numbers<[1], [0], [0], [1], [0, 0, 1, 1], [], []>} : vector<8x32xf32>, vector<32x128xf32>, vector<8x128xf32> -> vector<8x128xf32>
    %383 = arith.addf %381, %382 : vector<8x128xf32>
    %384 = vector.extract_strided_slice %383 {offsets = [0, 0], sizes = [8, 96], strides = [1, 1]} : vector<8x128xf32> to vector<8x96xf32>
    %385 = arith.negf %384 : vector<8x96xf32>
    %386 = math.exp %385 : vector<8x96xf32>
    %cst_104 = arith.constant 1.000000e+00 : f32
    %387 = vector.broadcast %cst_104 : f32 to vector<8x96xf32>
    %388 = arith.addf %387, %386 : vector<8x96xf32>
    %389 = arith.divf %387, %388 : vector<8x96xf32>
    %390 = vector.extract_strided_slice %383 {offsets = [0, 96], sizes = [8, 32], strides = [1, 1]} : vector<8x128xf32> to vector<8x32xf32>
    %391 = math.tanh %390 : vector<8x32xf32>
    %392 = vector.extract_strided_slice %389 {offsets = [0, 32], sizes = [8, 32], strides = [1, 1]} : vector<8x96xf32> to vector<8x32xf32>
    %393 = arith.mulf %392, %371 : vector<8x32xf32>
    %394 = vector.extract_strided_slice %389 {offsets = [0, 0], sizes = [8, 32], strides = [1, 1]} : vector<8x96xf32> to vector<8x32xf32>
    %395 = arith.mulf %394, %391 : vector<8x32xf32>
    %396 = arith.addf %393, %395 : vector<8x32xf32>
    %397 = vector.extract_strided_slice %389 {offsets = [0, 64], sizes = [8, 32], strides = [1, 1]} : vector<8x96xf32> to vector<8x32xf32>
    %398 = math.tanh %396 : vector<8x32xf32>
    %399 = arith.mulf %397, %398 : vector<8x32xf32>
    %400 = arith.index_cast %379 : i32 to index
    %c32_105 = arith.constant 32 : index
    %401 = vector.load %arg15[%400, %c32_105] : memref<64x64xf32, #tpu.memory_space<vmem>>, vector<8x32xf32>
    tpu.vector_store %arg15[%400, %c32_105], %399 {strides = array<i32>} : memref<64x64xf32, #tpu.memory_space<vmem>>, vector<8x32xf32>,
    %c8_i32_106 = arith.constant 8 : i32
    %c0_107 = arith.constant 0 : index
    %c0_108 = arith.constant 0 : index
    %402 = vector.load %arg15[%c0_107, %c0_108] : memref<64x64xf32, #tpu.memory_space<vmem>>, vector<64x64xf32>
    %403 = arith.truncf %402 : vector<64x64xf32> to vector<64x64xbf16>
    %c0_109 = arith.constant 0 : index
    %c0_110 = arith.constant 0 : index
    %404 = vector.load %arg5[%c0_109, %c0_110] : memref<64x256xbf16, #tpu.memory_space<vmem>>, vector<64x256xbf16>
    %cst_111 = arith.constant dense<0.000000e+00> : vector<64x256xf32>
    %405 = tpu.matmul %403, %404, %cst_111 {dimension_numbers = #tpu.dot_dimension_numbers<[1], [0], [0], [1], [0, 0, 1, 1], [], []>} : vector<64x64xbf16>, vector<64x256xbf16>, vector<64x256xf32> -> vector<64x256xf32>
    %c0_112 = arith.constant 0 : index
    %c0_113 = arith.constant 0 : index
    %406 = vector.load %arg14[%c0_112, %c0_113] : memref<64x256xf32, #tpu.memory_space<vmem>>, vector<64x256xf32>
    tpu.vector_store %arg14[%c0_112, %c0_113], %405 {strides = array<i32>} : memref<64x256xf32, #tpu.memory_space<vmem>>, vector<64x256xf32>,
    %c0_114 = arith.constant 0 : index
    %c0_115 = arith.constant 0 : index
    %c0_116 = arith.constant 0 : index
    %407 = vector.load %arg6[%c0_114, %c0_115, %c0_116] : memref<2x32x128xf32, #tpu.memory_space<vmem>>, vector<1x32x128xf32>
    %408 = vector.shape_cast %407 : vector<1x32x128xf32> to vector<32x128xf32>
    %cst_117 = arith.constant 0.000000e+00 : f32
    %409 = vector.broadcast %cst_117 : f32 to vector<8x32xf32>
    %c0_i32_118 = arith.constant 0 : i32
    %c8_i32_119 = arith.constant 8 : i32
    %410 = arith.muli %c0_i32_118, %c8_i32_119 : i32
    %411 = tpu.assume_multiple %410, 8 : i32
    %412 = arith.index_cast %411 : i32 to index
    %c0_120 = arith.constant 0 : index
    %413 = vector.load %arg14[%412, %c0_120] : memref<64x256xf32, #tpu.memory_space<vmem>>, vector<8x128xf32>
    %cst_121 = arith.constant dense<0.000000e+00> : vector<8x128xf32>
    %414 = tpu.matmul %409, %408, %cst_121 {dimension_numbers = #tpu.dot_dimension_numbers<[1], [0], [0], [1], [0, 0, 1, 1], [], []>} : vector<8x32xf32>, vector<32x128xf32>, vector<8x128xf32> -> vector<8x128xf32>
    %415 = arith.addf %413, %414 : vector<8x128xf32>
    %416 = vector.extract_strided_slice %415 {offsets = [0, 0], sizes = [8, 96], strides = [1, 1]} : vector<8x128xf32> to vector<8x96xf32>
    %417 = arith.negf %416 : vector<8x96xf32>
    %418 = math.exp %417 : vector<8x96xf32>
    %cst_122 = arith.constant 1.000000e+00 : f32
    %419 = vector.broadcast %cst_122 : f32 to vector<8x96xf32>
    %420 = arith.addf %419, %418 : vector<8x96xf32>
    %421 = arith.divf %419, %420 : vector<8x96xf32>
    %422 = vector.extract_strided_slice %415 {offsets = [0, 96], sizes = [8, 32], strides = [1, 1]} : vector<8x128xf32> to vector<8x32xf32>
    %423 = math.tanh %422 : vector<8x32xf32>
    %424 = vector.extract_strided_slice %421 {offsets = [0, 32], sizes = [8, 32], strides = [1, 1]} : vector<8x96xf32> to vector<8x32xf32>
    %425 = arith.mulf %424, %409 : vector<8x32xf32>
    %426 = vector.extract_strided_slice %421 {offsets = [0, 0], sizes = [8, 32], strides = [1, 1]} : vector<8x96xf32> to vector<8x32xf32>
    %427 = arith.mulf %426, %423 : vector<8x32xf32>
    %428 = arith.addf %425, %427 : vector<8x32xf32>
    %429 = vector.extract_strided_slice %421 {offsets = [0, 64], sizes = [8, 32], strides = [1, 1]} : vector<8x96xf32> to vector<8x32xf32>
    %430 = math.tanh %428 : vector<8x32xf32>
    %431 = arith.mulf %429, %430 : vector<8x32xf32>
    %432 = arith.index_cast %411 : i32 to index
    %c0_123 = arith.constant 0 : index
    %433 = vector.load %arg15[%432, %c0_123] : memref<64x64xf32, #tpu.memory_space<vmem>>, vector<8x32xf32>
    tpu.vector_store %arg15[%432, %c0_123], %431 {strides = array<i32>} : memref<64x64xf32, #tpu.memory_space<vmem>>, vector<8x32xf32>,
    %c1_i32_124 = arith.constant 1 : i32
    %c8_i32_125 = arith.constant 8 : i32
    %434 = arith.muli %c1_i32_124, %c8_i32_125 : i32
    %435 = tpu.assume_multiple %434, 8 : i32
    %436 = arith.index_cast %435 : i32 to index
    %c0_126 = arith.constant 0 : index
    %437 = vector.load %arg14[%436, %c0_126] : memref<64x256xf32, #tpu.memory_space<vmem>>, vector<8x128xf32>
    %cst_127 = arith.constant dense<0.000000e+00> : vector<8x128xf32>
    %438 = tpu.matmul %431, %408, %cst_127 {dimension_numbers = #tpu.dot_dimension_numbers<[1], [0], [0], [1], [0, 0, 1, 1], [], []>} : vector<8x32xf32>, vector<32x128xf32>, vector<8x128xf32> -> vector<8x128xf32>
    %439 = arith.addf %437, %438 : vector<8x128xf32>
    %440 = vector.extract_strided_slice %439 {offsets = [0, 0], sizes = [8, 96], strides = [1, 1]} : vector<8x128xf32> to vector<8x96xf32>
    %441 = arith.negf %440 : vector<8x96xf32>
    %442 = math.exp %441 : vector<8x96xf32>
    %cst_128 = arith.constant 1.000000e+00 : f32
    %443 = vector.broadcast %cst_128 : f32 to vector<8x96xf32>
    %444 = arith.addf %443, %442 : vector<8x96xf32>
    %445 = arith.divf %443, %444 : vector<8x96xf32>
    %446 = vector.extract_strided_slice %439 {offsets = [0, 96], sizes = [8, 32], strides = [1, 1]} : vector<8x128xf32> to vector<8x32xf32>
    %447 = math.tanh %446 : vector<8x32xf32>
    %448 = vector.extract_strided_slice %445 {offsets = [0, 32], sizes = [8, 32], strides = [1, 1]} : vector<8x96xf32> to vector<8x32xf32>
    %449 = arith.mulf %448, %428 : vector<8x32xf32>
    %450 = vector.extract_strided_slice %445 {offsets = [0, 0], sizes = [8, 32], strides = [1, 1]} : vector<8x96xf32> to vector<8x32xf32>
    %451 = arith.mulf %450, %447 : vector<8x32xf32>
    %452 = arith.addf %449, %451 : vector<8x32xf32>
    %453 = vector.extract_strided_slice %445 {offsets = [0, 64], sizes = [8, 32], strides = [1, 1]} : vector<8x96xf32> to vector<8x32xf32>
    %454 = math.tanh %452 : vector<8x32xf32>
    %455 = arith.mulf %453, %454 : vector<8x32xf32>
    %456 = arith.index_cast %435 : i32 to index
    %c0_129 = arith.constant 0 : index
    %457 = vector.load %arg15[%456, %c0_129] : memref<64x64xf32, #tpu.memory_space<vmem>>, vector<8x32xf32>
    tpu.vector_store %arg15[%456, %c0_129], %455 {strides = array<i32>} : memref<64x64xf32, #tpu.memory_space<vmem>>, vector<8x32xf32>,
    %c2_i32_130 = arith.constant 2 : i32
    %c8_i32_131 = arith.constant 8 : i32
    %458 = arith.muli %c2_i32_130, %c8_i32_131 : i32
    %459 = tpu.assume_multiple %458, 8 : i32
    %460 = arith.index_cast %459 : i32 to index
    %c0_132 = arith.constant 0 : index
    %461 = vector.load %arg14[%460, %c0_132] : memref<64x256xf32, #tpu.memory_space<vmem>>, vector<8x128xf32>
    %cst_133 = arith.constant dense<0.000000e+00> : vector<8x128xf32>
    %462 = tpu.matmul %455, %408, %cst_133 {dimension_numbers = #tpu.dot_dimension_numbers<[1], [0], [0], [1], [0, 0, 1, 1], [], []>} : vector<8x32xf32>, vector<32x128xf32>, vector<8x128xf32> -> vector<8x128xf32>
    %463 = arith.addf %461, %462 : vector<8x128xf32>
    %464 = vector.extract_strided_slice %463 {offsets = [0, 0], sizes = [8, 96], strides = [1, 1]} : vector<8x128xf32> to vector<8x96xf32>
    %465 = arith.negf %464 : vector<8x96xf32>
    %466 = math.exp %465 : vector<8x96xf32>
    %cst_134 = arith.constant 1.000000e+00 : f32
    %467 = vector.broadcast %cst_134 : f32 to vector<8x96xf32>
    %468 = arith.addf %467, %466 : vector<8x96xf32>
    %469 = arith.divf %467, %468 : vector<8x96xf32>
    %470 = vector.extract_strided_slice %463 {offsets = [0, 96], sizes = [8, 32], strides = [1, 1]} : vector<8x128xf32> to vector<8x32xf32>
    %471 = math.tanh %470 : vector<8x32xf32>
    %472 = vector.extract_strided_slice %469 {offsets = [0, 32], sizes = [8, 32], strides = [1, 1]} : vector<8x96xf32> to vector<8x32xf32>
    %473 = arith.mulf %472, %452 : vector<8x32xf32>
    %474 = vector.extract_strided_slice %469 {offsets = [0, 0], sizes = [8, 32], strides = [1, 1]} : vector<8x96xf32> to vector<8x32xf32>
    %475 = arith.mulf %474, %471 : vector<8x32xf32>
    %476 = arith.addf %473, %475 : vector<8x32xf32>
    %477 = vector.extract_strided_slice %469 {offsets = [0, 64], sizes = [8, 32], strides = [1, 1]} : vector<8x96xf32> to vector<8x32xf32>
    %478 = math.tanh %476 : vector<8x32xf32>
    %479 = arith.mulf %477, %478 : vector<8x32xf32>
    %480 = arith.index_cast %459 : i32 to index
    %c0_135 = arith.constant 0 : index
    %481 = vector.load %arg15[%480, %c0_135] : memref<64x64xf32, #tpu.memory_space<vmem>>, vector<8x32xf32>
    tpu.vector_store %arg15[%480, %c0_135], %479 {strides = array<i32>} : memref<64x64xf32, #tpu.memory_space<vmem>>, vector<8x32xf32>,
    %c3_i32_136 = arith.constant 3 : i32
    %c8_i32_137 = arith.constant 8 : i32
    %482 = arith.muli %c3_i32_136, %c8_i32_137 : i32
    %483 = tpu.assume_multiple %482, 8 : i32
    %484 = arith.index_cast %483 : i32 to index
    %c0_138 = arith.constant 0 : index
    %485 = vector.load %arg14[%484, %c0_138] : memref<64x256xf32, #tpu.memory_space<vmem>>, vector<8x128xf32>
    %cst_139 = arith.constant dense<0.000000e+00> : vector<8x128xf32>
    %486 = tpu.matmul %479, %408, %cst_139 {dimension_numbers = #tpu.dot_dimension_numbers<[1], [0], [0], [1], [0, 0, 1, 1], [], []>} : vector<8x32xf32>, vector<32x128xf32>, vector<8x128xf32> -> vector<8x128xf32>
    %487 = arith.addf %485, %486 : vector<8x128xf32>
    %488 = vector.extract_strided_slice %487 {offsets = [0, 0], sizes = [8, 96], strides = [1, 1]} : vector<8x128xf32> to vector<8x96xf32>
    %489 = arith.negf %488 : vector<8x96xf32>
    %490 = math.exp %489 : vector<8x96xf32>
    %cst_140 = arith.constant 1.000000e+00 : f32
    %491 = vector.broadcast %cst_140 : f32 to vector<8x96xf32>
    %492 = arith.addf %491, %490 : vector<8x96xf32>
    %493 = arith.divf %491, %492 : vector<8x96xf32>
    %494 = vector.extract_strided_slice %487 {offsets = [0, 96], sizes = [8, 32], strides = [1, 1]} : vector<8x128xf32> to vector<8x32xf32>
    %495 = math.tanh %494 : vector<8x32xf32>
    %496 = vector.extract_strided_slice %493 {offsets = [0, 32], sizes = [8, 32], strides = [1, 1]} : vector<8x96xf32> to vector<8x32xf32>
    %497 = arith.mulf %496, %476 : vector<8x32xf32>
    %498 = vector.extract_strided_slice %493 {offsets = [0, 0], sizes = [8, 32], strides = [1, 1]} : vector<8x96xf32> to vector<8x32xf32>
    %499 = arith.mulf %498, %495 : vector<8x32xf32>
    %500 = arith.addf %497, %499 : vector<8x32xf32>
    %501 = vector.extract_strided_slice %493 {offsets = [0, 64], sizes = [8, 32], strides = [1, 1]} : vector<8x96xf32> to vector<8x32xf32>
    %502 = math.tanh %500 : vector<8x32xf32>
    %503 = arith.mulf %501, %502 : vector<8x32xf32>
    %504 = arith.index_cast %483 : i32 to index
    %c0_141 = arith.constant 0 : index
    %505 = vector.load %arg15[%504, %c0_141] : memref<64x64xf32, #tpu.memory_space<vmem>>, vector<8x32xf32>
    tpu.vector_store %arg15[%504, %c0_141], %503 {strides = array<i32>} : memref<64x64xf32, #tpu.memory_space<vmem>>, vector<8x32xf32>,
    %c4_i32_142 = arith.constant 4 : i32
    %c8_i32_143 = arith.constant 8 : i32
    %506 = arith.muli %c4_i32_142, %c8_i32_143 : i32
    %507 = tpu.assume_multiple %506, 8 : i32
    %508 = arith.index_cast %507 : i32 to index
    %c0_144 = arith.constant 0 : index
    %509 = vector.load %arg14[%508, %c0_144] : memref<64x256xf32, #tpu.memory_space<vmem>>, vector<8x128xf32>
    %cst_145 = arith.constant dense<0.000000e+00> : vector<8x128xf32>
    %510 = tpu.matmul %503, %408, %cst_145 {dimension_numbers = #tpu.dot_dimension_numbers<[1], [0], [0], [1], [0, 0, 1, 1], [], []>} : vector<8x32xf32>, vector<32x128xf32>, vector<8x128xf32> -> vector<8x128xf32>
    %511 = arith.addf %509, %510 : vector<8x128xf32>
    %512 = vector.extract_strided_slice %511 {offsets = [0, 0], sizes = [8, 96], strides = [1, 1]} : vector<8x128xf32> to vector<8x96xf32>
    %513 = arith.negf %512 : vector<8x96xf32>
    %514 = math.exp %513 : vector<8x96xf32>
    %cst_146 = arith.constant 1.000000e+00 : f32
    %515 = vector.broadcast %cst_146 : f32 to vector<8x96xf32>
    %516 = arith.addf %515, %514 : vector<8x96xf32>
    %517 = arith.divf %515, %516 : vector<8x96xf32>
    %518 = vector.extract_strided_slice %511 {offsets = [0, 96], sizes = [8, 32], strides = [1, 1]} : vector<8x128xf32> to vector<8x32xf32>
    %519 = math.tanh %518 : vector<8x32xf32>
    %520 = vector.extract_strided_slice %517 {offsets = [0, 32], sizes = [8, 32], strides = [1, 1]} : vector<8x96xf32> to vector<8x32xf32>
    %521 = arith.mulf %520, %500 : vector<8x32xf32>
    %522 = vector.extract_strided_slice %517 {offsets = [0, 0], sizes = [8, 32], strides = [1, 1]} : vector<8x96xf32> to vector<8x32xf32>
    %523 = arith.mulf %522, %519 : vector<8x32xf32>
    %524 = arith.addf %521, %523 : vector<8x32xf32>
    %525 = vector.extract_strided_slice %517 {offsets = [0, 64], sizes = [8, 32], strides = [1, 1]} : vector<8x96xf32> to vector<8x32xf32>
    %526 = math.tanh %524 : vector<8x32xf32>
    %527 = arith.mulf %525, %526 : vector<8x32xf32>
    %528 = arith.index_cast %507 : i32 to index
    %c0_147 = arith.constant 0 : index
    %529 = vector.load %arg15[%528, %c0_147] : memref<64x64xf32, #tpu.memory_space<vmem>>, vector<8x32xf32>
    tpu.vector_store %arg15[%528, %c0_147], %527 {strides = array<i32>} : memref<64x64xf32, #tpu.memory_space<vmem>>, vector<8x32xf32>,
    %c5_i32_148 = arith.constant 5 : i32
    %c8_i32_149 = arith.constant 8 : i32
    %530 = arith.muli %c5_i32_148, %c8_i32_149 : i32
    %531 = tpu.assume_multiple %530, 8 : i32
    %532 = arith.index_cast %531 : i32 to index
    %c0_150 = arith.constant 0 : index
    %533 = vector.load %arg14[%532, %c0_150] : memref<64x256xf32, #tpu.memory_space<vmem>>, vector<8x128xf32>
    %cst_151 = arith.constant dense<0.000000e+00> : vector<8x128xf32>
    %534 = tpu.matmul %527, %408, %cst_151 {dimension_numbers = #tpu.dot_dimension_numbers<[1], [0], [0], [1], [0, 0, 1, 1], [], []>} : vector<8x32xf32>, vector<32x128xf32>, vector<8x128xf32> -> vector<8x128xf32>
    %535 = arith.addf %533, %534 : vector<8x128xf32>
    %536 = vector.extract_strided_slice %535 {offsets = [0, 0], sizes = [8, 96], strides = [1, 1]} : vector<8x128xf32> to vector<8x96xf32>
    %537 = arith.negf %536 : vector<8x96xf32>
    %538 = math.exp %537 : vector<8x96xf32>
    %cst_152 = arith.constant 1.000000e+00 : f32
    %539 = vector.broadcast %cst_152 : f32 to vector<8x96xf32>
    %540 = arith.addf %539, %538 : vector<8x96xf32>
    %541 = arith.divf %539, %540 : vector<8x96xf32>
    %542 = vector.extract_strided_slice %535 {offsets = [0, 96], sizes = [8, 32], strides = [1, 1]} : vector<8x128xf32> to vector<8x32xf32>
    %543 = math.tanh %542 : vector<8x32xf32>
    %544 = vector.extract_strided_slice %541 {offsets = [0, 32], sizes = [8, 32], strides = [1, 1]} : vector<8x96xf32> to vector<8x32xf32>
    %545 = arith.mulf %544, %524 : vector<8x32xf32>
    %546 = vector.extract_strided_slice %541 {offsets = [0, 0], sizes = [8, 32], strides = [1, 1]} : vector<8x96xf32> to vector<8x32xf32>
    %547 = arith.mulf %546, %543 : vector<8x32xf32>
    %548 = arith.addf %545, %547 : vector<8x32xf32>
    %549 = vector.extract_strided_slice %541 {offsets = [0, 64], sizes = [8, 32], strides = [1, 1]} : vector<8x96xf32> to vector<8x32xf32>
    %550 = math.tanh %548 : vector<8x32xf32>
    %551 = arith.mulf %549, %550 : vector<8x32xf32>
    %552 = arith.index_cast %531 : i32 to index
    %c0_153 = arith.constant 0 : index
    %553 = vector.load %arg15[%552, %c0_153] : memref<64x64xf32, #tpu.memory_space<vmem>>, vector<8x32xf32>
    tpu.vector_store %arg15[%552, %c0_153], %551 {strides = array<i32>} : memref<64x64xf32, #tpu.memory_space<vmem>>, vector<8x32xf32>,
    %c6_i32_154 = arith.constant 6 : i32
    %c8_i32_155 = arith.constant 8 : i32
    %554 = arith.muli %c6_i32_154, %c8_i32_155 : i32
    %555 = tpu.assume_multiple %554, 8 : i32
    %556 = arith.index_cast %555 : i32 to index
    %c0_156 = arith.constant 0 : index
    %557 = vector.load %arg14[%556, %c0_156] : memref<64x256xf32, #tpu.memory_space<vmem>>, vector<8x128xf32>
    %cst_157 = arith.constant dense<0.000000e+00> : vector<8x128xf32>
    %558 = tpu.matmul %551, %408, %cst_157 {dimension_numbers = #tpu.dot_dimension_numbers<[1], [0], [0], [1], [0, 0, 1, 1], [], []>} : vector<8x32xf32>, vector<32x128xf32>, vector<8x128xf32> -> vector<8x128xf32>
    %559 = arith.addf %557, %558 : vector<8x128xf32>
    %560 = vector.extract_strided_slice %559 {offsets = [0, 0], sizes = [8, 96], strides = [1, 1]} : vector<8x128xf32> to vector<8x96xf32>
    %561 = arith.negf %560 : vector<8x96xf32>
    %562 = math.exp %561 : vector<8x96xf32>
    %cst_158 = arith.constant 1.000000e+00 : f32
    %563 = vector.broadcast %cst_158 : f32 to vector<8x96xf32>
    %564 = arith.addf %563, %562 : vector<8x96xf32>
    %565 = arith.divf %563, %564 : vector<8x96xf32>
    %566 = vector.extract_strided_slice %559 {offsets = [0, 96], sizes = [8, 32], strides = [1, 1]} : vector<8x128xf32> to vector<8x32xf32>
    %567 = math.tanh %566 : vector<8x32xf32>
    %568 = vector.extract_strided_slice %565 {offsets = [0, 32], sizes = [8, 32], strides = [1, 1]} : vector<8x96xf32> to vector<8x32xf32>
    %569 = arith.mulf %568, %548 : vector<8x32xf32>
    %570 = vector.extract_strided_slice %565 {offsets = [0, 0], sizes = [8, 32], strides = [1, 1]} : vector<8x96xf32> to vector<8x32xf32>
    %571 = arith.mulf %570, %567 : vector<8x32xf32>
    %572 = arith.addf %569, %571 : vector<8x32xf32>
    %573 = vector.extract_strided_slice %565 {offsets = [0, 64], sizes = [8, 32], strides = [1, 1]} : vector<8x96xf32> to vector<8x32xf32>
    %574 = math.tanh %572 : vector<8x32xf32>
    %575 = arith.mulf %573, %574 : vector<8x32xf32>
    %576 = arith.index_cast %555 : i32 to index
    %c0_159 = arith.constant 0 : index
    %577 = vector.load %arg15[%576, %c0_159] : memref<64x64xf32, #tpu.memory_space<vmem>>, vector<8x32xf32>
    tpu.vector_store %arg15[%576, %c0_159], %575 {strides = array<i32>} : memref<64x64xf32, #tpu.memory_space<vmem>>, vector<8x32xf32>,
    %c7_i32_160 = arith.constant 7 : i32
    %c8_i32_161 = arith.constant 8 : i32
    %578 = arith.muli %c7_i32_160, %c8_i32_161 : i32
    %579 = tpu.assume_multiple %578, 8 : i32
    %580 = arith.index_cast %579 : i32 to index
    %c0_162 = arith.constant 0 : index
    %581 = vector.load %arg14[%580, %c0_162] : memref<64x256xf32, #tpu.memory_space<vmem>>, vector<8x128xf32>
    %cst_163 = arith.constant dense<0.000000e+00> : vector<8x128xf32>
    %582 = tpu.matmul %575, %408, %cst_163 {dimension_numbers = #tpu.dot_dimension_numbers<[1], [0], [0], [1], [0, 0, 1, 1], [], []>} : vector<8x32xf32>, vector<32x128xf32>, vector<8x128xf32> -> vector<8x128xf32>
    %583 = arith.addf %581, %582 : vector<8x128xf32>
    %584 = vector.extract_strided_slice %583 {offsets = [0, 0], sizes = [8, 96], strides = [1, 1]} : vector<8x128xf32> to vector<8x96xf32>
    %585 = arith.negf %584 : vector<8x96xf32>
    %586 = math.exp %585 : vector<8x96xf32>
    %cst_164 = arith.constant 1.000000e+00 : f32
    %587 = vector.broadcast %cst_164 : f32 to vector<8x96xf32>
    %588 = arith.addf %587, %586 : vector<8x96xf32>
    %589 = arith.divf %587, %588 : vector<8x96xf32>
    %590 = vector.extract_strided_slice %583 {offsets = [0, 96], sizes = [8, 32], strides = [1, 1]} : vector<8x128xf32> to vector<8x32xf32>
    %591 = math.tanh %590 : vector<8x32xf32>
    %592 = vector.extract_strided_slice %589 {offsets = [0, 32], sizes = [8, 32], strides = [1, 1]} : vector<8x96xf32> to vector<8x32xf32>
    %593 = arith.mulf %592, %572 : vector<8x32xf32>
    %594 = vector.extract_strided_slice %589 {offsets = [0, 0], sizes = [8, 32], strides = [1, 1]} : vector<8x96xf32> to vector<8x32xf32>
    %595 = arith.mulf %594, %591 : vector<8x32xf32>
    %596 = arith.addf %593, %595 : vector<8x32xf32>
    %597 = vector.extract_strided_slice %589 {offsets = [0, 64], sizes = [8, 32], strides = [1, 1]} : vector<8x96xf32> to vector<8x32xf32>
    %598 = math.tanh %596 : vector<8x32xf32>
    %599 = arith.mulf %597, %598 : vector<8x32xf32>
    %600 = arith.index_cast %579 : i32 to index
    %c0_165 = arith.constant 0 : index
    %601 = vector.load %arg15[%600, %c0_165] : memref<64x64xf32, #tpu.memory_space<vmem>>, vector<8x32xf32>
    tpu.vector_store %arg15[%600, %c0_165], %599 {strides = array<i32>} : memref<64x64xf32, #tpu.memory_space<vmem>>, vector<8x32xf32>,
    %c8_i32_166 = arith.constant 8 : i32
    %c1_167 = arith.constant 1 : index
    %c0_168 = arith.constant 0 : index
    %c0_169 = arith.constant 0 : index
    %602 = vector.load %arg6[%c1_167, %c0_168, %c0_169] : memref<2x32x128xf32, #tpu.memory_space<vmem>>, vector<1x32x128xf32>
    %603 = vector.shape_cast %602 : vector<1x32x128xf32> to vector<32x128xf32>
    %cst_170 = arith.constant 0.000000e+00 : f32
    %604 = vector.broadcast %cst_170 : f32 to vector<8x32xf32>
    %c0_i32_171 = arith.constant 0 : i32
    %c7_i32_172 = arith.constant 7 : i32
    %605 = arith.subi %c7_i32_172, %c0_i32_171 : i32
    %c8_i32_173 = arith.constant 8 : i32
    %606 = arith.muli %605, %c8_i32_173 : i32
    %607 = tpu.assume_multiple %606, 8 : i32
    %608 = arith.index_cast %607 : i32 to index
    %c128_174 = arith.constant 128 : index
    %609 = vector.load %arg14[%608, %c128_174] : memref<64x256xf32, #tpu.memory_space<vmem>>, vector<8x128xf32>
    %cst_175 = arith.constant dense<0.000000e+00> : vector<8x128xf32>
    %610 = tpu.matmul %604, %603, %cst_175 {dimension_numbers = #tpu.dot_dimension_numbers<[1], [0], [0], [1], [0, 0, 1, 1], [], []>} : vector<8x32xf32>, vector<32x128xf32>, vector<8x128xf32> -> vector<8x128xf32>
    %611 = arith.addf %609, %610 : vector<8x128xf32>
    %612 = vector.extract_strided_slice %611 {offsets = [0, 0], sizes = [8, 96], strides = [1, 1]} : vector<8x128xf32> to vector<8x96xf32>
    %613 = arith.negf %612 : vector<8x96xf32>
    %614 = math.exp %613 : vector<8x96xf32>
    %cst_176 = arith.constant 1.000000e+00 : f32
    %615 = vector.broadcast %cst_176 : f32 to vector<8x96xf32>
    %616 = arith.addf %615, %614 : vector<8x96xf32>
    %617 = arith.divf %615, %616 : vector<8x96xf32>
    %618 = vector.extract_strided_slice %611 {offsets = [0, 96], sizes = [8, 32], strides = [1, 1]} : vector<8x128xf32> to vector<8x32xf32>
    %619 = math.tanh %618 : vector<8x32xf32>
    %620 = vector.extract_strided_slice %617 {offsets = [0, 32], sizes = [8, 32], strides = [1, 1]} : vector<8x96xf32> to vector<8x32xf32>
    %621 = arith.mulf %620, %604 : vector<8x32xf32>
    %622 = vector.extract_strided_slice %617 {offsets = [0, 0], sizes = [8, 32], strides = [1, 1]} : vector<8x96xf32> to vector<8x32xf32>
    %623 = arith.mulf %622, %619 : vector<8x32xf32>
    %624 = arith.addf %621, %623 : vector<8x32xf32>
    %625 = vector.extract_strided_slice %617 {offsets = [0, 64], sizes = [8, 32], strides = [1, 1]} : vector<8x96xf32> to vector<8x32xf32>
    %626 = math.tanh %624 : vector<8x32xf32>
    %627 = arith.mulf %625, %626 : vector<8x32xf32>
    %628 = arith.index_cast %607 : i32 to index
    %c32_177 = arith.constant 32 : index
    %629 = vector.load %arg15[%628, %c32_177] : memref<64x64xf32, #tpu.memory_space<vmem>>, vector<8x32xf32>
    tpu.vector_store %arg15[%628, %c32_177], %627 {strides = array<i32>} : memref<64x64xf32, #tpu.memory_space<vmem>>, vector<8x32xf32>,
    %c1_i32_178 = arith.constant 1 : i32
    %c7_i32_179 = arith.constant 7 : i32
    %630 = arith.subi %c7_i32_179, %c1_i32_178 : i32
    %c8_i32_180 = arith.constant 8 : i32
    %631 = arith.muli %630, %c8_i32_180 : i32
    %632 = tpu.assume_multiple %631, 8 : i32
    %633 = arith.index_cast %632 : i32 to index
    %c128_181 = arith.constant 128 : index
    %634 = vector.load %arg14[%633, %c128_181] : memref<64x256xf32, #tpu.memory_space<vmem>>, vector<8x128xf32>
    %cst_182 = arith.constant dense<0.000000e+00> : vector<8x128xf32>
    %635 = tpu.matmul %627, %603, %cst_182 {dimension_numbers = #tpu.dot_dimension_numbers<[1], [0], [0], [1], [0, 0, 1, 1], [], []>} : vector<8x32xf32>, vector<32x128xf32>, vector<8x128xf32> -> vector<8x128xf32>
    %636 = arith.addf %634, %635 : vector<8x128xf32>
    %637 = vector.extract_strided_slice %636 {offsets = [0, 0], sizes = [8, 96], strides = [1, 1]} : vector<8x128xf32> to vector<8x96xf32>
    %638 = arith.negf %637 : vector<8x96xf32>
    %639 = math.exp %638 : vector<8x96xf32>
    %cst_183 = arith.constant 1.000000e+00 : f32
    %640 = vector.broadcast %cst_183 : f32 to vector<8x96xf32>
    %641 = arith.addf %640, %639 : vector<8x96xf32>
    %642 = arith.divf %640, %641 : vector<8x96xf32>
    %643 = vector.extract_strided_slice %636 {offsets = [0, 96], sizes = [8, 32], strides = [1, 1]} : vector<8x128xf32> to vector<8x32xf32>
    %644 = math.tanh %643 : vector<8x32xf32>
    %645 = vector.extract_strided_slice %642 {offsets = [0, 32], sizes = [8, 32], strides = [1, 1]} : vector<8x96xf32> to vector<8x32xf32>
    %646 = arith.mulf %645, %624 : vector<8x32xf32>
    %647 = vector.extract_strided_slice %642 {offsets = [0, 0], sizes = [8, 32], strides = [1, 1]} : vector<8x96xf32> to vector<8x32xf32>
    %648 = arith.mulf %647, %644 : vector<8x32xf32>
    %649 = arith.addf %646, %648 : vector<8x32xf32>
    %650 = vector.extract_strided_slice %642 {offsets = [0, 64], sizes = [8, 32], strides = [1, 1]} : vector<8x96xf32> to vector<8x32xf32>
    %651 = math.tanh %649 : vector<8x32xf32>
    %652 = arith.mulf %650, %651 : vector<8x32xf32>
    %653 = arith.index_cast %632 : i32 to index
    %c32_184 = arith.constant 32 : index
    %654 = vector.load %arg15[%653, %c32_184] : memref<64x64xf32, #tpu.memory_space<vmem>>, vector<8x32xf32>
    tpu.vector_store %arg15[%653, %c32_184], %652 {strides = array<i32>} : memref<64x64xf32, #tpu.memory_space<vmem>>, vector<8x32xf32>,
    %c2_i32_185 = arith.constant 2 : i32
    %c7_i32_186 = arith.constant 7 : i32
    %655 = arith.subi %c7_i32_186, %c2_i32_185 : i32
    %c8_i32_187 = arith.constant 8 : i32
    %656 = arith.muli %655, %c8_i32_187 : i32
    %657 = tpu.assume_multiple %656, 8 : i32
    %658 = arith.index_cast %657 : i32 to index
    %c128_188 = arith.constant 128 : index
    %659 = vector.load %arg14[%658, %c128_188] : memref<64x256xf32, #tpu.memory_space<vmem>>, vector<8x128xf32>
    %cst_189 = arith.constant dense<0.000000e+00> : vector<8x128xf32>
    %660 = tpu.matmul %652, %603, %cst_189 {dimension_numbers = #tpu.dot_dimension_numbers<[1], [0], [0], [1], [0, 0, 1, 1], [], []>} : vector<8x32xf32>, vector<32x128xf32>, vector<8x128xf32> -> vector<8x128xf32>
    %661 = arith.addf %659, %660 : vector<8x128xf32>
    %662 = vector.extract_strided_slice %661 {offsets = [0, 0], sizes = [8, 96], strides = [1, 1]} : vector<8x128xf32> to vector<8x96xf32>
    %663 = arith.negf %662 : vector<8x96xf32>
    %664 = math.exp %663 : vector<8x96xf32>
    %cst_190 = arith.constant 1.000000e+00 : f32
    %665 = vector.broadcast %cst_190 : f32 to vector<8x96xf32>
    %666 = arith.addf %665, %664 : vector<8x96xf32>
    %667 = arith.divf %665, %666 : vector<8x96xf32>
    %668 = vector.extract_strided_slice %661 {offsets = [0, 96], sizes = [8, 32], strides = [1, 1]} : vector<8x128xf32> to vector<8x32xf32>
    %669 = math.tanh %668 : vector<8x32xf32>
    %670 = vector.extract_strided_slice %667 {offsets = [0, 32], sizes = [8, 32], strides = [1, 1]} : vector<8x96xf32> to vector<8x32xf32>
    %671 = arith.mulf %670, %649 : vector<8x32xf32>
    %672 = vector.extract_strided_slice %667 {offsets = [0, 0], sizes = [8, 32], strides = [1, 1]} : vector<8x96xf32> to vector<8x32xf32>
    %673 = arith.mulf %672, %669 : vector<8x32xf32>
    %674 = arith.addf %671, %673 : vector<8x32xf32>
    %675 = vector.extract_strided_slice %667 {offsets = [0, 64], sizes = [8, 32], strides = [1, 1]} : vector<8x96xf32> to vector<8x32xf32>
    %676 = math.tanh %674 : vector<8x32xf32>
    %677 = arith.mulf %675, %676 : vector<8x32xf32>
    %678 = arith.index_cast %657 : i32 to index
    %c32_191 = arith.constant 32 : index
    %679 = vector.load %arg15[%678, %c32_191] : memref<64x64xf32, #tpu.memory_space<vmem>>, vector<8x32xf32>
    tpu.vector_store %arg15[%678, %c32_191], %677 {strides = array<i32>} : memref<64x64xf32, #tpu.memory_space<vmem>>, vector<8x32xf32>,
    %c3_i32_192 = arith.constant 3 : i32
    %c7_i32_193 = arith.constant 7 : i32
    %680 = arith.subi %c7_i32_193, %c3_i32_192 : i32
    %c8_i32_194 = arith.constant 8 : i32
    %681 = arith.muli %680, %c8_i32_194 : i32
    %682 = tpu.assume_multiple %681, 8 : i32
    %683 = arith.index_cast %682 : i32 to index
    %c128_195 = arith.constant 128 : index
    %684 = vector.load %arg14[%683, %c128_195] : memref<64x256xf32, #tpu.memory_space<vmem>>, vector<8x128xf32>
    %cst_196 = arith.constant dense<0.000000e+00> : vector<8x128xf32>
    %685 = tpu.matmul %677, %603, %cst_196 {dimension_numbers = #tpu.dot_dimension_numbers<[1], [0], [0], [1], [0, 0, 1, 1], [], []>} : vector<8x32xf32>, vector<32x128xf32>, vector<8x128xf32> -> vector<8x128xf32>
    %686 = arith.addf %684, %685 : vector<8x128xf32>
    %687 = vector.extract_strided_slice %686 {offsets = [0, 0], sizes = [8, 96], strides = [1, 1]} : vector<8x128xf32> to vector<8x96xf32>
    %688 = arith.negf %687 : vector<8x96xf32>
    %689 = math.exp %688 : vector<8x96xf32>
    %cst_197 = arith.constant 1.000000e+00 : f32
    %690 = vector.broadcast %cst_197 : f32 to vector<8x96xf32>
    %691 = arith.addf %690, %689 : vector<8x96xf32>
    %692 = arith.divf %690, %691 : vector<8x96xf32>
    %693 = vector.extract_strided_slice %686 {offsets = [0, 96], sizes = [8, 32], strides = [1, 1]} : vector<8x128xf32> to vector<8x32xf32>
    %694 = math.tanh %693 : vector<8x32xf32>
    %695 = vector.extract_strided_slice %692 {offsets = [0, 32], sizes = [8, 32], strides = [1, 1]} : vector<8x96xf32> to vector<8x32xf32>
    %696 = arith.mulf %695, %674 : vector<8x32xf32>
    %697 = vector.extract_strided_slice %692 {offsets = [0, 0], sizes = [8, 32], strides = [1, 1]} : vector<8x96xf32> to vector<8x32xf32>
    %698 = arith.mulf %697, %694 : vector<8x32xf32>
    %699 = arith.addf %696, %698 : vector<8x32xf32>
    %700 = vector.extract_strided_slice %692 {offsets = [0, 64], sizes = [8, 32], strides = [1, 1]} : vector<8x96xf32> to vector<8x32xf32>
    %701 = math.tanh %699 : vector<8x32xf32>
    %702 = arith.mulf %700, %701 : vector<8x32xf32>
    %703 = arith.index_cast %682 : i32 to index
    %c32_198 = arith.constant 32 : index
    %704 = vector.load %arg15[%703, %c32_198] : memref<64x64xf32, #tpu.memory_space<vmem>>, vector<8x32xf32>
    tpu.vector_store %arg15[%703, %c32_198], %702 {strides = array<i32>} : memref<64x64xf32, #tpu.memory_space<vmem>>, vector<8x32xf32>,
    %c4_i32_199 = arith.constant 4 : i32
    %c7_i32_200 = arith.constant 7 : i32
    %705 = arith.subi %c7_i32_200, %c4_i32_199 : i32
    %c8_i32_201 = arith.constant 8 : i32
    %706 = arith.muli %705, %c8_i32_201 : i32
    %707 = tpu.assume_multiple %706, 8 : i32
    %708 = arith.index_cast %707 : i32 to index
    %c128_202 = arith.constant 128 : index
    %709 = vector.load %arg14[%708, %c128_202] : memref<64x256xf32, #tpu.memory_space<vmem>>, vector<8x128xf32>
    %cst_203 = arith.constant dense<0.000000e+00> : vector<8x128xf32>
    %710 = tpu.matmul %702, %603, %cst_203 {dimension_numbers = #tpu.dot_dimension_numbers<[1], [0], [0], [1], [0, 0, 1, 1], [], []>} : vector<8x32xf32>, vector<32x128xf32>, vector<8x128xf32> -> vector<8x128xf32>
    %711 = arith.addf %709, %710 : vector<8x128xf32>
    %712 = vector.extract_strided_slice %711 {offsets = [0, 0], sizes = [8, 96], strides = [1, 1]} : vector<8x128xf32> to vector<8x96xf32>
    %713 = arith.negf %712 : vector<8x96xf32>
    %714 = math.exp %713 : vector<8x96xf32>
    %cst_204 = arith.constant 1.000000e+00 : f32
    %715 = vector.broadcast %cst_204 : f32 to vector<8x96xf32>
    %716 = arith.addf %715, %714 : vector<8x96xf32>
    %717 = arith.divf %715, %716 : vector<8x96xf32>
    %718 = vector.extract_strided_slice %711 {offsets = [0, 96], sizes = [8, 32], strides = [1, 1]} : vector<8x128xf32> to vector<8x32xf32>
    %719 = math.tanh %718 : vector<8x32xf32>
    %720 = vector.extract_strided_slice %717 {offsets = [0, 32], sizes = [8, 32], strides = [1, 1]} : vector<8x96xf32> to vector<8x32xf32>
    %721 = arith.mulf %720, %699 : vector<8x32xf32>
    %722 = vector.extract_strided_slice %717 {offsets = [0, 0], sizes = [8, 32], strides = [1, 1]} : vector<8x96xf32> to vector<8x32xf32>
    %723 = arith.mulf %722, %719 : vector<8x32xf32>
    %724 = arith.addf %721, %723 : vector<8x32xf32>
    %725 = vector.extract_strided_slice %717 {offsets = [0, 64], sizes = [8, 32], strides = [1, 1]} : vector<8x96xf32> to vector<8x32xf32>
    %726 = math.tanh %724 : vector<8x32xf32>
    %727 = arith.mulf %725, %726 : vector<8x32xf32>
    %728 = arith.index_cast %707 : i32 to index
    %c32_205 = arith.constant 32 : index
    %729 = vector.load %arg15[%728, %c32_205] : memref<64x64xf32, #tpu.memory_space<vmem>>, vector<8x32xf32>
    tpu.vector_store %arg15[%728, %c32_205], %727 {strides = array<i32>} : memref<64x64xf32, #tpu.memory_space<vmem>>, vector<8x32xf32>,
    %c5_i32_206 = arith.constant 5 : i32
    %c7_i32_207 = arith.constant 7 : i32
    %730 = arith.subi %c7_i32_207, %c5_i32_206 : i32
    %c8_i32_208 = arith.constant 8 : i32
    %731 = arith.muli %730, %c8_i32_208 : i32
    %732 = tpu.assume_multiple %731, 8 : i32
    %733 = arith.index_cast %732 : i32 to index
    %c128_209 = arith.constant 128 : index
    %734 = vector.load %arg14[%733, %c128_209] : memref<64x256xf32, #tpu.memory_space<vmem>>, vector<8x128xf32>
    %cst_210 = arith.constant dense<0.000000e+00> : vector<8x128xf32>
    %735 = tpu.matmul %727, %603, %cst_210 {dimension_numbers = #tpu.dot_dimension_numbers<[1], [0], [0], [1], [0, 0, 1, 1], [], []>} : vector<8x32xf32>, vector<32x128xf32>, vector<8x128xf32> -> vector<8x128xf32>
    %736 = arith.addf %734, %735 : vector<8x128xf32>
    %737 = vector.extract_strided_slice %736 {offsets = [0, 0], sizes = [8, 96], strides = [1, 1]} : vector<8x128xf32> to vector<8x96xf32>
    %738 = arith.negf %737 : vector<8x96xf32>
    %739 = math.exp %738 : vector<8x96xf32>
    %cst_211 = arith.constant 1.000000e+00 : f32
    %740 = vector.broadcast %cst_211 : f32 to vector<8x96xf32>
    %741 = arith.addf %740, %739 : vector<8x96xf32>
    %742 = arith.divf %740, %741 : vector<8x96xf32>
    %743 = vector.extract_strided_slice %736 {offsets = [0, 96], sizes = [8, 32], strides = [1, 1]} : vector<8x128xf32> to vector<8x32xf32>
    %744 = math.tanh %743 : vector<8x32xf32>
    %745 = vector.extract_strided_slice %742 {offsets = [0, 32], sizes = [8, 32], strides = [1, 1]} : vector<8x96xf32> to vector<8x32xf32>
    %746 = arith.mulf %745, %724 : vector<8x32xf32>
    %747 = vector.extract_strided_slice %742 {offsets = [0, 0], sizes = [8, 32], strides = [1, 1]} : vector<8x96xf32> to vector<8x32xf32>
    %748 = arith.mulf %747, %744 : vector<8x32xf32>
    %749 = arith.addf %746, %748 : vector<8x32xf32>
    %750 = vector.extract_strided_slice %742 {offsets = [0, 64], sizes = [8, 32], strides = [1, 1]} : vector<8x96xf32> to vector<8x32xf32>
    %751 = math.tanh %749 : vector<8x32xf32>
    %752 = arith.mulf %750, %751 : vector<8x32xf32>
    %753 = arith.index_cast %732 : i32 to index
    %c32_212 = arith.constant 32 : index
    %754 = vector.load %arg15[%753, %c32_212] : memref<64x64xf32, #tpu.memory_space<vmem>>, vector<8x32xf32>
    tpu.vector_store %arg15[%753, %c32_212], %752 {strides = array<i32>} : memref<64x64xf32, #tpu.memory_space<vmem>>, vector<8x32xf32>,
    %c6_i32_213 = arith.constant 6 : i32
    %c7_i32_214 = arith.constant 7 : i32
    %755 = arith.subi %c7_i32_214, %c6_i32_213 : i32
    %c8_i32_215 = arith.constant 8 : i32
    %756 = arith.muli %755, %c8_i32_215 : i32
    %757 = tpu.assume_multiple %756, 8 : i32
    %758 = arith.index_cast %757 : i32 to index
    %c128_216 = arith.constant 128 : index
    %759 = vector.load %arg14[%758, %c128_216] : memref<64x256xf32, #tpu.memory_space<vmem>>, vector<8x128xf32>
    %cst_217 = arith.constant dense<0.000000e+00> : vector<8x128xf32>
    %760 = tpu.matmul %752, %603, %cst_217 {dimension_numbers = #tpu.dot_dimension_numbers<[1], [0], [0], [1], [0, 0, 1, 1], [], []>} : vector<8x32xf32>, vector<32x128xf32>, vector<8x128xf32> -> vector<8x128xf32>
    %761 = arith.addf %759, %760 : vector<8x128xf32>
    %762 = vector.extract_strided_slice %761 {offsets = [0, 0], sizes = [8, 96], strides = [1, 1]} : vector<8x128xf32> to vector<8x96xf32>
    %763 = arith.negf %762 : vector<8x96xf32>
    %764 = math.exp %763 : vector<8x96xf32>
    %cst_218 = arith.constant 1.000000e+00 : f32
    %765 = vector.broadcast %cst_218 : f32 to vector<8x96xf32>
    %766 = arith.addf %765, %764 : vector<8x96xf32>
    %767 = arith.divf %765, %766 : vector<8x96xf32>
    %768 = vector.extract_strided_slice %761 {offsets = [0, 96], sizes = [8, 32], strides = [1, 1]} : vector<8x128xf32> to vector<8x32xf32>
    %769 = math.tanh %768 : vector<8x32xf32>
    %770 = vector.extract_strided_slice %767 {offsets = [0, 32], sizes = [8, 32], strides = [1, 1]} : vector<8x96xf32> to vector<8x32xf32>
    %771 = arith.mulf %770, %749 : vector<8x32xf32>
    %772 = vector.extract_strided_slice %767 {offsets = [0, 0], sizes = [8, 32], strides = [1, 1]} : vector<8x96xf32> to vector<8x32xf32>
    %773 = arith.mulf %772, %769 : vector<8x32xf32>
    %774 = arith.addf %771, %773 : vector<8x32xf32>
    %775 = vector.extract_strided_slice %767 {offsets = [0, 64], sizes = [8, 32], strides = [1, 1]} : vector<8x96xf32> to vector<8x32xf32>
    %776 = math.tanh %774 : vector<8x32xf32>
    %777 = arith.mulf %775, %776 : vector<8x32xf32>
    %778 = arith.index_cast %757 : i32 to index
    %c32_219 = arith.constant 32 : index
    %779 = vector.load %arg15[%778, %c32_219] : memref<64x64xf32, #tpu.memory_space<vmem>>, vector<8x32xf32>
    tpu.vector_store %arg15[%778, %c32_219], %777 {strides = array<i32>} : memref<64x64xf32, #tpu.memory_space<vmem>>, vector<8x32xf32>,
    %c7_i32_220 = arith.constant 7 : i32
    %c7_i32_221 = arith.constant 7 : i32
    %780 = arith.subi %c7_i32_221, %c7_i32_220 : i32
    %c8_i32_222 = arith.constant 8 : i32
    %781 = arith.muli %780, %c8_i32_222 : i32
    %782 = tpu.assume_multiple %781, 8 : i32
    %783 = arith.index_cast %782 : i32 to index
    %c128_223 = arith.constant 128 : index
    %784 = vector.load %arg14[%783, %c128_223] : memref<64x256xf32, #tpu.memory_space<vmem>>, vector<8x128xf32>
    %cst_224 = arith.constant dense<0.000000e+00> : vector<8x128xf32>
    %785 = tpu.matmul %777, %603, %cst_224 {dimension_numbers = #tpu.dot_dimension_numbers<[1], [0], [0], [1], [0, 0, 1, 1], [], []>} : vector<8x32xf32>, vector<32x128xf32>, vector<8x128xf32> -> vector<8x128xf32>
    %786 = arith.addf %784, %785 : vector<8x128xf32>
    %787 = vector.extract_strided_slice %786 {offsets = [0, 0], sizes = [8, 96], strides = [1, 1]} : vector<8x128xf32> to vector<8x96xf32>
    %788 = arith.negf %787 : vector<8x96xf32>
    %789 = math.exp %788 : vector<8x96xf32>
    %cst_225 = arith.constant 1.000000e+00 : f32
    %790 = vector.broadcast %cst_225 : f32 to vector<8x96xf32>
    %791 = arith.addf %790, %789 : vector<8x96xf32>
    %792 = arith.divf %790, %791 : vector<8x96xf32>
    %793 = vector.extract_strided_slice %786 {offsets = [0, 96], sizes = [8, 32], strides = [1, 1]} : vector<8x128xf32> to vector<8x32xf32>
    %794 = math.tanh %793 : vector<8x32xf32>
    %795 = vector.extract_strided_slice %792 {offsets = [0, 32], sizes = [8, 32], strides = [1, 1]} : vector<8x96xf32> to vector<8x32xf32>
    %796 = arith.mulf %795, %774 : vector<8x32xf32>
    %797 = vector.extract_strided_slice %792 {offsets = [0, 0], sizes = [8, 32], strides = [1, 1]} : vector<8x96xf32> to vector<8x32xf32>
    %798 = arith.mulf %797, %794 : vector<8x32xf32>
    %799 = arith.addf %796, %798 : vector<8x32xf32>
    %800 = vector.extract_strided_slice %792 {offsets = [0, 64], sizes = [8, 32], strides = [1, 1]} : vector<8x96xf32> to vector<8x32xf32>
    %801 = math.tanh %799 : vector<8x32xf32>
    %802 = arith.mulf %800, %801 : vector<8x32xf32>
    %803 = arith.index_cast %782 : i32 to index
    %c32_226 = arith.constant 32 : index
    %804 = vector.load %arg15[%803, %c32_226] : memref<64x64xf32, #tpu.memory_space<vmem>>, vector<8x32xf32>
    tpu.vector_store %arg15[%803, %c32_226], %802 {strides = array<i32>} : memref<64x64xf32, #tpu.memory_space<vmem>>, vector<8x32xf32>,
    %c8_i32_227 = arith.constant 8 : i32
    %c0_228 = arith.constant 0 : index
    %c0_229 = arith.constant 0 : index
    %805 = memref.load %arg0[%c0_228, %c0_229] : memref<5x4xi32, #tpu.memory_space<smem>>
    %c1_230 = arith.constant 1 : index
    %c0_231 = arith.constant 0 : index
    %806 = memref.load %arg0[%c1_230, %c0_231] : memref<5x4xi32, #tpu.memory_space<smem>>
    %c8_i32_232 = arith.constant 8 : i32
    %807 = arith.muli %806, %c8_i32_232 : i32
    %808 = arith.addi %807, %805 : i32
    %809 = arith.index_cast %808 : i32 to index
    %c0_233 = arith.constant 0 : index
    %810 = vector.load %arg15[%809, %c0_233] : memref<64x64xf32, #tpu.memory_space<vmem>>, vector<1x32xf32>
    %c2 = arith.constant 2 : index
    %c0_234 = arith.constant 0 : index
    %811 = memref.load %arg0[%c2, %c0_234] : memref<5x4xi32, #tpu.memory_space<smem>>
    %c8_i32_235 = arith.constant 8 : i32
    %812 = arith.muli %811, %c8_i32_235 : i32
    %813 = arith.addi %812, %805 : i32
    %814 = arith.index_cast %813 : i32 to index
    %c32_236 = arith.constant 32 : index
    %815 = vector.load %arg15[%814, %c32_236] : memref<64x64xf32, #tpu.memory_space<vmem>>, vector<1x32xf32>
    %c3 = arith.constant 3 : index
    %c0_237 = arith.constant 0 : index
    %816 = memref.load %arg0[%c3, %c0_237] : memref<5x4xi32, #tpu.memory_space<smem>>
    %c8_i32_238 = arith.constant 8 : i32
    %817 = arith.muli %816, %c8_i32_238 : i32
    %818 = arith.addi %817, %805 : i32
    %819 = arith.index_cast %818 : i32 to index
    %c0_239 = arith.constant 0 : index
    %820 = vector.load %arg15[%819, %c0_239] : memref<64x64xf32, #tpu.memory_space<vmem>>, vector<1x32xf32>
    %c4 = arith.constant 4 : index
    %c0_240 = arith.constant 0 : index
    %821 = memref.load %arg0[%c4, %c0_240] : memref<5x4xi32, #tpu.memory_space<smem>>
    %c8_i32_241 = arith.constant 8 : i32
    %822 = arith.muli %821, %c8_i32_241 : i32
    %823 = arith.addi %822, %805 : i32
    %824 = arith.index_cast %823 : i32 to index
    %c32_242 = arith.constant 32 : index
    %825 = vector.load %arg15[%824, %c32_242] : memref<64x64xf32, #tpu.memory_space<vmem>>, vector<1x32xf32>
    %826 = tpu.concatenate %810, %815, %820, %825 in 1 : vector<1x32xf32>, vector<1x32xf32>, vector<1x32xf32>, vector<1x32xf32> -> vector<1x128xf32>
    %c0_243 = arith.constant 0 : index
    %c1_244 = arith.constant 1 : index
    %827 = memref.load %arg0[%c0_243, %c1_244] : memref<5x4xi32, #tpu.memory_space<smem>>
    %c1_245 = arith.constant 1 : index
    %c1_246 = arith.constant 1 : index
    %828 = memref.load %arg0[%c1_245, %c1_246] : memref<5x4xi32, #tpu.memory_space<smem>>
    %c8_i32_247 = arith.constant 8 : i32
    %829 = arith.muli %828, %c8_i32_247 : i32
    %830 = arith.addi %829, %827 : i32
    %831 = arith.index_cast %830 : i32 to index
    %c0_248 = arith.constant 0 : index
    %832 = vector.load %arg15[%831, %c0_248] : memref<64x64xf32, #tpu.memory_space<vmem>>, vector<1x32xf32>
    %c2_249 = arith.constant 2 : index
    %c1_250 = arith.constant 1 : index
    %833 = memref.load %arg0[%c2_249, %c1_250] : memref<5x4xi32, #tpu.memory_space<smem>>
    %c8_i32_251 = arith.constant 8 : i32
    %834 = arith.muli %833, %c8_i32_251 : i32
    %835 = arith.addi %834, %827 : i32
    %836 = arith.index_cast %835 : i32 to index
    %c32_252 = arith.constant 32 : index
    %837 = vector.load %arg15[%836, %c32_252] : memref<64x64xf32, #tpu.memory_space<vmem>>, vector<1x32xf32>
    %c3_253 = arith.constant 3 : index
    %c1_254 = arith.constant 1 : index
    %838 = memref.load %arg0[%c3_253, %c1_254] : memref<5x4xi32, #tpu.memory_space<smem>>
    %c8_i32_255 = arith.constant 8 : i32
    %839 = arith.muli %838, %c8_i32_255 : i32
    %840 = arith.addi %839, %827 : i32
    %841 = arith.index_cast %840 : i32 to index
    %c0_256 = arith.constant 0 : index
    %842 = vector.load %arg15[%841, %c0_256] : memref<64x64xf32, #tpu.memory_space<vmem>>, vector<1x32xf32>
    %c4_257 = arith.constant 4 : index
    %c1_258 = arith.constant 1 : index
    %843 = memref.load %arg0[%c4_257, %c1_258] : memref<5x4xi32, #tpu.memory_space<smem>>
    %c8_i32_259 = arith.constant 8 : i32
    %844 = arith.muli %843, %c8_i32_259 : i32
    %845 = arith.addi %844, %827 : i32
    %846 = arith.index_cast %845 : i32 to index
    %c32_260 = arith.constant 32 : index
    %847 = vector.load %arg15[%846, %c32_260] : memref<64x64xf32, #tpu.memory_space<vmem>>, vector<1x32xf32>
    %848 = tpu.concatenate %832, %837, %842, %847 in 1 : vector<1x32xf32>, vector<1x32xf32>, vector<1x32xf32>, vector<1x32xf32> -> vector<1x128xf32>
    %c0_261 = arith.constant 0 : index
    %c2_262 = arith.constant 2 : index
    %849 = memref.load %arg0[%c0_261, %c2_262] : memref<5x4xi32, #tpu.memory_space<smem>>
    %c1_263 = arith.constant 1 : index
    %c2_264 = arith.constant 2 : index
    %850 = memref.load %arg0[%c1_263, %c2_264] : memref<5x4xi32, #tpu.memory_space<smem>>
    %c8_i32_265 = arith.constant 8 : i32
    %851 = arith.muli %850, %c8_i32_265 : i32
    %852 = arith.addi %851, %849 : i32
    %853 = arith.index_cast %852 : i32 to index
    %c0_266 = arith.constant 0 : index
    %854 = vector.load %arg15[%853, %c0_266] : memref<64x64xf32, #tpu.memory_space<vmem>>, vector<1x32xf32>
    %c2_267 = arith.constant 2 : index
    %c2_268 = arith.constant 2 : index
    %855 = memref.load %arg0[%c2_267, %c2_268] : memref<5x4xi32, #tpu.memory_space<smem>>
    %c8_i32_269 = arith.constant 8 : i32
    %856 = arith.muli %855, %c8_i32_269 : i32
    %857 = arith.addi %856, %849 : i32
    %858 = arith.index_cast %857 : i32 to index
    %c32_270 = arith.constant 32 : index
    %859 = vector.load %arg15[%858, %c32_270] : memref<64x64xf32, #tpu.memory_space<vmem>>, vector<1x32xf32>
    %c3_271 = arith.constant 3 : index
    %c2_272 = arith.constant 2 : index
    %860 = memref.load %arg0[%c3_271, %c2_272] : memref<5x4xi32, #tpu.memory_space<smem>>
    %c8_i32_273 = arith.constant 8 : i32
    %861 = arith.muli %860, %c8_i32_273 : i32
    %862 = arith.addi %861, %849 : i32
    %863 = arith.index_cast %862 : i32 to index
    %c0_274 = arith.constant 0 : index
    %864 = vector.load %arg15[%863, %c0_274] : memref<64x64xf32, #tpu.memory_space<vmem>>, vector<1x32xf32>
    %c4_275 = arith.constant 4 : index
    %c2_276 = arith.constant 2 : index
    %865 = memref.load %arg0[%c4_275, %c2_276] : memref<5x4xi32, #tpu.memory_space<smem>>
    %c8_i32_277 = arith.constant 8 : i32
    %866 = arith.muli %865, %c8_i32_277 : i32
    %867 = arith.addi %866, %849 : i32
    %868 = arith.index_cast %867 : i32 to index
    %c32_278 = arith.constant 32 : index
    %869 = vector.load %arg15[%868, %c32_278] : memref<64x64xf32, #tpu.memory_space<vmem>>, vector<1x32xf32>
    %870 = tpu.concatenate %854, %859, %864, %869 in 1 : vector<1x32xf32>, vector<1x32xf32>, vector<1x32xf32>, vector<1x32xf32> -> vector<1x128xf32>
    %c0_279 = arith.constant 0 : index
    %c3_280 = arith.constant 3 : index
    %871 = memref.load %arg0[%c0_279, %c3_280] : memref<5x4xi32, #tpu.memory_space<smem>>
    %c1_281 = arith.constant 1 : index
    %c3_282 = arith.constant 3 : index
    %872 = memref.load %arg0[%c1_281, %c3_282] : memref<5x4xi32, #tpu.memory_space<smem>>
    %c8_i32_283 = arith.constant 8 : i32
    %873 = arith.muli %872, %c8_i32_283 : i32
    %874 = arith.addi %873, %871 : i32
    %875 = arith.index_cast %874 : i32 to index
    %c0_284 = arith.constant 0 : index
    %876 = vector.load %arg15[%875, %c0_284] : memref<64x64xf32, #tpu.memory_space<vmem>>, vector<1x32xf32>
    %c2_285 = arith.constant 2 : index
    %c3_286 = arith.constant 3 : index
    %877 = memref.load %arg0[%c2_285, %c3_286] : memref<5x4xi32, #tpu.memory_space<smem>>
    %c8_i32_287 = arith.constant 8 : i32
    %878 = arith.muli %877, %c8_i32_287 : i32
    %879 = arith.addi %878, %871 : i32
    %880 = arith.index_cast %879 : i32 to index
    %c32_288 = arith.constant 32 : index
    %881 = vector.load %arg15[%880, %c32_288] : memref<64x64xf32, #tpu.memory_space<vmem>>, vector<1x32xf32>
    %c3_289 = arith.constant 3 : index
    %c3_290 = arith.constant 3 : index
    %882 = memref.load %arg0[%c3_289, %c3_290] : memref<5x4xi32, #tpu.memory_space<smem>>
    %c8_i32_291 = arith.constant 8 : i32
    %883 = arith.muli %882, %c8_i32_291 : i32
    %884 = arith.addi %883, %871 : i32
    %885 = arith.index_cast %884 : i32 to index
    %c0_292 = arith.constant 0 : index
    %886 = vector.load %arg15[%885, %c0_292] : memref<64x64xf32, #tpu.memory_space<vmem>>, vector<1x32xf32>
    %c4_293 = arith.constant 4 : index
    %c3_294 = arith.constant 3 : index
    %887 = memref.load %arg0[%c4_293, %c3_294] : memref<5x4xi32, #tpu.memory_space<smem>>
    %c8_i32_295 = arith.constant 8 : i32
    %888 = arith.muli %887, %c8_i32_295 : i32
    %889 = arith.addi %888, %871 : i32
    %890 = arith.index_cast %889 : i32 to index
    %c32_296 = arith.constant 32 : index
    %891 = vector.load %arg15[%890, %c32_296] : memref<64x64xf32, #tpu.memory_space<vmem>>, vector<1x32xf32>
    %892 = tpu.concatenate %876, %881, %886, %891 in 1 : vector<1x32xf32>, vector<1x32xf32>, vector<1x32xf32>, vector<1x32xf32> -> vector<1x128xf32>
    %893 = tpu.concatenate %826, %848, %870, %892 in 0 : vector<1x128xf32>, vector<1x128xf32>, vector<1x128xf32>, vector<1x128xf32> -> vector<4x128xf32>
    %894 = arith.truncf %893 : vector<4x128xf32> to vector<4x128xbf16>
    %c0_297 = arith.constant 0 : index
    %c0_298 = arith.constant 0 : index
    %895 = vector.load %arg7[%c0_297, %c0_298] : memref<128x32xbf16, #tpu.memory_space<vmem>>, vector<128x32xbf16>
    %cst_299 = arith.constant dense<0.000000e+00> : vector<4x32xf32>
    %896 = tpu.matmul %894, %895, %cst_299 {dimension_numbers = #tpu.dot_dimension_numbers<[1], [0], [0], [1], [0, 0, 1, 1], [], []>} : vector<4x128xbf16>, vector<128x32xbf16>, vector<4x32xf32> -> vector<4x32xf32>
    %c0_300 = arith.constant 0 : index
    %c0_301 = arith.constant 0 : index
    %897 = vector.load %arg2[%c0_300, %c0_301] : memref<4x2xf32, #tpu.memory_space<vmem>>, vector<4x2xf32>
    %c0_302 = arith.constant 0 : index
    %c0_303 = arith.constant 0 : index
    %898 = vector.load %arg8[%c0_302, %c0_303] : memref<2x32xf32, #tpu.memory_space<vmem>>, vector<2x32xf32>
    %cst_304 = arith.constant dense<0.000000e+00> : vector<4x32xf32>
    %899 = tpu.matmul %897, %898, %cst_304 {dimension_numbers = #tpu.dot_dimension_numbers<[1], [0], [0], [1], [0, 0, 1, 1], [], []>} : vector<4x2xf32>, vector<2x32xf32>, vector<4x32xf32> -> vector<4x32xf32>
    %900 = arith.addf %896, %899 : vector<4x32xf32>
    %c0_305 = arith.constant 0 : index
    %c0_306 = arith.constant 0 : index
    %901 = vector.load %arg9[%c0_305, %c0_306] : memref<1x32xf32, #tpu.memory_space<vmem>>, vector<1x32xf32>
    %902 = vector.broadcast %901 : vector<1x32xf32> to vector<4x32xf32>
    %903 = arith.addf %900, %902 : vector<4x32xf32>
    %904 = math.tanh %903 : vector<4x32xf32>
    %c0_307 = arith.constant 0 : index
    %c0_308 = arith.constant 0 : index
    %905 = vector.load %arg10[%c0_307, %c0_308] : memref<32x4xf32, #tpu.memory_space<vmem>>, vector<32x4xf32>
    %cst_309 = arith.constant dense<0.000000e+00> : vector<4x4xf32>
    %906 = tpu.matmul %904, %905, %cst_309 {dimension_numbers = #tpu.dot_dimension_numbers<[1], [0], [0], [1], [0, 0, 1, 1], [], []>} : vector<4x32xf32>, vector<32x4xf32>, vector<4x4xf32> -> vector<4x4xf32>
    %c0_310 = arith.constant 0 : index
    %c0_311 = arith.constant 0 : index
    %907 = vector.load %arg11[%c0_310, %c0_311] : memref<1x4xf32, #tpu.memory_space<vmem>>, vector<1x4xf32>
    %908 = vector.broadcast %907 : vector<1x4xf32> to vector<4x4xf32>
    %909 = arith.addf %906, %908 : vector<4x4xf32>
    %c0_312 = arith.constant 0 : index
    %c0_313 = arith.constant 0 : index
    %910 = vector.load %arg12[%c0_312, %c0_313] : memref<4x4xf32, #tpu.memory_space<vmem>>, vector<4x4xf32>
    tpu.vector_store %arg12[%c0_312, %c0_313], %909 {strides = array<i32>} : memref<4x4xf32, #tpu.memory_space<vmem>>, vector<4x4xf32>,
    %cst_314 = arith.constant dense<0xFF800000> : vector<4xf32>
    %911 = vector.multi_reduction <maximumf>, %909, %cst_314 [1] : vector<4x4xf32> to vector<4xf32>
    %912 = vector.shape_cast %911 : vector<4xf32> to vector<4x1xf32>
    %913 = vector.broadcast %912 : vector<4x1xf32> to vector<4x4xf32>
    %914 = arith.subf %909, %913 : vector<4x4xf32>
    %915 = math.exp %914 : vector<4x4xf32>
    %cst_315 = arith.constant dense<0.000000e+00> : vector<4xf32>
    %916 = vector.multi_reduction <add>, %915, %cst_315 [1] : vector<4x4xf32> to vector<4xf32>
    %917 = vector.shape_cast %916 : vector<4xf32> to vector<4x1xf32>
    %918 = vector.broadcast %917 : vector<4x1xf32> to vector<4x4xf32>
    %919 = arith.divf %915, %918 : vector<4x4xf32>
    %c0_316 = arith.constant 0 : index
    %c0_317 = arith.constant 0 : index
    %920 = vector.load %arg13[%c0_316, %c0_317] : memref<4x4xf32, #tpu.memory_space<vmem>>, vector<4x4xf32>
    tpu.vector_store %arg13[%c0_316, %c0_317], %919 {strides = array<i32>} : memref<4x4xf32, #tpu.memory_space<vmem>>, vector<4x4xf32>,
    return
  }
}

</mosaic_0001>

<llo_original>
// kernel: tpu_custom_call.1
$region0: #{tpu_custom_call.1}
  #allocation0 [shape = 'u32[]', space=smem, size = 0x4, offset = 0x4, fixed_abs, tag = 'smem constant byte address 0x4 - core index']
  #allocation1 [shape = 'u32[144,128]{1,0:T(1,128)}', space=vmem, size = 0x12000, scoped, tag = 'internal scratch']
  #allocation2 [shape = 'f32[64,256]{1,0:T(8,128)}', space=vmem, size = 0x10000, scoped, tag = 'scratch operand']
  #allocation3 [shape = 'f32[64,64]{1,0:T(8,128)}', space=vmem, size = 0x8000, scoped, tag = 'scratch operand']
  %s0 = inlined_call_operand.vmem [shape: s32[5,4], index: 0, kind: input, shape index: {}]
  %s1 = inlined_call_operand.hbm [shape: bf16[64,768], index: 1, kind: input, shape index: {}]
  %s2 = inlined_call_operand.vmem [shape: f32[4,2], index: 2, kind: input, shape index: {}]
  %s3 = inlined_call_operand.hbm [shape: bf16[768,256], index: 3, kind: input, shape index: {}]
  %s4 = inlined_call_operand.vmem [shape: f32[2,32,128], index: 4, kind: input, shape index: {}]
  %s5 = inlined_call_operand.vmem [shape: bf16[64,256], index: 5, kind: input, shape index: {}]
  %s6 = inlined_call_operand.hbm [shape: f32[2,32,128], index: 6, kind: input, shape index: {}]
  %s7 = inlined_call_operand.vmem [shape: bf16[128,32], index: 7, kind: input, shape index: {}]
  %s8 = inlined_call_operand.hbm [shape: f32[2,32], index: 8, kind: input, shape index: {}]
  %s9 = inlined_call_operand.vmem [shape: f32[1,32], index: 9, kind: input, shape index: {}]
  %s10 = inlined_call_operand.vmem [shape: f32[32,4], index: 10, kind: input, shape index: {}]
  %s11 = inlined_call_operand.vmem [shape: f32[1,4], index: 11, kind: input, shape index: {}]
  %s12 = inlined_call_operand.hbm [shape: f32[4,4], index: 12, kind: output, shape index: {0}]
  %s13 = inlined_call_operand.hbm [shape: f32[4,4], index: 13, kind: output, shape index: {1}]
  %14 = xla_tuple %s12, %s13
  %s15 = sld [smem:[#allocation0]]
  $region86: #{tpu_custom_call.1} parent=0
    _
  %s17 = ssub.s32 1, %s15
  %s18 = scalar_select 0, %s17, %s15
  $region1: #{tpu_custom_call.1} parent=0
    #allocation4 [shape = 'u8[4096]{0}', space=smem, size = 0x1000, scoped, tag = 'input window, operand 0, single buffered']
    #allocation5 [shape = 's32[1]{0}', space=sflag, size = 0x4, scoped, tag = 'scoped memory for tpu_custom_call.1']
    #allocation6 [shape = 's32[1]{0}', space=sflag, size = 0x4, scoped, tag = 'scoped memory for tpu_custom_call.1']
    #allocation7 [shape = 's32[1]{0}', space=sflag, size = 0x4, scoped, tag = 'scoped memory for tpu_custom_call.1']
    #allocation8 [shape = 'u8[98304]{0}', space=vmem, size = 0x18000, scoped, tag = 'input window, operand 1, single buffered']
    #allocation9 [shape = 'u8[393216]{0}', space=vmem, size = 0x60000, scoped, tag = 'input window, operand 3, single buffered']
    #allocation10 [shape = 's32[1]{0}', space=sflag, size = 0x4, scoped, tag = 'scoped memory for tpu_custom_call.1']
    #allocation11 [shape = 'u8[32768]{0}', space=vmem, size = 0x8000, scoped, tag = 'input window, operand 6, single buffered']
    #allocation12 [shape = 'u8[1024]{0}', space=vmem, size = 0x400, scoped, tag = 'input window, operand 8, single buffered']
    #allocation13 [shape = 's32[1]{0}', space=sflag, size = 0x4, scoped, tag = 'scoped memory for tpu_custom_call.1']
    #allocation14 [shape = 'u8[2048]{0}', space=vmem, size = 0x800, scoped, tag = 'output window, operand 0, single buffered']
    #allocation15 [shape = 'u8[2048]{0}', space=vmem, size = 0x800, scoped, tag = 'output window, operand 1, single buffered']
    #allocation16 [shape = 's32[1]{0}', space=sflag, size = 0x4, scoped, tag = 'scoped memory for tpu_custom_call.1']
    %19 = vsyncpa [#allocation7], 0
    %20 = vsyncpa [#allocation5], 0
    %21 = vsyncpa [#allocation10], 0
    %22 = vsyncpa [#allocation13], 0
    %23 = vsyncpa [#allocation6], 0
    %24 = vsyncpa [#allocation16], 0
    // Predicated region
    $region2: #{tpu_custom_call.1} parent=1 // pred_check
      _
    $region3: #{tpu_custom_call.1} parent=1 // pred_check_branch
      %26 = sbr.rel (0) target = $region5
    $region4: #{tpu_custom_call.1} parent=1 // pred_region
      %s28 = ssub.s32 128, 128
      %29 = vsyncadd [#allocation7], %s28
      %s31 = sshll.u32 %s0, 4
      %s32 = int_to_ptr.vmem [resolvable:$true] %s31
      %34 = dma.vmem_to_smem %s32, 128, [#allocation4], [#allocation7]
    $region5: #{tpu_custom_call.1} parent=1 // pred_fallthru
      _
    // Predicated region
    $region6: #{tpu_custom_call.1} parent=1 // pred_check
      _
    $region7: #{tpu_custom_call.1} parent=1 // pred_check_branch
      %36 = sbr.rel (0) target = $region9
    $region8: #{tpu_custom_call.1} parent=1 // pred_region
      %s38 = ssub.s32 3072, 3072
      %39 = vsyncadd [#allocation5], %s38
      %s40 = sshll.u32 [#allocation8], 4
      %s41 = int_to_ptr.vmem [resolvable:$true] %s40
      %46 = dma.hbm_to_vmem [thread:$0]  %s1, 3072, %s41, [#allocation5], 384, 384, 24
    $region9: #{tpu_custom_call.1} parent=1 // pred_fallthru
      _
    // Predicated region
    $region10: #{tpu_custom_call.1} parent=1 // pred_check
      _
    $region11: #{tpu_custom_call.1} parent=1 // pred_check_branch
      %48 = sbr.rel (0) target = $region13
    $region12: #{tpu_custom_call.1} parent=1 // pred_region
      _
    $region13: #{tpu_custom_call.1} parent=1 // pred_fallthru
      _
    // Predicated region
    $region14: #{tpu_custom_call.1} parent=1 // pred_check
      _
    $region15: #{tpu_custom_call.1} parent=1 // pred_check_branch
      %50 = sbr.rel (0) target = $region17
    $region16: #{tpu_custom_call.1} parent=1 // pred_region
      %s52 = ssub.s32 12288, 12288
      %53 = vsyncadd [#allocation10], %s52
      %s54 = sshll.u32 [#allocation9], 4
      %s55 = int_to_ptr.vmem [resolvable:$true] %s54
      %60 = dma.hbm_to_vmem [thread:$0]  %s3, 12288, %s55, [#allocation10], 128, 128, 8
    $region17: #{tpu_custom_call.1} parent=1 // pred_fallthru
      _
    // Predicated region
    $region18: #{tpu_custom_call.1} parent=1 // pred_check
      _
    $region19: #{tpu_custom_call.1} parent=1 // pred_check_branch
      %62 = sbr.rel (0) target = $region21
    $region20: #{tpu_custom_call.1} parent=1 // pred_region
      _
    $region21: #{tpu_custom_call.1} parent=1 // pred_fallthru
      _
    // Predicated region
    $region22: #{tpu_custom_call.1} parent=1 // pred_check
      _
    $region23: #{tpu_custom_call.1} parent=1 // pred_check_branch
      %64 = sbr.rel (0) target = $region25
    $region24: #{tpu_custom_call.1} parent=1 // pred_region
      _
    $region25: #{tpu_custom_call.1} parent=1 // pred_fallthru
      _
    // Predicated region
    $region26: #{tpu_custom_call.1} parent=1 // pred_check
      _
    $region27: #{tpu_custom_call.1} parent=1 // pred_check_branch
      %66 = sbr.rel (0) target = $region29
    $region28: #{tpu_custom_call.1} parent=1 // pred_region
      %s68 = ssub.s32 1024, 1024
      %69 = vsyncadd [#allocation10], %s68
      %s70 = sshll.u32 [#allocation11], 4
      %s71 = int_to_ptr.vmem [resolvable:$true] %s70
      %76 = dma.hbm_to_vmem [thread:$0]  %s6, 1024, %s71, [#allocation10], 128, 128, 8
    $region29: #{tpu_custom_call.1} parent=1 // pred_fallthru
      _
    // Predicated region
    $region30: #{tpu_custom_call.1} parent=1 // pred_check
      _
    $region31: #{tpu_custom_call.1} parent=1 // pred_check_branch
      %78 = sbr.rel (0) target = $region33
    $region32: #{tpu_custom_call.1} parent=1 // pred_region
      _
    $region33: #{tpu_custom_call.1} parent=1 // pred_fallthru
      _
    // Predicated region
    $region34: #{tpu_custom_call.1} parent=1 // pred_check
      _
    $region35: #{tpu_custom_call.1} parent=1 // pred_check_branch
      %80 = sbr.rel (0) target = $region37
    $region36: #{tpu_custom_call.1} parent=1 // pred_region
      %s82 = ssub.s32 32, 32
      %83 = vsyncadd [#allocation13], %s82
      %s85 = sshll.u32 [#allocation12], 4
      %s86 = int_to_ptr.vmem [resolvable:$true] %s85
      %88 = dma.hbm_to_vmem [thread:$0]  %s8, 32, %s86, [#allocation13]
    $region37: #{tpu_custom_call.1} parent=1 // pred_fallthru
      _
    // Predicated region
    $region38: #{tpu_custom_call.1} parent=1 // pred_check
      _
    $region39: #{tpu_custom_call.1} parent=1 // pred_check_branch
      %90 = sbr.rel (0) target = $region41
    $region40: #{tpu_custom_call.1} parent=1 // pred_region
      _
    $region41: #{tpu_custom_call.1} parent=1 // pred_fallthru
      _
    // Predicated region
    $region42: #{tpu_custom_call.1} parent=1 // pred_check
      _
    $region43: #{tpu_custom_call.1} parent=1 // pred_check_branch
      %92 = sbr.rel (0) target = $region45
    $region44: #{tpu_custom_call.1} parent=1 // pred_region
      _
    $region45: #{tpu_custom_call.1} parent=1 // pred_fallthru
      _
    // Predicated region
    $region46: #{tpu_custom_call.1} parent=1 // pred_check
      _
    $region47: #{tpu_custom_call.1} parent=1 // pred_check_branch
      %94 = sbr.rel (0) target = $region49
    $region48: #{tpu_custom_call.1} parent=1 // pred_region
      _
    $region49: #{tpu_custom_call.1} parent=1 // pred_fallthru
      _
    // Predicated region
    $region50: #{tpu_custom_call.1} parent=1 // pred_check
      _
    $region51: #{tpu_custom_call.1} parent=1 // pred_check_branch
      %96 = sbr.rel (0) target = $region53
    $region52: #{tpu_custom_call.1} parent=1 // pred_region
      %97 = dma.done [#allocation7], 128
    $region53: #{tpu_custom_call.1} parent=1 // pred_fallthru
      _
    // Predicated region
    $region54: #{tpu_custom_call.1} parent=1 // pred_check
      _
    $region55: #{tpu_custom_call.1} parent=1 // pred_check_branch
      %99 = sbr.rel (0) target = $region57
    $region56: #{tpu_custom_call.1} parent=1 // pred_region
      %100 = dma.done [#allocation5], 3072
    $region57: #{tpu_custom_call.1} parent=1 // pred_fallthru
      _
    // Predicated region
    $region58: #{tpu_custom_call.1} parent=1 // pred_check
      _
    $region59: #{tpu_custom_call.1} parent=1 // pred_check_branch
      %102 = sbr.rel (0) target = $region61
    $region60: #{tpu_custom_call.1} parent=1 // pred_region
      %103 = dma.done [#allocation10], 12288
    $region61: #{tpu_custom_call.1} parent=1 // pred_fallthru
      _
    // Predicated region
    $region62: #{tpu_custom_call.1} parent=1 // pred_check
      _
    $region63: #{tpu_custom_call.1} parent=1 // pred_check_branch
      %105 = sbr.rel (0) target = $region65
    $region64: #{tpu_custom_call.1} parent=1 // pred_region
      %106 = dma.done [#allocation10], 1024
    $region65: #{tpu_custom_call.1} parent=1 // pred_fallthru
      _
    // Predicated region
    $region66: #{tpu_custom_call.1} parent=1 // pred_check
      _
    $region67: #{tpu_custom_call.1} parent=1 // pred_check_branch
      %108 = sbr.rel (0) target = $region69
    $region68: #{tpu_custom_call.1} parent=1 // pred_region
      %109 = dma.done [#allocation13], 32
    $region69: #{tpu_custom_call.1} parent=1 // pred_fallthru
      _
    %110 = sfence
    %v112 = vld [vmem:[#allocation8] sm:$0xff]
    %v113 = vld [vmem:[#allocation8 + $0x8] sm:$0xff]
    %v114 = vld [vmem:[#allocation8 + $0x10] sm:$0xff]
    %v115 = vld [vmem:[#allocation8 + $0x18] sm:$0xff]
    %v116 = vld [vmem:[#allocation8 + $0x20] sm:$0xff]
    %v117 = vld [vmem:[#allocation8 + $0x28] sm:$0xff]
    %v118 = vld [vmem:[#allocation8 + $0x30] sm:$0xff]
    %v119 = vld [vmem:[#allocation8 + $0x38] sm:$0xff]
    %v120 = vld [vmem:[#allocation8 + $0x40] sm:$0xff]
    %v121 = vld [vmem:[#allocation8 + $0x48] sm:$0xff]
    %v122 = vld [vmem:[#allocation8 + $0x50] sm:$0xff]
    %v123 = vld [vmem:[#allocation8 + $0x58] sm:$0xff]
    %v124 = vld [vmem:[#allocation8 + $0x60] sm:$0xff]
    %v125 = vld [vmem:[#allocation8 + $0x68] sm:$0xff]
    %v126 = vld [vmem:[#allocation8 + $0x70] sm:$0xff]
    %v127 = vld [vmem:[#allocation8 + $0x78] sm:$0xff]
    %v128 = vld [vmem:[#allocation8 + $0x80] sm:$0xff]
    %v129 = vld [vmem:[#allocation8 + $0x88] sm:$0xff]
    %v130 = vld [vmem:[#allocation8 + $0x90] sm:$0xff]
    %v131 = vld [vmem:[#allocation8 + $0x98] sm:$0xff]
    %v132 = vld [vmem:[#allocation8 + $0xa0] sm:$0xff]
    %v133 = vld [vmem:[#allocation8 + $0xa8] sm:$0xff]
    %v134 = vld [vmem:[#allocation8 + $0xb0] sm:$0xff]
    %v135 = vld [vmem:[#allocation8 + $0xb8] sm:$0xff]
    %v136 = vld [vmem:[#allocation9] sm:$0xff]
    %v137 = vld [vmem:[#allocation9 + $0x8] sm:$0xff]
    %v138 = vld [vmem:[#allocation9 + $0x10] sm:$0xff]
    %v139 = vld [vmem:[#allocation9 + $0x18] sm:$0xff]
    %v140 = vld [vmem:[#allocation9 + $0x20] sm:$0xff]
    %v141 = vld [vmem:[#allocation9 + $0x28] sm:$0xff]
    %v142 = vld [vmem:[#allocation9 + $0x30] sm:$0xff]
    %v143 = vld [vmem:[#allocation9 + $0x38] sm:$0xff]
    %v144 = vld [vmem:[#allocation9 + $0x40] sm:$0xff]
    %v145 = vld [vmem:[#allocation9 + $0x48] sm:$0xff]
    %v146 = vld [vmem:[#allocation9 + $0x50] sm:$0xff]
    %v147 = vld [vmem:[#allocation9 + $0x58] sm:$0xff]
    %v148 = vld [vmem:[#allocation9 + $0x60] sm:$0xff]
    %v149 = vld [vmem:[#allocation9 + $0x68] sm:$0xff]
    %v150 = vld [vmem:[#allocation9 + $0x70] sm:$0xff]
    %v151 = vld [vmem:[#allocation9 + $0x78] sm:$0xff]
    %v152 = vld [vmem:[#allocation9 + $0x80] sm:$0xff]
    %v153 = vld [vmem:[#allocation9 + $0x88] sm:$0xff]
    %v154 = vld [vmem:[#allocation9 + $0x90] sm:$0xff]
    %v155 = vld [vmem:[#allocation9 + $0x98] sm:$0xff]
    %v156 = vld [vmem:[#allocation9 + $0xa0] sm:$0xff]
    %v157 = vld [vmem:[#allocation9 + $0xa8] sm:$0xff]
    %v158 = vld [vmem:[#allocation9 + $0xb0] sm:$0xff]
    %v159 = vld [vmem:[#allocation9 + $0xb8] sm:$0xff]
    %v160 = vld [vmem:[#allocation9 + $0xc0] sm:$0xff]
    %v161 = vld [vmem:[#allocation9 + $0xc8] sm:$0xff]
    %v162 = vld [vmem:[#allocation9 + $0xd0] sm:$0xff]
    %v163 = vld [vmem:[#allocation9 + $0xd8] sm:$0xff]
    %v164 = vld [vmem:[#allocation9 + $0xe0] sm:$0xff]
    %v165 = vld [vmem:[#allocation9 + $0xe8] sm:$0xff]
    %v166 = vld [vmem:[#allocation9 + $0xf0] sm:$0xff]
    %v167 = vld [vmem:[#allocation9 + $0xf8] sm:$0xff]
    %v168 = vld [vmem:[#allocation9 + $0x100] sm:$0xff]
    %v169 = vld [vmem:[#allocation9 + $0x108] sm:$0xff]
    %v170 = vld [vmem:[#allocation9 + $0x110] sm:$0xff]
    %v171 = vld [vmem:[#allocation9 + $0x118] sm:$0xff]
    %v172 = vld [vmem:[#allocation9 + $0x120] sm:$0xff]
    %v173 = vld [vmem:[#allocation9 + $0x128] sm:$0xff]
    %v174 = vld [vmem:[#allocation9 + $0x130] sm:$0xff]
    %v175 = vld [vmem:[#allocation9 + $0x138] sm:$0xff]
    %v176 = vld [vmem:[#allocation9 + $0x140] sm:$0xff]
    %v177 = vld [vmem:[#allocation9 + $0x148] sm:$0xff]
    %v178 = vld [vmem:[#allocation9 + $0x150] sm:$0xff]
    %v179 = vld [vmem:[#allocation9 + $0x158] sm:$0xff]
    %v180 = vld [vmem:[#allocation9 + $0x160] sm:$0xff]
    %v181 = vld [vmem:[#allocation9 + $0x168] sm:$0xff]
    %v182 = vld [vmem:[#allocation9 + $0x170] sm:$0xff]
    %v183 = vld [vmem:[#allocation9 + $0x178] sm:$0xff]
    %v184 = vld [vmem:[#allocation9 + $0x180] sm:$0xff]
    %v185 = vld [vmem:[#allocation9 + $0x188] sm:$0xff]
    %v186 = vld [vmem:[#allocation9 + $0x190] sm:$0xff]
    %v187 = vld [vmem:[#allocation9 + $0x198] sm:$0xff]
    %v188 = vld [vmem:[#allocation9 + $0x1a0] sm:$0xff]
    %v189 = vld [vmem:[#allocation9 + $0x1a8] sm:$0xff]
    %v190 = vld [vmem:[#allocation9 + $0x1b0] sm:$0xff]
    %v191 = vld [vmem:[#allocation9 + $0x1b8] sm:$0xff]
    %v192 = vld [vmem:[#allocation9 + $0x1c0] sm:$0xff]
    %v193 = vld [vmem:[#allocation9 + $0x1c8] sm:$0xff]
    %v194 = vld [vmem:[#allocation9 + $0x1d0] sm:$0xff]
    %v195 = vld [vmem:[#allocation9 + $0x1d8] sm:$0xff]
    %v196 = vld [vmem:[#allocation9 + $0x1e0] sm:$0xff]
    %v197 = vld [vmem:[#allocation9 + $0x1e8] sm:$0xff]
    %v198 = vld [vmem:[#allocation9 + $0x1f0] sm:$0xff]
    %v199 = vld [vmem:[#allocation9 + $0x1f8] sm:$0xff]
    %v200 = vld [vmem:[#allocation9 + $0x200] sm:$0xff]
    %v201 = vld [vmem:[#allocation9 + $0x208] sm:$0xff]
    %v202 = vld [vmem:[#allocation9 + $0x210] sm:$0xff]
    %v203 = vld [vmem:[#allocation9 + $0x218] sm:$0xff]
    %v204 = vld [vmem:[#allocation9 + $0x220] sm:$0xff]
    %v205 = vld [vmem:[#allocation9 + $0x228] sm:$0xff]
    %v206 = vld [vmem:[#allocation9 + $0x230] sm:$0xff]
    %v207 = vld [vmem:[#allocation9 + $0x238] sm:$0xff]
    %v208 = vld [vmem:[#allocation9 + $0x240] sm:$0xff]
    %v209 = vld [vmem:[#allocation9 + $0x248] sm:$0xff]
    %v210 = vld [vmem:[#allocation9 + $0x250] sm:$0xff]
    %v211 = vld [vmem:[#allocation9 + $0x258] sm:$0xff]
    %v212 = vld [vmem:[#allocation9 + $0x260] sm:$0xff]
    %v213 = vld [vmem:[#allocation9 + $0x268] sm:$0xff]
    %v214 = vld [vmem:[#allocation9 + $0x270] sm:$0xff]
    %v215 = vld [vmem:[#allocation9 + $0x278] sm:$0xff]
    %v216 = vld [vmem:[#allocation9 + $0x280] sm:$0xff]
    %v217 = vld [vmem:[#allocation9 + $0x288] sm:$0xff]
    %v218 = vld [vmem:[#allocation9 + $0x290] sm:$0xff]
    %v219 = vld [vmem:[#allocation9 + $0x298] sm:$0xff]
    %v220 = vld [vmem:[#allocation9 + $0x2a0] sm:$0xff]
    %v221 = vld [vmem:[#allocation9 + $0x2a8] sm:$0xff]
    %v222 = vld [vmem:[#allocation9 + $0x2b0] sm:$0xff]
    %v223 = vld [vmem:[#allocation9 + $0x2b8] sm:$0xff]
    %v224 = vld [vmem:[#allocation9 + $0x2c0] sm:$0xff]
    %v225 = vld [vmem:[#allocation9 + $0x2c8] sm:$0xff]
    %v226 = vld [vmem:[#allocation9 + $0x2d0] sm:$0xff]
    %v227 = vld [vmem:[#allocation9 + $0x2d8] sm:$0xff]
    %v228 = vld [vmem:[#allocation9 + $0x2e0] sm:$0xff]
    %v229 = vld [vmem:[#allocation9 + $0x2e8] sm:$0xff]
    %v230 = vld [vmem:[#allocation9 + $0x2f0] sm:$0xff]
    %v231 = vld [vmem:[#allocation9 + $0x2f8] sm:$0xff]
    %v256 = vunpack.c.l.b16 %v112
    %v257 = vunpack.c.h.b16 %v112
    %v258 = vunpack.c.l.b16 %v113
    %v259 = vunpack.c.h.b16 %v113
    %v260 = vunpack.c.l.b16 %v114
    %v261 = vunpack.c.h.b16 %v114
    %v262 = vunpack.c.l.b16 %v115
    %v263 = vunpack.c.h.b16 %v115
    %v264 = vunpack.c.l.b16 %v116
    %v265 = vunpack.c.h.b16 %v116
    %v266 = vunpack.c.l.b16 %v117
    %v267 = vunpack.c.h.b16 %v117
    %v268 = vunpack.c.l.b16 %v118
    %v269 = vunpack.c.h.b16 %v118
    %v270 = vunpack.c.l.b16 %v119
    %v271 = vunpack.c.h.b16 %v119
    %v272 = vunpack.c.l.b16 %v120
    %v273 = vunpack.c.h.b16 %v120
    %v274 = vunpack.c.l.b16 %v121
    %v275 = vunpack.c.h.b16 %v121
    %v276 = vunpack.c.l.b16 %v122
    %v277 = vunpack.c.h.b16 %v122
    %v278 = vunpack.c.l.b16 %v123
    %v279 = vunpack.c.h.b16 %v123
    %v280 = vunpack.c.l.b16 %v124
    %v281 = vunpack.c.h.b16 %v124
    %v282 = vunpack.c.l.b16 %v125
    %v283 = vunpack.c.h.b16 %v125
    %v284 = vunpack.c.l.b16 %v126
    %v285 = vunpack.c.h.b16 %v126
    %v286 = vunpack.c.l.b16 %v127
    %v287 = vunpack.c.h.b16 %v127
    %v288 = vunpack.c.l.b16 %v128
    %v289 = vunpack.c.h.b16 %v128
    %v290 = vunpack.c.l.b16 %v129
    %v291 = vunpack.c.h.b16 %v129
    %v292 = vunpack.c.l.b16 %v130
    %v293 = vunpack.c.h.b16 %v130
    %v294 = vunpack.c.l.b16 %v131
    %v295 = vunpack.c.h.b16 %v131
    %v296 = vunpack.c.l.b16 %v132
    %v297 = vunpack.c.h.b16 %v132
    %v298 = vunpack.c.l.b16 %v133
    %v299 = vunpack.c.h.b16 %v133
    %v300 = vunpack.c.l.b16 %v134
    %v301 = vunpack.c.h.b16 %v134
    %v302 = vunpack.c.l.b16 %v135
    %v303 = vunpack.c.h.b16 %v135
    %v304 = vpack.c.b16 %v262, %v256
    %v305 = vpack.c.b16 %v263, %v257
    %v306 = vpack.c.b16 %v264, %v258
    %v307 = vpack.c.b16 %v265, %v259
    %v308 = vpack.c.b16 %v266, %v260
    %v309 = vpack.c.b16 %v267, %v261
    %v310 = vpack.c.b16 %v274, %v268
    %v311 = vpack.c.b16 %v275, %v269
    %v312 = vpack.c.b16 %v276, %v270
    %v313 = vpack.c.b16 %v277, %v271
    %v314 = vpack.c.b16 %v278, %v272
    %v315 = vpack.c.b16 %v279, %v273
    %v316 = vpack.c.b16 %v286, %v280
    %v317 = vpack.c.b16 %v287, %v281
    %v318 = vpack.c.b16 %v288, %v282
    %v319 = vpack.c.b16 %v289, %v283
    %v320 = vpack.c.b16 %v290, %v284
    %v321 = vpack.c.b16 %v291, %v285
    %v322 = vpack.c.b16 %v298, %v292
    %v323 = vpack.c.b16 %v299, %v293
    %v324 = vpack.c.b16 %v300, %v294
    %v325 = vpack.c.b16 %v301, %v295
    %v326 = vpack.c.b16 %v302, %v296
    %v327 = vpack.c.b16 %v303, %v297
    %v448 = vunpack.c.l.b16 %v136
    %v449 = vunpack.c.h.b16 %v136
    %v450 = vunpack.c.l.b16 %v137
    %v451 = vunpack.c.h.b16 %v137
    %v452 = vunpack.c.l.b16 %v138
    %v453 = vunpack.c.h.b16 %v138
    %v454 = vunpack.c.l.b16 %v139
    %v455 = vunpack.c.h.b16 %v139
    %v456 = vunpack.c.l.b16 %v140
    %v457 = vunpack.c.h.b16 %v140
    %v458 = vunpack.c.l.b16 %v141
    %v459 = vunpack.c.h.b16 %v141
    %v460 = vunpack.c.l.b16 %v142
    %v461 = vunpack.c.h.b16 %v142
    %v462 = vunpack.c.l.b16 %v143
    %v463 = vunpack.c.h.b16 %v143
    %v464 = vunpack.c.l.b16 %v144
    %v465 = vunpack.c.h.b16 %v144
    %v466 = vunpack.c.l.b16 %v145
    %v467 = vunpack.c.h.b16 %v145
    %v468 = vunpack.c.l.b16 %v146
    %v469 = vunpack.c.h.b16 %v146
    %v470 = vunpack.c.l.b16 %v147
    %v471 = vunpack.c.h.b16 %v147
    %v472 = vunpack.c.l.b16 %v148
    %v473 = vunpack.c.h.b16 %v148
    %v474 = vunpack.c.l.b16 %v149
    %v475 = vunpack.c.h.b16 %v149
    %v476 = vunpack.c.l.b16 %v150
    %v477 = vunpack.c.h.b16 %v150
    %v478 = vunpack.c.l.b16 %v151
    %v479 = vunpack.c.h.b16 %v151
    %v480 = vunpack.c.l.b16 %v152
    %v481 = vunpack.c.h.b16 %v152
    %v482 = vunpack.c.l.b16 %v153
    %v483 = vunpack.c.h.b16 %v153
    %v484 = vunpack.c.l.b16 %v154
    %v485 = vunpack.c.h.b16 %v154
    %v486 = vunpack.c.l.b16 %v155
    %v487 = vunpack.c.h.b16 %v155
    %v488 = vunpack.c.l.b16 %v156
    %v489 = vunpack.c.h.b16 %v156
    %v490 = vunpack.c.l.b16 %v157
    %v491 = vunpack.c.h.b16 %v157
    %v492 = vunpack.c.l.b16 %v158
    %v493 = vunpack.c.h.b16 %v158
    %v494 = vunpack.c.l.b16 %v159
    %v495 = vunpack.c.h.b16 %v159
    %v496 = vunpack.c.l.b16 %v160
    %v497 = vunpack.c.h.b16 %v160
    %v498 = vunpack.c.l.b16 %v161
    %v499 = vunpack.c.h.b16 %v161
    %v500 = vunpack.c.l.b16 %v162
    %v501 = vunpack.c.h.b16 %v162
    %v502 = vunpack.c.l.b16 %v163
    %v503 = vunpack.c.h.b16 %v163
    %v504 = vunpack.c.l.b16 %v164
    %v505 = vunpack.c.h.b16 %v164
    %v506 = vunpack.c.l.b16 %v165
    %v507 = vunpack.c.h.b16 %v165
    %v508 = vunpack.c.l.b16 %v166
    %v509 = vunpack.c.h.b16 %v166
    %v510 = vunpack.c.l.b16 %v167
    %v511 = vunpack.c.h.b16 %v167
    %v512 = vunpack.c.l.b16 %v168
    %v513 = vunpack.c.h.b16 %v168
    %v514 = vunpack.c.l.b16 %v169
    %v515 = vunpack.c.h.b16 %v169
    %v516 = vunpack.c.l.b16 %v170
    %v517 = vunpack.c.h.b16 %v170
    %v518 = vunpack.c.l.b16 %v171
    %v519 = vunpack.c.h.b16 %v171
    %v520 = vunpack.c.l.b16 %v172
    %v521 = vunpack.c.h.b16 %v172
    %v522 = vunpack.c.l.b16 %v173
    %v523 = vunpack.c.h.b16 %v173
    %v524 = vunpack.c.l.b16 %v174
    %v525 = vunpack.c.h.b16 %v174
    %v526 = vunpack.c.l.b16 %v175
    %v527 = vunpack.c.h.b16 %v175
    %v528 = vunpack.c.l.b16 %v176
    %v529 = vunpack.c.h.b16 %v176
    %v530 = vunpack.c.l.b16 %v177
    %v531 = vunpack.c.h.b16 %v177
    %v532 = vunpack.c.l.b16 %v178
    %v533 = vunpack.c.h.b16 %v178
    %v534 = vunpack.c.l.b16 %v179
    %v535 = vunpack.c.h.b16 %v179
    %v536 = vunpack.c.l.b16 %v180
    %v537 = vunpack.c.h.b16 %v180
    %v538 = vunpack.c.l.b16 %v181
    %v539 = vunpack.c.h.b16 %v181
    %v540 = vunpack.c.l.b16 %v182
    %v541 = vunpack.c.h.b16 %v182
    %v542 = vunpack.c.l.b16 %v183
    %v543 = vunpack.c.h.b16 %v183
    %v544 = vunpack.c.l.b16 %v184
    %v545 = vunpack.c.h.b16 %v184
    %v546 = vunpack.c.l.b16 %v185
    %v547 = vunpack.c.h.b16 %v185
    %v548 = vunpack.c.l.b16 %v186
    %v549 = vunpack.c.h.b16 %v186
    %v550 = vunpack.c.l.b16 %v187
    %v551 = vunpack.c.h.b16 %v187
    %v552 = vunpack.c.l.b16 %v188
    %v553 = vunpack.c.h.b16 %v188
    %v554 = vunpack.c.l.b16 %v189
    %v555 = vunpack.c.h.b16 %v189
    %v556 = vunpack.c.l.b16 %v190
    %v557 = vunpack.c.h.b16 %v190
    %v558 = vunpack.c.l.b16 %v191
    %v559 = vunpack.c.h.b16 %v191
    %v560 = vunpack.c.l.b16 %v192
    %v561 = vunpack.c.h.b16 %v192
    %v562 = vunpack.c.l.b16 %v193
    %v563 = vunpack.c.h.b16 %v193
    %v564 = vunpack.c.l.b16 %v194
    %v565 = vunpack.c.h.b16 %v194
    %v566 = vunpack.c.l.b16 %v195
    %v567 = vunpack.c.h.b16 %v195
    %v568 = vunpack.c.l.b16 %v196
    %v569 = vunpack.c.h.b16 %v196
    %v570 = vunpack.c.l.b16 %v197
    %v571 = vunpack.c.h.b16 %v197
    %v572 = vunpack.c.l.b16 %v198
    %v573 = vunpack.c.h.b16 %v198
    %v574 = vunpack.c.l.b16 %v199
    %v575 = vunpack.c.h.b16 %v199
    %v576 = vunpack.c.l.b16 %v200
    %v577 = vunpack.c.h.b16 %v200
    %v578 = vunpack.c.l.b16 %v201
    %v579 = vunpack.c.h.b16 %v201
    %v580 = vunpack.c.l.b16 %v202
    %v581 = vunpack.c.h.b16 %v202
    %v582 = vunpack.c.l.b16 %v203
    %v583 = vunpack.c.h.b16 %v203
    %v584 = vunpack.c.l.b16 %v204
    %v585 = vunpack.c.h.b16 %v204
    %v586 = vunpack.c.l.b16 %v205
    %v587 = vunpack.c.h.b16 %v205
    %v588 = vunpack.c.l.b16 %v206
    %v589 = vunpack.c.h.b16 %v206
    %v590 = vunpack.c.l.b16 %v207
    %v591 = vunpack.c.h.b16 %v207
    %v592 = vunpack.c.l.b16 %v208
    %v593 = vunpack.c.h.b16 %v208
    %v594 = vunpack.c.l.b16 %v209
    %v595 = vunpack.c.h.b16 %v209
    %v596 = vunpack.c.l.b16 %v210
    %v597 = vunpack.c.h.b16 %v210
    %v598 = vunpack.c.l.b16 %v211
    %v599 = vunpack.c.h.b16 %v211
    %v600 = vunpack.c.l.b16 %v212
    %v601 = vunpack.c.h.b16 %v212
    %v602 = vunpack.c.l.b16 %v213
    %v603 = vunpack.c.h.b16 %v213
    %v604 = vunpack.c.l.b16 %v214
    %v605 = vunpack.c.h.b16 %v214
    %v606 = vunpack.c.l.b16 %v215
    %v607 = vunpack.c.h.b16 %v215
    %v608 = vunpack.c.l.b16 %v216
    %v609 = vunpack.c.h.b16 %v216
    %v610 = vunpack.c.l.b16 %v217
    %v611 = vunpack.c.h.b16 %v217
    %v612 = vunpack.c.l.b16 %v218
    %v613 = vunpack.c.h.b16 %v218
    %v614 = vunpack.c.l.b16 %v219
    %v615 = vunpack.c.h.b16 %v219
    %v616 = vunpack.c.l.b16 %v220
    %v617 = vunpack.c.h.b16 %v220
    %v618 = vunpack.c.l.b16 %v221
    %v619 = vunpack.c.h.b16 %v221
    %v620 = vunpack.c.l.b16 %v222
    %v621 = vunpack.c.h.b16 %v222
    %v622 = vunpack.c.l.b16 %v223
    %v623 = vunpack.c.h.b16 %v223
    %v624 = vunpack.c.l.b16 %v224
    %v625 = vunpack.c.h.b16 %v224
    %v626 = vunpack.c.l.b16 %v225
    %v627 = vunpack.c.h.b16 %v225
    %v628 = vunpack.c.l.b16 %v226
    %v629 = vunpack.c.h.b16 %v226
    %v630 = vunpack.c.l.b16 %v227
    %v631 = vunpack.c.h.b16 %v227
    %v632 = vunpack.c.l.b16 %v228
    %v633 = vunpack.c.h.b16 %v228
    %v634 = vunpack.c.l.b16 %v229
    %v635 = vunpack.c.h.b16 %v229
    %v636 = vunpack.c.l.b16 %v230
    %v637 = vunpack.c.h.b16 %v230
    %v638 = vunpack.c.l.b16 %v231
    %v639 = vunpack.c.h.b16 %v231
    %v640 = vpack.c.b16 %v450, %v448
    %v641 = vpack.c.b16 %v451, %v449
    %v642 = vpack.c.b16 %v454, %v452
    %v643 = vpack.c.b16 %v455, %v453
    %v644 = vpack.c.b16 %v458, %v456
    %v645 = vpack.c.b16 %v459, %v457
    %v646 = vpack.c.b16 %v462, %v460
    %v647 = vpack.c.b16 %v463, %v461
    %v648 = vpack.c.b16 %v466, %v464
    %v649 = vpack.c.b16 %v467, %v465
    %v650 = vpack.c.b16 %v470, %v468
    %v651 = vpack.c.b16 %v471, %v469
    %v652 = vpack.c.b16 %v474, %v472
    %v653 = vpack.c.b16 %v475, %v473
    %v654 = vpack.c.b16 %v478, %v476
    %v655 = vpack.c.b16 %v479, %v477
    %v656 = vpack.c.b16 %v482, %v480
    %v657 = vpack.c.b16 %v483, %v481
    %v658 = vpack.c.b16 %v486, %v484
    %v659 = vpack.c.b16 %v487, %v485
    %v660 = vpack.c.b16 %v490, %v488
    %v661 = vpack.c.b16 %v491, %v489
    %v662 = vpack.c.b16 %v494, %v492
    %v663 = vpack.c.b16 %v495, %v493
    %v664 = vpack.c.b16 %v498, %v496
    %v665 = vpack.c.b16 %v499, %v497
    %v666 = vpack.c.b16 %v502, %v500
    %v667 = vpack.c.b16 %v503, %v501
    %v668 = vpack.c.b16 %v506, %v504
    %v669 = vpack.c.b16 %v507, %v505
    %v670 = vpack.c.b16 %v510, %v508
    %v671 = vpack.c.b16 %v511, %v509
    %v672 = vpack.c.b16 %v514, %v512
    %v673 = vpack.c.b16 %v515, %v513
    %v674 = vpack.c.b16 %v518, %v516
    %v675 = vpack.c.b16 %v519, %v517
    %v676 = vpack.c.b16 %v522, %v520
    %v677 = vpack.c.b16 %v523, %v521
    %v678 = vpack.c.b16 %v526, %v524
    %v679 = vpack.c.b16 %v527, %v525
    %v680 = vpack.c.b16 %v530, %v528
    %v681 = vpack.c.b16 %v531, %v529
    %v682 = vpack.c.b16 %v534, %v532
    %v683 = vpack.c.b16 %v535, %v533
    %v684 = vpack.c.b16 %v538, %v536
    %v685 = vpack.c.b16 %v539, %v537
    %v686 = vpack.c.b16 %v542, %v540
    %v687 = vpack.c.b16 %v543, %v541
    %v688 = vpack.c.b16 %v546, %v544
    %v689 = vpack.c.b16 %v547, %v545
    %v690 = vpack.c.b16 %v550, %v548
    %v691 = vpack.c.b16 %v551, %v549
    %v692 = vpack.c.b16 %v554, %v552
    %v693 = vpack.c.b16 %v555, %v553
    %v694 = vpack.c.b16 %v558, %v556
    %v695 = vpack.c.b16 %v559, %v557
    %v696 = vpack.c.b16 %v562, %v560
    %v697 = vpack.c.b16 %v563, %v561
    %v698 = vpack.c.b16 %v566, %v564
    %v699 = vpack.c.b16 %v567, %v565
    %v700 = vpack.c.b16 %v570, %v568
    %v701 = vpack.c.b16 %v571, %v569
    %v702 = vpack.c.b16 %v574, %v572
    %v703 = vpack.c.b16 %v575, %v573
    %v704 = vpack.c.b16 %v578, %v576
    %v705 = vpack.c.b16 %v579, %v577
    %v706 = vpack.c.b16 %v582, %v580
    %v707 = vpack.c.b16 %v583, %v581
    %v708 = vpack.c.b16 %v586, %v584
    %v709 = vpack.c.b16 %v587, %v585
    %v710 = vpack.c.b16 %v590, %v588
    %v711 = vpack.c.b16 %v591, %v589
    %v712 = vpack.c.b16 %v594, %v592
    %v713 = vpack.c.b16 %v595, %v593
    %v714 = vpack.c.b16 %v598, %v596
    %v715 = vpack.c.b16 %v599, %v597
    %v716 = vpack.c.b16 %v602, %v600
    %v717 = vpack.c.b16 %v603, %v601
    %v718 = vpack.c.b16 %v606, %v604
    %v719 = vpack.c.b16 %v607, %v605
    %v720 = vpack.c.b16 %v610, %v608
    %v721 = vpack.c.b16 %v611, %v609
    %v722 = vpack.c.b16 %v614, %v612
    %v723 = vpack.c.b16 %v615, %v613
    %v724 = vpack.c.b16 %v618, %v616
    %v725 = vpack.c.b16 %v619, %v617
    %v726 = vpack.c.b16 %v622, %v620
    %v727 = vpack.c.b16 %v623, %v621
    %v728 = vpack.c.b16 %v626, %v624
    %v729 = vpack.c.b16 %v627, %v625
    %v730 = vpack.c.b16 %v630, %v628
    %v731 = vpack.c.b16 %v631, %v629
    %v732 = vpack.c.b16 %v634, %v632
    %v733 = vpack.c.b16 %v635, %v633
    %v734 = vpack.c.b16 %v638, %v636
    %v735 = vpack.c.b16 %v639, %v637
    %832 = vmatprep.subr.bf16.mxu0 %v655
    %833 = vmatpush1.bf16.msra.mxu0 %v654
    %834 = vmatprep.subr.bf16.mxu0 %v653
    %835 = vmatpush1.bf16.msra.mxu0 %v652
    %836 = vmatprep.subr.bf16.mxu0 %v651
    %837 = vmatpush1.bf16.msra.mxu0 %v650
    %838 = vmatprep.subr.bf16.mxu0 %v649
    %839 = vmatpush1.bf16.msra.mxu0 %v648
    %840 = vmatprep.subr.bf16.mxu0 %v647
    %841 = vmatpush1.bf16.msra.mxu0 %v646
    %842 = vmatprep.subr.bf16.mxu0 %v645
    %843 = vmatpush1.bf16.msra.mxu0 %v644
    %844 = vmatprep.subr.bf16.mxu0 %v643
    %845 = vmatpush1.bf16.msra.mxu0 %v642
    %846 = vmatprep.subr.bf16.mxu0 %v641
    %847 = vmatpush1.bf16.msra.mxu0 %v640
    %848 = vmatprep.subr.bf16.mxu0 %v671
    %849 = vmatpush2.bf16.msra.mxu0 %v670
    %850 = vmatprep.subr.bf16.mxu0 %v669
    %851 = vmatpush2.bf16.msra.mxu0 %v668
    %852 = vmatprep.subr.bf16.mxu0 %v667
    %853 = vmatpush2.bf16.msra.mxu0 %v666
    %854 = vmatprep.subr.bf16.mxu0 %v665
    %855 = vmatpush2.bf16.msra.mxu0 %v664
    %856 = vmatprep.subr.bf16.mxu0 %v663
    %857 = vmatpush2.bf16.msra.mxu0 %v662
    %858 = vmatprep.subr.bf16.mxu0 %v661
    %859 = vmatpush2.bf16.msra.mxu0 %v660
    %860 = vmatprep.subr.bf16.mxu0 %v659
    %861 = vmatpush2.bf16.msra.mxu0 %v658
    %862 = vmatprep.subr.bf16.mxu0 %v657
    %863 = vmatpush2.bf16.msra.mxu0 %v656
    %864 = vmatprep.mubr.bf16.mxu0 %v305
    %865 = vmatmul.mubr.bf16.gmra.mxu0 %v304
    %v866 = vpop.f32.mrf.mxu0
    %v867 = vadd.f32 0.0, %v866
    %v868 = vpop.f32.mrf.mxu0
    %v869 = vadd.f32 0.0, %v868
    %v870 = vpop.f32.mrf.mxu0
    %v871 = vadd.f32 0.0, %v870
    %v872 = vpop.f32.mrf.mxu0
    %v873 = vadd.f32 0.0, %v872
    %874 = vmatprep.mubr.bf16.mxu0 %v311
    %875 = vmatmul.mubr.bf16.gmra.mxu0 %v310
    %v876 = vpop.f32.mrf.mxu0
    %v877 = vadd.f32 0.0, %v876
    %v878 = vpop.f32.mrf.mxu0
    %v879 = vadd.f32 0.0, %v878
    %v880 = vpop.f32.mrf.mxu0
    %v881 = vadd.f32 0.0, %v880
    %v882 = vpop.f32.mrf.mxu0
    %v883 = vadd.f32 0.0, %v882
    %884 = vmatprep.mubr.bf16.mxu0 %v317
    %885 = vmatmul.mubr.bf16.gmra.mxu0 %v316
    %v886 = vpop.f32.mrf.mxu0
    %v887 = vadd.f32 0.0, %v886
    %v888 = vpop.f32.mrf.mxu0
    %v889 = vadd.f32 0.0, %v888
    %v890 = vpop.f32.mrf.mxu0
    %v891 = vadd.f32 0.0, %v890
    %v892 = vpop.f32.mrf.mxu0
    %v893 = vadd.f32 0.0, %v892
    %894 = vmatprep.mubr.bf16.mxu0 %v323
    %895 = vmatmul.mubr.bf16.gmra.mxu0 %v322
    %v896 = vpop.f32.mrf.mxu0
    %v897 = vadd.f32 0.0, %v896
    %v898 = vpop.f32.mrf.mxu0
    %v899 = vadd.f32 0.0, %v898
    %v900 = vpop.f32.mrf.mxu0
    %v901 = vadd.f32 0.0, %v900
    %v902 = vpop.f32.mrf.mxu0
    %v903 = vadd.f32 0.0, %v902
    %904 = vdwg.mxu0
    %905 = vmatprep.subr.bf16.mxu0 %v687
    %906 = vmatpush1.bf16.msra.mxu0 %v686
    %907 = vmatprep.subr.bf16.mxu0 %v685
    %908 = vmatpush1.bf16.msra.mxu0 %v684
    %909 = vmatprep.subr.bf16.mxu0 %v683
    %910 = vmatpush1.bf16.msra.mxu0 %v682
    %911 = vmatprep.subr.bf16.mxu0 %v681
    %912 = vmatpush1.bf16.msra.mxu0 %v680
    %913 = vmatprep.subr.bf16.mxu0 %v679
    %914 = vmatpush1.bf16.msra.mxu0 %v678
    %915 = vmatprep.subr.bf16.mxu0 %v677
    %916 = vmatpush1.bf16.msra.mxu0 %v676
    %917 = vmatprep.subr.bf16.mxu0 %v675
    %918 = vmatpush1.bf16.msra.mxu0 %v674
    %919 = vmatprep.subr.bf16.mxu0 %v673
    %920 = vmatpush1.bf16.msra.mxu0 %v672
    %921 = vmatprep.subr.bf16.mxu0 %v703
    %922 = vmatpush2.bf16.msra.mxu0 %v702
    %923 = vmatprep.subr.bf16.mxu0 %v701
    %924 = vmatpush2.bf16.msra.mxu0 %v700
    %925 = vmatprep.subr.bf16.mxu0 %v699
    %926 = vmatpush2.bf16.msra.mxu0 %v698
    %927 = vmatprep.subr.bf16.mxu0 %v697
    %928 = vmatpush2.bf16.msra.mxu0 %v696
    %929 = vmatprep.subr.bf16.mxu0 %v695
    %930 = vmatpush2.bf16.msra.mxu0 %v694
    %931 = vmatprep.subr.bf16.mxu0 %v693
    %932 = vmatpush2.bf16.msra.mxu0 %v692
    %933 = vmatprep.subr.bf16.mxu0 %v691
    %934 = vmatpush2.bf16.msra.mxu0 %v690
    %935 = vmatprep.subr.bf16.mxu0 %v689
    %936 = vmatpush2.bf16.msra.mxu0 %v688
    %937 = vmatprep.mubr.bf16.mxu0 %v307
    %938 = vmatmul.mubr.bf16.gmra.mxu0 %v306
    %v939 = vpop.f32.mrf.mxu0
    %v940 = vadd.f32 %v867, %v939
    %v941 = vpop.f32.mrf.mxu0
    %v942 = vadd.f32 %v869, %v941
    %v943 = vpop.f32.mrf.mxu0
    %v944 = vadd.f32 %v871, %v943
    %v945 = vpop.f32.mrf.mxu0
    %v946 = vadd.f32 %v873, %v945
    %947 = vmatprep.mubr.bf16.mxu0 %v313
    %948 = vmatmul.mubr.bf16.gmra.mxu0 %v312
    %v949 = vpop.f32.mrf.mxu0
    %v950 = vadd.f32 %v877, %v949
    %v951 = vpop.f32.mrf.mxu0
    %v952 = vadd.f32 %v879, %v951
    %v953 = vpop.f32.mrf.mxu0
    %v954 = vadd.f32 %v881, %v953
    %v955 = vpop.f32.mrf.mxu0
    %v956 = vadd.f32 %v883, %v955
    %957 = vmatprep.mubr.bf16.mxu0 %v319
    %958 = vmatmul.mubr.bf16.gmra.mxu0 %v318
    %v959 = vpop.f32.mrf.mxu0
    %v960 = vadd.f32 %v887, %v959
    %v961 = vpop.f32.mrf.mxu0
    %v962 = vadd.f32 %v889, %v961
    %v963 = vpop.f32.mrf.mxu0
    %v964 = vadd.f32 %v891, %v963
    %v965 = vpop.f32.mrf.mxu0
    %v966 = vadd.f32 %v893, %v965
    %967 = vmatprep.mubr.bf16.mxu0 %v325
    %968 = vmatmul.mubr.bf16.gmra.mxu0 %v324
    %v969 = vpop.f32.mrf.mxu0
    %v970 = vadd.f32 %v897, %v969
    %v971 = vpop.f32.mrf.mxu0
    %v972 = vadd.f32 %v899, %v971
    %v973 = vpop.f32.mrf.mxu0
    %v974 = vadd.f32 %v901, %v973
    %v975 = vpop.f32.mrf.mxu0
    %v976 = vadd.f32 %v903, %v975
    %977 = vdwg.mxu0
    %978 = vmatprep.subr.bf16.mxu0 %v719
    %979 = vmatpush1.bf16.msra.mxu0 %v718
    %980 = vmatprep.subr.bf16.mxu0 %v717
    %981 = vmatpush1.bf16.msra.mxu0 %v716
    %982 = vmatprep.subr.bf16.mxu0 %v715
    %983 = vmatpush1.bf16.msra.mxu0 %v714
    %984 = vmatprep.subr.bf16.mxu0 %v713
    %985 = vmatpush1.bf16.msra.mxu0 %v712
    %986 = vmatprep.subr.bf16.mxu0 %v711
    %987 = vmatpush1.bf16.msra.mxu0 %v710
    %988 = vmatprep.subr.bf16.mxu0 %v709
    %989 = vmatpush1.bf16.msra.mxu0 %v708
    %990 = vmatprep.subr.bf16.mxu0 %v707
    %991 = vmatpush1.bf16.msra.mxu0 %v706
    %992 = vmatprep.subr.bf16.mxu0 %v705
    %993 = vmatpush1.bf16.msra.mxu0 %v704
    %994 = vmatprep.subr.bf16.mxu0 %v735
    %995 = vmatpush2.bf16.msra.mxu0 %v734
    %996 = vmatprep.subr.bf16.mxu0 %v733
    %997 = vmatpush2.bf16.msra.mxu0 %v732
    %998 = vmatprep.subr.bf16.mxu0 %v731
    %999 = vmatpush2.bf16.msra.mxu0 %v730
    %1000 = vmatprep.subr.bf16.mxu0 %v729
    %1001 = vmatpush2.bf16.msra.mxu0 %v728
    %1002 = vmatprep.subr.bf16.mxu0 %v727
    %1003 = vmatpush2.bf16.msra.mxu0 %v726
    %1004 = vmatprep.subr.bf16.mxu0 %v725
    %1005 = vmatpush2.bf16.msra.mxu0 %v724
    %1006 = vmatprep.subr.bf16.mxu0 %v723
    %1007 = vmatpush2.bf16.msra.mxu0 %v722
    %1008 = vmatprep.subr.bf16.mxu0 %v721
    %1009 = vmatpush2.bf16.msra.mxu0 %v720
    %1010 = vmatprep.mubr.bf16.mxu0 %v309
    %1011 = vmatmul.mubr.bf16.gmra.mxu0 %v308
    %v1012 = vpop.f32.mrf.mxu0
    %v1013 = vadd.f32 %v940, %v1012
    %v1014 = vpop.f32.mrf.mxu0
    %v1015 = vadd.f32 %v942, %v1014
    %v1016 = vpop.f32.mrf.mxu0
    %v1017 = vadd.f32 %v944, %v1016
    %v1018 = vpop.f32.mrf.mxu0
    %v1019 = vadd.f32 %v946, %v1018
    %1020 = vmatprep.mubr.bf16.mxu0 %v315
    %1021 = vmatmul.mubr.bf16.gmra.mxu0 %v314
    %v1022 = vpop.f32.mrf.mxu0
    %v1023 = vadd.f32 %v950, %v1022
    %v1024 = vpop.f32.mrf.mxu0
    %v1025 = vadd.f32 %v952, %v1024
    %v1026 = vpop.f32.mrf.mxu0
    %v1027 = vadd.f32 %v954, %v1026
    %v1028 = vpop.f32.mrf.mxu0
    %v1029 = vadd.f32 %v956, %v1028
    %1030 = vmatprep.mubr.bf16.mxu0 %v321
    %1031 = vmatmul.mubr.bf16.gmra.mxu0 %v320
    %v1032 = vpop.f32.mrf.mxu0
    %v1033 = vadd.f32 %v960, %v1032
    %v1034 = vpop.f32.mrf.mxu0
    %v1035 = vadd.f32 %v962, %v1034
    %v1036 = vpop.f32.mrf.mxu0
    %v1037 = vadd.f32 %v964, %v1036
    %v1038 = vpop.f32.mrf.mxu0
    %v1039 = vadd.f32 %v966, %v1038
    %1040 = vmatprep.mubr.bf16.mxu0 %v327
    %1041 = vmatmul.mubr.bf16.gmra.mxu0 %v326
    %v1042 = vpop.f32.mrf.mxu0
    %v1043 = vadd.f32 %v970, %v1042
    %v1044 = vpop.f32.mrf.mxu0
    %v1045 = vadd.f32 %v972, %v1044
    %v1046 = vpop.f32.mrf.mxu0
    %v1047 = vadd.f32 %v974, %v1046
    %v1048 = vpop.f32.mrf.mxu0
    %v1049 = vadd.f32 %v976, %v1048
    %1050 = vdwg.mxu0
    %1051 = vst [vmem:[#allocation2] sm:$0xff] %v1013
    %1052 = vst [vmem:[#allocation2 + $0x8] sm:$0xff] %v1015
    %1053 = vst [vmem:[#allocation2 + $0x10] sm:$0xff] %v1017
    %1054 = vst [vmem:[#allocation2 + $0x18] sm:$0xff] %v1019
    %1055 = vst [vmem:[#allocation2 + $0x20] sm:$0xff] %v1023
    %1056 = vst [vmem:[#allocation2 + $0x28] sm:$0xff] %v1025
    %1057 = vst [vmem:[#allocation2 + $0x30] sm:$0xff] %v1027
    %1058 = vst [vmem:[#allocation2 + $0x38] sm:$0xff] %v1029
    %1059 = vst [vmem:[#allocation2 + $0x40] sm:$0xff] %v1033
    %1060 = vst [vmem:[#allocation2 + $0x48] sm:$0xff] %v1035
    %1061 = vst [vmem:[#allocation2 + $0x50] sm:$0xff] %v1037
    %1062 = vst [vmem:[#allocation2 + $0x58] sm:$0xff] %v1039
    %1063 = vst [vmem:[#allocation2 + $0x60] sm:$0xff] %v1043
    %1064 = vst [vmem:[#allocation2 + $0x68] sm:$0xff] %v1045
    %1065 = vst [vmem:[#allocation2 + $0x70] sm:$0xff] %v1047
    %1066 = vst [vmem:[#allocation2 + $0x78] sm:$0xff] %v1049
    %v1067 = vld [vmem:[%s4] sm:$0xff]
    %v1068 = vld [vmem:[%s4 + $0x8] sm:$0xff]
    %v1069 = vld [vmem:[%s4 + $0x10] sm:$0xff]
    %v1070 = vld [vmem:[%s4 + $0x18] sm:$0xff]
    %s1071 = smul.u32 0, 2
    %s1072 = smul.addr %s1071, 8
    %s1073 = scalar_lea.vmem [#allocation2], %s1072
    %v1074 = vld [vmem:[%s1073] sm:$0xff]
    %vm1075 = vcmask 261120
    %v1077 = vsel %vm1075, 0.0, 0
    %1079 = vmatprep.subr.mxu0 0.0
    %1080 = vmatpush1.msra.mxu0 0.0
    %1081 = vmatprep.subr.mxu0 0.0
    %1082 = vmatpush1.msra.mxu0 0.0
    %1083 = vmatprep.subr.mxu0 0.0
    %1084 = vmatpush1.msra.mxu0 0.0
    %1085 = vmatprep.subr.mxu0 0.0
    %1086 = vmatpush1.msra.mxu0 0.0
    %1087 = vmatprep.subr.mxu0 0.0
    %1088 = vmatpush1.msra.mxu0 0.0
    %1089 = vmatprep.subr.mxu0 0.0
    %1090 = vmatpush1.msra.mxu0 0.0
    %1091 = vmatprep.subr.mxu0 0.0
    %1092 = vmatpush1.msra.mxu0 0.0
    %1093 = vmatprep.subr.mxu0 0.0
    %1094 = vmatpush1.msra.mxu0 0.0
    %1095 = vmatprep.subr.mxu0 0.0
    %1096 = vmatpush1.msra.mxu0 0.0
    %1097 = vmatprep.subr.mxu0 0.0
    %1098 = vmatpush1.msra.mxu0 0.0
    %1099 = vmatprep.subr.mxu0 0.0
    %1100 = vmatpush1.msra.mxu0 0.0
    %1101 = vmatprep.subr.mxu0 0.0
    %1102 = vmatpush1.msra.mxu0 0.0
    %1103 = vmatprep.subr.mxu0 0.0
    %1104 = vmatpush1.msra.mxu0 %v1070
    %1105 = vmatprep.subr.mxu0 0.0
    %1106 = vmatpush1.msra.mxu0 %v1069
    %1107 = vmatprep.subr.mxu0 0.0
    %1108 = vmatpush1.msra.mxu0 %v1068
    %1109 = vmatprep.subr.mxu0 0.0
    %1110 = vmatpush1.msra.mxu0 %v1067
    %1111 = vmatprep.subr.mxu0 0.0
    %1112 = vmatpush2.msra.mxu0 0.0
    %1113 = vmatprep.subr.mxu0 0.0
    %1114 = vmatpush2.msra.mxu0 0.0
    %1115 = vmatprep.subr.mxu0 0.0
    %1116 = vmatpush2.msra.mxu0 0.0
    %1117 = vmatprep.subr.mxu0 0.0
    %1118 = vmatpush2.msra.mxu0 0.0
    %1119 = vmatprep.subr.mxu0 0.0
    %1120 = vmatpush2.msra.mxu0 0.0
    %1121 = vmatprep.subr.mxu0 0.0
    %1122 = vmatpush2.msra.mxu0 0.0
    %1123 = vmatprep.subr.mxu0 0.0
    %1124 = vmatpush2.msra.mxu0 0.0
    %1125 = vmatprep.subr.mxu0 0.0
    %1126 = vmatpush2.msra.mxu0 0.0
    %1127 = vmatprep.subr.mxu0 0.0
    %1128 = vmatpush2.msra.mxu0 0.0
    %1129 = vmatprep.subr.mxu0 0.0
    %1130 = vmatpush2.msra.mxu0 0.0
    %1131 = vmatprep.subr.mxu0 0.0
    %1132 = vmatpush2.msra.mxu0 0.0
    %1133 = vmatprep.subr.mxu0 0.0
    %1134 = vmatpush2.msra.mxu0 0.0
    %1135 = vmatprep.subr.mxu0 0.0
    %1136 = vmatpush2.msra.mxu0 0.0
    %1137 = vmatprep.subr.mxu0 0.0
    %1138 = vmatpush2.msra.mxu0 0.0
    %1139 = vmatprep.subr.mxu0 0.0
    %1140 = vmatpush2.msra.mxu0 0.0
    %1141 = vmatprep.subr.mxu0 0.0
    %1142 = vmatpush2.msra.mxu0 0.0
    %1143 = vmatprep.mubr.f32.mxu0 0.0
    %1144 = vmatmul.mubr.f32.gmra.mxu0 %v1077
    %v1145 = vpop.f32.mrf.mxu0
    %v1146 = vadd.f32 0.0, %v1145
    %v1147 = vpop.f32.mrf.mxu0
    %1148 = vdwg.mxu0
    %v1149 = vadd.f32 %v1074, %v1146
    %v1150 = vxor.u32 %v1149, 2147483648
    %v1151 = vmul.f32 %v1150, 1.442695
    %v1152 = vpow.pop %v1151
    %v1153 = vadd.f32 %v1152, 1.0
    %v1154 = vrcp.pop %v1153
    %v1155 = vmul.f32 1.0, %v1154
    %v1156 = vtanh.pop %v1149
    %v1157 = vmul.f32 %v1155, 0.0
    %1159 = vrot.lane.b32.xlu0 %v1156, 32
    %v1160 = vpop.permute.xlu0 %1159
    %v1162 = vmul.f32 %v1155, %v1160
    %1164 = vrot.lane.b32.xlu0 %v1162, 32
    %v1165 = vpop.permute.xlu0 %1164
    %v1167 = vadd.f32 %v1157, %v1165
    %v1168 = vtanh.pop %v1167
    %1170 = vrot.lane.b32.xlu0 %v1168, 32
    %v1171 = vpop.permute.xlu0 %1170
    %v1173 = vmul.f32 %v1155, %v1171
    %1175 = vrot.lane.b32.xlu0 %v1173, 64
    %v1176 = vpop.permute.xlu0 %1175
    %1178 = vst.msk [vmem:[#allocation3] sm:$0xff] %vm1075, %v1176
    %s1179 = smul.u32 1, 2
    %s1180 = smul.addr %s1179, 8
    %s1181 = scalar_lea.vmem [#allocation2], %s1180
    %v1182 = vld [vmem:[%s1181] sm:$0xff]
    %v1183 = vsel %vm1075, %v1176, 0
    %1185 = vmatprep.subr.mxu0 0.0
    %1186 = vmatpush1.msra.mxu0 0.0
    %1187 = vmatprep.subr.mxu0 0.0
    %1188 = vmatpush1.msra.mxu0 0.0
    %1189 = vmatprep.subr.mxu0 0.0
    %1190 = vmatpush1.msra.mxu0 0.0
    %1191 = vmatprep.subr.mxu0 0.0
    %1192 = vmatpush1.msra.mxu0 0.0
    %1193 = vmatprep.subr.mxu0 0.0
    %1194 = vmatpush1.msra.mxu0 0.0
    %1195 = vmatprep.subr.mxu0 0.0
    %1196 = vmatpush1.msra.mxu0 0.0
    %1197 = vmatprep.subr.mxu0 0.0
    %1198 = vmatpush1.msra.mxu0 0.0
    %1199 = vmatprep.subr.mxu0 0.0
    %1200 = vmatpush1.msra.mxu0 0.0
    %1201 = vmatprep.subr.mxu0 0.0
    %1202 = vmatpush1.msra.mxu0 0.0
    %1203 = vmatprep.subr.mxu0 0.0
    %1204 = vmatpush1.msra.mxu0 0.0
    %1205 = vmatprep.subr.mxu0 0.0
    %1206 = vmatpush1.msra.mxu0 0.0
    %1207 = vmatprep.subr.mxu0 0.0
    %1208 = vmatpush1.msra.mxu0 0.0
    %1209 = vmatprep.subr.mxu0 0.0
    %1210 = vmatpush1.msra.mxu0 %v1070
    %1211 = vmatprep.subr.mxu0 0.0
    %1212 = vmatpush1.msra.mxu0 %v1069
    %1213 = vmatprep.subr.mxu0 0.0
    %1214 = vmatpush1.msra.mxu0 %v1068
    %1215 = vmatprep.subr.mxu0 0.0
    %1216 = vmatpush1.msra.mxu0 %v1067
    %1217 = vmatprep.subr.mxu0 0.0
    %1218 = vmatpush2.msra.mxu0 0.0
    %1219 = vmatprep.subr.mxu0 0.0
    %1220 = vmatpush2.msra.mxu0 0.0
    %1221 = vmatprep.subr.mxu0 0.0
    %1222 = vmatpush2.msra.mxu0 0.0
    %1223 = vmatprep.subr.mxu0 0.0
    %1224 = vmatpush2.msra.mxu0 0.0
    %1225 = vmatprep.subr.mxu0 0.0
    %1226 = vmatpush2.msra.mxu0 0.0
    %1227 = vmatprep.subr.mxu0 0.0
    %1228 = vmatpush2.msra.mxu0 0.0
    %1229 = vmatprep.subr.mxu0 0.0
    %1230 = vmatpush2.msra.mxu0 0.0
    %1231 = vmatprep.subr.mxu0 0.0
    %1232 = vmatpush2.msra.mxu0 0.0
    %1233 = vmatprep.subr.mxu0 0.0
    %1234 = vmatpush2.msra.mxu0 0.0
    %1235 = vmatprep.subr.mxu0 0.0
    %1236 = vmatpush2.msra.mxu0 0.0
    %1237 = vmatprep.subr.mxu0 0.0
    %1238 = vmatpush2.msra.mxu0 0.0
    %1239 = vmatprep.subr.mxu0 0.0
    %1240 = vmatpush2.msra.mxu0 0.0
    %1241 = vmatprep.subr.mxu0 0.0
    %1242 = vmatpush2.msra.mxu0 0.0
    %1243 = vmatprep.subr.mxu0 0.0
    %1244 = vmatpush2.msra.mxu0 0.0
    %1245 = vmatprep.subr.mxu0 0.0
    %1246 = vmatpush2.msra.mxu0 0.0
    %1247 = vmatprep.subr.mxu0 0.0
    %1248 = vmatpush2.msra.mxu0 0.0
    %1249 = vmatprep.mubr.f32.mxu0 0.0
    %1250 = vmatmul.mubr.f32.gmra.mxu0 %v1183
    %v1251 = vpop.f32.mrf.mxu0
    %v1252 = vadd.f32 0.0, %v1251
    %v1253 = vpop.f32.mrf.mxu0
    %1254 = vdwg.mxu0
    %v1255 = vadd.f32 %v1182, %v1252
    %v1256 = vxor.u32 %v1255, 2147483648
    %v1257 = vmul.f32 %v1256, 1.442695
    %v1258 = vpow.pop %v1257
    %v1259 = vadd.f32 %v1258, 1.0
    %v1260 = vrcp.pop %v1259
    %v1261 = vmul.f32 1.0, %v1260
    %v1262 = vtanh.pop %v1255
    %v1263 = vmul.f32 %v1261, %v1167
    %1265 = vrot.lane.b32.xlu0 %v1262, 32
    %v1266 = vpop.permute.xlu0 %1265
    %v1268 = vmul.f32 %v1261, %v1266
    %1270 = vrot.lane.b32.xlu0 %v1268, 32
    %v1271 = vpop.permute.xlu0 %1270
    %v1273 = vadd.f32 %v1263, %v1271
    %v1274 = vtanh.pop %v1273
    %1276 = vrot.lane.b32.xlu0 %v1274, 32
    %v1277 = vpop.permute.xlu0 %1276
    %v1279 = vmul.f32 %v1261, %v1277
    %1281 = vrot.lane.b32.xlu0 %v1279, 64
    %v1282 = vpop.permute.xlu0 %1281
    %s1284 = scalar_lea.vmem [#allocation3], 8
    %1285 = vst.msk [vmem:[%s1284] sm:$0xff] %vm1075, %v1282
    %s1286 = smul.u32 2, 2
    %s1287 = smul.addr %s1286, 8
    %s1288 = scalar_lea.vmem [#allocation2], %s1287
    %v1289 = vld [vmem:[%s1288] sm:$0xff]
    %v1290 = vsel %vm1075, %v1282, 0
    %1292 = vmatprep.subr.mxu0 0.0
    %1293 = vmatpush1.msra.mxu0 0.0
    %1294 = vmatprep.subr.mxu0 0.0
    %1295 = vmatpush1.msra.mxu0 0.0
    %1296 = vmatprep.subr.mxu0 0.0
    %1297 = vmatpush1.msra.mxu0 0.0
    %1298 = vmatprep.subr.mxu0 0.0
    %1299 = vmatpush1.msra.mxu0 0.0
    %1300 = vmatprep.subr.mxu0 0.0
    %1301 = vmatpush1.msra.mxu0 0.0
    %1302 = vmatprep.subr.mxu0 0.0
    %1303 = vmatpush1.msra.mxu0 0.0
    %1304 = vmatprep.subr.mxu0 0.0
    %1305 = vmatpush1.msra.mxu0 0.0
    %1306 = vmatprep.subr.mxu0 0.0
    %1307 = vmatpush1.msra.mxu0 0.0
    %1308 = vmatprep.subr.mxu0 0.0
    %1309 = vmatpush1.msra.mxu0 0.0
    %1310 = vmatprep.subr.mxu0 0.0
    %1311 = vmatpush1.msra.mxu0 0.0
    %1312 = vmatprep.subr.mxu0 0.0
    %1313 = vmatpush1.msra.mxu0 0.0
    %1314 = vmatprep.subr.mxu0 0.0
    %1315 = vmatpush1.msra.mxu0 0.0
    %1316 = vmatprep.subr.mxu0 0.0
    %1317 = vmatpush1.msra.mxu0 %v1070
    %1318 = vmatprep.subr.mxu0 0.0
    %1319 = vmatpush1.msra.mxu0 %v1069
    %1320 = vmatprep.subr.mxu0 0.0
    %1321 = vmatpush1.msra.mxu0 %v1068
    %1322 = vmatprep.subr.mxu0 0.0
    %1323 = vmatpush1.msra.mxu0 %v1067
    %1324 = vmatprep.subr.mxu0 0.0
    %1325 = vmatpush2.msra.mxu0 0.0
    %1326 = vmatprep.subr.mxu0 0.0
    %1327 = vmatpush2.msra.mxu0 0.0
    %1328 = vmatprep.subr.mxu0 0.0
    %1329 = vmatpush2.msra.mxu0 0.0
    %1330 = vmatprep.subr.mxu0 0.0
    %1331 = vmatpush2.msra.mxu0 0.0
    %1332 = vmatprep.subr.mxu0 0.0
    %1333 = vmatpush2.msra.mxu0 0.0
    %1334 = vmatprep.subr.mxu0 0.0
    %1335 = vmatpush2.msra.mxu0 0.0
    %1336 = vmatprep.subr.mxu0 0.0
    %1337 = vmatpush2.msra.mxu0 0.0
    %1338 = vmatprep.subr.mxu0 0.0
    %1339 = vmatpush2.msra.mxu0 0.0
    %1340 = vmatprep.subr.mxu0 0.0
    %1341 = vmatpush2.msra.mxu0 0.0
    %1342 = vmatprep.subr.mxu0 0.0
    %1343 = vmatpush2.msra.mxu0 0.0
    %1344 = vmatprep.subr.mxu0 0.0
    %1345 = vmatpush2.msra.mxu0 0.0
    %1346 = vmatprep.subr.mxu0 0.0
    %1347 = vmatpush2.msra.mxu0 0.0
    %1348 = vmatprep.subr.mxu0 0.0
    %1349 = vmatpush2.msra.mxu0 0.0
    %1350 = vmatprep.subr.mxu0 0.0
    %1351 = vmatpush2.msra.mxu0 0.0
    %1352 = vmatprep.subr.mxu0 0.0
    %1353 = vmatpush2.msra.mxu0 0.0
    %1354 = vmatprep.subr.mxu0 0.0
    %1355 = vmatpush2.msra.mxu0 0.0
    %1356 = vmatprep.mubr.f32.mxu0 0.0
    %1357 = vmatmul.mubr.f32.gmra.mxu0 %v1290
    %v1358 = vpop.f32.mrf.mxu0
    %v1359 = vadd.f32 0.0, %v1358
    %v1360 = vpop.f32.mrf.mxu0
    %1361 = vdwg.mxu0
    %v1362 = vadd.f32 %v1289, %v1359
    %v1363 = vxor.u32 %v1362, 2147483648
    %v1364 = vmul.f32 %v1363, 1.442695
    %v1365 = vpow.pop %v1364
    %v1366 = vadd.f32 %v1365, 1.0
    %v1367 = vrcp.pop %v1366
    %v1368 = vmul.f32 1.0, %v1367
    %v1369 = vtanh.pop %v1362
    %v1370 = vmul.f32 %v1368, %v1273
    %1372 = vrot.lane.b32.xlu0 %v1369, 32
    %v1373 = vpop.permute.xlu0 %1372
    %v1375 = vmul.f32 %v1368, %v1373
    %1377 = vrot.lane.b32.xlu0 %v1375, 32
    %v1378 = vpop.permute.xlu0 %1377
    %v1380 = vadd.f32 %v1370, %v1378
    %v1381 = vtanh.pop %v1380
    %1383 = vrot.lane.b32.xlu0 %v1381, 32
    %v1384 = vpop.permute.xlu0 %1383
    %v1386 = vmul.f32 %v1368, %v1384
    %1388 = vrot.lane.b32.xlu0 %v1386, 64
    %v1389 = vpop.permute.xlu0 %1388
    %s1391 = scalar_lea.vmem [#allocation3], 16
    %1392 = vst.msk [vmem:[%s1391] sm:$0xff] %vm1075, %v1389
    %s1393 = smul.u32 3, 2
    %s1394 = smul.addr %s1393, 8
    %s1395 = scalar_lea.vmem [#allocation2], %s1394
    %v1396 = vld [vmem:[%s1395] sm:$0xff]
    %v1397 = vsel %vm1075, %v1389, 0
    %1399 = vmatprep.subr.mxu0 0.0
    %1400 = vmatpush1.msra.mxu0 0.0
    %1401 = vmatprep.subr.mxu0 0.0
    %1402 = vmatpush1.msra.mxu0 0.0
    %1403 = vmatprep.subr.mxu0 0.0
    %1404 = vmatpush1.msra.mxu0 0.0
    %1405 = vmatprep.subr.mxu0 0.0
    %1406 = vmatpush1.msra.mxu0 0.0
    %1407 = vmatprep.subr.mxu0 0.0
    %1408 = vmatpush1.msra.mxu0 0.0
    %1409 = vmatprep.subr.mxu0 0.0
    %1410 = vmatpush1.msra.mxu0 0.0
    %1411 = vmatprep.subr.mxu0 0.0
    %1412 = vmatpush1.msra.mxu0 0.0
    %1413 = vmatprep.subr.mxu0 0.0
    %1414 = vmatpush1.msra.mxu0 0.0
    %1415 = vmatprep.subr.mxu0 0.0
    %1416 = vmatpush1.msra.mxu0 0.0
    %1417 = vmatprep.subr.mxu0 0.0
    %1418 = vmatpush1.msra.mxu0 0.0
    %1419 = vmatprep.subr.mxu0 0.0
    %1420 = vmatpush1.msra.mxu0 0.0
    %1421 = vmatprep.subr.mxu0 0.0
    %1422 = vmatpush1.msra.mxu0 0.0
    %1423 = vmatprep.subr.mxu0 0.0
    %1424 = vmatpush1.msra.mxu0 %v1070
    %1425 = vmatprep.subr.mxu0 0.0
    %1426 = vmatpush1.msra.mxu0 %v1069
    %1427 = vmatprep.subr.mxu0 0.0
    %1428 = vmatpush1.msra.mxu0 %v1068
    %1429 = vmatprep.subr.mxu0 0.0
    %1430 = vmatpush1.msra.mxu0 %v1067
    %1431 = vmatprep.subr.mxu0 0.0
    %1432 = vmatpush2.msra.mxu0 0.0
    %1433 = vmatprep.subr.mxu0 0.0
    %1434 = vmatpush2.msra.mxu0 0.0
    %1435 = vmatprep.subr.mxu0 0.0
    %1436 = vmatpush2.msra.mxu0 0.0
    %1437 = vmatprep.subr.mxu0 0.0
    %1438 = vmatpush2.msra.mxu0 0.0
    %1439 = vmatprep.subr.mxu0 0.0
    %1440 = vmatpush2.msra.mxu0 0.0
    %1441 = vmatprep.subr.mxu0 0.0
    %1442 = vmatpush2.msra.mxu0 0.0
    %1443 = vmatprep.subr.mxu0 0.0
    %1444 = vmatpush2.msra.mxu0 0.0
    %1445 = vmatprep.subr.mxu0 0.0
    %1446 = vmatpush2.msra.mxu0 0.0
    %1447 = vmatprep.subr.mxu0 0.0
    %1448 = vmatpush2.msra.mxu0 0.0
    %1449 = vmatprep.subr.mxu0 0.0
    %1450 = vmatpush2.msra.mxu0 0.0
    %1451 = vmatprep.subr.mxu0 0.0
    %1452 = vmatpush2.msra.mxu0 0.0
    %1453 = vmatprep.subr.mxu0 0.0
    %1454 = vmatpush2.msra.mxu0 0.0
    %1455 = vmatprep.subr.mxu0 0.0
    %1456 = vmatpush2.msra.mxu0 0.0
    %1457 = vmatprep.subr.mxu0 0.0
    %1458 = vmatpush2.msra.mxu0 0.0
    %1459 = vmatprep.subr.mxu0 0.0
    %1460 = vmatpush2.msra.mxu0 0.0
    %1461 = vmatprep.subr.mxu0 0.0
    %1462 = vmatpush2.msra.mxu0 0.0
    %1463 = vmatprep.mubr.f32.mxu0 0.0
    %1464 = vmatmul.mubr.f32.gmra.mxu0 %v1397
    %v1465 = vpop.f32.mrf.mxu0
    %v1466 = vadd.f32 0.0, %v1465
    %v1467 = vpop.f32.mrf.mxu0
    %1468 = vdwg.mxu0
    %v1469 = vadd.f32 %v1396, %v1466
    %v1470 = vxor.u32 %v1469, 2147483648
    %v1471 = vmul.f32 %v1470, 1.442695
    %v1472 = vpow.pop %v1471
    %v1473 = vadd.f32 %v1472, 1.0
    %v1474 = vrcp.pop %v1473
    %v1475 = vmul.f32 1.0, %v1474
    %v1476 = vtanh.pop %v1469
    %v1477 = vmul.f32 %v1475, %v1380
    %1479 = vrot.lane.b32.xlu0 %v1476, 32
    %v1480 = vpop.permute.xlu0 %1479
    %v1482 = vmul.f32 %v1475, %v1480
    %1484 = vrot.lane.b32.xlu0 %v1482, 32
    %v1485 = vpop.permute.xlu0 %1484
    %v1487 = vadd.f32 %v1477, %v1485
    %v1488 = vtanh.pop %v1487
    %1490 = vrot.lane.b32.xlu0 %v1488, 32
    %v1491 = vpop.permute.xlu0 %1490
    %v1493 = vmul.f32 %v1475, %v1491
    %1495 = vrot.lane.b32.xlu0 %v1493, 64
    %v1496 = vpop.permute.xlu0 %1495
    %s1498 = scalar_lea.vmem [#allocation3], 24
    %1499 = vst.msk [vmem:[%s1498] sm:$0xff] %vm1075, %v1496
    %s1500 = smul.u32 4, 2
    %s1501 = smul.addr %s1500, 8
    %s1502 = scalar_lea.vmem [#allocation2], %s1501
    %v1503 = vld [vmem:[%s1502] sm:$0xff]
    %v1504 = vsel %vm1075, %v1496, 0
    %1506 = vmatprep.subr.mxu0 0.0
    %1507 = vmatpush1.msra.mxu0 0.0
    %1508 = vmatprep.subr.mxu0 0.0
    %1509 = vmatpush1.msra.mxu0 0.0
    %1510 = vmatprep.subr.mxu0 0.0
    %1511 = vmatpush1.msra.mxu0 0.0
    %1512 = vmatprep.subr.mxu0 0.0
    %1513 = vmatpush1.msra.mxu0 0.0
    %1514 = vmatprep.subr.mxu0 0.0
    %1515 = vmatpush1.msra.mxu0 0.0
    %1516 = vmatprep.subr.mxu0 0.0
    %1517 = vmatpush1.msra.mxu0 0.0
    %1518 = vmatprep.subr.mxu0 0.0
    %1519 = vmatpush1.msra.mxu0 0.0
    %1520 = vmatprep.subr.mxu0 0.0
    %1521 = vmatpush1.msra.mxu0 0.0
    %1522 = vmatprep.subr.mxu0 0.0
    %1523 = vmatpush1.msra.mxu0 0.0
    %1524 = vmatprep.subr.mxu0 0.0
    %1525 = vmatpush1.msra.mxu0 0.0
    %1526 = vmatprep.subr.mxu0 0.0
    %1527 = vmatpush1.msra.mxu0 0.0
    %1528 = vmatprep.subr.mxu0 0.0
    %1529 = vmatpush1.msra.mxu0 0.0
    %1530 = vmatprep.subr.mxu0 0.0
    %1531 = vmatpush1.msra.mxu0 %v1070
    %1532 = vmatprep.subr.mxu0 0.0
    %1533 = vmatpush1.msra.mxu0 %v1069
    %1534 = vmatprep.subr.mxu0 0.0
    %1535 = vmatpush1.msra.mxu0 %v1068
    %1536 = vmatprep.subr.mxu0 0.0
    %1537 = vmatpush1.msra.mxu0 %v1067
    %1538 = vmatprep.subr.mxu0 0.0
    %1539 = vmatpush2.msra.mxu0 0.0
    %1540 = vmatprep.subr.mxu0 0.0
    %1541 = vmatpush2.msra.mxu0 0.0
    %1542 = vmatprep.subr.mxu0 0.0
    %1543 = vmatpush2.msra.mxu0 0.0
    %1544 = vmatprep.subr.mxu0 0.0
    %1545 = vmatpush2.msra.mxu0 0.0
    %1546 = vmatprep.subr.mxu0 0.0
    %1547 = vmatpush2.msra.mxu0 0.0
    %1548 = vmatprep.subr.mxu0 0.0
    %1549 = vmatpush2.msra.mxu0 0.0
    %1550 = vmatprep.subr.mxu0 0.0
    %1551 = vmatpush2.msra.mxu0 0.0
    %1552 = vmatprep.subr.mxu0 0.0
    %1553 = vmatpush2.msra.mxu0 0.0
    %1554 = vmatprep.subr.mxu0 0.0
    %1555 = vmatpush2.msra.mxu0 0.0
    %1556 = vmatprep.subr.mxu0 0.0
    %1557 = vmatpush2.msra.mxu0 0.0
    %1558 = vmatprep.subr.mxu0 0.0
    %1559 = vmatpush2.msra.mxu0 0.0
    %1560 = vmatprep.subr.mxu0 0.0
    %1561 = vmatpush2.msra.mxu0 0.0
    %1562 = vmatprep.subr.mxu0 0.0
    %1563 = vmatpush2.msra.mxu0 0.0
    %1564 = vmatprep.subr.mxu0 0.0
    %1565 = vmatpush2.msra.mxu0 0.0
    %1566 = vmatprep.subr.mxu0 0.0
    %1567 = vmatpush2.msra.mxu0 0.0
    %1568 = vmatprep.subr.mxu0 0.0
    %1569 = vmatpush2.msra.mxu0 0.0
    %1570 = vmatprep.mubr.f32.mxu0 0.0
    %1571 = vmatmul.mubr.f32.gmra.mxu0 %v1504
    %v1572 = vpop.f32.mrf.mxu0
    %v1573 = vadd.f32 0.0, %v1572
    %v1574 = vpop.f32.mrf.mxu0
    %1575 = vdwg.mxu0
    %v1576 = vadd.f32 %v1503, %v1573
    %v1577 = vxor.u32 %v1576, 2147483648
    %v1578 = vmul.f32 %v1577, 1.442695
    %v1579 = vpow.pop %v1578
    %v1580 = vadd.f32 %v1579, 1.0
    %v1581 = vrcp.pop %v1580
    %v1582 = vmul.f32 1.0, %v1581
    %v1583 = vtanh.pop %v1576
    %v1584 = vmul.f32 %v1582, %v1487
    %1586 = vrot.lane.b32.xlu0 %v1583, 32
    %v1587 = vpop.permute.xlu0 %1586
    %v1589 = vmul.f32 %v1582, %v1587
    %1591 = vrot.lane.b32.xlu0 %v1589, 32
    %v1592 = vpop.permute.xlu0 %1591
    %v1594 = vadd.f32 %v1584, %v1592
    %v1595 = vtanh.pop %v1594
    %1597 = vrot.lane.b32.xlu0 %v1595, 32
    %v1598 = vpop.permute.xlu0 %1597
    %v1600 = vmul.f32 %v1582, %v1598
    %1602 = vrot.lane.b32.xlu0 %v1600, 64
    %v1603 = vpop.permute.xlu0 %1602
    %s1605 = scalar_lea.vmem [#allocation3], 32
    %1606 = vst.msk [vmem:[%s1605] sm:$0xff] %vm1075, %v1603
    %s1607 = smul.u32 5, 2
    %s1608 = smul.addr %s1607, 8
    %s1609 = scalar_lea.vmem [#allocation2], %s1608
    %v1610 = vld [vmem:[%s1609] sm:$0xff]
    %v1611 = vsel %vm1075, %v1603, 0
    %1613 = vmatprep.subr.mxu0 0.0
    %1614 = vmatpush1.msra.mxu0 0.0
    %1615 = vmatprep.subr.mxu0 0.0
    %1616 = vmatpush1.msra.mxu0 0.0
    %1617 = vmatprep.subr.mxu0 0.0
    %1618 = vmatpush1.msra.mxu0 0.0
    %1619 = vmatprep.subr.mxu0 0.0
    %1620 = vmatpush1.msra.mxu0 0.0
    %1621 = vmatprep.subr.mxu0 0.0
    %1622 = vmatpush1.msra.mxu0 0.0
    %1623 = vmatprep.subr.mxu0 0.0
    %1624 = vmatpush1.msra.mxu0 0.0
    %1625 = vmatprep.subr.mxu0 0.0
    %1626 = vmatpush1.msra.mxu0 0.0
    %1627 = vmatprep.subr.mxu0 0.0
    %1628 = vmatpush1.msra.mxu0 0.0
    %1629 = vmatprep.subr.mxu0 0.0
    %1630 = vmatpush1.msra.mxu0 0.0
    %1631 = vmatprep.subr.mxu0 0.0
    %1632 = vmatpush1.msra.mxu0 0.0
    %1633 = vmatprep.subr.mxu0 0.0
    %1634 = vmatpush1.msra.mxu0 0.0
    %1635 = vmatprep.subr.mxu0 0.0
    %1636 = vmatpush1.msra.mxu0 0.0
    %1637 = vmatprep.subr.mxu0 0.0
    %1638 = vmatpush1.msra.mxu0 %v1070
    %1639 = vmatprep.subr.mxu0 0.0
    %1640 = vmatpush1.msra.mxu0 %v1069
    %1641 = vmatprep.subr.mxu0 0.0
    %1642 = vmatpush1.msra.mxu0 %v1068
    %1643 = vmatprep.subr.mxu0 0.0
    %1644 = vmatpush1.msra.mxu0 %v1067
    %1645 = vmatprep.subr.mxu0 0.0
    %1646 = vmatpush2.msra.mxu0 0.0
    %1647 = vmatprep.subr.mxu0 0.0
    %1648 = vmatpush2.msra.mxu0 0.0
    %1649 = vmatprep.subr.mxu0 0.0
    %1650 = vmatpush2.msra.mxu0 0.0
    %1651 = vmatprep.subr.mxu0 0.0
    %1652 = vmatpush2.msra.mxu0 0.0
    %1653 = vmatprep.subr.mxu0 0.0
    %1654 = vmatpush2.msra.mxu0 0.0
    %1655 = vmatprep.subr.mxu0 0.0
    %1656 = vmatpush2.msra.mxu0 0.0
    %1657 = vmatprep.subr.mxu0 0.0
    %1658 = vmatpush2.msra.mxu0 0.0
    %1659 = vmatprep.subr.mxu0 0.0
    %1660 = vmatpush2.msra.mxu0 0.0
    %1661 = vmatprep.subr.mxu0 0.0
    %1662 = vmatpush2.msra.mxu0 0.0
    %1663 = vmatprep.subr.mxu0 0.0
    %1664 = vmatpush2.msra.mxu0 0.0
    %1665 = vmatprep.subr.mxu0 0.0
    %1666 = vmatpush2.msra.mxu0 0.0
    %1667 = vmatprep.subr.mxu0 0.0
    %1668 = vmatpush2.msra.mxu0 0.0
    %1669 = vmatprep.subr.mxu0 0.0
    %1670 = vmatpush2.msra.mxu0 0.0
    %1671 = vmatprep.subr.mxu0 0.0
    %1672 = vmatpush2.msra.mxu0 0.0
    %1673 = vmatprep.subr.mxu0 0.0
    %1674 = vmatpush2.msra.mxu0 0.0
    %1675 = vmatprep.subr.mxu0 0.0
    %1676 = vmatpush2.msra.mxu0 0.0
    %1677 = vmatprep.mubr.f32.mxu0 0.0
    %1678 = vmatmul.mubr.f32.gmra.mxu0 %v1611
    %v1679 = vpop.f32.mrf.mxu0
    %v1680 = vadd.f32 0.0, %v1679
    %v1681 = vpop.f32.mrf.mxu0
    %1682 = vdwg.mxu0
    %v1683 = vadd.f32 %v1610, %v1680
    %v1684 = vxor.u32 %v1683, 2147483648
    %v1685 = vmul.f32 %v1684, 1.442695
    %v1686 = vpow.pop %v1685
    %v1687 = vadd.f32 %v1686, 1.0
    %v1688 = vrcp.pop %v1687
    %v1689 = vmul.f32 1.0, %v1688
    %v1690 = vtanh.pop %v1683
    %v1691 = vmul.f32 %v1689, %v1594
    %1693 = vrot.lane.b32.xlu0 %v1690, 32
    %v1694 = vpop.permute.xlu0 %1693
    %v1696 = vmul.f32 %v1689, %v1694
    %1698 = vrot.lane.b32.xlu0 %v1696, 32
    %v1699 = vpop.permute.xlu0 %1698
    %v1701 = vadd.f32 %v1691, %v1699
    %v1702 = vtanh.pop %v1701
    %1704 = vrot.lane.b32.xlu0 %v1702, 32
    %v1705 = vpop.permute.xlu0 %1704
    %v1707 = vmul.f32 %v1689, %v1705
    %1709 = vrot.lane.b32.xlu0 %v1707, 64
    %v1710 = vpop.permute.xlu0 %1709
    %s1712 = scalar_lea.vmem [#allocation3], 40
    %1713 = vst.msk [vmem:[%s1712] sm:$0xff] %vm1075, %v1710
    %s1714 = smul.u32 6, 2
    %s1715 = smul.addr %s1714, 8
    %s1716 = scalar_lea.vmem [#allocation2], %s1715
    %v1717 = vld [vmem:[%s1716] sm:$0xff]
    %v1718 = vsel %vm1075, %v1710, 0
    %1720 = vmatprep.subr.mxu0 0.0
    %1721 = vmatpush1.msra.mxu0 0.0
    %1722 = vmatprep.subr.mxu0 0.0
    %1723 = vmatpush1.msra.mxu0 0.0
    %1724 = vmatprep.subr.mxu0 0.0
    %1725 = vmatpush1.msra.mxu0 0.0
    %1726 = vmatprep.subr.mxu0 0.0
    %1727 = vmatpush1.msra.mxu0 0.0
    %1728 = vmatprep.subr.mxu0 0.0
    %1729 = vmatpush1.msra.mxu0 0.0
    %1730 = vmatprep.subr.mxu0 0.0
    %1731 = vmatpush1.msra.mxu0 0.0
    %1732 = vmatprep.subr.mxu0 0.0
    %1733 = vmatpush1.msra.mxu0 0.0
    %1734 = vmatprep.subr.mxu0 0.0
    %1735 = vmatpush1.msra.mxu0 0.0
    %1736 = vmatprep.subr.mxu0 0.0
    %1737 = vmatpush1.msra.mxu0 0.0
    %1738 = vmatprep.subr.mxu0 0.0
    %1739 = vmatpush1.msra.mxu0 0.0
    %1740 = vmatprep.subr.mxu0 0.0
    %1741 = vmatpush1.msra.mxu0 0.0
    %1742 = vmatprep.subr.mxu0 0.0
    %1743 = vmatpush1.msra.mxu0 0.0
    %1744 = vmatprep.subr.mxu0 0.0
    %1745 = vmatpush1.msra.mxu0 %v1070
    %1746 = vmatprep.subr.mxu0 0.0
    %1747 = vmatpush1.msra.mxu0 %v1069
    %1748 = vmatprep.subr.mxu0 0.0
    %1749 = vmatpush1.msra.mxu0 %v1068
    %1750 = vmatprep.subr.mxu0 0.0
    %1751 = vmatpush1.msra.mxu0 %v1067
    %1752 = vmatprep.subr.mxu0 0.0
    %1753 = vmatpush2.msra.mxu0 0.0
    %1754 = vmatprep.subr.mxu0 0.0
    %1755 = vmatpush2.msra.mxu0 0.0
    %1756 = vmatprep.subr.mxu0 0.0
    %1757 = vmatpush2.msra.mxu0 0.0
    %1758 = vmatprep.subr.mxu0 0.0
    %1759 = vmatpush2.msra.mxu0 0.0
    %1760 = vmatprep.subr.mxu0 0.0
    %1761 = vmatpush2.msra.mxu0 0.0
    %1762 = vmatprep.subr.mxu0 0.0
    %1763 = vmatpush2.msra.mxu0 0.0
    %1764 = vmatprep.subr.mxu0 0.0
    %1765 = vmatpush2.msra.mxu0 0.0
    %1766 = vmatprep.subr.mxu0 0.0
    %1767 = vmatpush2.msra.mxu0 0.0
    %1768 = vmatprep.subr.mxu0 0.0
    %1769 = vmatpush2.msra.mxu0 0.0
    %1770 = vmatprep.subr.mxu0 0.0
    %1771 = vmatpush2.msra.mxu0 0.0
    %1772 = vmatprep.subr.mxu0 0.0
    %1773 = vmatpush2.msra.mxu0 0.0
    %1774 = vmatprep.subr.mxu0 0.0
    %1775 = vmatpush2.msra.mxu0 0.0
    %1776 = vmatprep.subr.mxu0 0.0
    %1777 = vmatpush2.msra.mxu0 0.0
    %1778 = vmatprep.subr.mxu0 0.0
    %1779 = vmatpush2.msra.mxu0 0.0
    %1780 = vmatprep.subr.mxu0 0.0
    %1781 = vmatpush2.msra.mxu0 0.0
    %1782 = vmatprep.subr.mxu0 0.0
    %1783 = vmatpush2.msra.mxu0 0.0
    %1784 = vmatprep.mubr.f32.mxu0 0.0
    %1785 = vmatmul.mubr.f32.gmra.mxu0 %v1718
    %v1786 = vpop.f32.mrf.mxu0
    %v1787 = vadd.f32 0.0, %v1786
    %v1788 = vpop.f32.mrf.mxu0
    %1789 = vdwg.mxu0
    %v1790 = vadd.f32 %v1717, %v1787
    %v1791 = vxor.u32 %v1790, 2147483648
    %v1792 = vmul.f32 %v1791, 1.442695
    %v1793 = vpow.pop %v1792
    %v1794 = vadd.f32 %v1793, 1.0
    %v1795 = vrcp.pop %v1794
    %v1796 = vmul.f32 1.0, %v1795
    %v1797 = vtanh.pop %v1790
    %v1798 = vmul.f32 %v1796, %v1701
    %1800 = vrot.lane.b32.xlu0 %v1797, 32
    %v1801 = vpop.permute.xlu0 %1800
    %v1803 = vmul.f32 %v1796, %v1801
    %1805 = vrot.lane.b32.xlu0 %v1803, 32
    %v1806 = vpop.permute.xlu0 %1805
    %v1808 = vadd.f32 %v1798, %v1806
    %v1809 = vtanh.pop %v1808
    %1811 = vrot.lane.b32.xlu0 %v1809, 32
    %v1812 = vpop.permute.xlu0 %1811
    %v1814 = vmul.f32 %v1796, %v1812
    %1816 = vrot.lane.b32.xlu0 %v1814, 64
    %v1817 = vpop.permute.xlu0 %1816
    %s1819 = scalar_lea.vmem [#allocation3], 48
    %1820 = vst.msk [vmem:[%s1819] sm:$0xff] %vm1075, %v1817
    %s1821 = smul.u32 7, 2
    %s1822 = smul.addr %s1821, 8
    %s1823 = scalar_lea.vmem [#allocation2], %s1822
    %v1824 = vld [vmem:[%s1823] sm:$0xff]
    %v1825 = vsel %vm1075, %v1817, 0
    %1827 = vmatprep.subr.mxu0 0.0
    %1828 = vmatpush1.msra.mxu0 0.0
    %1829 = vmatprep.subr.mxu0 0.0
    %1830 = vmatpush1.msra.mxu0 0.0
    %1831 = vmatprep.subr.mxu0 0.0
    %1832 = vmatpush1.msra.mxu0 0.0
    %1833 = vmatprep.subr.mxu0 0.0
    %1834 = vmatpush1.msra.mxu0 0.0
    %1835 = vmatprep.subr.mxu0 0.0
    %1836 = vmatpush1.msra.mxu0 0.0
    %1837 = vmatprep.subr.mxu0 0.0
    %1838 = vmatpush1.msra.mxu0 0.0
    %1839 = vmatprep.subr.mxu0 0.0
    %1840 = vmatpush1.msra.mxu0 0.0
    %1841 = vmatprep.subr.mxu0 0.0
    %1842 = vmatpush1.msra.mxu0 0.0
    %1843 = vmatprep.subr.mxu0 0.0
    %1844 = vmatpush1.msra.mxu0 0.0
    %1845 = vmatprep.subr.mxu0 0.0
    %1846 = vmatpush1.msra.mxu0 0.0
    %1847 = vmatprep.subr.mxu0 0.0
    %1848 = vmatpush1.msra.mxu0 0.0
    %1849 = vmatprep.subr.mxu0 0.0
    %1850 = vmatpush1.msra.mxu0 0.0
    %1851 = vmatprep.subr.mxu0 0.0
    %1852 = vmatpush1.msra.mxu0 %v1070
    %1853 = vmatprep.subr.mxu0 0.0
    %1854 = vmatpush1.msra.mxu0 %v1069
    %1855 = vmatprep.subr.mxu0 0.0
    %1856 = vmatpush1.msra.mxu0 %v1068
    %1857 = vmatprep.subr.mxu0 0.0
    %1858 = vmatpush1.msra.mxu0 %v1067
    %1859 = vmatprep.subr.mxu0 0.0
    %1860 = vmatpush2.msra.mxu0 0.0
    %1861 = vmatprep.subr.mxu0 0.0
    %1862 = vmatpush2.msra.mxu0 0.0
    %1863 = vmatprep.subr.mxu0 0.0
    %1864 = vmatpush2.msra.mxu0 0.0
    %1865 = vmatprep.subr.mxu0 0.0
    %1866 = vmatpush2.msra.mxu0 0.0
    %1867 = vmatprep.subr.mxu0 0.0
    %1868 = vmatpush2.msra.mxu0 0.0
    %1869 = vmatprep.subr.mxu0 0.0
    %1870 = vmatpush2.msra.mxu0 0.0
    %1871 = vmatprep.subr.mxu0 0.0
    %1872 = vmatpush2.msra.mxu0 0.0
    %1873 = vmatprep.subr.mxu0 0.0
    %1874 = vmatpush2.msra.mxu0 0.0
    %1875 = vmatprep.subr.mxu0 0.0
    %1876 = vmatpush2.msra.mxu0 0.0
    %1877 = vmatprep.subr.mxu0 0.0
    %1878 = vmatpush2.msra.mxu0 0.0
    %1879 = vmatprep.subr.mxu0 0.0
    %1880 = vmatpush2.msra.mxu0 0.0
    %1881 = vmatprep.subr.mxu0 0.0
    %1882 = vmatpush2.msra.mxu0 0.0
    %1883 = vmatprep.subr.mxu0 0.0
    %1884 = vmatpush2.msra.mxu0 0.0
    %1885 = vmatprep.subr.mxu0 0.0
    %1886 = vmatpush2.msra.mxu0 0.0
    %1887 = vmatprep.subr.mxu0 0.0
    %1888 = vmatpush2.msra.mxu0 0.0
    %1889 = vmatprep.subr.mxu0 0.0
    %1890 = vmatpush2.msra.mxu0 0.0
    %1891 = vmatprep.mubr.f32.mxu0 0.0
    %1892 = vmatmul.mubr.f32.gmra.mxu0 %v1825
    %v1893 = vpop.f32.mrf.mxu0
    %v1894 = vadd.f32 0.0, %v1893
    %v1895 = vpop.f32.mrf.mxu0
    %1896 = vdwg.mxu0
    %v1897 = vadd.f32 %v1824, %v1894
    %v1898 = vxor.u32 %v1897, 2147483648
    %v1899 = vmul.f32 %v1898, 1.442695
    %v1900 = vpow.pop %v1899
    %v1901 = vadd.f32 %v1900, 1.0
    %v1902 = vrcp.pop %v1901
    %v1903 = vmul.f32 1.0, %v1902
    %v1904 = vtanh.pop %v1897
    %v1905 = vmul.f32 %v1903, %v1808
    %1907 = vrot.lane.b32.xlu0 %v1904, 32
    %v1908 = vpop.permute.xlu0 %1907
    %v1910 = vmul.f32 %v1903, %v1908
    %1912 = vrot.lane.b32.xlu0 %v1910, 32
    %v1913 = vpop.permute.xlu0 %1912
    %v1915 = vadd.f32 %v1905, %v1913
    %v1916 = vtanh.pop %v1915
    %1918 = vrot.lane.b32.xlu0 %v1916, 32
    %v1919 = vpop.permute.xlu0 %1918
    %v1921 = vmul.f32 %v1903, %v1919
    %1923 = vrot.lane.b32.xlu0 %v1921, 64
    %v1924 = vpop.permute.xlu0 %1923
    %s1926 = scalar_lea.vmem [#allocation3], 56
    %1927 = vst.msk [vmem:[%s1926] sm:$0xff] %vm1075, %v1924
    %s1928 = scalar_lea.vmem %s4, 32
    %v1929 = vld [vmem:[%s1928] sm:$0xff]
    %v1930 = vld [vmem:[%s1928 + $0x8] sm:$0xff]
    %v1931 = vld [vmem:[%s1928 + $0x10] sm:$0xff]
    %v1932 = vld [vmem:[%s1928 + $0x18] sm:$0xff]
    %v1933 = vld [vmem:[%s1823 + $0x8] sm:$0xff]
    %1934 = vmatprep.subr.mxu0 0.0
    %1935 = vmatpush1.msra.mxu0 0.0
    %1936 = vmatprep.subr.mxu0 0.0
    %1937 = vmatpush1.msra.mxu0 0.0
    %1938 = vmatprep.subr.mxu0 0.0
    %1939 = vmatpush1.msra.mxu0 0.0
    %1940 = vmatprep.subr.mxu0 0.0
    %1941 = vmatpush1.msra.mxu0 0.0
    %1942 = vmatprep.subr.mxu0 0.0
    %1943 = vmatpush1.msra.mxu0 0.0
    %1944 = vmatprep.subr.mxu0 0.0
    %1945 = vmatpush1.msra.mxu0 0.0
    %1946 = vmatprep.subr.mxu0 0.0
    %1947 = vmatpush1.msra.mxu0 0.0
    %1948 = vmatprep.subr.mxu0 0.0
    %1949 = vmatpush1.msra.mxu0 0.0
    %1950 = vmatprep.subr.mxu0 0.0
    %1951 = vmatpush1.msra.mxu0 0.0
    %1952 = vmatprep.subr.mxu0 0.0
    %1953 = vmatpush1.msra.mxu0 0.0
    %1954 = vmatprep.subr.mxu0 0.0
    %1955 = vmatpush1.msra.mxu0 0.0
    %1956 = vmatprep.subr.mxu0 0.0
    %1957 = vmatpush1.msra.mxu0 0.0
    %1958 = vmatprep.subr.mxu0 0.0
    %1959 = vmatpush1.msra.mxu0 %v1932
    %1960 = vmatprep.subr.mxu0 0.0
    %1961 = vmatpush1.msra.mxu0 %v1931
    %1962 = vmatprep.subr.mxu0 0.0
    %1963 = vmatpush1.msra.mxu0 %v1930
    %1964 = vmatprep.subr.mxu0 0.0
    %1965 = vmatpush1.msra.mxu0 %v1929
    %1966 = vmatprep.subr.mxu0 0.0
    %1967 = vmatpush2.msra.mxu0 0.0
    %1968 = vmatprep.subr.mxu0 0.0
    %1969 = vmatpush2.msra.mxu0 0.0
    %1970 = vmatprep.subr.mxu0 0.0
    %1971 = vmatpush2.msra.mxu0 0.0
    %1972 = vmatprep.subr.mxu0 0.0
    %1973 = vmatpush2.msra.mxu0 0.0
    %1974 = vmatprep.subr.mxu0 0.0
    %1975 = vmatpush2.msra.mxu0 0.0
    %1976 = vmatprep.subr.mxu0 0.0
    %1977 = vmatpush2.msra.mxu0 0.0
    %1978 = vmatprep.subr.mxu0 0.0
    %1979 = vmatpush2.msra.mxu0 0.0
    %1980 = vmatprep.subr.mxu0 0.0
    %1981 = vmatpush2.msra.mxu0 0.0
    %1982 = vmatprep.subr.mxu0 0.0
    %1983 = vmatpush2.msra.mxu0 0.0
    %1984 = vmatprep.subr.mxu0 0.0
    %1985 = vmatpush2.msra.mxu0 0.0
    %1986 = vmatprep.subr.mxu0 0.0
    %1987 = vmatpush2.msra.mxu0 0.0
    %1988 = vmatprep.subr.mxu0 0.0
    %1989 = vmatpush2.msra.mxu0 0.0
    %1990 = vmatprep.subr.mxu0 0.0
    %1991 = vmatpush2.msra.mxu0 0.0
    %1992 = vmatprep.subr.mxu0 0.0
    %1993 = vmatpush2.msra.mxu0 0.0
    %1994 = vmatprep.subr.mxu0 0.0
    %1995 = vmatpush2.msra.mxu0 0.0
    %1996 = vmatprep.subr.mxu0 0.0
    %1997 = vmatpush2.msra.mxu0 0.0
    %1998 = vmatprep.mubr.f32.mxu0 0.0
    %1999 = vmatmul.mubr.f32.gmra.mxu0 %v1077
    %v2000 = vpop.f32.mrf.mxu0
    %v2001 = vadd.f32 0.0, %v2000
    %v2002 = vpop.f32.mrf.mxu0
    %2003 = vdwg.mxu0
    %v2004 = vadd.f32 %v1933, %v2001
    %v2005 = vxor.u32 %v2004, 2147483648
    %v2006 = vmul.f32 %v2005, 1.442695
    %v2007 = vpow.pop %v2006
    %v2008 = vadd.f32 %v2007, 1.0
    %v2009 = vrcp.pop %v2008
    %v2010 = vmul.f32 1.0, %v2009
    %v2011 = vtanh.pop %v2004
    %v2012 = vmul.f32 %v2010, 0.0
    %2014 = vrot.lane.b32.xlu0 %v2011, 32
    %v2015 = vpop.permute.xlu0 %2014
    %v2017 = vmul.f32 %v2010, %v2015
    %2019 = vrot.lane.b32.xlu0 %v2017, 32
    %v2020 = vpop.permute.xlu0 %2019
    %v2022 = vadd.f32 %v2012, %v2020
    %v2023 = vtanh.pop %v2022
    %2025 = vrot.lane.b32.xlu0 %v2023, 32
    %v2026 = vpop.permute.xlu0 %2025
    %v2028 = vmul.f32 %v2010, %v2026
    %2030 = vrot.lane.b32.xlu0 %v2028, 96
    %v2031 = vpop.permute.xlu0 %2030
    %vm2033 = vcmask 523520
    %2034 = vst.msk [vmem:[%s1926] sm:$0xff] %vm2033, %v2031
    %v2035 = vld [vmem:[%s1716 + $0x8] sm:$0xff]
    %2036 = vrot.lane.b32.xlu0 %v2028, 64
    %v2037 = vpop.permute.xlu0 %2036
    %v2038 = vsel %vm1075, %v2037, 0
    %2040 = vmatprep.subr.mxu0 0.0
    %2041 = vmatpush1.msra.mxu0 0.0
    %2042 = vmatprep.subr.mxu0 0.0
    %2043 = vmatpush1.msra.mxu0 0.0
    %2044 = vmatprep.subr.mxu0 0.0
    %2045 = vmatpush1.msra.mxu0 0.0
    %2046 = vmatprep.subr.mxu0 0.0
    %2047 = vmatpush1.msra.mxu0 0.0
    %2048 = vmatprep.subr.mxu0 0.0
    %2049 = vmatpush1.msra.mxu0 0.0
    %2050 = vmatprep.subr.mxu0 0.0
    %2051 = vmatpush1.msra.mxu0 0.0
    %2052 = vmatprep.subr.mxu0 0.0
    %2053 = vmatpush1.msra.mxu0 0.0
    %2054 = vmatprep.subr.mxu0 0.0
    %2055 = vmatpush1.msra.mxu0 0.0
    %2056 = vmatprep.subr.mxu0 0.0
    %2057 = vmatpush1.msra.mxu0 0.0
    %2058 = vmatprep.subr.mxu0 0.0
    %2059 = vmatpush1.msra.mxu0 0.0
    %2060 = vmatprep.subr.mxu0 0.0
    %2061 = vmatpush1.msra.mxu0 0.0
    %2062 = vmatprep.subr.mxu0 0.0
    %2063 = vmatpush1.msra.mxu0 0.0
    %2064 = vmatprep.subr.mxu0 0.0
    %2065 = vmatpush1.msra.mxu0 %v1932
    %2066 = vmatprep.subr.mxu0 0.0
    %2067 = vmatpush1.msra.mxu0 %v1931
    %2068 = vmatprep.subr.mxu0 0.0
    %2069 = vmatpush1.msra.mxu0 %v1930
    %2070 = vmatprep.subr.mxu0 0.0
    %2071 = vmatpush1.msra.mxu0 %v1929
    %2072 = vmatprep.subr.mxu0 0.0
    %2073 = vmatpush2.msra.mxu0 0.0
    %2074 = vmatprep.subr.mxu0 0.0
    %2075 = vmatpush2.msra.mxu0 0.0
    %2076 = vmatprep.subr.mxu0 0.0
    %2077 = vmatpush2.msra.mxu0 0.0
    %2078 = vmatprep.subr.mxu0 0.0
    %2079 = vmatpush2.msra.mxu0 0.0
    %2080 = vmatprep.subr.mxu0 0.0
    %2081 = vmatpush2.msra.mxu0 0.0
    %2082 = vmatprep.subr.mxu0 0.0
    %2083 = vmatpush2.msra.mxu0 0.0
    %2084 = vmatprep.subr.mxu0 0.0
    %2085 = vmatpush2.msra.mxu0 0.0
    %2086 = vmatprep.subr.mxu0 0.0
    %2087 = vmatpush2.msra.mxu0 0.0
    %2088 = vmatprep.subr.mxu0 0.0
    %2089 = vmatpush2.msra.mxu0 0.0
    %2090 = vmatprep.subr.mxu0 0.0
    %2091 = vmatpush2.msra.mxu0 0.0
    %2092 = vmatprep.subr.mxu0 0.0
    %2093 = vmatpush2.msra.mxu0 0.0
    %2094 = vmatprep.subr.mxu0 0.0
    %2095 = vmatpush2.msra.mxu0 0.0
    %2096 = vmatprep.subr.mxu0 0.0
    %2097 = vmatpush2.msra.mxu0 0.0
    %2098 = vmatprep.subr.mxu0 0.0
    %2099 = vmatpush2.msra.mxu0 0.0
    %2100 = vmatprep.subr.mxu0 0.0
    %2101 = vmatpush2.msra.mxu0 0.0
    %2102 = vmatprep.subr.mxu0 0.0
    %2103 = vmatpush2.msra.mxu0 0.0
    %2104 = vmatprep.mubr.f32.mxu0 0.0
    %2105 = vmatmul.mubr.f32.gmra.mxu0 %v2038
    %v2106 = vpop.f32.mrf.mxu0
    %v2107 = vadd.f32 0.0, %v2106
    %v2108 = vpop.f32.mrf.mxu0
    %2109 = vdwg.mxu0
    %v2110 = vadd.f32 %v2035, %v2107
    %v2111 = vxor.u32 %v2110, 2147483648
    %v2112 = vmul.f32 %v2111, 1.442695
    %v2113 = vpow.pop %v2112
    %v2114 = vadd.f32 %v2113, 1.0
    %v2115 = vrcp.pop %v2114
    %v2116 = vmul.f32 1.0, %v2115
    %v2117 = vtanh.pop %v2110
    %v2118 = vmul.f32 %v2116, %v2022
    %2120 = vrot.lane.b32.xlu0 %v2117, 32
    %v2121 = vpop.permute.xlu0 %2120
    %v2123 = vmul.f32 %v2116, %v2121
    %2125 = vrot.lane.b32.xlu0 %v2123, 32
    %v2126 = vpop.permute.xlu0 %2125
    %v2128 = vadd.f32 %v2118, %v2126
    %v2129 = vtanh.pop %v2128
    %2131 = vrot.lane.b32.xlu0 %v2129, 32
    %v2132 = vpop.permute.xlu0 %2131
    %v2134 = vmul.f32 %v2116, %v2132
    %2136 = vrot.lane.b32.xlu0 %v2134, 96
    %v2137 = vpop.permute.xlu0 %2136
    %2139 = vst.msk [vmem:[%s1819] sm:$0xff] %vm2033, %v2137
    %v2140 = vld [vmem:[%s1609 + $0x8] sm:$0xff]
    %2141 = vrot.lane.b32.xlu0 %v2134, 64
    %v2142 = vpop.permute.xlu0 %2141
    %v2143 = vsel %vm1075, %v2142, 0
    %2145 = vmatprep.subr.mxu0 0.0
    %2146 = vmatpush1.msra.mxu0 0.0
    %2147 = vmatprep.subr.mxu0 0.0
    %2148 = vmatpush1.msra.mxu0 0.0
    %2149 = vmatprep.subr.mxu0 0.0
    %2150 = vmatpush1.msra.mxu0 0.0
    %2151 = vmatprep.subr.mxu0 0.0
    %2152 = vmatpush1.msra.mxu0 0.0
    %2153 = vmatprep.subr.mxu0 0.0
    %2154 = vmatpush1.msra.mxu0 0.0
    %2155 = vmatprep.subr.mxu0 0.0
    %2156 = vmatpush1.msra.mxu0 0.0
    %2157 = vmatprep.subr.mxu0 0.0
    %2158 = vmatpush1.msra.mxu0 0.0
    %2159 = vmatprep.subr.mxu0 0.0
    %2160 = vmatpush1.msra.mxu0 0.0
    %2161 = vmatprep.subr.mxu0 0.0
    %2162 = vmatpush1.msra.mxu0 0.0
    %2163 = vmatprep.subr.mxu0 0.0
    %2164 = vmatpush1.msra.mxu0 0.0
    %2165 = vmatprep.subr.mxu0 0.0
    %2166 = vmatpush1.msra.mxu0 0.0
    %2167 = vmatprep.subr.mxu0 0.0
    %2168 = vmatpush1.msra.mxu0 0.0
    %2169 = vmatprep.subr.mxu0 0.0
    %2170 = vmatpush1.msra.mxu0 %v1932
    %2171 = vmatprep.subr.mxu0 0.0
    %2172 = vmatpush1.msra.mxu0 %v1931
    %2173 = vmatprep.subr.mxu0 0.0
    %2174 = vmatpush1.msra.mxu0 %v1930
    %2175 = vmatprep.subr.mxu0 0.0
    %2176 = vmatpush1.msra.mxu0 %v1929
    %2177 = vmatprep.subr.mxu0 0.0
    %2178 = vmatpush2.msra.mxu0 0.0
    %2179 = vmatprep.subr.mxu0 0.0
    %2180 = vmatpush2.msra.mxu0 0.0
    %2181 = vmatprep.subr.mxu0 0.0
    %2182 = vmatpush2.msra.mxu0 0.0
    %2183 = vmatprep.subr.mxu0 0.0
    %2184 = vmatpush2.msra.mxu0 0.0
    %2185 = vmatprep.subr.mxu0 0.0
    %2186 = vmatpush2.msra.mxu0 0.0
    %2187 = vmatprep.subr.mxu0 0.0
    %2188 = vmatpush2.msra.mxu0 0.0
    %2189 = vmatprep.subr.mxu0 0.0
    %2190 = vmatpush2.msra.mxu0 0.0
    %2191 = vmatprep.subr.mxu0 0.0
    %2192 = vmatpush2.msra.mxu0 0.0
    %2193 = vmatprep.subr.mxu0 0.0
    %2194 = vmatpush2.msra.mxu0 0.0
    %2195 = vmatprep.subr.mxu0 0.0
    %2196 = vmatpush2.msra.mxu0 0.0
    %2197 = vmatprep.subr.mxu0 0.0
    %2198 = vmatpush2.msra.mxu0 0.0
    %2199 = vmatprep.subr.mxu0 0.0
    %2200 = vmatpush2.msra.mxu0 0.0
    %2201 = vmatprep.subr.mxu0 0.0
    %2202 = vmatpush2.msra.mxu0 0.0
    %2203 = vmatprep.subr.mxu0 0.0
    %2204 = vmatpush2.msra.mxu0 0.0
    %2205 = vmatprep.subr.mxu0 0.0
    %2206 = vmatpush2.msra.mxu0 0.0
    %2207 = vmatprep.subr.mxu0 0.0
    %2208 = vmatpush2.msra.mxu0 0.0
    %2209 = vmatprep.mubr.f32.mxu0 0.0
    %2210 = vmatmul.mubr.f32.gmra.mxu0 %v2143
    %v2211 = vpop.f32.mrf.mxu0
    %v2212 = vadd.f32 0.0, %v2211
    %v2213 = vpop.f32.mrf.mxu0
    %2214 = vdwg.mxu0
    %v2215 = vadd.f32 %v2140, %v2212
    %v2216 = vxor.u32 %v2215, 2147483648
    %v2217 = vmul.f32 %v2216, 1.442695
    %v2218 = vpow.pop %v2217
    %v2219 = vadd.f32 %v2218, 1.0
    %v2220 = vrcp.pop %v2219
    %v2221 = vmul.f32 1.0, %v2220
    %v2222 = vtanh.pop %v2215
    %v2223 = vmul.f32 %v2221, %v2128
    %2225 = vrot.lane.b32.xlu0 %v2222, 32
    %v2226 = vpop.permute.xlu0 %2225
    %v2228 = vmul.f32 %v2221, %v2226
    %2230 = vrot.lane.b32.xlu0 %v2228, 32
    %v2231 = vpop.permute.xlu0 %2230
    %v2233 = vadd.f32 %v2223, %v2231
    %v2234 = vtanh.pop %v2233
    %2236 = vrot.lane.b32.xlu0 %v2234, 32
    %v2237 = vpop.permute.xlu0 %2236
    %v2239 = vmul.f32 %v2221, %v2237
    %2241 = vrot.lane.b32.xlu0 %v2239, 96
    %v2242 = vpop.permute.xlu0 %2241
    %2244 = vst.msk [vmem:[%s1712] sm:$0xff] %vm2033, %v2242
    %v2245 = vld [vmem:[%s1502 + $0x8] sm:$0xff]
    %2246 = vrot.lane.b32.xlu0 %v2239, 64
    %v2247 = vpop.permute.xlu0 %2246
    %v2248 = vsel %vm1075, %v2247, 0
    %2250 = vmatprep.subr.mxu0 0.0
    %2251 = vmatpush1.msra.mxu0 0.0
    %2252 = vmatprep.subr.mxu0 0.0
    %2253 = vmatpush1.msra.mxu0 0.0
    %2254 = vmatprep.subr.mxu0 0.0
    %2255 = vmatpush1.msra.mxu0 0.0
    %2256 = vmatprep.subr.mxu0 0.0
    %2257 = vmatpush1.msra.mxu0 0.0
    %2258 = vmatprep.subr.mxu0 0.0
    %2259 = vmatpush1.msra.mxu0 0.0
    %2260 = vmatprep.subr.mxu0 0.0
    %2261 = vmatpush1.msra.mxu0 0.0
    %2262 = vmatprep.subr.mxu0 0.0
    %2263 = vmatpush1.msra.mxu0 0.0
    %2264 = vmatprep.subr.mxu0 0.0
    %2265 = vmatpush1.msra.mxu0 0.0
    %2266 = vmatprep.subr.mxu0 0.0
    %2267 = vmatpush1.msra.mxu0 0.0
    %2268 = vmatprep.subr.mxu0 0.0
    %2269 = vmatpush1.msra.mxu0 0.0
    %2270 = vmatprep.subr.mxu0 0.0
    %2271 = vmatpush1.msra.mxu0 0.0
    %2272 = vmatprep.subr.mxu0 0.0
    %2273 = vmatpush1.msra.mxu0 0.0
    %2274 = vmatprep.subr.mxu0 0.0
    %2275 = vmatpush1.msra.mxu0 %v1932
    %2276 = vmatprep.subr.mxu0 0.0
    %2277 = vmatpush1.msra.mxu0 %v1931
    %2278 = vmatprep.subr.mxu0 0.0
    %2279 = vmatpush1.msra.mxu0 %v1930
    %2280 = vmatprep.subr.mxu0 0.0
    %2281 = vmatpush1.msra.mxu0 %v1929
    %2282 = vmatprep.subr.mxu0 0.0
    %2283 = vmatpush2.msra.mxu0 0.0
    %2284 = vmatprep.subr.mxu0 0.0
    %2285 = vmatpush2.msra.mxu0 0.0
    %2286 = vmatprep.subr.mxu0 0.0
    %2287 = vmatpush2.msra.mxu0 0.0
    %2288 = vmatprep.subr.mxu0 0.0
    %2289 = vmatpush2.msra.mxu0 0.0
    %2290 = vmatprep.subr.mxu0 0.0
    %2291 = vmatpush2.msra.mxu0 0.0
    %2292 = vmatprep.subr.mxu0 0.0
    %2293 = vmatpush2.msra.mxu0 0.0
    %2294 = vmatprep.subr.mxu0 0.0
    %2295 = vmatpush2.msra.mxu0 0.0
    %2296 = vmatprep.subr.mxu0 0.0
    %2297 = vmatpush2.msra.mxu0 0.0
    %2298 = vmatprep.subr.mxu0 0.0
    %2299 = vmatpush2.msra.mxu0 0.0
    %2300 = vmatprep.subr.mxu0 0.0
    %2301 = vmatpush2.msra.mxu0 0.0
    %2302 = vmatprep.subr.mxu0 0.0
    %2303 = vmatpush2.msra.mxu0 0.0
    %2304 = vmatprep.subr.mxu0 0.0
    %2305 = vmatpush2.msra.mxu0 0.0
    %2306 = vmatprep.subr.mxu0 0.0
    %2307 = vmatpush2.msra.mxu0 0.0
    %2308 = vmatprep.subr.mxu0 0.0
    %2309 = vmatpush2.msra.mxu0 0.0
    %2310 = vmatprep.subr.mxu0 0.0
    %2311 = vmatpush2.msra.mxu0 0.0
    %2312 = vmatprep.subr.mxu0 0.0
    %2313 = vmatpush2.msra.mxu0 0.0
    %2314 = vmatprep.mubr.f32.mxu0 0.0
    %2315 = vmatmul.mubr.f32.gmra.mxu0 %v2248
    %v2316 = vpop.f32.mrf.mxu0
    %v2317 = vadd.f32 0.0, %v2316
    %v2318 = vpop.f32.mrf.mxu0
    %2319 = vdwg.mxu0
    %v2320 = vadd.f32 %v2245, %v2317
    %v2321 = vxor.u32 %v2320, 2147483648
    %v2322 = vmul.f32 %v2321, 1.442695
    %v2323 = vpow.pop %v2322
    %v2324 = vadd.f32 %v2323, 1.0
    %v2325 = vrcp.pop %v2324
    %v2326 = vmul.f32 1.0, %v2325
    %v2327 = vtanh.pop %v2320
    %v2328 = vmul.f32 %v2326, %v2233
    %2330 = vrot.lane.b32.xlu0 %v2327, 32
    %v2331 = vpop.permute.xlu0 %2330
    %v2333 = vmul.f32 %v2326, %v2331
    %2335 = vrot.lane.b32.xlu0 %v2333, 32
    %v2336 = vpop.permute.xlu0 %2335
    %v2338 = vadd.f32 %v2328, %v2336
    %v2339 = vtanh.pop %v2338
    %2341 = vrot.lane.b32.xlu0 %v2339, 32
    %v2342 = vpop.permute.xlu0 %2341
    %v2344 = vmul.f32 %v2326, %v2342
    %2346 = vrot.lane.b32.xlu0 %v2344, 96
    %v2347 = vpop.permute.xlu0 %2346
    %2349 = vst.msk [vmem:[%s1605] sm:$0xff] %vm2033, %v2347
    %v2350 = vld [vmem:[%s1395 + $0x8] sm:$0xff]
    %2351 = vrot.lane.b32.xlu0 %v2344, 64
    %v2352 = vpop.permute.xlu0 %2351
    %v2353 = vsel %vm1075, %v2352, 0
    %2355 = vmatprep.subr.mxu0 0.0
    %2356 = vmatpush1.msra.mxu0 0.0
    %2357 = vmatprep.subr.mxu0 0.0
    %2358 = vmatpush1.msra.mxu0 0.0
    %2359 = vmatprep.subr.mxu0 0.0
    %2360 = vmatpush1.msra.mxu0 0.0
    %2361 = vmatprep.subr.mxu0 0.0
    %2362 = vmatpush1.msra.mxu0 0.0
    %2363 = vmatprep.subr.mxu0 0.0
    %2364 = vmatpush1.msra.mxu0 0.0
    %2365 = vmatprep.subr.mxu0 0.0
    %2366 = vmatpush1.msra.mxu0 0.0
    %2367 = vmatprep.subr.mxu0 0.0
    %2368 = vmatpush1.msra.mxu0 0.0
    %2369 = vmatprep.subr.mxu0 0.0
    %2370 = vmatpush1.msra.mxu0 0.0
    %2371 = vmatprep.subr.mxu0 0.0
    %2372 = vmatpush1.msra.mxu0 0.0
    %2373 = vmatprep.subr.mxu0 0.0
    %2374 = vmatpush1.msra.mxu0 0.0
    %2375 = vmatprep.subr.mxu0 0.0
    %2376 = vmatpush1.msra.mxu0 0.0
    %2377 = vmatprep.subr.mxu0 0.0
    %2378 = vmatpush1.msra.mxu0 0.0
    %2379 = vmatprep.subr.mxu0 0.0
    %2380 = vmatpush1.msra.mxu0 %v1932
    %2381 = vmatprep.subr.mxu0 0.0
    %2382 = vmatpush1.msra.mxu0 %v1931
    %2383 = vmatprep.subr.mxu0 0.0
    %2384 = vmatpush1.msra.mxu0 %v1930
    %2385 = vmatprep.subr.mxu0 0.0
    %2386 = vmatpush1.msra.mxu0 %v1929
    %2387 = vmatprep.subr.mxu0 0.0
    %2388 = vmatpush2.msra.mxu0 0.0
    %2389 = vmatprep.subr.mxu0 0.0
    %2390 = vmatpush2.msra.mxu0 0.0
    %2391 = vmatprep.subr.mxu0 0.0
    %2392 = vmatpush2.msra.mxu0 0.0
    %2393 = vmatprep.subr.mxu0 0.0
    %2394 = vmatpush2.msra.mxu0 0.0
    %2395 = vmatprep.subr.mxu0 0.0
    %2396 = vmatpush2.msra.mxu0 0.0
    %2397 = vmatprep.subr.mxu0 0.0
    %2398 = vmatpush2.msra.mxu0 0.0
    %2399 = vmatprep.subr.mxu0 0.0
    %2400 = vmatpush2.msra.mxu0 0.0
    %2401 = vmatprep.subr.mxu0 0.0
    %2402 = vmatpush2.msra.mxu0 0.0
    %2403 = vmatprep.subr.mxu0 0.0
    %2404 = vmatpush2.msra.mxu0 0.0
    %2405 = vmatprep.subr.mxu0 0.0
    %2406 = vmatpush2.msra.mxu0 0.0
    %2407 = vmatprep.subr.mxu0 0.0
    %2408 = vmatpush2.msra.mxu0 0.0
    %2409 = vmatprep.subr.mxu0 0.0
    %2410 = vmatpush2.msra.mxu0 0.0
    %2411 = vmatprep.subr.mxu0 0.0
    %2412 = vmatpush2.msra.mxu0 0.0
    %2413 = vmatprep.subr.mxu0 0.0
    %2414 = vmatpush2.msra.mxu0 0.0
    %2415 = vmatprep.subr.mxu0 0.0
    %2416 = vmatpush2.msra.mxu0 0.0
    %2417 = vmatprep.subr.mxu0 0.0
    %2418 = vmatpush2.msra.mxu0 0.0
    %2419 = vmatprep.mubr.f32.mxu0 0.0
    %2420 = vmatmul.mubr.f32.gmra.mxu0 %v2353
    %v2421 = vpop.f32.mrf.mxu0
    %v2422 = vadd.f32 0.0, %v2421
    %v2423 = vpop.f32.mrf.mxu0
    %2424 = vdwg.mxu0
    %v2425 = vadd.f32 %v2350, %v2422
    %v2426 = vxor.u32 %v2425, 2147483648
    %v2427 = vmul.f32 %v2426, 1.442695
    %v2428 = vpow.pop %v2427
    %v2429 = vadd.f32 %v2428, 1.0
    %v2430 = vrcp.pop %v2429
    %v2431 = vmul.f32 1.0, %v2430
    %v2432 = vtanh.pop %v2425
    %v2433 = vmul.f32 %v2431, %v2338
    %2435 = vrot.lane.b32.xlu0 %v2432, 32
    %v2436 = vpop.permute.xlu0 %2435
    %v2438 = vmul.f32 %v2431, %v2436
    %2440 = vrot.lane.b32.xlu0 %v2438, 32
    %v2441 = vpop.permute.xlu0 %2440
    %v2443 = vadd.f32 %v2433, %v2441
    %v2444 = vtanh.pop %v2443
    %2446 = vrot.lane.b32.xlu0 %v2444, 32
    %v2447 = vpop.permute.xlu0 %2446
    %v2449 = vmul.f32 %v2431, %v2447
    %2451 = vrot.lane.b32.xlu0 %v2449, 96
    %v2452 = vpop.permute.xlu0 %2451
    %2454 = vst.msk [vmem:[%s1498] sm:$0xff] %vm2033, %v2452
    %v2455 = vld [vmem:[%s1288 + $0x8] sm:$0xff]
    %2456 = vrot.lane.b32.xlu0 %v2449, 64
    %v2457 = vpop.permute.xlu0 %2456
    %v2458 = vsel %vm1075, %v2457, 0
    %2460 = vmatprep.subr.mxu0 0.0
    %2461 = vmatpush1.msra.mxu0 0.0
    %2462 = vmatprep.subr.mxu0 0.0
    %2463 = vmatpush1.msra.mxu0 0.0
    %2464 = vmatprep.subr.mxu0 0.0
    %2465 = vmatpush1.msra.mxu0 0.0
    %2466 = vmatprep.subr.mxu0 0.0
    %2467 = vmatpush1.msra.mxu0 0.0
    %2468 = vmatprep.subr.mxu0 0.0
    %2469 = vmatpush1.msra.mxu0 0.0
    %2470 = vmatprep.subr.mxu0 0.0
    %2471 = vmatpush1.msra.mxu0 0.0
    %2472 = vmatprep.subr.mxu0 0.0
    %2473 = vmatpush1.msra.mxu0 0.0
    %2474 = vmatprep.subr.mxu0 0.0
    %2475 = vmatpush1.msra.mxu0 0.0
    %2476 = vmatprep.subr.mxu0 0.0
    %2477 = vmatpush1.msra.mxu0 0.0
    %2478 = vmatprep.subr.mxu0 0.0
    %2479 = vmatpush1.msra.mxu0 0.0
    %2480 = vmatprep.subr.mxu0 0.0
    %2481 = vmatpush1.msra.mxu0 0.0
    %2482 = vmatprep.subr.mxu0 0.0
    %2483 = vmatpush1.msra.mxu0 0.0
    %2484 = vmatprep.subr.mxu0 0.0
    %2485 = vmatpush1.msra.mxu0 %v1932
    %2486 = vmatprep.subr.mxu0 0.0
    %2487 = vmatpush1.msra.mxu0 %v1931
    %2488 = vmatprep.subr.mxu0 0.0
    %2489 = vmatpush1.msra.mxu0 %v1930
    %2490 = vmatprep.subr.mxu0 0.0
    %2491 = vmatpush1.msra.mxu0 %v1929
    %2492 = vmatprep.subr.mxu0 0.0
    %2493 = vmatpush2.msra.mxu0 0.0
    %2494 = vmatprep.subr.mxu0 0.0
    %2495 = vmatpush2.msra.mxu0 0.0
    %2496 = vmatprep.subr.mxu0 0.0
    %2497 = vmatpush2.msra.mxu0 0.0
    %2498 = vmatprep.subr.mxu0 0.0
    %2499 = vmatpush2.msra.mxu0 0.0
    %2500 = vmatprep.subr.mxu0 0.0
    %2501 = vmatpush2.msra.mxu0 0.0
    %2502 = vmatprep.subr.mxu0 0.0
    %2503 = vmatpush2.msra.mxu0 0.0
    %2504 = vmatprep.subr.mxu0 0.0
    %2505 = vmatpush2.msra.mxu0 0.0
    %2506 = vmatprep.subr.mxu0 0.0
    %2507 = vmatpush2.msra.mxu0 0.0
    %2508 = vmatprep.subr.mxu0 0.0
    %2509 = vmatpush2.msra.mxu0 0.0
    %2510 = vmatprep.subr.mxu0 0.0
    %2511 = vmatpush2.msra.mxu0 0.0
    %2512 = vmatprep.subr.mxu0 0.0
    %2513 = vmatpush2.msra.mxu0 0.0
    %2514 = vmatprep.subr.mxu0 0.0
    %2515 = vmatpush2.msra.mxu0 0.0
    %2516 = vmatprep.subr.mxu0 0.0
    %2517 = vmatpush2.msra.mxu0 0.0
    %2518 = vmatprep.subr.mxu0 0.0
    %2519 = vmatpush2.msra.mxu0 0.0
    %2520 = vmatprep.subr.mxu0 0.0
    %2521 = vmatpush2.msra.mxu0 0.0
    %2522 = vmatprep.subr.mxu0 0.0
    %2523 = vmatpush2.msra.mxu0 0.0
    %2524 = vmatprep.mubr.f32.mxu0 0.0
    %2525 = vmatmul.mubr.f32.gmra.mxu0 %v2458
    %v2526 = vpop.f32.mrf.mxu0
    %v2527 = vadd.f32 0.0, %v2526
    %v2528 = vpop.f32.mrf.mxu0
    %2529 = vdwg.mxu0
    %v2530 = vadd.f32 %v2455, %v2527
    %v2531 = vxor.u32 %v2530, 2147483648
    %v2532 = vmul.f32 %v2531, 1.442695
    %v2533 = vpow.pop %v2532
    %v2534 = vadd.f32 %v2533, 1.0
    %v2535 = vrcp.pop %v2534
    %v2536 = vmul.f32 1.0, %v2535
    %v2537 = vtanh.pop %v2530
    %v2538 = vmul.f32 %v2536, %v2443
    %2540 = vrot.lane.b32.xlu0 %v2537, 32
    %v2541 = vpop.permute.xlu0 %2540
    %v2543 = vmul.f32 %v2536, %v2541
    %2545 = vrot.lane.b32.xlu0 %v2543, 32
    %v2546 = vpop.permute.xlu0 %2545
    %v2548 = vadd.f32 %v2538, %v2546
    %v2549 = vtanh.pop %v2548
    %2551 = vrot.lane.b32.xlu0 %v2549, 32
    %v2552 = vpop.permute.xlu0 %2551
    %v2554 = vmul.f32 %v2536, %v2552
    %2556 = vrot.lane.b32.xlu0 %v2554, 96
    %v2557 = vpop.permute.xlu0 %2556
    %2559 = vst.msk [vmem:[%s1391] sm:$0xff] %vm2033, %v2557
    %v2560 = vld [vmem:[%s1181 + $0x8] sm:$0xff]
    %2561 = vrot.lane.b32.xlu0 %v2554, 64
    %v2562 = vpop.permute.xlu0 %2561
    %v2563 = vsel %vm1075, %v2562, 0
    %2565 = vmatprep.subr.mxu0 0.0
    %2566 = vmatpush1.msra.mxu0 0.0
    %2567 = vmatprep.subr.mxu0 0.0
    %2568 = vmatpush1.msra.mxu0 0.0
    %2569 = vmatprep.subr.mxu0 0.0
    %2570 = vmatpush1.msra.mxu0 0.0
    %2571 = vmatprep.subr.mxu0 0.0
    %2572 = vmatpush1.msra.mxu0 0.0
    %2573 = vmatprep.subr.mxu0 0.0
    %2574 = vmatpush1.msra.mxu0 0.0
    %2575 = vmatprep.subr.mxu0 0.0
    %2576 = vmatpush1.msra.mxu0 0.0
    %2577 = vmatprep.subr.mxu0 0.0
    %2578 = vmatpush1.msra.mxu0 0.0
    %2579 = vmatprep.subr.mxu0 0.0
    %2580 = vmatpush1.msra.mxu0 0.0
    %2581 = vmatprep.subr.mxu0 0.0
    %2582 = vmatpush1.msra.mxu0 0.0
    %2583 = vmatprep.subr.mxu0 0.0
    %2584 = vmatpush1.msra.mxu0 0.0
    %2585 = vmatprep.subr.mxu0 0.0
    %2586 = vmatpush1.msra.mxu0 0.0
    %2587 = vmatprep.subr.mxu0 0.0
    %2588 = vmatpush1.msra.mxu0 0.0
    %2589 = vmatprep.subr.mxu0 0.0
    %2590 = vmatpush1.msra.mxu0 %v1932
    %2591 = vmatprep.subr.mxu0 0.0
    %2592 = vmatpush1.msra.mxu0 %v1931
    %2593 = vmatprep.subr.mxu0 0.0
    %2594 = vmatpush1.msra.mxu0 %v1930
    %2595 = vmatprep.subr.mxu0 0.0
    %2596 = vmatpush1.msra.mxu0 %v1929
    %2597 = vmatprep.subr.mxu0 0.0
    %2598 = vmatpush2.msra.mxu0 0.0
    %2599 = vmatprep.subr.mxu0 0.0
    %2600 = vmatpush2.msra.mxu0 0.0
    %2601 = vmatprep.subr.mxu0 0.0
    %2602 = vmatpush2.msra.mxu0 0.0
    %2603 = vmatprep.subr.mxu0 0.0
    %2604 = vmatpush2.msra.mxu0 0.0
    %2605 = vmatprep.subr.mxu0 0.0
    %2606 = vmatpush2.msra.mxu0 0.0
    %2607 = vmatprep.subr.mxu0 0.0
    %2608 = vmatpush2.msra.mxu0 0.0
    %2609 = vmatprep.subr.mxu0 0.0
    %2610 = vmatpush2.msra.mxu0 0.0
    %2611 = vmatprep.subr.mxu0 0.0
    %2612 = vmatpush2.msra.mxu0 0.0
    %2613 = vmatprep.subr.mxu0 0.0
    %2614 = vmatpush2.msra.mxu0 0.0
    %2615 = vmatprep.subr.mxu0 0.0
    %2616 = vmatpush2.msra.mxu0 0.0
    %2617 = vmatprep.subr.mxu0 0.0
    %2618 = vmatpush2.msra.mxu0 0.0
    %2619 = vmatprep.subr.mxu0 0.0
    %2620 = vmatpush2.msra.mxu0 0.0
    %2621 = vmatprep.subr.mxu0 0.0
    %2622 = vmatpush2.msra.mxu0 0.0
    %2623 = vmatprep.subr.mxu0 0.0
    %2624 = vmatpush2.msra.mxu0 0.0
    %2625 = vmatprep.subr.mxu0 0.0
    %2626 = vmatpush2.msra.mxu0 0.0
    %2627 = vmatprep.subr.mxu0 0.0
    %2628 = vmatpush2.msra.mxu0 0.0
    %2629 = vmatprep.mubr.f32.mxu0 0.0
    %2630 = vmatmul.mubr.f32.gmra.mxu0 %v2563
    %v2631 = vpop.f32.mrf.mxu0
    %v2632 = vadd.f32 0.0, %v2631
    %v2633 = vpop.f32.mrf.mxu0
    %2634 = vdwg.mxu0
    %v2635 = vadd.f32 %v2560, %v2632
    %v2636 = vxor.u32 %v2635, 2147483648
    %v2637 = vmul.f32 %v2636, 1.442695
    %v2638 = vpow.pop %v2637
    %v2639 = vadd.f32 %v2638, 1.0
    %v2640 = vrcp.pop %v2639
    %v2641 = vmul.f32 1.0, %v2640
    %v2642 = vtanh.pop %v2635
    %v2643 = vmul.f32 %v2641, %v2548
    %2645 = vrot.lane.b32.xlu0 %v2642, 32
    %v2646 = vpop.permute.xlu0 %2645
    %v2648 = vmul.f32 %v2641, %v2646
    %2650 = vrot.lane.b32.xlu0 %v2648, 32
    %v2651 = vpop.permute.xlu0 %2650
    %v2653 = vadd.f32 %v2643, %v2651
    %v2654 = vtanh.pop %v2653
    %2656 = vrot.lane.b32.xlu0 %v2654, 32
    %v2657 = vpop.permute.xlu0 %2656
    %v2659 = vmul.f32 %v2641, %v2657
    %2661 = vrot.lane.b32.xlu0 %v2659, 96
    %v2662 = vpop.permute.xlu0 %2661
    %2664 = vst.msk [vmem:[%s1284] sm:$0xff] %vm2033, %v2662
    %v2665 = vld [vmem:[%s1073 + $0x8] sm:$0xff]
    %2666 = vrot.lane.b32.xlu0 %v2659, 64
    %v2667 = vpop.permute.xlu0 %2666
    %v2668 = vsel %vm1075, %v2667, 0
    %2670 = vmatprep.subr.mxu0 0.0
    %2671 = vmatpush1.msra.mxu0 0.0
    %2672 = vmatprep.subr.mxu0 0.0
    %2673 = vmatpush1.msra.mxu0 0.0
    %2674 = vmatprep.subr.mxu0 0.0
    %2675 = vmatpush1.msra.mxu0 0.0
    %2676 = vmatprep.subr.mxu0 0.0
    %2677 = vmatpush1.msra.mxu0 0.0
    %2678 = vmatprep.subr.mxu0 0.0
    %2679 = vmatpush1.msra.mxu0 0.0
    %2680 = vmatprep.subr.mxu0 0.0
    %2681 = vmatpush1.msra.mxu0 0.0
    %2682 = vmatprep.subr.mxu0 0.0
    %2683 = vmatpush1.msra.mxu0 0.0
    %2684 = vmatprep.subr.mxu0 0.0
    %2685 = vmatpush1.msra.mxu0 0.0
    %2686 = vmatprep.subr.mxu0 0.0
    %2687 = vmatpush1.msra.mxu0 0.0
    %2688 = vmatprep.subr.mxu0 0.0
    %2689 = vmatpush1.msra.mxu0 0.0
    %2690 = vmatprep.subr.mxu0 0.0
    %2691 = vmatpush1.msra.mxu0 0.0
    %2692 = vmatprep.subr.mxu0 0.0
    %2693 = vmatpush1.msra.mxu0 0.0
    %2694 = vmatprep.subr.mxu0 0.0
    %2695 = vmatpush1.msra.mxu0 %v1932
    %2696 = vmatprep.subr.mxu0 0.0
    %2697 = vmatpush1.msra.mxu0 %v1931
    %2698 = vmatprep.subr.mxu0 0.0
    %2699 = vmatpush1.msra.mxu0 %v1930
    %2700 = vmatprep.subr.mxu0 0.0
    %2701 = vmatpush1.msra.mxu0 %v1929
    %2702 = vmatprep.subr.mxu0 0.0
    %2703 = vmatpush2.msra.mxu0 0.0
    %2704 = vmatprep.subr.mxu0 0.0
    %2705 = vmatpush2.msra.mxu0 0.0
    %2706 = vmatprep.subr.mxu0 0.0
    %2707 = vmatpush2.msra.mxu0 0.0
    %2708 = vmatprep.subr.mxu0 0.0
    %2709 = vmatpush2.msra.mxu0 0.0
    %2710 = vmatprep.subr.mxu0 0.0
    %2711 = vmatpush2.msra.mxu0 0.0
    %2712 = vmatprep.subr.mxu0 0.0
    %2713 = vmatpush2.msra.mxu0 0.0
    %2714 = vmatprep.subr.mxu0 0.0
    %2715 = vmatpush2.msra.mxu0 0.0
    %2716 = vmatprep.subr.mxu0 0.0
    %2717 = vmatpush2.msra.mxu0 0.0
    %2718 = vmatprep.subr.mxu0 0.0
    %2719 = vmatpush2.msra.mxu0 0.0
    %2720 = vmatprep.subr.mxu0 0.0
    %2721 = vmatpush2.msra.mxu0 0.0
    %2722 = vmatprep.subr.mxu0 0.0
    %2723 = vmatpush2.msra.mxu0 0.0
    %2724 = vmatprep.subr.mxu0 0.0
    %2725 = vmatpush2.msra.mxu0 0.0
    %2726 = vmatprep.subr.mxu0 0.0
    %2727 = vmatpush2.msra.mxu0 0.0
    %2728 = vmatprep.subr.mxu0 0.0
    %2729 = vmatpush2.msra.mxu0 0.0
    %2730 = vmatprep.subr.mxu0 0.0
    %2731 = vmatpush2.msra.mxu0 0.0
    %2732 = vmatprep.subr.mxu0 0.0
    %2733 = vmatpush2.msra.mxu0 0.0
    %2734 = vmatprep.mubr.f32.mxu0 0.0
    %2735 = vmatmul.mubr.f32.gmra.mxu0 %v2668
    %v2736 = vpop.f32.mrf.mxu0
    %v2737 = vadd.f32 0.0, %v2736
    %v2738 = vpop.f32.mrf.mxu0
    %2739 = vdwg.mxu0
    %v2740 = vadd.f32 %v2665, %v2737
    %v2741 = vxor.u32 %v2740, 2147483648
    %v2742 = vmul.f32 %v2741, 1.442695
    %v2743 = vpow.pop %v2742
    %v2744 = vadd.f32 %v2743, 1.0
    %v2745 = vrcp.pop %v2744
    %v2746 = vmul.f32 1.0, %v2745
    %v2747 = vtanh.pop %v2740
    %v2748 = vmul.f32 %v2746, %v2653
    %2750 = vrot.lane.b32.xlu0 %v2747, 32
    %v2751 = vpop.permute.xlu0 %2750
    %v2753 = vmul.f32 %v2746, %v2751
    %2755 = vrot.lane.b32.xlu0 %v2753, 32
    %v2756 = vpop.permute.xlu0 %2755
    %v2758 = vadd.f32 %v2748, %v2756
    %v2759 = vtanh.pop %v2758
    %2761 = vrot.lane.b32.xlu0 %v2759, 32
    %v2762 = vpop.permute.xlu0 %2761
    %v2764 = vmul.f32 %v2746, %v2762
    %2766 = vrot.lane.b32.xlu0 %v2764, 96
    %v2767 = vpop.permute.xlu0 %2766
    %2769 = vst.msk [vmem:[#allocation3] sm:$0xff] %vm2033, %v2767
    %v2770 = vld [vmem:[#allocation3] sm:$0xff]
    %v2771 = vld [vmem:[#allocation3 + $0x8] sm:$0xff]
    %v2772 = vld [vmem:[#allocation3 + $0x10] sm:$0xff]
    %v2773 = vld [vmem:[#allocation3 + $0x18] sm:$0xff]
    %v2774 = vld [vmem:[#allocation3 + $0x20] sm:$0xff]
    %v2775 = vld [vmem:[#allocation3 + $0x28] sm:$0xff]
    %v2776 = vld [vmem:[#allocation3 + $0x30] sm:$0xff]
    %v2777 = vld [vmem:[#allocation3 + $0x38] sm:$0xff]
    %v2778 = vpack.c.bf16 %v2771, %v2770
    %v2779 = vpack.c.bf16 %v2773, %v2772
    %v2780 = vpack.c.bf16 %v2775, %v2774
    %v2781 = vpack.c.bf16 %v2777, %v2776
    %v2782 = vld [vmem:[%s5] sm:$0xff]
    %v2783 = vld [vmem:[%s5 + $0x8] sm:$0xff]
    %v2784 = vld [vmem:[%s5 + $0x10] sm:$0xff]
    %v2785 = vld [vmem:[%s5 + $0x18] sm:$0xff]
    %v2786 = vld [vmem:[%s5 + $0x20] sm:$0xff]
    %v2787 = vld [vmem:[%s5 + $0x28] sm:$0xff]
    %v2788 = vld [vmem:[%s5 + $0x30] sm:$0xff]
    %v2789 = vld [vmem:[%s5 + $0x38] sm:$0xff]
    %v2798 = vunpack.c.l.b16 %v2782
    %v2799 = vunpack.c.h.b16 %v2782
    %v2800 = vunpack.c.l.b16 %v2783
    %v2801 = vunpack.c.h.b16 %v2783
    %v2802 = vunpack.c.l.b16 %v2784
    %v2803 = vunpack.c.h.b16 %v2784
    %v2804 = vunpack.c.l.b16 %v2785
    %v2805 = vunpack.c.h.b16 %v2785
    %v2806 = vunpack.c.l.b16 %v2786
    %v2807 = vunpack.c.h.b16 %v2786
    %v2808 = vunpack.c.l.b16 %v2787
    %v2809 = vunpack.c.h.b16 %v2787
    %v2810 = vunpack.c.l.b16 %v2788
    %v2811 = vunpack.c.h.b16 %v2788
    %v2812 = vunpack.c.l.b16 %v2789
    %v2813 = vunpack.c.h.b16 %v2789
    %v2814 = vpack.c.b16 %v2800, %v2798
    %v2815 = vpack.c.b16 %v2801, %v2799
    %v2816 = vpack.c.b16 %v2804, %v2802
    %v2817 = vpack.c.b16 %v2805, %v2803
    %v2818 = vpack.c.b16 %v2808, %v2806
    %v2819 = vpack.c.b16 %v2809, %v2807
    %v2820 = vpack.c.b16 %v2812, %v2810
    %v2821 = vpack.c.b16 %v2813, %v2811
    %vm2830 = vcmask 523264
    %v2832 = vsel %vm2830, %v2778, 0
    %v2835 = vsel %vm2830, %v2779, 0
    %v2838 = vsel %vm2830, %v2780, 0
    %v2841 = vsel %vm2830, %v2781, 0
    %2843 = vmatprep.subr.bf16.mxu0 0
    %2844 = vmatpush1.bf16.msra.mxu0 0
    %2845 = vmatprep.subr.bf16.mxu0 0
    %2846 = vmatpush1.bf16.msra.mxu0 0
    %2847 = vmatprep.subr.bf16.mxu0 0
    %2848 = vmatpush1.bf16.msra.mxu0 0
    %2849 = vmatprep.subr.bf16.mxu0 0
    %2850 = vmatpush1.bf16.msra.mxu0 0
    %2851 = vmatprep.subr.bf16.mxu0 %v2821
    %2852 = vmatpush1.bf16.msra.mxu0 %v2820
    %2853 = vmatprep.subr.bf16.mxu0 %v2819
    %2854 = vmatpush1.bf16.msra.mxu0 %v2818
    %2855 = vmatprep.subr.bf16.mxu0 %v2817
    %2856 = vmatpush1.bf16.msra.mxu0 %v2816
    %2857 = vmatprep.subr.bf16.mxu0 %v2815
    %2858 = vmatpush1.bf16.msra.mxu0 %v2814
    %2859 = vmatprep.subr.bf16.mxu0 0
    %2860 = vmatpush2.bf16.msra.mxu0 0
    %2861 = vmatprep.subr.bf16.mxu0 0
    %2862 = vmatpush2.bf16.msra.mxu0 0
    %2863 = vmatprep.subr.bf16.mxu0 0
    %2864 = vmatpush2.bf16.msra.mxu0 0
    %2865 = vmatprep.subr.bf16.mxu0 0
    %2866 = vmatpush2.bf16.msra.mxu0 0
    %2867 = vmatprep.subr.bf16.mxu0 0
    %2868 = vmatpush2.bf16.msra.mxu0 0
    %2869 = vmatprep.subr.bf16.mxu0 0
    %2870 = vmatpush2.bf16.msra.mxu0 0
    %2871 = vmatprep.subr.bf16.mxu0 0
    %2872 = vmatpush2.bf16.msra.mxu0 0
    %2873 = vmatprep.subr.bf16.mxu0 0
    %2874 = vmatpush2.bf16.msra.mxu0 0
    %2875 = vmatprep.mubr.bf16.mxu0 0
    %2876 = vmatmul.mubr.bf16.gmra.mxu0 %v2832
    %v2877 = vpop.f32.mrf.mxu0
    %v2878 = vadd.f32 0.0, %v2877
    %v2879 = vpop.f32.mrf.mxu0
    %v2880 = vadd.f32 0.0, %v2879
    %v2881 = vpop.f32.mrf.mxu0
    %v2882 = vadd.f32 0.0, %v2881
    %v2883 = vpop.f32.mrf.mxu0
    %v2884 = vadd.f32 0.0, %v2883
    %2885 = vmatprep.mubr.bf16.mxu0 0
    %2886 = vmatmul.mubr.bf16.gmra.mxu0 %v2835
    %v2887 = vpop.f32.mrf.mxu0
    %v2888 = vadd.f32 0.0, %v2887
    %v2889 = vpop.f32.mrf.mxu0
    %v2890 = vadd.f32 0.0, %v2889
    %v2891 = vpop.f32.mrf.mxu0
    %v2892 = vadd.f32 0.0, %v2891
    %v2893 = vpop.f32.mrf.mxu0
    %v2894 = vadd.f32 0.0, %v2893
    %2895 = vmatprep.mubr.bf16.mxu0 0
    %2896 = vmatmul.mubr.bf16.gmra.mxu0 %v2838
    %v2897 = vpop.f32.mrf.mxu0
    %v2898 = vadd.f32 0.0, %v2897
    %v2899 = vpop.f32.mrf.mxu0
    %v2900 = vadd.f32 0.0, %v2899
    %v2901 = vpop.f32.mrf.mxu0
    %v2902 = vadd.f32 0.0, %v2901
    %v2903 = vpop.f32.mrf.mxu0
    %v2904 = vadd.f32 0.0, %v2903
    %2905 = vmatprep.mubr.bf16.mxu0 0
    %2906 = vmatmul.mubr.bf16.gmra.mxu0 %v2841
    %v2907 = vpop.f32.mrf.mxu0
    %v2908 = vadd.f32 0.0, %v2907
    %v2909 = vpop.f32.mrf.mxu0
    %v2910 = vadd.f32 0.0, %v2909
    %v2911 = vpop.f32.mrf.mxu0
    %v2912 = vadd.f32 0.0, %v2911
    %v2913 = vpop.f32.mrf.mxu0
    %v2914 = vadd.f32 0.0, %v2913
    %2915 = vdwg.mxu0
    %2916 = vst [vmem:[#allocation2] sm:$0xff] %v2878
    %2917 = vst [vmem:[#allocation2 + $0x8] sm:$0xff] %v2880
    %2918 = vst [vmem:[#allocation2 + $0x10] sm:$0xff] %v2882
    %2919 = vst [vmem:[#allocation2 + $0x18] sm:$0xff] %v2884
    %2920 = vst [vmem:[#allocation2 + $0x20] sm:$0xff] %v2888
    %2921 = vst [vmem:[#allocation2 + $0x28] sm:$0xff] %v2890
    %2922 = vst [vmem:[#allocation2 + $0x30] sm:$0xff] %v2892
    %2923 = vst [vmem:[#allocation2 + $0x38] sm:$0xff] %v2894
    %2924 = vst [vmem:[#allocation2 + $0x40] sm:$0xff] %v2898
    %2925 = vst [vmem:[#allocation2 + $0x48] sm:$0xff] %v2900
    %2926 = vst [vmem:[#allocation2 + $0x50] sm:$0xff] %v2902
    %2927 = vst [vmem:[#allocation2 + $0x58] sm:$0xff] %v2904
    %2928 = vst [vmem:[#allocation2 + $0x60] sm:$0xff] %v2908
    %2929 = vst [vmem:[#allocation2 + $0x68] sm:$0xff] %v2910
    %2930 = vst [vmem:[#allocation2 + $0x70] sm:$0xff] %v2912
    %2931 = vst [vmem:[#allocation2 + $0x78] sm:$0xff] %v2914
    %v2932 = vld [vmem:[#allocation11] sm:$0xff]
    %v2933 = vld [vmem:[#allocation11 + $0x8] sm:$0xff]
    %v2934 = vld [vmem:[#allocation11 + $0x10] sm:$0xff]
    %v2935 = vld [vmem:[#allocation11 + $0x18] sm:$0xff]
    %v2936 = vld [vmem:[%s1073] sm:$0xff]
    %2937 = vmatprep.subr.mxu0 0.0
    %2938 = vmatpush1.msra.mxu0 0.0
    %2939 = vmatprep.subr.mxu0 0.0
    %2940 = vmatpush1.msra.mxu0 0.0
    %2941 = vmatprep.subr.mxu0 0.0
    %2942 = vmatpush1.msra.mxu0 0.0
    %2943 = vmatprep.subr.mxu0 0.0
    %2944 = vmatpush1.msra.mxu0 0.0
    %2945 = vmatprep.subr.mxu0 0.0
    %2946 = vmatpush1.msra.mxu0 0.0
    %2947 = vmatprep.subr.mxu0 0.0
    %2948 = vmatpush1.msra.mxu0 0.0
    %2949 = vmatprep.subr.mxu0 0.0
    %2950 = vmatpush1.msra.mxu0 0.0
    %2951 = vmatprep.subr.mxu0 0.0
    %2952 = vmatpush1.msra.mxu0 0.0
    %2953 = vmatprep.subr.mxu0 0.0
    %2954 = vmatpush1.msra.mxu0 0.0
    %2955 = vmatprep.subr.mxu0 0.0
    %2956 = vmatpush1.msra.mxu0 0.0
    %2957 = vmatprep.subr.mxu0 0.0
    %2958 = vmatpush1.msra.mxu0 0.0
    %2959 = vmatprep.subr.mxu0 0.0
    %2960 = vmatpush1.msra.mxu0 0.0
    %2961 = vmatprep.subr.mxu0 0.0
    %2962 = vmatpush1.msra.mxu0 %v2935
    %2963 = vmatprep.subr.mxu0 0.0
    %2964 = vmatpush1.msra.mxu0 %v2934
    %2965 = vmatprep.subr.mxu0 0.0
    %2966 = vmatpush1.msra.mxu0 %v2933
    %2967 = vmatprep.subr.mxu0 0.0
    %2968 = vmatpush1.msra.mxu0 %v2932
    %2969 = vmatprep.subr.mxu0 0.0
    %2970 = vmatpush2.msra.mxu0 0.0
    %2971 = vmatprep.subr.mxu0 0.0
    %2972 = vmatpush2.msra.mxu0 0.0
    %2973 = vmatprep.subr.mxu0 0.0
    %2974 = vmatpush2.msra.mxu0 0.0
    %2975 = vmatprep.subr.mxu0 0.0
    %2976 = vmatpush2.msra.mxu0 0.0
    %2977 = vmatprep.subr.mxu0 0.0
    %2978 = vmatpush2.msra.mxu0 0.0
    %2979 = vmatprep.subr.mxu0 0.0
    %2980 = vmatpush2.msra.mxu0 0.0
    %2981 = vmatprep.subr.mxu0 0.0
    %2982 = vmatpush2.msra.mxu0 0.0
    %2983 = vmatprep.subr.mxu0 0.0
    %2984 = vmatpush2.msra.mxu0 0.0
    %2985 = vmatprep.subr.mxu0 0.0
    %2986 = vmatpush2.msra.mxu0 0.0
    %2987 = vmatprep.subr.mxu0 0.0
    %2988 = vmatpush2.msra.mxu0 0.0
    %2989 = vmatprep.subr.mxu0 0.0
    %2990 = vmatpush2.msra.mxu0 0.0
    %2991 = vmatprep.subr.mxu0 0.0
    %2992 = vmatpush2.msra.mxu0 0.0
    %2993 = vmatprep.subr.mxu0 0.0
    %2994 = vmatpush2.msra.mxu0 0.0
    %2995 = vmatprep.subr.mxu0 0.0
    %2996 = vmatpush2.msra.mxu0 0.0
    %2997 = vmatprep.subr.mxu0 0.0
    %2998 = vmatpush2.msra.mxu0 0.0
    %2999 = vmatprep.subr.mxu0 0.0
    %3000 = vmatpush2.msra.mxu0 0.0
    %3001 = vmatprep.mubr.f32.mxu0 0.0
    %3002 = vmatmul.mubr.f32.gmra.mxu0 %v1077
    %v3003 = vpop.f32.mrf.mxu0
    %v3004 = vadd.f32 0.0, %v3003
    %v3005 = vpop.f32.mrf.mxu0
    %3006 = vdwg.mxu0
    %v3007 = vadd.f32 %v2936, %v3004
    %v3008 = vxor.u32 %v3007, 2147483648
    %v3009 = vmul.f32 %v3008, 1.442695
    %v3010 = vpow.pop %v3009
    %v3011 = vadd.f32 %v3010, 1.0
    %v3012 = vrcp.pop %v3011
    %v3013 = vmul.f32 1.0, %v3012
    %v3014 = vtanh.pop %v3007
    %v3015 = vmul.f32 %v3013, 0.0
    %3017 = vrot.lane.b32.xlu0 %v3014, 32
    %v3018 = vpop.permute.xlu0 %3017
    %v3020 = vmul.f32 %v3013, %v3018
    %3022 = vrot.lane.b32.xlu0 %v3020, 32
    %v3023 = vpop.permute.xlu0 %3022
    %v3025 = vadd.f32 %v3015, %v3023
    %v3026 = vtanh.pop %v3025
    %3028 = vrot.lane.b32.xlu0 %v3026, 32
    %v3029 = vpop.permute.xlu0 %3028
    %v3031 = vmul.f32 %v3013, %v3029
    %3033 = vrot.lane.b32.xlu0 %v3031, 64
    %v3034 = vpop.permute.xlu0 %3033
    %3036 = vst.msk [vmem:[#allocation3] sm:$0xff] %vm1075, %v3034
    %v3037 = vld [vmem:[%s1181] sm:$0xff]
    %v3038 = vsel %vm1075, %v3034, 0
    %3040 = vmatprep.subr.mxu0 0.0
    %3041 = vmatpush1.msra.mxu0 0.0
    %3042 = vmatprep.subr.mxu0 0.0
    %3043 = vmatpush1.msra.mxu0 0.0
    %3044 = vmatprep.subr.mxu0 0.0
    %3045 = vmatpush1.msra.mxu0 0.0
    %3046 = vmatprep.subr.mxu0 0.0
    %3047 = vmatpush1.msra.mxu0 0.0
    %3048 = vmatprep.subr.mxu0 0.0
    %3049 = vmatpush1.msra.mxu0 0.0
    %3050 = vmatprep.subr.mxu0 0.0
    %3051 = vmatpush1.msra.mxu0 0.0
    %3052 = vmatprep.subr.mxu0 0.0
    %3053 = vmatpush1.msra.mxu0 0.0
    %3054 = vmatprep.subr.mxu0 0.0
    %3055 = vmatpush1.msra.mxu0 0.0
    %3056 = vmatprep.subr.mxu0 0.0
    %3057 = vmatpush1.msra.mxu0 0.0
    %3058 = vmatprep.subr.mxu0 0.0
    %3059 = vmatpush1.msra.mxu0 0.0
    %3060 = vmatprep.subr.mxu0 0.0
    %3061 = vmatpush1.msra.mxu0 0.0
    %3062 = vmatprep.subr.mxu0 0.0
    %3063 = vmatpush1.msra.mxu0 0.0
    %3064 = vmatprep.subr.mxu0 0.0
    %3065 = vmatpush1.msra.mxu0 %v2935
    %3066 = vmatprep.subr.mxu0 0.0
    %3067 = vmatpush1.msra.mxu0 %v2934
    %3068 = vmatprep.subr.mxu0 0.0
    %3069 = vmatpush1.msra.mxu0 %v2933
    %3070 = vmatprep.subr.mxu0 0.0
    %3071 = vmatpush1.msra.mxu0 %v2932
    %3072 = vmatprep.subr.mxu0 0.0
    %3073 = vmatpush2.msra.mxu0 0.0
    %3074 = vmatprep.subr.mxu0 0.0
    %3075 = vmatpush2.msra.mxu0 0.0
    %3076 = vmatprep.subr.mxu0 0.0
    %3077 = vmatpush2.msra.mxu0 0.0
    %3078 = vmatprep.subr.mxu0 0.0
    %3079 = vmatpush2.msra.mxu0 0.0
    %3080 = vmatprep.subr.mxu0 0.0
    %3081 = vmatpush2.msra.mxu0 0.0
    %3082 = vmatprep.subr.mxu0 0.0
    %3083 = vmatpush2.msra.mxu0 0.0
    %3084 = vmatprep.subr.mxu0 0.0
    %3085 = vmatpush2.msra.mxu0 0.0
    %3086 = vmatprep.subr.mxu0 0.0
    %3087 = vmatpush2.msra.mxu0 0.0
    %3088 = vmatprep.subr.mxu0 0.0
    %3089 = vmatpush2.msra.mxu0 0.0
    %3090 = vmatprep.subr.mxu0 0.0
    %3091 = vmatpush2.msra.mxu0 0.0
    %3092 = vmatprep.subr.mxu0 0.0
    %3093 = vmatpush2.msra.mxu0 0.0
    %3094 = vmatprep.subr.mxu0 0.0
    %3095 = vmatpush2.msra.mxu0 0.0
    %3096 = vmatprep.subr.mxu0 0.0
    %3097 = vmatpush2.msra.mxu0 0.0
    %3098 = vmatprep.subr.mxu0 0.0
    %3099 = vmatpush2.msra.mxu0 0.0
    %3100 = vmatprep.subr.mxu0 0.0
    %3101 = vmatpush2.msra.mxu0 0.0
    %3102 = vmatprep.subr.mxu0 0.0
    %3103 = vmatpush2.msra.mxu0 0.0
    %3104 = vmatprep.mubr.f32.mxu0 0.0
    %3105 = vmatmul.mubr.f32.gmra.mxu0 %v3038
    %v3106 = vpop.f32.mrf.mxu0
    %v3107 = vadd.f32 0.0, %v3106
    %v3108 = vpop.f32.mrf.mxu0
    %3109 = vdwg.mxu0
    %v3110 = vadd.f32 %v3037, %v3107
    %v3111 = vxor.u32 %v3110, 2147483648
    %v3112 = vmul.f32 %v3111, 1.442695
    %v3113 = vpow.pop %v3112
    %v3114 = vadd.f32 %v3113, 1.0
    %v3115 = vrcp.pop %v3114
    %v3116 = vmul.f32 1.0, %v3115
    %v3117 = vtanh.pop %v3110
    %v3118 = vmul.f32 %v3116, %v3025
    %3120 = vrot.lane.b32.xlu0 %v3117, 32
    %v3121 = vpop.permute.xlu0 %3120
    %v3123 = vmul.f32 %v3116, %v3121
    %3125 = vrot.lane.b32.xlu0 %v3123, 32
    %v3126 = vpop.permute.xlu0 %3125
    %v3128 = vadd.f32 %v3118, %v3126
    %v3129 = vtanh.pop %v3128
    %3131 = vrot.lane.b32.xlu0 %v3129, 32
    %v3132 = vpop.permute.xlu0 %3131
    %v3134 = vmul.f32 %v3116, %v3132
    %3136 = vrot.lane.b32.xlu0 %v3134, 64
    %v3137 = vpop.permute.xlu0 %3136
    %3139 = vst.msk [vmem:[%s1284] sm:$0xff] %vm1075, %v3137
    %v3140 = vld [vmem:[%s1288] sm:$0xff]
    %v3141 = vsel %vm1075, %v3137, 0
    %3143 = vmatprep.subr.mxu0 0.0
    %3144 = vmatpush1.msra.mxu0 0.0
    %3145 = vmatprep.subr.mxu0 0.0
    %3146 = vmatpush1.msra.mxu0 0.0
    %3147 = vmatprep.subr.mxu0 0.0
    %3148 = vmatpush1.msra.mxu0 0.0
    %3149 = vmatprep.subr.mxu0 0.0
    %3150 = vmatpush1.msra.mxu0 0.0
    %3151 = vmatprep.subr.mxu0 0.0
    %3152 = vmatpush1.msra.mxu0 0.0
    %3153 = vmatprep.subr.mxu0 0.0
    %3154 = vmatpush1.msra.mxu0 0.0
    %3155 = vmatprep.subr.mxu0 0.0
    %3156 = vmatpush1.msra.mxu0 0.0
    %3157 = vmatprep.subr.mxu0 0.0
    %3158 = vmatpush1.msra.mxu0 0.0
    %3159 = vmatprep.subr.mxu0 0.0
    %3160 = vmatpush1.msra.mxu0 0.0
    %3161 = vmatprep.subr.mxu0 0.0
    %3162 = vmatpush1.msra.mxu0 0.0
    %3163 = vmatprep.subr.mxu0 0.0
    %3164 = vmatpush1.msra.mxu0 0.0
    %3165 = vmatprep.subr.mxu0 0.0
    %3166 = vmatpush1.msra.mxu0 0.0
    %3167 = vmatprep.subr.mxu0 0.0
    %3168 = vmatpush1.msra.mxu0 %v2935
    %3169 = vmatprep.subr.mxu0 0.0
    %3170 = vmatpush1.msra.mxu0 %v2934
    %3171 = vmatprep.subr.mxu0 0.0
    %3172 = vmatpush1.msra.mxu0 %v2933
    %3173 = vmatprep.subr.mxu0 0.0
    %3174 = vmatpush1.msra.mxu0 %v2932
    %3175 = vmatprep.subr.mxu0 0.0
    %3176 = vmatpush2.msra.mxu0 0.0
    %3177 = vmatprep.subr.mxu0 0.0
    %3178 = vmatpush2.msra.mxu0 0.0
    %3179 = vmatprep.subr.mxu0 0.0
    %3180 = vmatpush2.msra.mxu0 0.0
    %3181 = vmatprep.subr.mxu0 0.0
    %3182 = vmatpush2.msra.mxu0 0.0
    %3183 = vmatprep.subr.mxu0 0.0
    %3184 = vmatpush2.msra.mxu0 0.0
    %3185 = vmatprep.subr.mxu0 0.0
    %3186 = vmatpush2.msra.mxu0 0.0
    %3187 = vmatprep.subr.mxu0 0.0
    %3188 = vmatpush2.msra.mxu0 0.0
    %3189 = vmatprep.subr.mxu0 0.0
    %3190 = vmatpush2.msra.mxu0 0.0
    %3191 = vmatprep.subr.mxu0 0.0
    %3192 = vmatpush2.msra.mxu0 0.0
    %3193 = vmatprep.subr.mxu0 0.0
    %3194 = vmatpush2.msra.mxu0 0.0
    %3195 = vmatprep.subr.mxu0 0.0
    %3196 = vmatpush2.msra.mxu0 0.0
    %3197 = vmatprep.subr.mxu0 0.0
    %3198 = vmatpush2.msra.mxu0 0.0
    %3199 = vmatprep.subr.mxu0 0.0
    %3200 = vmatpush2.msra.mxu0 0.0
    %3201 = vmatprep.subr.mxu0 0.0
    %3202 = vmatpush2.msra.mxu0 0.0
    %3203 = vmatprep.subr.mxu0 0.0
    %3204 = vmatpush2.msra.mxu0 0.0
    %3205 = vmatprep.subr.mxu0 0.0
    %3206 = vmatpush2.msra.mxu0 0.0
    %3207 = vmatprep.mubr.f32.mxu0 0.0
    %3208 = vmatmul.mubr.f32.gmra.mxu0 %v3141
    %v3209 = vpop.f32.mrf.mxu0
    %v3210 = vadd.f32 0.0, %v3209
    %v3211 = vpop.f32.mrf.mxu0
    %3212 = vdwg.mxu0
    %v3213 = vadd.f32 %v3140, %v3210
    %v3214 = vxor.u32 %v3213, 2147483648
    %v3215 = vmul.f32 %v3214, 1.442695
    %v3216 = vpow.pop %v3215
    %v3217 = vadd.f32 %v3216, 1.0
    %v3218 = vrcp.pop %v3217
    %v3219 = vmul.f32 1.0, %v3218
    %v3220 = vtanh.pop %v3213
    %v3221 = vmul.f32 %v3219, %v3128
    %3223 = vrot.lane.b32.xlu0 %v3220, 32
    %v3224 = vpop.permute.xlu0 %3223
    %v3226 = vmul.f32 %v3219, %v3224
    %3228 = vrot.lane.b32.xlu0 %v3226, 32
    %v3229 = vpop.permute.xlu0 %3228
    %v3231 = vadd.f32 %v3221, %v3229
    %v3232 = vtanh.pop %v3231
    %3234 = vrot.lane.b32.xlu0 %v3232, 32
    %v3235 = vpop.permute.xlu0 %3234
    %v3237 = vmul.f32 %v3219, %v3235
    %3239 = vrot.lane.b32.xlu0 %v3237, 64
    %v3240 = vpop.permute.xlu0 %3239
    %3242 = vst.msk [vmem:[%s1391] sm:$0xff] %vm1075, %v3240
    %v3243 = vld [vmem:[%s1395] sm:$0xff]
    %v3244 = vsel %vm1075, %v3240, 0
    %3246 = vmatprep.subr.mxu0 0.0
    %3247 = vmatpush1.msra.mxu0 0.0
    %3248 = vmatprep.subr.mxu0 0.0
    %3249 = vmatpush1.msra.mxu0 0.0
    %3250 = vmatprep.subr.mxu0 0.0
    %3251 = vmatpush1.msra.mxu0 0.0
    %3252 = vmatprep.subr.mxu0 0.0
    %3253 = vmatpush1.msra.mxu0 0.0
    %3254 = vmatprep.subr.mxu0 0.0
    %3255 = vmatpush1.msra.mxu0 0.0
    %3256 = vmatprep.subr.mxu0 0.0
    %3257 = vmatpush1.msra.mxu0 0.0
    %3258 = vmatprep.subr.mxu0 0.0
    %3259 = vmatpush1.msra.mxu0 0.0
    %3260 = vmatprep.subr.mxu0 0.0
    %3261 = vmatpush1.msra.mxu0 0.0
    %3262 = vmatprep.subr.mxu0 0.0
    %3263 = vmatpush1.msra.mxu0 0.0
    %3264 = vmatprep.subr.mxu0 0.0
    %3265 = vmatpush1.msra.mxu0 0.0
    %3266 = vmatprep.subr.mxu0 0.0
    %3267 = vmatpush1.msra.mxu0 0.0
    %3268 = vmatprep.subr.mxu0 0.0
    %3269 = vmatpush1.msra.mxu0 0.0
    %3270 = vmatprep.subr.mxu0 0.0
    %3271 = vmatpush1.msra.mxu0 %v2935
    %3272 = vmatprep.subr.mxu0 0.0
    %3273 = vmatpush1.msra.mxu0 %v2934
    %3274 = vmatprep.subr.mxu0 0.0
    %3275 = vmatpush1.msra.mxu0 %v2933
    %3276 = vmatprep.subr.mxu0 0.0
    %3277 = vmatpush1.msra.mxu0 %v2932
    %3278 = vmatprep.subr.mxu0 0.0
    %3279 = vmatpush2.msra.mxu0 0.0
    %3280 = vmatprep.subr.mxu0 0.0
    %3281 = vmatpush2.msra.mxu0 0.0
    %3282 = vmatprep.subr.mxu0 0.0
    %3283 = vmatpush2.msra.mxu0 0.0
    %3284 = vmatprep.subr.mxu0 0.0
    %3285 = vmatpush2.msra.mxu0 0.0
    %3286 = vmatprep.subr.mxu0 0.0
    %3287 = vmatpush2.msra.mxu0 0.0
    %3288 = vmatprep.subr.mxu0 0.0
    %3289 = vmatpush2.msra.mxu0 0.0
    %3290 = vmatprep.subr.mxu0 0.0
    %3291 = vmatpush2.msra.mxu0 0.0
    %3292 = vmatprep.subr.mxu0 0.0
    %3293 = vmatpush2.msra.mxu0 0.0
    %3294 = vmatprep.subr.mxu0 0.0
    %3295 = vmatpush2.msra.mxu0 0.0
    %3296 = vmatprep.subr.mxu0 0.0
    %3297 = vmatpush2.msra.mxu0 0.0
    %3298 = vmatprep.subr.mxu0 0.0
    %3299 = vmatpush2.msra.mxu0 0.0
    %3300 = vmatprep.subr.mxu0 0.0
    %3301 = vmatpush2.msra.mxu0 0.0
    %3302 = vmatprep.subr.mxu0 0.0
    %3303 = vmatpush2.msra.mxu0 0.0
    %3304 = vmatprep.subr.mxu0 0.0
    %3305 = vmatpush2.msra.mxu0 0.0
    %3306 = vmatprep.subr.mxu0 0.0
    %3307 = vmatpush2.msra.mxu0 0.0
    %3308 = vmatprep.subr.mxu0 0.0
    %3309 = vmatpush2.msra.mxu0 0.0
    %3310 = vmatprep.mubr.f32.mxu0 0.0
    %3311 = vmatmul.mubr.f32.gmra.mxu0 %v3244
    %v3312 = vpop.f32.mrf.mxu0
    %v3313 = vadd.f32 0.0, %v3312
    %v3314 = vpop.f32.mrf.mxu0
    %3315 = vdwg.mxu0
    %v3316 = vadd.f32 %v3243, %v3313
    %v3317 = vxor.u32 %v3316, 2147483648
    %v3318 = vmul.f32 %v3317, 1.442695
    %v3319 = vpow.pop %v3318
    %v3320 = vadd.f32 %v3319, 1.0
    %v3321 = vrcp.pop %v3320
    %v3322 = vmul.f32 1.0, %v3321
    %v3323 = vtanh.pop %v3316
    %v3324 = vmul.f32 %v3322, %v3231
    %3326 = vrot.lane.b32.xlu0 %v3323, 32
    %v3327 = vpop.permute.xlu0 %3326
    %v3329 = vmul.f32 %v3322, %v3327
    %3331 = vrot.lane.b32.xlu0 %v3329, 32
    %v3332 = vpop.permute.xlu0 %3331
    %v3334 = vadd.f32 %v3324, %v3332
    %v3335 = vtanh.pop %v3334
    %3337 = vrot.lane.b32.xlu0 %v3335, 32
    %v3338 = vpop.permute.xlu0 %3337
    %v3340 = vmul.f32 %v3322, %v3338
    %3342 = vrot.lane.b32.xlu0 %v3340, 64
    %v3343 = vpop.permute.xlu0 %3342
    %3345 = vst.msk [vmem:[%s1498] sm:$0xff] %vm1075, %v3343
    %v3346 = vld [vmem:[%s1502] sm:$0xff]
    %v3347 = vsel %vm1075, %v3343, 0
    %3349 = vmatprep.subr.mxu0 0.0
    %3350 = vmatpush1.msra.mxu0 0.0
    %3351 = vmatprep.subr.mxu0 0.0
    %3352 = vmatpush1.msra.mxu0 0.0
    %3353 = vmatprep.subr.mxu0 0.0
    %3354 = vmatpush1.msra.mxu0 0.0
    %3355 = vmatprep.subr.mxu0 0.0
    %3356 = vmatpush1.msra.mxu0 0.0
    %3357 = vmatprep.subr.mxu0 0.0
    %3358 = vmatpush1.msra.mxu0 0.0
    %3359 = vmatprep.subr.mxu0 0.0
    %3360 = vmatpush1.msra.mxu0 0.0
    %3361 = vmatprep.subr.mxu0 0.0
    %3362 = vmatpush1.msra.mxu0 0.0
    %3363 = vmatprep.subr.mxu0 0.0
    %3364 = vmatpush1.msra.mxu0 0.0
    %3365 = vmatprep.subr.mxu0 0.0
    %3366 = vmatpush1.msra.mxu0 0.0
    %3367 = vmatprep.subr.mxu0 0.0
    %3368 = vmatpush1.msra.mxu0 0.0
    %3369 = vmatprep.subr.mxu0 0.0
    %3370 = vmatpush1.msra.mxu0 0.0
    %3371 = vmatprep.subr.mxu0 0.0
    %3372 = vmatpush1.msra.mxu0 0.0
    %3373 = vmatprep.subr.mxu0 0.0
    %3374 = vmatpush1.msra.mxu0 %v2935
    %3375 = vmatprep.subr.mxu0 0.0
    %3376 = vmatpush1.msra.mxu0 %v2934
    %3377 = vmatprep.subr.mxu0 0.0
    %3378 = vmatpush1.msra.mxu0 %v2933
    %3379 = vmatprep.subr.mxu0 0.0
    %3380 = vmatpush1.msra.mxu0 %v2932
    %3381 = vmatprep.subr.mxu0 0.0
    %3382 = vmatpush2.msra.mxu0 0.0
    %3383 = vmatprep.subr.mxu0 0.0
    %3384 = vmatpush2.msra.mxu0 0.0
    %3385 = vmatprep.subr.mxu0 0.0
    %3386 = vmatpush2.msra.mxu0 0.0
    %3387 = vmatprep.subr.mxu0 0.0
    %3388 = vmatpush2.msra.mxu0 0.0
    %3389 = vmatprep.subr.mxu0 0.0
    %3390 = vmatpush2.msra.mxu0 0.0
    %3391 = vmatprep.subr.mxu0 0.0
    %3392 = vmatpush2.msra.mxu0 0.0
    %3393 = vmatprep.subr.mxu0 0.0
    %3394 = vmatpush2.msra.mxu0 0.0
    %3395 = vmatprep.subr.mxu0 0.0
    %3396 = vmatpush2.msra.mxu0 0.0
    %3397 = vmatprep.subr.mxu0 0.0
    %3398 = vmatpush2.msra.mxu0 0.0
    %3399 = vmatprep.subr.mxu0 0.0
    %3400 = vmatpush2.msra.mxu0 0.0
    %3401 = vmatprep.subr.mxu0 0.0
    %3402 = vmatpush2.msra.mxu0 0.0
    %3403 = vmatprep.subr.mxu0 0.0
    %3404 = vmatpush2.msra.mxu0 0.0
    %3405 = vmatprep.subr.mxu0 0.0
    %3406 = vmatpush2.msra.mxu0 0.0
    %3407 = vmatprep.subr.mxu0 0.0
    %3408 = vmatpush2.msra.mxu0 0.0
    %3409 = vmatprep.subr.mxu0 0.0
    %3410 = vmatpush2.msra.mxu0 0.0
    %3411 = vmatprep.subr.mxu0 0.0
    %3412 = vmatpush2.msra.mxu0 0.0
    %3413 = vmatprep.mubr.f32.mxu0 0.0
    %3414 = vmatmul.mubr.f32.gmra.mxu0 %v3347
    %v3415 = vpop.f32.mrf.mxu0
    %v3416 = vadd.f32 0.0, %v3415
    %v3417 = vpop.f32.mrf.mxu0
    %3418 = vdwg.mxu0
    %v3419 = vadd.f32 %v3346, %v3416
    %v3420 = vxor.u32 %v3419, 2147483648
    %v3421 = vmul.f32 %v3420, 1.442695
    %v3422 = vpow.pop %v3421
    %v3423 = vadd.f32 %v3422, 1.0
    %v3424 = vrcp.pop %v3423
    %v3425 = vmul.f32 1.0, %v3424
    %v3426 = vtanh.pop %v3419
    %v3427 = vmul.f32 %v3425, %v3334
    %3429 = vrot.lane.b32.xlu0 %v3426, 32
    %v3430 = vpop.permute.xlu0 %3429
    %v3432 = vmul.f32 %v3425, %v3430
    %3434 = vrot.lane.b32.xlu0 %v3432, 32
    %v3435 = vpop.permute.xlu0 %3434
    %v3437 = vadd.f32 %v3427, %v3435
    %v3438 = vtanh.pop %v3437
    %3440 = vrot.lane.b32.xlu0 %v3438, 32
    %v3441 = vpop.permute.xlu0 %3440
    %v3443 = vmul.f32 %v3425, %v3441
    %3445 = vrot.lane.b32.xlu0 %v3443, 64
    %v3446 = vpop.permute.xlu0 %3445
    %3448 = vst.msk [vmem:[%s1605] sm:$0xff] %vm1075, %v3446
    %v3449 = vld [vmem:[%s1609] sm:$0xff]
    %v3450 = vsel %vm1075, %v3446, 0
    %3452 = vmatprep.subr.mxu0 0.0
    %3453 = vmatpush1.msra.mxu0 0.0
    %3454 = vmatprep.subr.mxu0 0.0
    %3455 = vmatpush1.msra.mxu0 0.0
    %3456 = vmatprep.subr.mxu0 0.0
    %3457 = vmatpush1.msra.mxu0 0.0
    %3458 = vmatprep.subr.mxu0 0.0
    %3459 = vmatpush1.msra.mxu0 0.0
    %3460 = vmatprep.subr.mxu0 0.0
    %3461 = vmatpush1.msra.mxu0 0.0
    %3462 = vmatprep.subr.mxu0 0.0
    %3463 = vmatpush1.msra.mxu0 0.0
    %3464 = vmatprep.subr.mxu0 0.0
    %3465 = vmatpush1.msra.mxu0 0.0
    %3466 = vmatprep.subr.mxu0 0.0
    %3467 = vmatpush1.msra.mxu0 0.0
    %3468 = vmatprep.subr.mxu0 0.0
    %3469 = vmatpush1.msra.mxu0 0.0
    %3470 = vmatprep.subr.mxu0 0.0
    %3471 = vmatpush1.msra.mxu0 0.0
    %3472 = vmatprep.subr.mxu0 0.0
    %3473 = vmatpush1.msra.mxu0 0.0
    %3474 = vmatprep.subr.mxu0 0.0
    %3475 = vmatpush1.msra.mxu0 0.0
    %3476 = vmatprep.subr.mxu0 0.0
    %3477 = vmatpush1.msra.mxu0 %v2935
    %3478 = vmatprep.subr.mxu0 0.0
    %3479 = vmatpush1.msra.mxu0 %v2934
    %3480 = vmatprep.subr.mxu0 0.0
    %3481 = vmatpush1.msra.mxu0 %v2933
    %3482 = vmatprep.subr.mxu0 0.0
    %3483 = vmatpush1.msra.mxu0 %v2932
    %3484 = vmatprep.subr.mxu0 0.0
    %3485 = vmatpush2.msra.mxu0 0.0
    %3486 = vmatprep.subr.mxu0 0.0
    %3487 = vmatpush2.msra.mxu0 0.0
    %3488 = vmatprep.subr.mxu0 0.0
    %3489 = vmatpush2.msra.mxu0 0.0
    %3490 = vmatprep.subr.mxu0 0.0
    %3491 = vmatpush2.msra.mxu0 0.0
    %3492 = vmatprep.subr.mxu0 0.0
    %3493 = vmatpush2.msra.mxu0 0.0
    %3494 = vmatprep.subr.mxu0 0.0
    %3495 = vmatpush2.msra.mxu0 0.0
    %3496 = vmatprep.subr.mxu0 0.0
    %3497 = vmatpush2.msra.mxu0 0.0
    %3498 = vmatprep.subr.mxu0 0.0
    %3499 = vmatpush2.msra.mxu0 0.0
    %3500 = vmatprep.subr.mxu0 0.0
    %3501 = vmatpush2.msra.mxu0 0.0
    %3502 = vmatprep.subr.mxu0 0.0
    %3503 = vmatpush2.msra.mxu0 0.0
    %3504 = vmatprep.subr.mxu0 0.0
    %3505 = vmatpush2.msra.mxu0 0.0
    %3506 = vmatprep.subr.mxu0 0.0
    %3507 = vmatpush2.msra.mxu0 0.0
    %3508 = vmatprep.subr.mxu0 0.0
    %3509 = vmatpush2.msra.mxu0 0.0
    %3510 = vmatprep.subr.mxu0 0.0
    %3511 = vmatpush2.msra.mxu0 0.0
    %3512 = vmatprep.subr.mxu0 0.0
    %3513 = vmatpush2.msra.mxu0 0.0
    %3514 = vmatprep.subr.mxu0 0.0
    %3515 = vmatpush2.msra.mxu0 0.0
    %3516 = vmatprep.mubr.f32.mxu0 0.0
    %3517 = vmatmul.mubr.f32.gmra.mxu0 %v3450
    %v3518 = vpop.f32.mrf.mxu0
    %v3519 = vadd.f32 0.0, %v3518
    %v3520 = vpop.f32.mrf.mxu0
    %3521 = vdwg.mxu0
    %v3522 = vadd.f32 %v3449, %v3519
    %v3523 = vxor.u32 %v3522, 2147483648
    %v3524 = vmul.f32 %v3523, 1.442695
    %v3525 = vpow.pop %v3524
    %v3526 = vadd.f32 %v3525, 1.0
    %v3527 = vrcp.pop %v3526
    %v3528 = vmul.f32 1.0, %v3527
    %v3529 = vtanh.pop %v3522
    %v3530 = vmul.f32 %v3528, %v3437
    %3532 = vrot.lane.b32.xlu0 %v3529, 32
    %v3533 = vpop.permute.xlu0 %3532
    %v3535 = vmul.f32 %v3528, %v3533
    %3537 = vrot.lane.b32.xlu0 %v3535, 32
    %v3538 = vpop.permute.xlu0 %3537
    %v3540 = vadd.f32 %v3530, %v3538
    %v3541 = vtanh.pop %v3540
    %3543 = vrot.lane.b32.xlu0 %v3541, 32
    %v3544 = vpop.permute.xlu0 %3543
    %v3546 = vmul.f32 %v3528, %v3544
    %3548 = vrot.lane.b32.xlu0 %v3546, 64
    %v3549 = vpop.permute.xlu0 %3548
    %3551 = vst.msk [vmem:[%s1712] sm:$0xff] %vm1075, %v3549
    %v3552 = vld [vmem:[%s1716] sm:$0xff]
    %v3553 = vsel %vm1075, %v3549, 0
    %3555 = vmatprep.subr.mxu0 0.0
    %3556 = vmatpush1.msra.mxu0 0.0
    %3557 = vmatprep.subr.mxu0 0.0
    %3558 = vmatpush1.msra.mxu0 0.0
    %3559 = vmatprep.subr.mxu0 0.0
    %3560 = vmatpush1.msra.mxu0 0.0
    %3561 = vmatprep.subr.mxu0 0.0
    %3562 = vmatpush1.msra.mxu0 0.0
    %3563 = vmatprep.subr.mxu0 0.0
    %3564 = vmatpush1.msra.mxu0 0.0
    %3565 = vmatprep.subr.mxu0 0.0
    %3566 = vmatpush1.msra.mxu0 0.0
    %3567 = vmatprep.subr.mxu0 0.0
    %3568 = vmatpush1.msra.mxu0 0.0
    %3569 = vmatprep.subr.mxu0 0.0
    %3570 = vmatpush1.msra.mxu0 0.0
    %3571 = vmatprep.subr.mxu0 0.0
    %3572 = vmatpush1.msra.mxu0 0.0
    %3573 = vmatprep.subr.mxu0 0.0
    %3574 = vmatpush1.msra.mxu0 0.0
    %3575 = vmatprep.subr.mxu0 0.0
    %3576 = vmatpush1.msra.mxu0 0.0
    %3577 = vmatprep.subr.mxu0 0.0
    %3578 = vmatpush1.msra.mxu0 0.0
    %3579 = vmatprep.subr.mxu0 0.0
    %3580 = vmatpush1.msra.mxu0 %v2935
    %3581 = vmatprep.subr.mxu0 0.0
    %3582 = vmatpush1.msra.mxu0 %v2934
    %3583 = vmatprep.subr.mxu0 0.0
    %3584 = vmatpush1.msra.mxu0 %v2933
    %3585 = vmatprep.subr.mxu0 0.0
    %3586 = vmatpush1.msra.mxu0 %v2932
    %3587 = vmatprep.subr.mxu0 0.0
    %3588 = vmatpush2.msra.mxu0 0.0
    %3589 = vmatprep.subr.mxu0 0.0
    %3590 = vmatpush2.msra.mxu0 0.0
    %3591 = vmatprep.subr.mxu0 0.0
    %3592 = vmatpush2.msra.mxu0 0.0
    %3593 = vmatprep.subr.mxu0 0.0
    %3594 = vmatpush2.msra.mxu0 0.0
    %3595 = vmatprep.subr.mxu0 0.0
    %3596 = vmatpush2.msra.mxu0 0.0
    %3597 = vmatprep.subr.mxu0 0.0
    %3598 = vmatpush2.msra.mxu0 0.0
    %3599 = vmatprep.subr.mxu0 0.0
    %3600 = vmatpush2.msra.mxu0 0.0
    %3601 = vmatprep.subr.mxu0 0.0
    %3602 = vmatpush2.msra.mxu0 0.0
    %3603 = vmatprep.subr.mxu0 0.0
    %3604 = vmatpush2.msra.mxu0 0.0
    %3605 = vmatprep.subr.mxu0 0.0
    %3606 = vmatpush2.msra.mxu0 0.0
    %3607 = vmatprep.subr.mxu0 0.0
    %3608 = vmatpush2.msra.mxu0 0.0
    %3609 = vmatprep.subr.mxu0 0.0
    %3610 = vmatpush2.msra.mxu0 0.0
    %3611 = vmatprep.subr.mxu0 0.0
    %3612 = vmatpush2.msra.mxu0 0.0
    %3613 = vmatprep.subr.mxu0 0.0
    %3614 = vmatpush2.msra.mxu0 0.0
    %3615 = vmatprep.subr.mxu0 0.0
    %3616 = vmatpush2.msra.mxu0 0.0
    %3617 = vmatprep.subr.mxu0 0.0
    %3618 = vmatpush2.msra.mxu0 0.0
    %3619 = vmatprep.mubr.f32.mxu0 0.0
    %3620 = vmatmul.mubr.f32.gmra.mxu0 %v3553
    %v3621 = vpop.f32.mrf.mxu0
    %v3622 = vadd.f32 0.0, %v3621
    %v3623 = vpop.f32.mrf.mxu0
    %3624 = vdwg.mxu0
    %v3625 = vadd.f32 %v3552, %v3622
    %v3626 = vxor.u32 %v3625, 2147483648
    %v3627 = vmul.f32 %v3626, 1.442695
    %v3628 = vpow.pop %v3627
    %v3629 = vadd.f32 %v3628, 1.0
    %v3630 = vrcp.pop %v3629
    %v3631 = vmul.f32 1.0, %v3630
    %v3632 = vtanh.pop %v3625
    %v3633 = vmul.f32 %v3631, %v3540
    %3635 = vrot.lane.b32.xlu0 %v3632, 32
    %v3636 = vpop.permute.xlu0 %3635
    %v3638 = vmul.f32 %v3631, %v3636
    %3640 = vrot.lane.b32.xlu0 %v3638, 32
    %v3641 = vpop.permute.xlu0 %3640
    %v3643 = vadd.f32 %v3633, %v3641
    %v3644 = vtanh.pop %v3643
    %3646 = vrot.lane.b32.xlu0 %v3644, 32
    %v3647 = vpop.permute.xlu0 %3646
    %v3649 = vmul.f32 %v3631, %v3647
    %3651 = vrot.lane.b32.xlu0 %v3649, 64
    %v3652 = vpop.permute.xlu0 %3651
    %3654 = vst.msk [vmem:[%s1819] sm:$0xff] %vm1075, %v3652
    %v3655 = vld [vmem:[%s1823] sm:$0xff]
    %v3656 = vsel %vm1075, %v3652, 0
    %3658 = vmatprep.subr.mxu0 0.0
    %3659 = vmatpush1.msra.mxu0 0.0
    %3660 = vmatprep.subr.mxu0 0.0
    %3661 = vmatpush1.msra.mxu0 0.0
    %3662 = vmatprep.subr.mxu0 0.0
    %3663 = vmatpush1.msra.mxu0 0.0
    %3664 = vmatprep.subr.mxu0 0.0
    %3665 = vmatpush1.msra.mxu0 0.0
    %3666 = vmatprep.subr.mxu0 0.0
    %3667 = vmatpush1.msra.mxu0 0.0
    %3668 = vmatprep.subr.mxu0 0.0
    %3669 = vmatpush1.msra.mxu0 0.0
    %3670 = vmatprep.subr.mxu0 0.0
    %3671 = vmatpush1.msra.mxu0 0.0
    %3672 = vmatprep.subr.mxu0 0.0
    %3673 = vmatpush1.msra.mxu0 0.0
    %3674 = vmatprep.subr.mxu0 0.0
    %3675 = vmatpush1.msra.mxu0 0.0
    %3676 = vmatprep.subr.mxu0 0.0
    %3677 = vmatpush1.msra.mxu0 0.0
    %3678 = vmatprep.subr.mxu0 0.0
    %3679 = vmatpush1.msra.mxu0 0.0
    %3680 = vmatprep.subr.mxu0 0.0
    %3681 = vmatpush1.msra.mxu0 0.0
    %3682 = vmatprep.subr.mxu0 0.0
    %3683 = vmatpush1.msra.mxu0 %v2935
    %3684 = vmatprep.subr.mxu0 0.0
    %3685 = vmatpush1.msra.mxu0 %v2934
    %3686 = vmatprep.subr.mxu0 0.0
    %3687 = vmatpush1.msra.mxu0 %v2933
    %3688 = vmatprep.subr.mxu0 0.0
    %3689 = vmatpush1.msra.mxu0 %v2932
    %3690 = vmatprep.subr.mxu0 0.0
    %3691 = vmatpush2.msra.mxu0 0.0
    %3692 = vmatprep.subr.mxu0 0.0
    %3693 = vmatpush2.msra.mxu0 0.0
    %3694 = vmatprep.subr.mxu0 0.0
    %3695 = vmatpush2.msra.mxu0 0.0
    %3696 = vmatprep.subr.mxu0 0.0
    %3697 = vmatpush2.msra.mxu0 0.0
    %3698 = vmatprep.subr.mxu0 0.0
    %3699 = vmatpush2.msra.mxu0 0.0
    %3700 = vmatprep.subr.mxu0 0.0
    %3701 = vmatpush2.msra.mxu0 0.0
    %3702 = vmatprep.subr.mxu0 0.0
    %3703 = vmatpush2.msra.mxu0 0.0
    %3704 = vmatprep.subr.mxu0 0.0
    %3705 = vmatpush2.msra.mxu0 0.0
    %3706 = vmatprep.subr.mxu0 0.0
    %3707 = vmatpush2.msra.mxu0 0.0
    %3708 = vmatprep.subr.mxu0 0.0
    %3709 = vmatpush2.msra.mxu0 0.0
    %3710 = vmatprep.subr.mxu0 0.0
    %3711 = vmatpush2.msra.mxu0 0.0
    %3712 = vmatprep.subr.mxu0 0.0
    %3713 = vmatpush2.msra.mxu0 0.0
    %3714 = vmatprep.subr.mxu0 0.0
    %3715 = vmatpush2.msra.mxu0 0.0
    %3716 = vmatprep.subr.mxu0 0.0
    %3717 = vmatpush2.msra.mxu0 0.0
    %3718 = vmatprep.subr.mxu0 0.0
    %3719 = vmatpush2.msra.mxu0 0.0
    %3720 = vmatprep.subr.mxu0 0.0
    %3721 = vmatpush2.msra.mxu0 0.0
    %3722 = vmatprep.mubr.f32.mxu0 0.0
    %3723 = vmatmul.mubr.f32.gmra.mxu0 %v3656
    %v3724 = vpop.f32.mrf.mxu0
    %v3725 = vadd.f32 0.0, %v3724
    %v3726 = vpop.f32.mrf.mxu0
    %3727 = vdwg.mxu0
    %v3728 = vadd.f32 %v3655, %v3725
    %v3729 = vxor.u32 %v3728, 2147483648
    %v3730 = vmul.f32 %v3729, 1.442695
    %v3731 = vpow.pop %v3730
    %v3732 = vadd.f32 %v3731, 1.0
    %v3733 = vrcp.pop %v3732
    %v3734 = vmul.f32 1.0, %v3733
    %v3735 = vtanh.pop %v3728
    %v3736 = vmul.f32 %v3734, %v3643
    %3738 = vrot.lane.b32.xlu0 %v3735, 32
    %v3739 = vpop.permute.xlu0 %3738
    %v3741 = vmul.f32 %v3734, %v3739
    %3743 = vrot.lane.b32.xlu0 %v3741, 32
    %v3744 = vpop.permute.xlu0 %3743
    %v3746 = vadd.f32 %v3736, %v3744
    %v3747 = vtanh.pop %v3746
    %3749 = vrot.lane.b32.xlu0 %v3747, 32
    %v3750 = vpop.permute.xlu0 %3749
    %v3752 = vmul.f32 %v3734, %v3750
    %3754 = vrot.lane.b32.xlu0 %v3752, 64
    %v3755 = vpop.permute.xlu0 %3754
    %3757 = vst.msk [vmem:[%s1926] sm:$0xff] %vm1075, %v3755
    %s3758 = scalar_lea.vmem [#allocation11], 32
    %v3759 = vld [vmem:[%s3758] sm:$0xff]
    %v3760 = vld [vmem:[%s3758 + $0x8] sm:$0xff]
    %v3761 = vld [vmem:[%s3758 + $0x10] sm:$0xff]
    %v3762 = vld [vmem:[%s3758 + $0x18] sm:$0xff]
    %v3763 = vld [vmem:[%s1823 + $0x8] sm:$0xff]
    %3764 = vmatprep.subr.mxu0 0.0
    %3765 = vmatpush1.msra.mxu0 0.0
    %3766 = vmatprep.subr.mxu0 0.0
    %3767 = vmatpush1.msra.mxu0 0.0
    %3768 = vmatprep.subr.mxu0 0.0
    %3769 = vmatpush1.msra.mxu0 0.0
    %3770 = vmatprep.subr.mxu0 0.0
    %3771 = vmatpush1.msra.mxu0 0.0
    %3772 = vmatprep.subr.mxu0 0.0
    %3773 = vmatpush1.msra.mxu0 0.0
    %3774 = vmatprep.subr.mxu0 0.0
    %3775 = vmatpush1.msra.mxu0 0.0
    %3776 = vmatprep.subr.mxu0 0.0
    %3777 = vmatpush1.msra.mxu0 0.0
    %3778 = vmatprep.subr.mxu0 0.0
    %3779 = vmatpush1.msra.mxu0 0.0
    %3780 = vmatprep.subr.mxu0 0.0
    %3781 = vmatpush1.msra.mxu0 0.0
    %3782 = vmatprep.subr.mxu0 0.0
    %3783 = vmatpush1.msra.mxu0 0.0
    %3784 = vmatprep.subr.mxu0 0.0
    %3785 = vmatpush1.msra.mxu0 0.0
    %3786 = vmatprep.subr.mxu0 0.0
    %3787 = vmatpush1.msra.mxu0 0.0
    %3788 = vmatprep.subr.mxu0 0.0
    %3789 = vmatpush1.msra.mxu0 %v3762
    %3790 = vmatprep.subr.mxu0 0.0
    %3791 = vmatpush1.msra.mxu0 %v3761
    %3792 = vmatprep.subr.mxu0 0.0
    %3793 = vmatpush1.msra.mxu0 %v3760
    %3794 = vmatprep.subr.mxu0 0.0
    %3795 = vmatpush1.msra.mxu0 %v3759
    %3796 = vmatprep.subr.mxu0 0.0
    %3797 = vmatpush2.msra.mxu0 0.0
    %3798 = vmatprep.subr.mxu0 0.0
    %3799 = vmatpush2.msra.mxu0 0.0
    %3800 = vmatprep.subr.mxu0 0.0
    %3801 = vmatpush2.msra.mxu0 0.0
    %3802 = vmatprep.subr.mxu0 0.0
    %3803 = vmatpush2.msra.mxu0 0.0
    %3804 = vmatprep.subr.mxu0 0.0
    %3805 = vmatpush2.msra.mxu0 0.0
    %3806 = vmatprep.subr.mxu0 0.0
    %3807 = vmatpush2.msra.mxu0 0.0
    %3808 = vmatprep.subr.mxu0 0.0
    %3809 = vmatpush2.msra.mxu0 0.0
    %3810 = vmatprep.subr.mxu0 0.0
    %3811 = vmatpush2.msra.mxu0 0.0
    %3812 = vmatprep.subr.mxu0 0.0
    %3813 = vmatpush2.msra.mxu0 0.0
    %3814 = vmatprep.subr.mxu0 0.0
    %3815 = vmatpush2.msra.mxu0 0.0
    %3816 = vmatprep.subr.mxu0 0.0
    %3817 = vmatpush2.msra.mxu0 0.0
    %3818 = vmatprep.subr.mxu0 0.0
    %3819 = vmatpush2.msra.mxu0 0.0
    %3820 = vmatprep.subr.mxu0 0.0
    %3821 = vmatpush2.msra.mxu0 0.0
    %3822 = vmatprep.subr.mxu0 0.0
    %3823 = vmatpush2.msra.mxu0 0.0
    %3824 = vmatprep.subr.mxu0 0.0
    %3825 = vmatpush2.msra.mxu0 0.0
    %3826 = vmatprep.subr.mxu0 0.0
    %3827 = vmatpush2.msra.mxu0 0.0
    %3828 = vmatprep.mubr.f32.mxu0 0.0
    %3829 = vmatmul.mubr.f32.gmra.mxu0 %v1077
    %v3830 = vpop.f32.mrf.mxu0
    %v3831 = vadd.f32 0.0, %v3830
    %v3832 = vpop.f32.mrf.mxu0
    %3833 = vdwg.mxu0
    %v3834 = vadd.f32 %v3763, %v3831
    %v3835 = vxor.u32 %v3834, 2147483648
    %v3836 = vmul.f32 %v3835, 1.442695
    %v3837 = vpow.pop %v3836
    %v3838 = vadd.f32 %v3837, 1.0
    %v3839 = vrcp.pop %v3838
    %v3840 = vmul.f32 1.0, %v3839
    %v3841 = vtanh.pop %v3834
    %v3842 = vmul.f32 %v3840, 0.0
    %3844 = vrot.lane.b32.xlu0 %v3841, 32
    %v3845 = vpop.permute.xlu0 %3844
    %v3847 = vmul.f32 %v3840, %v3845
    %3849 = vrot.lane.b32.xlu0 %v3847, 32
    %v3850 = vpop.permute.xlu0 %3849
    %v3852 = vadd.f32 %v3842, %v3850
    %v3853 = vtanh.pop %v3852
    %3855 = vrot.lane.b32.xlu0 %v3853, 32
    %v3856 = vpop.permute.xlu0 %3855
    %v3858 = vmul.f32 %v3840, %v3856
    %3860 = vrot.lane.b32.xlu0 %v3858, 96
    %v3861 = vpop.permute.xlu0 %3860
    %3863 = vst.msk [vmem:[%s1926] sm:$0xff] %vm2033, %v3861
    %v3864 = vld [vmem:[%s1716 + $0x8] sm:$0xff]
    %3865 = vrot.lane.b32.xlu0 %v3858, 64
    %v3866 = vpop.permute.xlu0 %3865
    %v3867 = vsel %vm1075, %v3866, 0
    %3869 = vmatprep.subr.mxu0 0.0
    %3870 = vmatpush1.msra.mxu0 0.0
    %3871 = vmatprep.subr.mxu0 0.0
    %3872 = vmatpush1.msra.mxu0 0.0
    %3873 = vmatprep.subr.mxu0 0.0
    %3874 = vmatpush1.msra.mxu0 0.0
    %3875 = vmatprep.subr.mxu0 0.0
    %3876 = vmatpush1.msra.mxu0 0.0
    %3877 = vmatprep.subr.mxu0 0.0
    %3878 = vmatpush1.msra.mxu0 0.0
    %3879 = vmatprep.subr.mxu0 0.0
    %3880 = vmatpush1.msra.mxu0 0.0
    %3881 = vmatprep.subr.mxu0 0.0
    %3882 = vmatpush1.msra.mxu0 0.0
    %3883 = vmatprep.subr.mxu0 0.0
    %3884 = vmatpush1.msra.mxu0 0.0
    %3885 = vmatprep.subr.mxu0 0.0
    %3886 = vmatpush1.msra.mxu0 0.0
    %3887 = vmatprep.subr.mxu0 0.0
    %3888 = vmatpush1.msra.mxu0 0.0
    %3889 = vmatprep.subr.mxu0 0.0
    %3890 = vmatpush1.msra.mxu0 0.0
    %3891 = vmatprep.subr.mxu0 0.0
    %3892 = vmatpush1.msra.mxu0 0.0
    %3893 = vmatprep.subr.mxu0 0.0
    %3894 = vmatpush1.msra.mxu0 %v3762
    %3895 = vmatprep.subr.mxu0 0.0
    %3896 = vmatpush1.msra.mxu0 %v3761
    %3897 = vmatprep.subr.mxu0 0.0
    %3898 = vmatpush1.msra.mxu0 %v3760
    %3899 = vmatprep.subr.mxu0 0.0
    %3900 = vmatpush1.msra.mxu0 %v3759
    %3901 = vmatprep.subr.mxu0 0.0
    %3902 = vmatpush2.msra.mxu0 0.0
    %3903 = vmatprep.subr.mxu0 0.0
    %3904 = vmatpush2.msra.mxu0 0.0
    %3905 = vmatprep.subr.mxu0 0.0
    %3906 = vmatpush2.msra.mxu0 0.0
    %3907 = vmatprep.subr.mxu0 0.0
    %3908 = vmatpush2.msra.mxu0 0.0
    %3909 = vmatprep.subr.mxu0 0.0
    %3910 = vmatpush2.msra.mxu0 0.0
    %3911 = vmatprep.subr.mxu0 0.0
    %3912 = vmatpush2.msra.mxu0 0.0
    %3913 = vmatprep.subr.mxu0 0.0
    %3914 = vmatpush2.msra.mxu0 0.0
    %3915 = vmatprep.subr.mxu0 0.0
    %3916 = vmatpush2.msra.mxu0 0.0
    %3917 = vmatprep.subr.mxu0 0.0
    %3918 = vmatpush2.msra.mxu0 0.0
    %3919 = vmatprep.subr.mxu0 0.0
    %3920 = vmatpush2.msra.mxu0 0.0
    %3921 = vmatprep.subr.mxu0 0.0
    %3922 = vmatpush2.msra.mxu0 0.0
    %3923 = vmatprep.subr.mxu0 0.0
    %3924 = vmatpush2.msra.mxu0 0.0
    %3925 = vmatprep.subr.mxu0 0.0
    %3926 = vmatpush2.msra.mxu0 0.0
    %3927 = vmatprep.subr.mxu0 0.0
    %3928 = vmatpush2.msra.mxu0 0.0
    %3929 = vmatprep.subr.mxu0 0.0
    %3930 = vmatpush2.msra.mxu0 0.0
    %3931 = vmatprep.subr.mxu0 0.0
    %3932 = vmatpush2.msra.mxu0 0.0
    %3933 = vmatprep.mubr.f32.mxu0 0.0
    %3934 = vmatmul.mubr.f32.gmra.mxu0 %v3867
    %v3935 = vpop.f32.mrf.mxu0
    %v3936 = vadd.f32 0.0, %v3935
    %v3937 = vpop.f32.mrf.mxu0
    %3938 = vdwg.mxu0
    %v3939 = vadd.f32 %v3864, %v3936
    %v3940 = vxor.u32 %v3939, 2147483648
    %v3941 = vmul.f32 %v3940, 1.442695
    %v3942 = vpow.pop %v3941
    %v3943 = vadd.f32 %v3942, 1.0
    %v3944 = vrcp.pop %v3943
    %v3945 = vmul.f32 1.0, %v3944
    %v3946 = vtanh.pop %v3939
    %v3947 = vmul.f32 %v3945, %v3852
    %3949 = vrot.lane.b32.xlu0 %v3946, 32
    %v3950 = vpop.permute.xlu0 %3949
    %v3952 = vmul.f32 %v3945, %v3950
    %3954 = vrot.lane.b32.xlu0 %v3952, 32
    %v3955 = vpop.permute.xlu0 %3954
    %v3957 = vadd.f32 %v3947, %v3955
    %v3958 = vtanh.pop %v3957
    %3960 = vrot.lane.b32.xlu0 %v3958, 32
    %v3961 = vpop.permute.xlu0 %3960
    %v3963 = vmul.f32 %v3945, %v3961
    %3965 = vrot.lane.b32.xlu0 %v3963, 96
    %v3966 = vpop.permute.xlu0 %3965
    %3968 = vst.msk [vmem:[%s1819] sm:$0xff] %vm2033, %v3966
    %v3969 = vld [vmem:[%s1609 + $0x8] sm:$0xff]
    %3970 = vrot.lane.b32.xlu0 %v3963, 64
    %v3971 = vpop.permute.xlu0 %3970
    %v3972 = vsel %vm1075, %v3971, 0
    %3974 = vmatprep.subr.mxu0 0.0
    %3975 = vmatpush1.msra.mxu0 0.0
    %3976 = vmatprep.subr.mxu0 0.0
    %3977 = vmatpush1.msra.mxu0 0.0
    %3978 = vmatprep.subr.mxu0 0.0
    %3979 = vmatpush1.msra.mxu0 0.0
    %3980 = vmatprep.subr.mxu0 0.0
    %3981 = vmatpush1.msra.mxu0 0.0
    %3982 = vmatprep.subr.mxu0 0.0
    %3983 = vmatpush1.msra.mxu0 0.0
    %3984 = vmatprep.subr.mxu0 0.0
    %3985 = vmatpush1.msra.mxu0 0.0
    %3986 = vmatprep.subr.mxu0 0.0
    %3987 = vmatpush1.msra.mxu0 0.0
    %3988 = vmatprep.subr.mxu0 0.0
    %3989 = vmatpush1.msra.mxu0 0.0
    %3990 = vmatprep.subr.mxu0 0.0
    %3991 = vmatpush1.msra.mxu0 0.0
    %3992 = vmatprep.subr.mxu0 0.0
    %3993 = vmatpush1.msra.mxu0 0.0
    %3994 = vmatprep.subr.mxu0 0.0
    %3995 = vmatpush1.msra.mxu0 0.0
    %3996 = vmatprep.subr.mxu0 0.0
    %3997 = vmatpush1.msra.mxu0 0.0
    %3998 = vmatprep.subr.mxu0 0.0
    %3999 = vmatpush1.msra.mxu0 %v3762
    %4000 = vmatprep.subr.mxu0 0.0
    %4001 = vmatpush1.msra.mxu0 %v3761
    %4002 = vmatprep.subr.mxu0 0.0
    %4003 = vmatpush1.msra.mxu0 %v3760
    %4004 = vmatprep.subr.mxu0 0.0
    %4005 = vmatpush1.msra.mxu0 %v3759
    %4006 = vmatprep.subr.mxu0 0.0
    %4007 = vmatpush2.msra.mxu0 0.0
    %4008 = vmatprep.subr.mxu0 0.0
    %4009 = vmatpush2.msra.mxu0 0.0
    %4010 = vmatprep.subr.mxu0 0.0
    %4011 = vmatpush2.msra.mxu0 0.0
    %4012 = vmatprep.subr.mxu0 0.0
    %4013 = vmatpush2.msra.mxu0 0.0
    %4014 = vmatprep.subr.mxu0 0.0
    %4015 = vmatpush2.msra.mxu0 0.0
    %4016 = vmatprep.subr.mxu0 0.0
    %4017 = vmatpush2.msra.mxu0 0.0
    %4018 = vmatprep.subr.mxu0 0.0
    %4019 = vmatpush2.msra.mxu0 0.0
    %4020 = vmatprep.subr.mxu0 0.0
    %4021 = vmatpush2.msra.mxu0 0.0
    %4022 = vmatprep.subr.mxu0 0.0
    %4023 = vmatpush2.msra.mxu0 0.0
    %4024 = vmatprep.subr.mxu0 0.0
    %4025 = vmatpush2.msra.mxu0 0.0
    %4026 = vmatprep.subr.mxu0 0.0
    %4027 = vmatpush2.msra.mxu0 0.0
    %4028 = vmatprep.subr.mxu0 0.0
    %4029 = vmatpush2.msra.mxu0 0.0
    %4030 = vmatprep.subr.mxu0 0.0
    %4031 = vmatpush2.msra.mxu0 0.0
    %4032 = vmatprep.subr.mxu0 0.0
    %4033 = vmatpush2.msra.mxu0 0.0
    %4034 = vmatprep.subr.mxu0 0.0
    %4035 = vmatpush2.msra.mxu0 0.0
    %4036 = vmatprep.subr.mxu0 0.0
    %4037 = vmatpush2.msra.mxu0 0.0
    %4038 = vmatprep.mubr.f32.mxu0 0.0
    %4039 = vmatmul.mubr.f32.gmra.mxu0 %v3972
    %v4040 = vpop.f32.mrf.mxu0
    %v4041 = vadd.f32 0.0, %v4040
    %v4042 = vpop.f32.mrf.mxu0
    %4043 = vdwg.mxu0
    %v4044 = vadd.f32 %v3969, %v4041
    %v4045 = vxor.u32 %v4044, 2147483648
    %v4046 = vmul.f32 %v4045, 1.442695
    %v4047 = vpow.pop %v4046
    %v4048 = vadd.f32 %v4047, 1.0
    %v4049 = vrcp.pop %v4048
    %v4050 = vmul.f32 1.0, %v4049
    %v4051 = vtanh.pop %v4044
    %v4052 = vmul.f32 %v4050, %v3957
    %4054 = vrot.lane.b32.xlu0 %v4051, 32
    %v4055 = vpop.permute.xlu0 %4054
    %v4057 = vmul.f32 %v4050, %v4055
    %4059 = vrot.lane.b32.xlu0 %v4057, 32
    %v4060 = vpop.permute.xlu0 %4059
    %v4062 = vadd.f32 %v4052, %v4060
    %v4063 = vtanh.pop %v4062
    %4065 = vrot.lane.b32.xlu0 %v4063, 32
    %v4066 = vpop.permute.xlu0 %4065
    %v4068 = vmul.f32 %v4050, %v4066
    %4070 = vrot.lane.b32.xlu0 %v4068, 96
    %v4071 = vpop.permute.xlu0 %4070
    %4073 = vst.msk [vmem:[%s1712] sm:$0xff] %vm2033, %v4071
    %v4074 = vld [vmem:[%s1502 + $0x8] sm:$0xff]
    %4075 = vrot.lane.b32.xlu0 %v4068, 64
    %v4076 = vpop.permute.xlu0 %4075
    %v4077 = vsel %vm1075, %v4076, 0
    %4079 = vmatprep.subr.mxu0 0.0
    %4080 = vmatpush1.msra.mxu0 0.0
    %4081 = vmatprep.subr.mxu0 0.0
    %4082 = vmatpush1.msra.mxu0 0.0
    %4083 = vmatprep.subr.mxu0 0.0
    %4084 = vmatpush1.msra.mxu0 0.0
    %4085 = vmatprep.subr.mxu0 0.0
    %4086 = vmatpush1.msra.mxu0 0.0
    %4087 = vmatprep.subr.mxu0 0.0
    %4088 = vmatpush1.msra.mxu0 0.0
    %4089 = vmatprep.subr.mxu0 0.0
    %4090 = vmatpush1.msra.mxu0 0.0
    %4091 = vmatprep.subr.mxu0 0.0
    %4092 = vmatpush1.msra.mxu0 0.0
    %4093 = vmatprep.subr.mxu0 0.0
    %4094 = vmatpush1.msra.mxu0 0.0
    %4095 = vmatprep.subr.mxu0 0.0
    %4096 = vmatpush1.msra.mxu0 0.0
    %4097 = vmatprep.subr.mxu0 0.0
    %4098 = vmatpush1.msra.mxu0 0.0
    %4099 = vmatprep.subr.mxu0 0.0
    %4100 = vmatpush1.msra.mxu0 0.0
    %4101 = vmatprep.subr.mxu0 0.0
    %4102 = vmatpush1.msra.mxu0 0.0
    %4103 = vmatprep.subr.mxu0 0.0
    %4104 = vmatpush1.msra.mxu0 %v3762
    %4105 = vmatprep.subr.mxu0 0.0
    %4106 = vmatpush1.msra.mxu0 %v3761
    %4107 = vmatprep.subr.mxu0 0.0
    %4108 = vmatpush1.msra.mxu0 %v3760
    %4109 = vmatprep.subr.mxu0 0.0
    %4110 = vmatpush1.msra.mxu0 %v3759
    %4111 = vmatprep.subr.mxu0 0.0
    %4112 = vmatpush2.msra.mxu0 0.0
    %4113 = vmatprep.subr.mxu0 0.0
    %4114 = vmatpush2.msra.mxu0 0.0
    %4115 = vmatprep.subr.mxu0 0.0
    %4116 = vmatpush2.msra.mxu0 0.0
    %4117 = vmatprep.subr.mxu0 0.0
    %4118 = vmatpush2.msra.mxu0 0.0
    %4119 = vmatprep.subr.mxu0 0.0
    %4120 = vmatpush2.msra.mxu0 0.0
    %4121 = vmatprep.subr.mxu0 0.0
    %4122 = vmatpush2.msra.mxu0 0.0
    %4123 = vmatprep.subr.mxu0 0.0
    %4124 = vmatpush2.msra.mxu0 0.0
    %4125 = vmatprep.subr.mxu0 0.0
    %4126 = vmatpush2.msra.mxu0 0.0
    %4127 = vmatprep.subr.mxu0 0.0
    %4128 = vmatpush2.msra.mxu0 0.0
    %4129 = vmatprep.subr.mxu0 0.0
    %4130 = vmatpush2.msra.mxu0 0.0
    %4131 = vmatprep.subr.mxu0 0.0
    %4132 = vmatpush2.msra.mxu0 0.0
    %4133 = vmatprep.subr.mxu0 0.0
    %4134 = vmatpush2.msra.mxu0 0.0
    %4135 = vmatprep.subr.mxu0 0.0
    %4136 = vmatpush2.msra.mxu0 0.0
    %4137 = vmatprep.subr.mxu0 0.0
    %4138 = vmatpush2.msra.mxu0 0.0
    %4139 = vmatprep.subr.mxu0 0.0
    %4140 = vmatpush2.msra.mxu0 0.0
    %4141 = vmatprep.subr.mxu0 0.0
    %4142 = vmatpush2.msra.mxu0 0.0
    %4143 = vmatprep.mubr.f32.mxu0 0.0
    %4144 = vmatmul.mubr.f32.gmra.mxu0 %v4077
    %v4145 = vpop.f32.mrf.mxu0
    %v4146 = vadd.f32 0.0, %v4145
    %v4147 = vpop.f32.mrf.mxu0
    %4148 = vdwg.mxu0
    %v4149 = vadd.f32 %v4074, %v4146
    %v4150 = vxor.u32 %v4149, 2147483648
    %v4151 = vmul.f32 %v4150, 1.442695
    %v4152 = vpow.pop %v4151
    %v4153 = vadd.f32 %v4152, 1.0
    %v4154 = vrcp.pop %v4153
    %v4155 = vmul.f32 1.0, %v4154
    %v4156 = vtanh.pop %v4149
    %v4157 = vmul.f32 %v4155, %v4062
    %4159 = vrot.lane.b32.xlu0 %v4156, 32
    %v4160 = vpop.permute.xlu0 %4159
    %v4162 = vmul.f32 %v4155, %v4160
    %4164 = vrot.lane.b32.xlu0 %v4162, 32
    %v4165 = vpop.permute.xlu0 %4164
    %v4167 = vadd.f32 %v4157, %v4165
    %v4168 = vtanh.pop %v4167
    %4170 = vrot.lane.b32.xlu0 %v4168, 32
    %v4171 = vpop.permute.xlu0 %4170
    %v4173 = vmul.f32 %v4155, %v4171
    %4175 = vrot.lane.b32.xlu0 %v4173, 96
    %v4176 = vpop.permute.xlu0 %4175
    %4178 = vst.msk [vmem:[%s1605] sm:$0xff] %vm2033, %v4176
    %v4179 = vld [vmem:[%s1395 + $0x8] sm:$0xff]
    %4180 = vrot.lane.b32.xlu0 %v4173, 64
    %v4181 = vpop.permute.xlu0 %4180
    %v4182 = vsel %vm1075, %v4181, 0
    %4184 = vmatprep.subr.mxu0 0.0
    %4185 = vmatpush1.msra.mxu0 0.0
    %4186 = vmatprep.subr.mxu0 0.0
    %4187 = vmatpush1.msra.mxu0 0.0
    %4188 = vmatprep.subr.mxu0 0.0
    %4189 = vmatpush1.msra.mxu0 0.0
    %4190 = vmatprep.subr.mxu0 0.0
    %4191 = vmatpush1.msra.mxu0 0.0
    %4192 = vmatprep.subr.mxu0 0.0
    %4193 = vmatpush1.msra.mxu0 0.0
    %4194 = vmatprep.subr.mxu0 0.0
    %4195 = vmatpush1.msra.mxu0 0.0
    %4196 = vmatprep.subr.mxu0 0.0
    %4197 = vmatpush1.msra.mxu0 0.0
    %4198 = vmatprep.subr.mxu0 0.0
    %4199 = vmatpush1.msra.mxu0 0.0
    %4200 = vmatprep.subr.mxu0 0.0
    %4201 = vmatpush1.msra.mxu0 0.0
    %4202 = vmatprep.subr.mxu0 0.0
    %4203 = vmatpush1.msra.mxu0 0.0
    %4204 = vmatprep.subr.mxu0 0.0
    %4205 = vmatpush1.msra.mxu0 0.0
    %4206 = vmatprep.subr.mxu0 0.0
    %4207 = vmatpush1.msra.mxu0 0.0
    %4208 = vmatprep.subr.mxu0 0.0
    %4209 = vmatpush1.msra.mxu0 %v3762
    %4210 = vmatprep.subr.mxu0 0.0
    %4211 = vmatpush1.msra.mxu0 %v3761
    %4212 = vmatprep.subr.mxu0 0.0
    %4213 = vmatpush1.msra.mxu0 %v3760
    %4214 = vmatprep.subr.mxu0 0.0
    %4215 = vmatpush1.msra.mxu0 %v3759
    %4216 = vmatprep.subr.mxu0 0.0
    %4217 = vmatpush2.msra.mxu0 0.0
    %4218 = vmatprep.subr.mxu0 0.0
    %4219 = vmatpush2.msra.mxu0 0.0
    %4220 = vmatprep.subr.mxu0 0.0
    %4221 = vmatpush2.msra.mxu0 0.0
    %4222 = vmatprep.subr.mxu0 0.0
    %4223 = vmatpush2.msra.mxu0 0.0
    %4224 = vmatprep.subr.mxu0 0.0
    %4225 = vmatpush2.msra.mxu0 0.0
    %4226 = vmatprep.subr.mxu0 0.0
    %4227 = vmatpush2.msra.mxu0 0.0
    %4228 = vmatprep.subr.mxu0 0.0
    %4229 = vmatpush2.msra.mxu0 0.0
    %4230 = vmatprep.subr.mxu0 0.0
    %4231 = vmatpush2.msra.mxu0 0.0
    %4232 = vmatprep.subr.mxu0 0.0
    %4233 = vmatpush2.msra.mxu0 0.0
    %4234 = vmatprep.subr.mxu0 0.0
    %4235 = vmatpush2.msra.mxu0 0.0
    %4236 = vmatprep.subr.mxu0 0.0
    %4237 = vmatpush2.msra.mxu0 0.0
    %4238 = vmatprep.subr.mxu0 0.0
    %4239 = vmatpush2.msra.mxu0 0.0
    %4240 = vmatprep.subr.mxu0 0.0
    %4241 = vmatpush2.msra.mxu0 0.0
    %4242 = vmatprep.subr.mxu0 0.0
    %4243 = vmatpush2.msra.mxu0 0.0
    %4244 = vmatprep.subr.mxu0 0.0
    %4245 = vmatpush2.msra.mxu0 0.0
    %4246 = vmatprep.subr.mxu0 0.0
    %4247 = vmatpush2.msra.mxu0 0.0
    %4248 = vmatprep.mubr.f32.mxu0 0.0
    %4249 = vmatmul.mubr.f32.gmra.mxu0 %v4182
    %v4250 = vpop.f32.mrf.mxu0
    %v4251 = vadd.f32 0.0, %v4250
    %v4252 = vpop.f32.mrf.mxu0
    %4253 = vdwg.mxu0
    %v4254 = vadd.f32 %v4179, %v4251
    %v4255 = vxor.u32 %v4254, 2147483648
    %v4256 = vmul.f32 %v4255, 1.442695
    %v4257 = vpow.pop %v4256
    %v4258 = vadd.f32 %v4257, 1.0
    %v4259 = vrcp.pop %v4258
    %v4260 = vmul.f32 1.0, %v4259
    %v4261 = vtanh.pop %v4254
    %v4262 = vmul.f32 %v4260, %v4167
    %4264 = vrot.lane.b32.xlu0 %v4261, 32
    %v4265 = vpop.permute.xlu0 %4264
    %v4267 = vmul.f32 %v4260, %v4265
    %4269 = vrot.lane.b32.xlu0 %v4267, 32
    %v4270 = vpop.permute.xlu0 %4269
    %v4272 = vadd.f32 %v4262, %v4270
    %v4273 = vtanh.pop %v4272
    %4275 = vrot.lane.b32.xlu0 %v4273, 32
    %v4276 = vpop.permute.xlu0 %4275
    %v4278 = vmul.f32 %v4260, %v4276
    %4280 = vrot.lane.b32.xlu0 %v4278, 96
    %v4281 = vpop.permute.xlu0 %4280
    %4283 = vst.msk [vmem:[%s1498] sm:$0xff] %vm2033, %v4281
    %v4284 = vld [vmem:[%s1288 + $0x8] sm:$0xff]
    %4285 = vrot.lane.b32.xlu0 %v4278, 64
    %v4286 = vpop.permute.xlu0 %4285
    %v4287 = vsel %vm1075, %v4286, 0
    %4289 = vmatprep.subr.mxu0 0.0
    %4290 = vmatpush1.msra.mxu0 0.0
    %4291 = vmatprep.subr.mxu0 0.0
    %4292 = vmatpush1.msra.mxu0 0.0
    %4293 = vmatprep.subr.mxu0 0.0
    %4294 = vmatpush1.msra.mxu0 0.0
    %4295 = vmatprep.subr.mxu0 0.0
    %4296 = vmatpush1.msra.mxu0 0.0
    %4297 = vmatprep.subr.mxu0 0.0
    %4298 = vmatpush1.msra.mxu0 0.0
    %4299 = vmatprep.subr.mxu0 0.0
    %4300 = vmatpush1.msra.mxu0 0.0
    %4301 = vmatprep.subr.mxu0 0.0
    %4302 = vmatpush1.msra.mxu0 0.0
    %4303 = vmatprep.subr.mxu0 0.0
    %4304 = vmatpush1.msra.mxu0 0.0
    %4305 = vmatprep.subr.mxu0 0.0
    %4306 = vmatpush1.msra.mxu0 0.0
    %4307 = vmatprep.subr.mxu0 0.0
    %4308 = vmatpush1.msra.mxu0 0.0
    %4309 = vmatprep.subr.mxu0 0.0
    %4310 = vmatpush1.msra.mxu0 0.0
    %4311 = vmatprep.subr.mxu0 0.0
    %4312 = vmatpush1.msra.mxu0 0.0
    %4313 = vmatprep.subr.mxu0 0.0
    %4314 = vmatpush1.msra.mxu0 %v3762
    %4315 = vmatprep.subr.mxu0 0.0
    %4316 = vmatpush1.msra.mxu0 %v3761
    %4317 = vmatprep.subr.mxu0 0.0
    %4318 = vmatpush1.msra.mxu0 %v3760
    %4319 = vmatprep.subr.mxu0 0.0
    %4320 = vmatpush1.msra.mxu0 %v3759
    %4321 = vmatprep.subr.mxu0 0.0
    %4322 = vmatpush2.msra.mxu0 0.0
    %4323 = vmatprep.subr.mxu0 0.0
    %4324 = vmatpush2.msra.mxu0 0.0
    %4325 = vmatprep.subr.mxu0 0.0
    %4326 = vmatpush2.msra.mxu0 0.0
    %4327 = vmatprep.subr.mxu0 0.0
    %4328 = vmatpush2.msra.mxu0 0.0
    %4329 = vmatprep.subr.mxu0 0.0
    %4330 = vmatpush2.msra.mxu0 0.0
    %4331 = vmatprep.subr.mxu0 0.0
    %4332 = vmatpush2.msra.mxu0 0.0
    %4333 = vmatprep.subr.mxu0 0.0
    %4334 = vmatpush2.msra.mxu0 0.0
    %4335 = vmatprep.subr.mxu0 0.0
    %4336 = vmatpush2.msra.mxu0 0.0
    %4337 = vmatprep.subr.mxu0 0.0
    %4338 = vmatpush2.msra.mxu0 0.0
    %4339 = vmatprep.subr.mxu0 0.0
    %4340 = vmatpush2.msra.mxu0 0.0
    %4341 = vmatprep.subr.mxu0 0.0
    %4342 = vmatpush2.msra.mxu0 0.0
    %4343 = vmatprep.subr.mxu0 0.0
    %4344 = vmatpush2.msra.mxu0 0.0
    %4345 = vmatprep.subr.mxu0 0.0
    %4346 = vmatpush2.msra.mxu0 0.0
    %4347 = vmatprep.subr.mxu0 0.0
    %4348 = vmatpush2.msra.mxu0 0.0
    %4349 = vmatprep.subr.mxu0 0.0
    %4350 = vmatpush2.msra.mxu0 0.0
    %4351 = vmatprep.subr.mxu0 0.0
    %4352 = vmatpush2.msra.mxu0 0.0
    %4353 = vmatprep.mubr.f32.mxu0 0.0
    %4354 = vmatmul.mubr.f32.gmra.mxu0 %v4287
    %v4355 = vpop.f32.mrf.mxu0
    %v4356 = vadd.f32 0.0, %v4355
    %v4357 = vpop.f32.mrf.mxu0
    %4358 = vdwg.mxu0
    %v4359 = vadd.f32 %v4284, %v4356
    %v4360 = vxor.u32 %v4359, 2147483648
    %v4361 = vmul.f32 %v4360, 1.442695
    %v4362 = vpow.pop %v4361
    %v4363 = vadd.f32 %v4362, 1.0
    %v4364 = vrcp.pop %v4363
    %v4365 = vmul.f32 1.0, %v4364
    %v4366 = vtanh.pop %v4359
    %v4367 = vmul.f32 %v4365, %v4272
    %4369 = vrot.lane.b32.xlu0 %v4366, 32
    %v4370 = vpop.permute.xlu0 %4369
    %v4372 = vmul.f32 %v4365, %v4370
    %4374 = vrot.lane.b32.xlu0 %v4372, 32
    %v4375 = vpop.permute.xlu0 %4374
    %v4377 = vadd.f32 %v4367, %v4375
    %v4378 = vtanh.pop %v4377
    %4380 = vrot.lane.b32.xlu0 %v4378, 32
    %v4381 = vpop.permute.xlu0 %4380
    %v4383 = vmul.f32 %v4365, %v4381
    %4385 = vrot.lane.b32.xlu0 %v4383, 96
    %v4386 = vpop.permute.xlu0 %4385
    %4388 = vst.msk [vmem:[%s1391] sm:$0xff] %vm2033, %v4386
    %v4389 = vld [vmem:[%s1181 + $0x8] sm:$0xff]
    %4390 = vrot.lane.b32.xlu0 %v4383, 64
    %v4391 = vpop.permute.xlu0 %4390
    %v4392 = vsel %vm1075, %v4391, 0
    %4394 = vmatprep.subr.mxu0 0.0
    %4395 = vmatpush1.msra.mxu0 0.0
    %4396 = vmatprep.subr.mxu0 0.0
    %4397 = vmatpush1.msra.mxu0 0.0
    %4398 = vmatprep.subr.mxu0 0.0
    %4399 = vmatpush1.msra.mxu0 0.0
    %4400 = vmatprep.subr.mxu0 0.0
    %4401 = vmatpush1.msra.mxu0 0.0
    %4402 = vmatprep.subr.mxu0 0.0
    %4403 = vmatpush1.msra.mxu0 0.0
    %4404 = vmatprep.subr.mxu0 0.0
    %4405 = vmatpush1.msra.mxu0 0.0
    %4406 = vmatprep.subr.mxu0 0.0
    %4407 = vmatpush1.msra.mxu0 0.0
    %4408 = vmatprep.subr.mxu0 0.0
    %4409 = vmatpush1.msra.mxu0 0.0
    %4410 = vmatprep.subr.mxu0 0.0
    %4411 = vmatpush1.msra.mxu0 0.0
    %4412 = vmatprep.subr.mxu0 0.0
    %4413 = vmatpush1.msra.mxu0 0.0
    %4414 = vmatprep.subr.mxu0 0.0
    %4415 = vmatpush1.msra.mxu0 0.0
    %4416 = vmatprep.subr.mxu0 0.0
    %4417 = vmatpush1.msra.mxu0 0.0
    %4418 = vmatprep.subr.mxu0 0.0
    %4419 = vmatpush1.msra.mxu0 %v3762
    %4420 = vmatprep.subr.mxu0 0.0
    %4421 = vmatpush1.msra.mxu0 %v3761
    %4422 = vmatprep.subr.mxu0 0.0
    %4423 = vmatpush1.msra.mxu0 %v3760
    %4424 = vmatprep.subr.mxu0 0.0
    %4425 = vmatpush1.msra.mxu0 %v3759
    %4426 = vmatprep.subr.mxu0 0.0
    %4427 = vmatpush2.msra.mxu0 0.0
    %4428 = vmatprep.subr.mxu0 0.0
    %4429 = vmatpush2.msra.mxu0 0.0
    %4430 = vmatprep.subr.mxu0 0.0
    %4431 = vmatpush2.msra.mxu0 0.0
    %4432 = vmatprep.subr.mxu0 0.0
    %4433 = vmatpush2.msra.mxu0 0.0
    %4434 = vmatprep.subr.mxu0 0.0
    %4435 = vmatpush2.msra.mxu0 0.0
    %4436 = vmatprep.subr.mxu0 0.0
    %4437 = vmatpush2.msra.mxu0 0.0
    %4438 = vmatprep.subr.mxu0 0.0
    %4439 = vmatpush2.msra.mxu0 0.0
    %4440 = vmatprep.subr.mxu0 0.0
    %4441 = vmatpush2.msra.mxu0 0.0
    %4442 = vmatprep.subr.mxu0 0.0
    %4443 = vmatpush2.msra.mxu0 0.0
    %4444 = vmatprep.subr.mxu0 0.0
    %4445 = vmatpush2.msra.mxu0 0.0
    %4446 = vmatprep.subr.mxu0 0.0
    %4447 = vmatpush2.msra.mxu0 0.0
    %4448 = vmatprep.subr.mxu0 0.0
    %4449 = vmatpush2.msra.mxu0 0.0
    %4450 = vmatprep.subr.mxu0 0.0
    %4451 = vmatpush2.msra.mxu0 0.0
    %4452 = vmatprep.subr.mxu0 0.0
    %4453 = vmatpush2.msra.mxu0 0.0
    %4454 = vmatprep.subr.mxu0 0.0
    %4455 = vmatpush2.msra.mxu0 0.0
    %4456 = vmatprep.subr.mxu0 0.0
    %4457 = vmatpush2.msra.mxu0 0.0
    %4458 = vmatprep.mubr.f32.mxu0 0.0
    %4459 = vmatmul.mubr.f32.gmra.mxu0 %v4392
    %v4460 = vpop.f32.mrf.mxu0
    %v4461 = vadd.f32 0.0, %v4460
    %v4462 = vpop.f32.mrf.mxu0
    %4463 = vdwg.mxu0
    %v4464 = vadd.f32 %v4389, %v4461
    %v4465 = vxor.u32 %v4464, 2147483648
    %v4466 = vmul.f32 %v4465, 1.442695
    %v4467 = vpow.pop %v4466
    %v4468 = vadd.f32 %v4467, 1.0
    %v4469 = vrcp.pop %v4468
    %v4470 = vmul.f32 1.0, %v4469
    %v4471 = vtanh.pop %v4464
    %v4472 = vmul.f32 %v4470, %v4377
    %4474 = vrot.lane.b32.xlu0 %v4471, 32
    %v4475 = vpop.permute.xlu0 %4474
    %v4477 = vmul.f32 %v4470, %v4475
    %4479 = vrot.lane.b32.xlu0 %v4477, 32
    %v4480 = vpop.permute.xlu0 %4479
    %v4482 = vadd.f32 %v4472, %v4480
    %v4483 = vtanh.pop %v4482
    %4485 = vrot.lane.b32.xlu0 %v4483, 32
    %v4486 = vpop.permute.xlu0 %4485
    %v4488 = vmul.f32 %v4470, %v4486
    %4490 = vrot.lane.b32.xlu0 %v4488, 96
    %v4491 = vpop.permute.xlu0 %4490
    %4493 = vst.msk [vmem:[%s1284] sm:$0xff] %vm2033, %v4491
    %v4494 = vld [vmem:[%s1073 + $0x8] sm:$0xff]
    %4495 = vrot.lane.b32.xlu0 %v4488, 64
    %v4496 = vpop.permute.xlu0 %4495
    %v4497 = vsel %vm1075, %v4496, 0
    %4499 = vmatprep.subr.mxu0 0.0
    %4500 = vmatpush1.msra.mxu0 0.0
    %4501 = vmatprep.subr.mxu0 0.0
    %4502 = vmatpush1.msra.mxu0 0.0
    %4503 = vmatprep.subr.mxu0 0.0
    %4504 = vmatpush1.msra.mxu0 0.0
    %4505 = vmatprep.subr.mxu0 0.0
    %4506 = vmatpush1.msra.mxu0 0.0
    %4507 = vmatprep.subr.mxu0 0.0
    %4508 = vmatpush1.msra.mxu0 0.0
    %4509 = vmatprep.subr.mxu0 0.0
    %4510 = vmatpush1.msra.mxu0 0.0
    %4511 = vmatprep.subr.mxu0 0.0
    %4512 = vmatpush1.msra.mxu0 0.0
    %4513 = vmatprep.subr.mxu0 0.0
    %4514 = vmatpush1.msra.mxu0 0.0
    %4515 = vmatprep.subr.mxu0 0.0
    %4516 = vmatpush1.msra.mxu0 0.0
    %4517 = vmatprep.subr.mxu0 0.0
    %4518 = vmatpush1.msra.mxu0 0.0
    %4519 = vmatprep.subr.mxu0 0.0
    %4520 = vmatpush1.msra.mxu0 0.0
    %4521 = vmatprep.subr.mxu0 0.0
    %4522 = vmatpush1.msra.mxu0 0.0
    %4523 = vmatprep.subr.mxu0 0.0
    %4524 = vmatpush1.msra.mxu0 %v3762
    %4525 = vmatprep.subr.mxu0 0.0
    %4526 = vmatpush1.msra.mxu0 %v3761
    %4527 = vmatprep.subr.mxu0 0.0
    %4528 = vmatpush1.msra.mxu0 %v3760
    %4529 = vmatprep.subr.mxu0 0.0
    %4530 = vmatpush1.msra.mxu0 %v3759
    %4531 = vmatprep.subr.mxu0 0.0
    %4532 = vmatpush2.msra.mxu0 0.0
    %4533 = vmatprep.subr.mxu0 0.0
    %4534 = vmatpush2.msra.mxu0 0.0
    %4535 = vmatprep.subr.mxu0 0.0
    %4536 = vmatpush2.msra.mxu0 0.0
    %4537 = vmatprep.subr.mxu0 0.0
    %4538 = vmatpush2.msra.mxu0 0.0
    %4539 = vmatprep.subr.mxu0 0.0
    %4540 = vmatpush2.msra.mxu0 0.0
    %4541 = vmatprep.subr.mxu0 0.0
    %4542 = vmatpush2.msra.mxu0 0.0
    %4543 = vmatprep.subr.mxu0 0.0
    %4544 = vmatpush2.msra.mxu0 0.0
    %4545 = vmatprep.subr.mxu0 0.0
    %4546 = vmatpush2.msra.mxu0 0.0
    %4547 = vmatprep.subr.mxu0 0.0
    %4548 = vmatpush2.msra.mxu0 0.0
    %4549 = vmatprep.subr.mxu0 0.0
    %4550 = vmatpush2.msra.mxu0 0.0
    %4551 = vmatprep.subr.mxu0 0.0
    %4552 = vmatpush2.msra.mxu0 0.0
    %4553 = vmatprep.subr.mxu0 0.0
    %4554 = vmatpush2.msra.mxu0 0.0
    %4555 = vmatprep.subr.mxu0 0.0
    %4556 = vmatpush2.msra.mxu0 0.0
    %4557 = vmatprep.subr.mxu0 0.0
    %4558 = vmatpush2.msra.mxu0 0.0
    %4559 = vmatprep.subr.mxu0 0.0
    %4560 = vmatpush2.msra.mxu0 0.0
    %4561 = vmatprep.subr.mxu0 0.0
    %4562 = vmatpush2.msra.mxu0 0.0
    %4563 = vmatprep.mubr.f32.mxu0 0.0
    %4564 = vmatmul.mubr.f32.gmra.mxu0 %v4497
    %v4565 = vpop.f32.mrf.mxu0
    %v4566 = vadd.f32 0.0, %v4565
    %v4567 = vpop.f32.mrf.mxu0
    %4568 = vdwg.mxu0
    %v4569 = vadd.f32 %v4494, %v4566
    %v4570 = vxor.u32 %v4569, 2147483648
    %v4571 = vmul.f32 %v4570, 1.442695
    %v4572 = vpow.pop %v4571
    %v4573 = vadd.f32 %v4572, 1.0
    %v4574 = vrcp.pop %v4573
    %v4575 = vmul.f32 1.0, %v4574
    %v4576 = vtanh.pop %v4569
    %v4577 = vmul.f32 %v4575, %v4482
    %4579 = vrot.lane.b32.xlu0 %v4576, 32
    %v4580 = vpop.permute.xlu0 %4579
    %v4582 = vmul.f32 %v4575, %v4580
    %4584 = vrot.lane.b32.xlu0 %v4582, 32
    %v4585 = vpop.permute.xlu0 %4584
    %v4587 = vadd.f32 %v4577, %v4585
    %v4588 = vtanh.pop %v4587
    %4590 = vrot.lane.b32.xlu0 %v4588, 32
    %v4591 = vpop.permute.xlu0 %4590
    %v4593 = vmul.f32 %v4575, %v4591
    %4595 = vrot.lane.b32.xlu0 %v4593, 96
    %v4596 = vpop.permute.xlu0 %4595
    %4598 = vst.msk [vmem:[#allocation3] sm:$0xff] %vm2033, %v4596
    %s4599 = sld [smem:[#allocation4]]
    %s4600 = sld [smem:[#allocation4 + $0x80]]
    %s4601 = smul.u32 %s4600, 8
    %s4602 = sadd.s32 %s4601, %s4599
    %s4603 = scalar_lea.vmem [#allocation3], %s4602
    %v4604 = vld [vmem:[%s4603] sm:$0x1]
    %s4605 = sld [smem:[#allocation4 + $0x100]]
    %s4606 = smul.u32 %s4605, 8
    %s4607 = sadd.s32 %s4606, %s4599
    %s4608 = scalar_lea.vmem [#allocation3], %s4607
    %v4609 = vld [vmem:[%s4608] sm:$0x1]
    %s4610 = sld [smem:[#allocation4 + $0x180]]
    %s4611 = smul.u32 %s4610, 8
    %s4612 = sadd.s32 %s4611, %s4599
    %s4613 = scalar_lea.vmem [#allocation3], %s4612
    %v4614 = vld [vmem:[%s4613] sm:$0x1]
    %s4615 = sld [smem:[#allocation4 + $0x200]]
    %s4616 = smul.u32 %s4615, 8
    %s4617 = sadd.s32 %s4616, %s4599
    %s4618 = scalar_lea.vmem [#allocation3], %s4617
    %v4619 = vld [vmem:[%s4618] sm:$0x1]
    %4621 = vrot.lane.b32.xlu0 %v4614, 64
    %v4622 = vpop.permute.xlu0 %4621
    %4625 = vrot.lane.b32.xlu0 %v4619, 64
    %v4626 = vpop.permute.xlu0 %4625
    %v4628 = vsel %vm1075, %v4604, %v4609
    %v4629 = vsel %vm2830, %v4628, %v4622
    %vm4630 = vcmask 785408
    %v4631 = vsel %vm4630, %v4629, %v4626
    %s4632 = sld [smem:[#allocation4 + $0x1]]
    %s4633 = sld [smem:[#allocation4 + $0x81]]
    %s4634 = smul.u32 %s4633, 8
    %s4635 = sadd.s32 %s4634, %s4632
    %s4636 = scalar_lea.vmem [#allocation3], %s4635
    %v4637 = vld [vmem:[%s4636] sm:$0x1]
    %s4638 = sld [smem:[#allocation4 + $0x101]]
    %s4639 = smul.u32 %s4638, 8
    %s4640 = sadd.s32 %s4639, %s4632
    %s4641 = scalar_lea.vmem [#allocation3], %s4640
    %v4642 = vld [vmem:[%s4641] sm:$0x1]
    %s4643 = sld [smem:[#allocation4 + $0x181]]
    %s4644 = smul.u32 %s4643, 8
    %s4645 = sadd.s32 %s4644, %s4632
    %s4646 = scalar_lea.vmem [#allocation3], %s4645
    %v4647 = vld [vmem:[%s4646] sm:$0x1]
    %s4648 = sld [smem:[#allocation4 + $0x201]]
    %s4649 = smul.u32 %s4648, 8
    %s4650 = sadd.s32 %s4649, %s4632
    %s4651 = scalar_lea.vmem [#allocation3], %s4650
    %v4652 = vld [vmem:[%s4651] sm:$0x1]
    %4654 = vrot.lane.b32.xlu0 %v4647, 64
    %v4655 = vpop.permute.xlu0 %4654
    %4658 = vrot.lane.b32.xlu0 %v4652, 64
    %v4659 = vpop.permute.xlu0 %4658
    %v4661 = vsel %vm1075, %v4637, %v4642
    %v4662 = vsel %vm2830, %v4661, %v4655
    %v4663 = vsel %vm4630, %v4662, %v4659
    %s4664 = sld [smem:[#allocation4 + $0x2]]
    %s4665 = sld [smem:[#allocation4 + $0x82]]
    %s4666 = smul.u32 %s4665, 8
    %s4667 = sadd.s32 %s4666, %s4664
    %s4668 = scalar_lea.vmem [#allocation3], %s4667
    %v4669 = vld [vmem:[%s4668] sm:$0x1]
    %s4670 = sld [smem:[#allocation4 + $0x102]]
    %s4671 = smul.u32 %s4670, 8
    %s4672 = sadd.s32 %s4671, %s4664
    %s4673 = scalar_lea.vmem [#allocation3], %s4672
    %v4674 = vld [vmem:[%s4673] sm:$0x1]
    %s4675 = sld [smem:[#allocation4 + $0x182]]
    %s4676 = smul.u32 %s4675, 8
    %s4677 = sadd.s32 %s4676, %s4664
    %s4678 = scalar_lea.vmem [#allocation3], %s4677
    %v4679 = vld [vmem:[%s4678] sm:$0x1]
    %s4680 = sld [smem:[#allocation4 + $0x202]]
    %s4681 = smul.u32 %s4680, 8
    %s4682 = sadd.s32 %s4681, %s4664
    %s4683 = scalar_lea.vmem [#allocation3], %s4682
    %v4684 = vld [vmem:[%s4683] sm:$0x1]
    %4686 = vrot.lane.b32.xlu0 %v4679, 64
    %v4687 = vpop.permute.xlu0 %4686
    %4690 = vrot.lane.b32.xlu0 %v4684, 64
    %v4691 = vpop.permute.xlu0 %4690
    %v4693 = vsel %vm1075, %v4669, %v4674
    %v4694 = vsel %vm2830, %v4693, %v4687
    %v4695 = vsel %vm4630, %v4694, %v4691
    %s4696 = sld [smem:[#allocation4 + $0x3]]
    %s4697 = sld [smem:[#allocation4 + $0x83]]
    %s4698 = smul.u32 %s4697, 8
    %s4699 = sadd.s32 %s4698, %s4696
    %s4700 = scalar_lea.vmem [#allocation3], %s4699
    %v4701 = vld [vmem:[%s4700] sm:$0x1]
    %s4702 = sld [smem:[#allocation4 + $0x103]]
    %s4703 = smul.u32 %s4702, 8
    %s4704 = sadd.s32 %s4703, %s4696
    %s4705 = scalar_lea.vmem [#allocation3], %s4704
    %v4706 = vld [vmem:[%s4705] sm:$0x1]
    %s4707 = sld [smem:[#allocation4 + $0x183]]
    %s4708 = smul.u32 %s4707, 8
    %s4709 = sadd.s32 %s4708, %s4696
    %s4710 = scalar_lea.vmem [#allocation3], %s4709
    %v4711 = vld [vmem:[%s4710] sm:$0x1]
    %s4712 = sld [smem:[#allocation4 + $0x203]]
    %s4713 = smul.u32 %s4712, 8
    %s4714 = sadd.s32 %s4713, %s4696
    %s4715 = scalar_lea.vmem [#allocation3], %s4714
    %v4716 = vld [vmem:[%s4715] sm:$0x1]
    %4718 = vrot.lane.b32.xlu0 %v4711, 64
    %v4719 = vpop.permute.xlu0 %4718
    %4722 = vrot.lane.b32.xlu0 %v4716, 64
    %v4723 = vpop.permute.xlu0 %4722
    %v4725 = vsel %vm1075, %v4701, %v4706
    %v4726 = vsel %vm2830, %v4725, %v4719
    %v4727 = vsel %vm4630, %v4726, %v4723
    %v4729 = vrot.slane %v4663, 7
    %v4732 = vrot.slane %v4695, 6
    %v4735 = vrot.slane %v4727, 5
    %vm4737 = vcmask 1040384
    %v4738 = vsel %vm4737, %v4631, %v4729
    %vm4739 = vcmask 1041408
    %v4740 = vsel %vm4739, %v4738, %v4732
    %vm4741 = vcmask 1042432
    %v4742 = vsel %vm4741, %v4740, %v4735
    %v4743 = vpack.c.bf16 %v4742, %v4742
    %v4744 = vld [vmem:[%s7] sm:$0xf]
    %v4745 = vld [vmem:[%s7 + $0x4] sm:$0xf]
    %v4746 = vld [vmem:[%s7 + $0x8] sm:$0xf]
    %v4747 = vld [vmem:[%s7 + $0xc] sm:$0xf]
    %v4748 = vld [vmem:[%s7 + $0x10] sm:$0xf]
    %v4749 = vld [vmem:[%s7 + $0x14] sm:$0xf]
    %v4750 = vld [vmem:[%s7 + $0x18] sm:$0xf]
    %v4751 = vld [vmem:[%s7 + $0x1c] sm:$0xf]
    %v4752 = vld [vmem:[%s7 + $0x20] sm:$0xf]
    %v4753 = vld [vmem:[%s7 + $0x24] sm:$0xf]
    %v4754 = vld [vmem:[%s7 + $0x28] sm:$0xf]
    %v4755 = vld [vmem:[%s7 + $0x2c] sm:$0xf]
    %v4756 = vld [vmem:[%s7 + $0x30] sm:$0xf]
    %v4757 = vld [vmem:[%s7 + $0x34] sm:$0xf]
    %v4758 = vld [vmem:[%s7 + $0x38] sm:$0xf]
    %v4759 = vld [vmem:[%s7 + $0x3c] sm:$0xf]
    %v4760 = vld [vmem:[%s2] sm:$0xf]
    %v4761 = vld [vmem:[#allocation12] sm:$0x3]
    %vm4762 = vcmask 15360
    %v4764 = vsel %vm4762, %v4760, 0
    %v4767 = vsel %vm4739, %v4761, 0
    %4769 = vmatprep.subr.mxu0 0.0
    %4770 = vmatpush1.msra.mxu0 0.0
    %4771 = vmatprep.subr.mxu0 0.0
    %4772 = vmatpush1.msra.mxu0 0.0
    %4773 = vmatprep.subr.mxu0 0.0
    %4774 = vmatpush1.msra.mxu0 0.0
    %4775 = vmatprep.subr.mxu0 0.0
    %4776 = vmatpush1.msra.mxu0 0.0
    %4777 = vmatprep.subr.mxu0 0.0
    %4778 = vmatpush1.msra.mxu0 0.0
    %4779 = vmatprep.subr.mxu0 0.0
    %4780 = vmatpush1.msra.mxu0 0.0
    %4781 = vmatprep.subr.mxu0 0.0
    %4782 = vmatpush1.msra.mxu0 0.0
    %4783 = vmatprep.subr.mxu0 0.0
    %4784 = vmatpush1.msra.mxu0 0.0
    %4785 = vmatprep.subr.mxu0 0.0
    %4786 = vmatpush1.msra.mxu0 0.0
    %4787 = vmatprep.subr.mxu0 0.0
    %4788 = vmatpush1.msra.mxu0 0.0
    %4789 = vmatprep.subr.mxu0 0.0
    %4790 = vmatpush1.msra.mxu0 0.0
    %4791 = vmatprep.subr.mxu0 0.0
    %4792 = vmatpush1.msra.mxu0 0.0
    %4793 = vmatprep.subr.mxu0 0.0
    %4794 = vmatpush1.msra.mxu0 0.0
    %4795 = vmatprep.subr.mxu0 0.0
    %4796 = vmatpush1.msra.mxu0 0.0
    %4797 = vmatprep.subr.mxu0 0.0
    %4798 = vmatpush1.msra.mxu0 0.0
    %4799 = vmatprep.subr.mxu0 0.0
    %4800 = vmatpush1.msra.mxu0 %v4767
    %4801 = vmatprep.subr.mxu0 0.0
    %4802 = vmatpush2.msra.mxu0 0.0
    %4803 = vmatprep.subr.mxu0 0.0
    %4804 = vmatpush2.msra.mxu0 0.0
    %4805 = vmatprep.subr.mxu0 0.0
    %4806 = vmatpush2.msra.mxu0 0.0
    %4807 = vmatprep.subr.mxu0 0.0
    %4808 = vmatpush2.msra.mxu0 0.0
    %4809 = vmatprep.subr.mxu0 0.0
    %4810 = vmatpush2.msra.mxu0 0.0
    %4811 = vmatprep.subr.mxu0 0.0
    %4812 = vmatpush2.msra.mxu0 0.0
    %4813 = vmatprep.subr.mxu0 0.0
    %4814 = vmatpush2.msra.mxu0 0.0
    %4815 = vmatprep.subr.mxu0 0.0
    %4816 = vmatpush2.msra.mxu0 0.0
    %4817 = vmatprep.subr.mxu0 0.0
    %4818 = vmatpush2.msra.mxu0 0.0
    %4819 = vmatprep.subr.mxu0 0.0
    %4820 = vmatpush2.msra.mxu0 0.0
    %4821 = vmatprep.subr.mxu0 0.0
    %4822 = vmatpush2.msra.mxu0 0.0
    %4823 = vmatprep.subr.mxu0 0.0
    %4824 = vmatpush2.msra.mxu0 0.0
    %4825 = vmatprep.subr.mxu0 0.0
    %4826 = vmatpush2.msra.mxu0 0.0
    %4827 = vmatprep.subr.mxu0 0.0
    %4828 = vmatpush2.msra.mxu0 0.0
    %4829 = vmatprep.subr.mxu0 0.0
    %4830 = vmatpush2.msra.mxu0 0.0
    %4831 = vmatprep.subr.mxu0 0.0
    %4832 = vmatpush2.msra.mxu0 0.0
    %4833 = vmatprep.mubr.f32.mxu0 0.0
    %4834 = vmatmul.mubr.f32.gmra.mxu0 %v4764
    %v4835 = vpop.f32.mrf.mxu0
    %v4836 = vadd.f32 0.0, %v4835
    %v4837 = vpop.f32.mrf.mxu0
    %4838 = vdwg.mxu0
    %v4855 = vunpack.c.l.b16 %v4744
    %v4856 = vunpack.c.l.b16 %v4745
    %v4857 = vunpack.c.l.b16 %v4746
    %v4858 = vunpack.c.l.b16 %v4747
    %v4859 = vunpack.c.l.b16 %v4748
    %v4860 = vunpack.c.l.b16 %v4749
    %v4861 = vunpack.c.l.b16 %v4750
    %v4862 = vunpack.c.l.b16 %v4751
    %v4863 = vunpack.c.l.b16 %v4752
    %v4864 = vunpack.c.l.b16 %v4753
    %v4865 = vunpack.c.l.b16 %v4754
    %v4866 = vunpack.c.l.b16 %v4755
    %v4867 = vunpack.c.l.b16 %v4756
    %v4868 = vunpack.c.l.b16 %v4757
    %v4869 = vunpack.c.l.b16 %v4758
    %v4870 = vunpack.c.l.b16 %v4759
    %v4871 = vpack.c.b16 %v4856, %v4855
    %v4872 = vpack.c.b16 %v4858, %v4857
    %v4873 = vpack.c.b16 %v4860, %v4859
    %v4874 = vpack.c.b16 %v4862, %v4861
    %v4875 = vpack.c.b16 %v4864, %v4863
    %v4876 = vpack.c.b16 %v4866, %v4865
    %v4877 = vpack.c.b16 %v4868, %v4867
    %v4878 = vpack.c.b16 %v4870, %v4869
    %4887 = vmatprep.subr.bf16.mxu0 0
    %4888 = vmatpush1.bf16.msra.mxu0 %v4878
    %4889 = vmatprep.subr.bf16.mxu0 0
    %4890 = vmatpush1.bf16.msra.mxu0 %v4877
    %4891 = vmatprep.subr.bf16.mxu0 0
    %4892 = vmatpush1.bf16.msra.mxu0 %v4876
    %4893 = vmatprep.subr.bf16.mxu0 0
    %4894 = vmatpush1.bf16.msra.mxu0 %v4875
    %4895 = vmatprep.subr.bf16.mxu0 0
    %4896 = vmatpush1.bf16.msra.mxu0 %v4874
    %4897 = vmatprep.subr.bf16.mxu0 0
    %4898 = vmatpush1.bf16.msra.mxu0 %v4873
    %4899 = vmatprep.subr.bf16.mxu0 0
    %4900 = vmatpush1.bf16.msra.mxu0 %v4872
    %4901 = vmatprep.subr.bf16.mxu0 0
    %4902 = vmatpush1.bf16.msra.mxu0 %v4871
    %4903 = vmatprep.subr.bf16.mxu0 0
    %4904 = vmatpush2.bf16.msra.mxu0 0
    %4905 = vmatprep.subr.bf16.mxu0 0
    %4906 = vmatpush2.bf16.msra.mxu0 0
    %4907 = vmatprep.subr.bf16.mxu0 0
    %4908 = vmatpush2.bf16.msra.mxu0 0
    %4909 = vmatprep.subr.bf16.mxu0 0
    %4910 = vmatpush2.bf16.msra.mxu0 0
    %4911 = vmatprep.subr.bf16.mxu0 0
    %4912 = vmatpush2.bf16.msra.mxu0 0
    %4913 = vmatprep.subr.bf16.mxu0 0
    %4914 = vmatpush2.bf16.msra.mxu0 0
    %4915 = vmatprep.subr.bf16.mxu0 0
    %4916 = vmatpush2.bf16.msra.mxu0 0
    %4917 = vmatprep.subr.bf16.mxu0 0
    %4918 = vmatpush2.bf16.msra.mxu0 0
    %4919 = vmatprep.mubr.bf16.mxu0 0
    %4920 = vmatmul.mubr.bf16.gmra.mxu0 %v4743
    %v4921 = vpop.f32.mrf.mxu0
    %v4922 = vadd.f32 %v4836, %v4921
    %v4923 = vpop.f32.mrf.mxu0
    %v4924 = vpop.f32.mrf.mxu0
    %v4925 = vpop.f32.mrf.mxu0
    %4926 = vdwg.mxu0
    %v4927 = vld [vmem:[%s9] sm:$0x1]
    %v4929 = vlaneseq
    %v4930 = vshrl.u32 %v4929, 7
    %v4931 = vsub.s32 0, %v4930
    %v4932 = vrot.slane %v4927, %v4931
    %v4934 = vadd.f32 %v4922, %v4932
    %v4935 = vtanh.pop %v4934
    %v4936 = vld [vmem:[%s10] sm:$0xff]
    %v4937 = vld [vmem:[%s10 + $0x8] sm:$0xff]
    %v4938 = vld [vmem:[%s10 + $0x10] sm:$0xff]
    %v4939 = vld [vmem:[%s10 + $0x18] sm:$0xff]
    %v4940 = vld [vmem:[%s11] sm:$0x1]
    %v4942 = vlaneseq
    %v4943 = vshrl.u32 %v4942, 7
    %v4944 = vsub.s32 0, %v4943
    %v4945 = vrot.slane %v4940, %v4944
    %v4948 = vsel %vm1075, %v4935, 0
    %4950 = vmatprep.subr.mxu0 0.0
    %4951 = vmatpush1.msra.mxu0 0.0
    %4952 = vmatprep.subr.mxu0 0.0
    %4953 = vmatpush1.msra.mxu0 0.0
    %4954 = vmatprep.subr.mxu0 0.0
    %4955 = vmatpush1.msra.mxu0 0.0
    %4956 = vmatprep.subr.mxu0 0.0
    %4957 = vmatpush1.msra.mxu0 0.0
    %4958 = vmatprep.subr.mxu0 0.0
    %4959 = vmatpush1.msra.mxu0 0.0
    %4960 = vmatprep.subr.mxu0 0.0
    %4961 = vmatpush1.msra.mxu0 0.0
    %4962 = vmatprep.subr.mxu0 0.0
    %4963 = vmatpush1.msra.mxu0 0.0
    %4964 = vmatprep.subr.mxu0 0.0
    %4965 = vmatpush1.msra.mxu0 0.0
    %4966 = vmatprep.subr.mxu0 0.0
    %4967 = vmatpush1.msra.mxu0 0.0
    %4968 = vmatprep.subr.mxu0 0.0
    %4969 = vmatpush1.msra.mxu0 0.0
    %4970 = vmatprep.subr.mxu0 0.0
    %4971 = vmatpush1.msra.mxu0 0.0
    %4972 = vmatprep.subr.mxu0 0.0
    %4973 = vmatpush1.msra.mxu0 0.0
    %4974 = vmatprep.subr.mxu0 0.0
    %4975 = vmatpush1.msra.mxu0 %v4939
    %4976 = vmatprep.subr.mxu0 0.0
    %4977 = vmatpush1.msra.mxu0 %v4938
    %4978 = vmatprep.subr.mxu0 0.0
    %4979 = vmatpush1.msra.mxu0 %v4937
    %4980 = vmatprep.subr.mxu0 0.0
    %4981 = vmatpush1.msra.mxu0 %v4936
    %4982 = vmatprep.subr.mxu0 0.0
    %4983 = vmatpush2.msra.mxu0 0.0
    %4984 = vmatprep.subr.mxu0 0.0
    %4985 = vmatpush2.msra.mxu0 0.0
    %4986 = vmatprep.subr.mxu0 0.0
    %4987 = vmatpush2.msra.mxu0 0.0
    %4988 = vmatprep.subr.mxu0 0.0
    %4989 = vmatpush2.msra.mxu0 0.0
    %4990 = vmatprep.subr.mxu0 0.0
    %4991 = vmatpush2.msra.mxu0 0.0
    %4992 = vmatprep.subr.mxu0 0.0
    %4993 = vmatpush2.msra.mxu0 0.0
    %4994 = vmatprep.subr.mxu0 0.0
    %4995 = vmatpush2.msra.mxu0 0.0
    %4996 = vmatprep.subr.mxu0 0.0
    %4997 = vmatpush2.msra.mxu0 0.0
    %4998 = vmatprep.subr.mxu0 0.0
    %4999 = vmatpush2.msra.mxu0 0.0
    %5000 = vmatprep.subr.mxu0 0.0
    %5001 = vmatpush2.msra.mxu0 0.0
    %5002 = vmatprep.subr.mxu0 0.0
    %5003 = vmatpush2.msra.mxu0 0.0
    %5004 = vmatprep.subr.mxu0 0.0
    %5005 = vmatpush2.msra.mxu0 0.0
    %5006 = vmatprep.subr.mxu0 0.0
    %5007 = vmatpush2.msra.mxu0 0.0
    %5008 = vmatprep.subr.mxu0 0.0
    %5009 = vmatpush2.msra.mxu0 0.0
    %5010 = vmatprep.subr.mxu0 0.0
    %5011 = vmatpush2.msra.mxu0 0.0
    %5012 = vmatprep.subr.mxu0 0.0
    %5013 = vmatpush2.msra.mxu0 0.0
    %5014 = vmatprep.mubr.f32.mxu0 0.0
    %5015 = vmatmul.mubr.f32.gmra.mxu0 %v4948
    %v5016 = vpop.f32.mrf.mxu0
    %v5017 = vadd.f32 %v4945, %v5016
    %v5018 = vpop.f32.mrf.mxu0
    %5019 = vdwg.mxu0
    %vm5020 = vcmask 27648
    %5021 = vst.msk [vmem:[#allocation14] sm:$0xf] %vm5020, %v5017
    %v5022 = vsel %vm5020, %v5017, -inf
    %5023 = vmax.xlane.f32.xlu0 %v5022
    %v5024 = vpop.xlane.xlu0 %5023
    %v5025 = vsub.f32 %v5017, %v5024
    %v5026 = vmul.f32 %v5025, 1.442695
    %v5027 = vpow.pop %v5026
    %v5028 = vsel %vm5020, %v5027, 0.0
    %5029 = vadd.xlane.f32.xlu0 %v5028
    %v5030 = vpop.xlane.xlu0 %5029
    %v5031 = vrcp.pop %v5030
    %v5032 = vmul.f32 %v5027, %v5031
    %5033 = vst.msk [vmem:[#allocation15] sm:$0xf] %vm5020, %v5032
    // Predicated region
    $region70: #{tpu_custom_call.1} parent=1 // pred_check
      _
    $region71: #{tpu_custom_call.1} parent=1 // pred_check_branch
      %5035 = sbr.rel (0) target = $region73
    $region72: #{tpu_custom_call.1} parent=1 // pred_region
      %s5037 = ssub.s32 64, 64
      %5038 = vsyncadd [#allocation6], %s5037
      %s5040 = sshll.u32 [#allocation14], 4
      %s5041 = int_to_ptr.vmem [resolvable:$true] %s5040
      %5043 = dma.vmem_to_hbm [thread:$0]  %s5041, 64, %s12, [#allocation6]
    $region73: #{tpu_custom_call.1} parent=1 // pred_fallthru
      _
    // Predicated region
    $region74: #{tpu_custom_call.1} parent=1 // pred_check
      _
    $region75: #{tpu_custom_call.1} parent=1 // pred_check_branch
      %5045 = sbr.rel (0) target = $region77
    $region76: #{tpu_custom_call.1} parent=1 // pred_region
      %s5047 = ssub.s32 64, 64
      %5048 = vsyncadd [#allocation16], %s5047
      %s5050 = sshll.u32 [#allocation15], 4
      %s5051 = int_to_ptr.vmem [resolvable:$true] %s5050
      %5053 = dma.vmem_to_hbm [thread:$0]  %s5051, 64, %s13, [#allocation16]
    $region77: #{tpu_custom_call.1} parent=1 // pred_fallthru
      _
    // Predicated region
    $region78: #{tpu_custom_call.1} parent=1 // pred_check
      _
    $region79: #{tpu_custom_call.1} parent=1 // pred_check_branch
      %5055 = sbr.rel (0) target = $region81
    $region80: #{tpu_custom_call.1} parent=1 // pred_region
      %5056 = dma.done [#allocation6], 64
    $region81: #{tpu_custom_call.1} parent=1 // pred_fallthru
      _
    // Predicated region
    $region82: #{tpu_custom_call.1} parent=1 // pred_check
      _
    $region83: #{tpu_custom_call.1} parent=1 // pred_check_branch
      %5058 = sbr.rel (0) target = $region85
    $region84: #{tpu_custom_call.1} parent=1 // pred_region
      %5059 = dma.done [#allocation16], 64
    $region85: #{tpu_custom_call.1} parent=1 // pred_fallthru
      _
    %5060 = vsyncpa [#allocation5], 1
    %5061 = vsyncpa [#allocation10], 1
    %5062 = vsyncpa [#allocation13], 1
    %5063 = vsyncpa [#allocation6], 1
    %5064 = vsyncpa [#allocation16], 1
    %5065 = vsyncpa [#allocation7], 1

</llo_original>
